<compile_context>
chip_gen: v7x
topology: tpu7x:2x2x1
jax: 0.10.0
libtpu: 0.0.40
codegen_flags: <defaults>
</compile_context>

<pallas_src>
import functools

import jax
import jax.numpy as jnp
from jax.experimental import pallas as pl
from jax.experimental.pallas import tpu as pltpu

EPS = 1e-5
VMEM_LIMIT = 32 * 1024 * 1024


# ----------------------------------------------------------------------------- helpers
def _gelu(x):
    # tanh-approximate GELU: routes through the EUP instead of a long VALU polynomial.
    return jax.nn.gelu(x, approximate=True)


def _round_up(x, m):
    return (x + m - 1) // m * m


def _tile_rows(M, max_tm=128):
    tm = min(max_tm, _round_up(M, 8))
    Mp = _round_up(M, tm)
    return tm, Mp


def _pad_rows(x, Mp):
    M = x.shape[0]
    if Mp == M:
        return x
    return jnp.pad(x, ((0, Mp - M), (0, 0)))


def _const_spec(shape):
    zeros = (0,) * len(shape)
    return pl.BlockSpec(shape, lambda *_: zeros)


def _params(parallel=True):
    sem = "parallel" if parallel else "arbitrary"
    return pltpu.CompilerParams(dimension_semantics=(sem,),
                                vmem_limit_bytes=VMEM_LIMIT)


def _layernorm(x, g, b):
    mu = jnp.mean(x, axis=-1, keepdims=True)
    var = jnp.mean((x - mu) ** 2, axis=-1, keepdims=True)
    return (x - mu) * jax.lax.rsqrt(var + EPS) * g + b


def _read_global_stats(stats_ref, count):
    st = stats_ref[...]
    lane = jax.lax.broadcasted_iota(jnp.int32, st.shape, 1)
    s = jnp.sum(jnp.where(lane == 0, st, 0.0))
    ss = jnp.sum(jnp.where(lane == 1, st, 0.0))
    mu = s / count
    var = ss / count - mu * mu
    return mu, jax.lax.rsqrt(var + EPS)


# ----------------------------------------------------------------------------- kernels
def _gstats_kernel(x_ref, o_ref):
    # accumulate [sum, sumsq] of the waveform across L-chunks into lanes 0/1 of o_ref.
    @pl.when(pl.program_id(0) == 0)
    def _():
        o_ref[...] = jnp.zeros_like(o_ref)

    x = x_ref[...]
    s = jnp.sum(x)
    ss = jnp.sum(x * x)
    lane = jax.lax.broadcasted_iota(jnp.int32, o_ref.shape, 1)
    o_ref[...] += jnp.where(lane == 0, s, jnp.where(lane == 1, ss, 0.0))


def _conv_ln_gelu_kernel(p_ref, w_ref, g_ref, b_ref, o_ref):
    # conv-as-matmul (bf16 MXU, f32 acc) -> LayerNorm over channels -> GELU, fused.
    y = jnp.dot(p_ref[...].astype(jnp.bfloat16), w_ref[...],
                preferred_element_type=jnp.float32)
    o_ref[...] = _gelu(_layernorm(y, g_ref[...], b_ref[...]))


def _norm_conv_ln_gelu_kernel(p_ref, stats_ref, w_ref, g_ref, b_ref, o_ref, *, count):
    # first conv block: global waveform layer_norm applied to the im2col patches in-kernel
    # (normalization commutes with the gather since it is a global elementwise affine).
    mu, rstd = _read_global_stats(stats_ref, count)
    xp = (p_ref[...] - mu) * rstd
    y = jnp.dot(xp.astype(jnp.bfloat16), w_ref[...],
                preferred_element_type=jnp.float32)
    o_ref[...] = _gelu(_layernorm(y, g_ref[...], b_ref[...]))


def _ln_proj_kernel(x_ref, g_ref, b_ref, w_ref, pb_ref, o_ref):
    h = _layernorm(x_ref[...], g_ref[...], b_ref[...])
    o_ref[...] = jnp.dot(h.astype(jnp.bfloat16), w_ref[...],
                         preferred_element_type=jnp.float32) + pb_ref[...]


def _posconv_kernel(p_ref, w_ref, b_ref, r_ref, o_ref):
    # grouped positional conv as one block-diagonal matmul + bias + GELU, fused residual add.
    y = jnp.dot(p_ref[...].astype(jnp.bfloat16), w_ref[...],
                preferred_element_type=jnp.float32) + b_ref[...]
    o_ref[...] = r_ref[...] + _gelu(y)


def _encoder_stack_kernel(x_ref, ln1g, ln1b, wq, bq, wk, bk, wv, bv, wo, bo,
                          ln2g, ln2b, w1, b1, w2, b2, fg, fb, o_ref,
                          *, num_heads, scale, num_layers):
    # grid = (batch, layer). The residual stream lives in the output VMEM block, which is
    # resident across the layer axis (same block index), so each layer reads/writes it in
    # place; per-layer weights are streamed in via the layer-indexed BlockSpecs.
    li = pl.program_id(1)

    @pl.when(li == 0)
    def _():
        o_ref[0] = x_ref[0]                                   # seed residual stream

    x = o_ref[0]                                              # [T, D] f32

    # ---- pre-LN self-attention ----
    h = _layernorm(x, ln1g[0], ln1b[0]).astype(jnp.bfloat16)
    q = jnp.dot(h, wq[0], preferred_element_type=jnp.float32) + bq[0]
    k = jnp.dot(h, wk[0], preferred_element_type=jnp.float32) + bk[0]
    v = jnp.dot(h, wv[0], preferred_element_type=jnp.float32) + bv[0]
    wo_w = wo[0]                                              # [D, D] bf16

    D = x.shape[-1]
    dh = D // num_heads
    acc = jnp.zeros_like(x)
    for hh in range(num_heads):                               # static unroll, dh == 128 lanes
        sl = slice(hh * dh, (hh + 1) * dh)
        qh = (q[:, sl] * scale).astype(jnp.bfloat16)
        kh = k[:, sl].astype(jnp.bfloat16)
        vh = v[:, sl].astype(jnp.bfloat16)
        s = jnp.einsum("qd,kd->qk", qh, kh, preferred_element_type=jnp.float32)
        s = s - jnp.max(s, axis=-1, keepdims=True)
        p = jnp.exp(s)
        p = p * pl.reciprocal(jnp.sum(p, axis=-1, keepdims=True), approx=True)
        ctx = jnp.dot(p.astype(jnp.bfloat16), vh, preferred_element_type=jnp.float32)
        acc = acc + jnp.dot(ctx.astype(jnp.bfloat16), wo_w[sl, :],
                            preferred_element_type=jnp.float32)
    x1 = x + acc + bo[0]

    # ---- pre-LN feed-forward ----
    h2 = _layernorm(x1, ln2g[0], ln2b[0]).astype(jnp.bfloat16)
    f1 = _gelu(jnp.dot(h2, w1[0], preferred_element_type=jnp.float32) + b1[0])
    f2 = jnp.dot(f1.astype(jnp.bfloat16), w2[0],
                 preferred_element_type=jnp.float32) + b2[0]
    x2 = x1 + f2

    # final encoder LayerNorm fused into the last layer iteration (layer_norm_first=True)
    is_last = li == num_layers - 1
    o_ref[0] = jnp.where(is_last, _layernorm(x2, fg[...], fb[...]), x2)


# ----------------------------------------------------------------------------- wrappers
def waveform_stats(x):
    # two-pass part 1: tiled [sum, sumsq] reduction over the whole [B, L] waveform.
    B, L = x.shape
    Lc = 256
    Lp = _round_up(L, Lc)
    xp = jnp.pad(x, ((0, 0), (0, Lp - L)))        # zero-pad: does not change sum / sumsq
    nc = Lp // Lc
    return pl.pallas_call(
        _gstats_kernel,
        grid=(nc,),
        out_shape=jax.ShapeDtypeStruct((1, 128), jnp.float32),
        in_specs=[pl.BlockSpec((B, Lc), lambda i: (0, i))],
        out_specs=pl.BlockSpec((1, 128), lambda i: (0, 0)),
        compiler_params=_params(parallel=False),
    )(xp)


def conv_block(h_ncl, w_mat, g, b, kernel, stride, stats=None, count=None):
    # h_ncl: [B, Cin, L]; w_mat: [Cin*K, Cout] bf16 (bias-free conv); returns [B, T, Cout].
    # If stats is given, the global waveform layer_norm is applied to the patches in-kernel.
    B, Cin, L = h_ncl.shape
    Cout = w_mat.shape[1]
    T = (L - kernel) // stride + 1
    idx = jnp.arange(T)[:, None] * stride + jnp.arange(kernel)[None, :]
    patches = h_ncl[:, :, idx].transpose(0, 2, 1, 3).reshape(B * T, Cin * kernel)

    M = B * T
    tm, Mp = _tile_rows(M)
    patches = _pad_rows(patches, Mp)

    if stats is None:
        kern = _conv_ln_gelu_kernel
        extra_in, extra_specs = (), []
    else:
        kern = functools.partial(_norm_conv_ln_gelu_kernel, count=float(count))
        extra_in, extra_specs = (stats,), [_const_spec((1, 128))]

    out = pl.pallas_call(
        kern,
        grid=(Mp // tm,),
        out_shape=jax.ShapeDtypeStruct((Mp, Cout), jnp.float32),
        in_specs=[pl.BlockSpec((tm, Cin * kernel), lambda i: (i, 0))]
                 + extra_specs
                 + [_const_spec(w_mat.shape), _const_spec(g.shape), _const_spec(b.shape)],
        out_specs=pl.BlockSpec((tm, Cout), lambda i: (i, 0)),
        compiler_params=_params(),
    )(patches, *extra_in, w_mat, g, b)
    return out[:M].reshape(B, T, Cout)


def ln_proj(feats, g, b, w, pb):
    # LayerNorm over conv channels + post_extract_proj, fused.
    B, T, C = feats.shape
    D = w.shape[1]
    M = B * T
    tm, Mp = _tile_rows(M)
    x2 = _pad_rows(feats.reshape(M, C), Mp)
    out = pl.pallas_call(
        _ln_proj_kernel,
        grid=(Mp // tm,),
        out_shape=jax.ShapeDtypeStruct((Mp, D), jnp.float32),
        in_specs=[pl.BlockSpec((tm, C), lambda i: (i, 0)),
                  _const_spec(g.shape), _const_spec(b.shape),
                  _const_spec(w.shape), _const_spec(pb.shape)],
        out_specs=pl.BlockSpec((tm, D), lambda i: (i, 0)),
        compiler_params=_params(),
    )(x2, g, b, w, pb)
    return out[:M].reshape(B, T, D)


def pos_conv_residual(feats, w_bd, pb, kernel):
    # grouped Conv1d(D, D, kernel, pad=k//2, groups=G) + SamePad + GELU, residual add fused.
    # Group structure folded into one block-diagonal weight -> single lane-dense matmul.
    B, T, D = feats.shape
    pad = kernel // 2
    xt = jnp.pad(jnp.transpose(feats, (0, 2, 1)), ((0, 0), (0, 0), (pad, pad)))
    # only the first T output positions are kept (SamePad trims the extra one for even kernels)
    idx = jnp.arange(T)[:, None] + jnp.arange(kernel)[None, :]
    patches = xt[:, :, idx].transpose(0, 2, 1, 3).reshape(B * T, D * kernel)
    res = feats.reshape(B * T, D)

    M = B * T
    tm, Mp = _tile_rows(M)
    patches = _pad_rows(patches, Mp)
    res = _pad_rows(res, Mp)
    out = pl.pallas_call(
        _posconv_kernel,
        grid=(Mp // tm,),
        out_shape=jax.ShapeDtypeStruct((Mp, D), jnp.float32),
        in_specs=[pl.BlockSpec((tm, D * kernel), lambda i: (i, 0)),
                  _const_spec(w_bd.shape), _const_spec(pb.shape),
                  pl.BlockSpec((tm, D), lambda i: (i, 0))],
        out_specs=pl.BlockSpec((tm, D), lambda i: (i, 0)),
        compiler_params=_params(),
    )(patches, w_bd, pb, res)
    return out[:M].reshape(B, T, D)


def encoder_stack(x, lp, final_g, final_b, num_heads):
    # all pre-LN transformer layers + final LayerNorm in one weight-streaming kernel.
    B, T, D = x.shape
    nL = lp["wq"].shape[0]
    F = lp["w1"].shape[2]
    dh = D // num_heads
    kern = functools.partial(_encoder_stack_kernel, num_heads=num_heads,
                             scale=dh ** -0.5, num_layers=nL)

    def lspec(a):  # per-layer weight: leading layer axis indexed by grid axis 1
        return pl.BlockSpec((1,) + a.shape[1:],
                            lambda bi, li, nd=a.ndim: (li,) + (0,) * (nd - 1))

    def cspec(a):  # shared (layer-invariant) weight
        return pl.BlockSpec(a.shape, lambda bi, li, nd=a.ndim: (0,) * nd)

    weight_args = (lp["ln1_g"], lp["ln1_b"], lp["wq"], lp["bq"], lp["wk"], lp["bk"],
                   lp["wv"], lp["bv"], lp["wo"], lp["bo"],
                   lp["ln2_g"], lp["ln2_b"], lp["w1"], lp["b1"], lp["w2"], lp["b2"])
    cost = pl.CostEstimate(
        flops=int(B * nL * (8 * T * D * D + 4 * T * T * D + 4 * T * D * F)),
        transcendentals=int(B * nL * (num_heads * T * T + T * F)),
        bytes_accessed=int(2 * B * T * D * 4 + nL * (4 * D * D + 2 * D * F) * 2))

    return pl.pallas_call(
        kern,
        grid=(B, nL),
        out_shape=jax.ShapeDtypeStruct((B, T, D), jnp.float32),
        in_specs=[pl.BlockSpec((1, T, D), lambda bi, li: (bi, 0, 0))]
                 + [lspec(a) for a in weight_args]
                 + [cspec(final_g), cspec(final_b)],
        out_specs=pl.BlockSpec((1, T, D), lambda bi, li: (bi, 0, 0)),
        compiler_params=pltpu.CompilerParams(
            dimension_semantics=("parallel", "arbitrary"),
            vmem_limit_bytes=VMEM_LIMIT),
        cost_estimate=cost,
    )(x, *weight_args, final_g, final_b)


# ----------------------------------------------------------------------------- model glue
def wavlm_extract_features(input_values, params, cfg):
    B = input_values.shape[0]
    x = input_values.reshape(B, -1).astype(jnp.float32)                # [B, L]
    L = x.shape[1]

    stats = waveform_stats(x) if cfg["normalize"] else None            # LN over whole tensor

    # conv feature extractor ("layer_norm" mode: conv -> LN(channel) -> GELU)
    h = x[:, None, :]                                                  # [B, 1, L]
    for idx, (blk, (_, k, stride)) in enumerate(zip(params["conv_blocks"],
                                                    cfg["conv_layers"])):
        st = stats if (idx == 0 and cfg["normalize"]) else None
        y = conv_block(h, blk["w"], blk["g"], blk["b"], k, stride,
                       stats=st, count=B * L)                          # [B, T, C]
        h = jnp.transpose(y, (0, 2, 1))                                # [B, C, T]
    feats = jnp.transpose(h, (0, 2, 1))                                # [B, T, C]

    feats = ln_proj(feats, params["fe_ln_g"], params["fe_ln_b"],
                    params["proj_w"], params["proj_b"])                # [B, T, D]

    h = pos_conv_residual(feats, params["pos_w"], params["pos_b"],
                          cfg["pos_kernel"])                           # x + gelu(pos_conv(x))

    h = encoder_stack(h, params["layers"], params["final_ln_g"],
                      params["final_ln_b"], cfg["num_heads"])          # layers + final LN

    return h                                                           # feature [B, T, D]


# ----------------------------------------------------------------------------- params
def init_params(key, cfg):
    keys = iter(jax.random.split(key, 128))

    def nrm(shape, scale=0.05):
        return scale * jax.random.normal(next(keys), shape, jnp.float32)

    D, F, nL = cfg["embed_dim"], cfg["ffn_dim"], cfg["num_layers"]
    params = {}

    conv_blocks = []
    cin = 1
    for (cout, k, _stride) in cfg["conv_layers"]:
        w = nrm((cout, cin, k), 0.5)                                   # torch Conv1d layout
        conv_blocks.append(dict(
            w=w.reshape(cout, cin * k).T.astype(jnp.bfloat16),         # [Cin*K, Cout]
            g=jnp.ones((1, cout), jnp.float32),
            b=jnp.zeros((1, cout), jnp.float32)))
        cin = cout
    params["conv_blocks"] = conv_blocks

    C = cin
    params["fe_ln_g"] = jnp.ones((1, C), jnp.float32)
    params["fe_ln_b"] = jnp.zeros((1, C), jnp.float32)
    params["proj_w"] = nrm((C, D)).astype(jnp.bfloat16)
    params["proj_b"] = jnp.zeros((1, D), jnp.float32)

    # positional grouped conv (torch layout [D, D//G, K]) folded into a block-diag [D*K, D]
    K, G = cfg["pos_kernel"], cfg["pos_groups"]
    Dg = D // G
    wp = nrm((D, Dg, K), 0.1)
    wbd = jnp.zeros((D * K, D), jnp.float32)
    for g in range(G):
        blk = jnp.transpose(wp[g * Dg:(g + 1) * Dg], (1, 2, 0)).reshape(Dg * K, Dg)
        wbd = wbd.at[g * Dg * K:(g + 1) * Dg * K, g * Dg:(g + 1) * Dg].set(blk)
    params["pos_w"] = wbd.astype(jnp.bfloat16)
    params["pos_b"] = jnp.zeros((1, D), jnp.float32)

    # transformer layer weights stacked along a leading layer axis for weight streaming
    params["layers"] = dict(
        ln1_g=jnp.ones((nL, 1, D), jnp.float32), ln1_b=jnp.zeros((nL, 1, D), jnp.float32),
        wq=nrm((nL, D, D)).astype(jnp.bfloat16), bq=jnp.zeros((nL, 1, D), jnp.float32),
        wk=nrm((nL, D, D)).astype(jnp.bfloat16), bk=jnp.zeros((nL, 1, D), jnp.float32),
        wv=nrm((nL, D, D)).astype(jnp.bfloat16), bv=jnp.zeros((nL, 1, D), jnp.float32),
        wo=nrm((nL, D, D)).astype(jnp.bfloat16), bo=jnp.zeros((nL, 1, D), jnp.float32),
        ln2_g=jnp.ones((nL, 1, D), jnp.float32), ln2_b=jnp.zeros((nL, 1, D), jnp.float32),
        w1=nrm((nL, D, F)).astype(jnp.bfloat16), b1=jnp.zeros((nL, 1, F), jnp.float32),
        w2=nrm((nL, F, D)).astype(jnp.bfloat16), b2=jnp.zeros((nL, 1, D), jnp.float32),
    )
    params["final_ln_g"] = jnp.ones((1, D), jnp.float32)
    params["final_ln_b"] = jnp.zeros((1, D), jnp.float32)
    return params


# ----------------------------------------------------------------------------- main
if __name__ == "__main__":
    cfg = dict(
        conv_layers=[(128, 10, 5), (128, 3, 2), (128, 2, 2)],   # (channels, kernel, stride)
        embed_dim=256,      # head_dim = 256 / 2 = 128 -> lane-dense per-head slices
        num_heads=2,
        num_layers=2,
        ffn_dim=512,
        pos_kernel=8,
        pos_groups=4,
        normalize=True,
    )
    params = init_params(jax.random.PRNGKey(42), cfg)

    # small synthetic waveform: batch=2, 1 channel, 400 samples
    input_values = jax.random.normal(jax.random.PRNGKey(0), (2, 1, 400), jnp.float32)

    forward = jax.jit(lambda wav, prm: wavlm_extract_features(wav, prm, cfg))
    feature = forward(input_values, params)
    feature = jax.block_until_ready(feature)

    assert feature.shape == (2, 19, cfg["embed_dim"]) and feature.dtype == jnp.float32
    assert bool(jnp.all(jnp.isfinite(feature)))
    print("KERNEL_OK")
</pallas_src>

<mosaic_0001>
module attributes {stable_mosaic.version = 11 : i64} {
  func.func @_gstats_kernel(%arg0: i32, %arg1: memref<2x256xf32, #tpu.memory_space<vmem>>, %arg2: memref<1x128xf32, #tpu.memory_space<vmem>>) attributes {dimension_semantics = [#tpu.dimension_semantics<arbitrary>], iteration_bounds = array<i64: 2>, scalar_prefetch = 0 : i64, scratch_operands = 0 : i64, tpu.core_type = #tpu.core_type<tc>, window_params = [{transform_indices = @transform_0, window_bounds = array<i64: 2, 256>}, {pipeline_mode = #tpu.pipeline_mode<synchronous>, transform_indices = @transform_1, window_bounds = array<i64: 1, 128>}]} {
    %c0_i32 = arith.constant 0 : i32
    %0 = arith.cmpi eq, %arg0, %c0_i32 : i32
    %1 = arith.extui %0 : i1 to i32
    %c0_i32_0 = arith.constant 0 : i32
    %2 = arith.cmpi ne, %1, %c0_i32_0 : i32
    scf.if %2 {
      %cst_9 = arith.constant 0.000000e+00 : f32
      %26 = vector.broadcast %cst_9 : f32 to vector<1x128xf32>
      %c0_10 = arith.constant 0 : index
      %c0_11 = arith.constant 0 : index
      %27 = vector.load %arg2[%c0_10, %c0_11] : memref<1x128xf32, #tpu.memory_space<vmem>>, vector<1x128xf32>
      tpu.vector_store %arg2[%c0_10, %c0_11], %26 {strides = array<i32>} : memref<1x128xf32, #tpu.memory_space<vmem>>, vector<1x128xf32>,
    } else {
    }
    %c0 = arith.constant 0 : index
    %c0_1 = arith.constant 0 : index
    %3 = vector.load %arg1[%c0, %c0_1] : memref<2x256xf32, #tpu.memory_space<vmem>>, vector<2x256xf32>
    %4 = vector.shape_cast %3 : vector<2x256xf32> to vector<1x2x256xf32>
    %cst = arith.constant dense<0.000000e+00> : vector<1xf32>
    %5 = vector.multi_reduction <add>, %4, %cst [1, 2] : vector<1x2x256xf32> to vector<1xf32>
    %6 = vector.shape_cast %5 : vector<1xf32> to vector<1x1x1xf32>
    %7 = vector.extract %6[0, 0, 0] : f32 from vector<1x1x1xf32>
    %8 = arith.mulf %3, %3 : vector<2x256xf32>
    %9 = vector.shape_cast %8 : vector<2x256xf32> to vector<1x2x256xf32>
    %cst_2 = arith.constant dense<0.000000e+00> : vector<1xf32>
    %10 = vector.multi_reduction <add>, %9, %cst_2 [1, 2] : vector<1x2x256xf32> to vector<1xf32>
    %11 = vector.shape_cast %10 : vector<1xf32> to vector<1x1x1xf32>
    %12 = vector.extract %11[0, 0, 0] : f32 from vector<1x1x1xf32>
    %13 = tpu.iota {dimensions = array<i32: 1>} : vector<1x128xi32>
    %c0_3 = arith.constant 0 : index
    %c0_4 = arith.constant 0 : index
    %14 = vector.load %arg2[%c0_3, %c0_4] : memref<1x128xf32, #tpu.memory_space<vmem>>, vector<1x128xf32>
    %c0_i32_5 = arith.constant 0 : i32
    %15 = vector.broadcast %c0_i32_5 : i32 to vector<1x128xi32>
    %16 = arith.cmpi eq, %13, %15 : vector<1x128xi32>
    %c1_i32 = arith.constant 1 : i32
    %17 = vector.broadcast %c1_i32 : i32 to vector<1x128xi32>
    %18 = arith.cmpi eq, %13, %17 : vector<1x128xi32>
    %cst_6 = arith.constant 0.000000e+00 : f32
    %19 = vector.broadcast %12 : f32 to vector<1x128xf32>
    %20 = vector.broadcast %cst_6 : f32 to vector<1x128xf32>
    %21 = arith.select %18, %19, %20 : vector<1x128xi1>, vector<1x128xf32>
    %22 = vector.broadcast %7 : f32 to vector<1x128xf32>
    %23 = arith.select %16, %22, %21 : vector<1x128xi1>, vector<1x128xf32>
    %24 = arith.addf %14, %23 : vector<1x128xf32>
    %c0_7 = arith.constant 0 : index
    %c0_8 = arith.constant 0 : index
    %25 = vector.load %arg2[%c0_7, %c0_8] : memref<1x128xf32, #tpu.memory_space<vmem>>, vector<1x128xf32>
    tpu.vector_store %arg2[%c0_7, %c0_8], %24 {strides = array<i32>} : memref<1x128xf32, #tpu.memory_space<vmem>>, vector<1x128xf32>,
    return
  }
  func.func @transform_0(%arg0: i32) -> (i32, i32) {
    %c0_i32 = arith.constant 0 : i32
    %c0_i32_0 = arith.constant 0 : i32
    return %c0_i32, %arg0 : i32, i32
  }
  func.func @transform_1(%arg0: i32) -> (i32, i32) {
    %c0_i32 = arith.constant 0 : i32
    %c0_i32_0 = arith.constant 0 : i32
    %c0_i32_1 = arith.constant 0 : i32
    return %c0_i32, %c0_i32_0 : i32, i32
  }
}

module attributes {stable_mosaic.version = 11 : i64} {
  func.func @_norm_conv_ln_gelu_kernel(%arg0: i32, %arg1: memref<128x10xf32, #tpu.memory_space<vmem>>, %arg2: memref<1x128xf32, #tpu.memory_space<vmem>>, %arg3: memref<10x128xbf16, #tpu.memory_space<vmem>>, %arg4: memref<1x128xf32, #tpu.memory_space<vmem>>, %arg5: memref<1x128xf32, #tpu.memory_space<vmem>>, %arg6: memref<128x128xf32, #tpu.memory_space<vmem>>) attributes {dimension_semantics = [#tpu.dimension_semantics<parallel>], iteration_bounds = array<i64: 2>, scalar_prefetch = 0 : i64, scratch_operands = 0 : i64, tpu.core_type = #tpu.core_type<tc>, window_params = [{transform_indices = @transform_0, window_bounds = array<i64: 128, 10>}, {pipeline_mode = #tpu.pipeline_mode<synchronous>, transform_indices = @transform_1, window_bounds = array<i64: 1, 128>}, {pipeline_mode = #tpu.pipeline_mode<synchronous>, transform_indices = @transform_2, window_bounds = array<i64: 10, 128>}, {pipeline_mode = #tpu.pipeline_mode<synchronous>, transform_indices = @transform_3, window_bounds = array<i64: 1, 128>}, {pipeline_mode = #tpu.pipeline_mode<synchronous>, transform_indices = @transform_4, window_bounds = array<i64: 1, 128>}, {transform_indices = @transform_5, window_bounds = array<i64: 128, 128>}]} {
    %c0 = arith.constant 0 : index
    %c0_0 = arith.constant 0 : index
    %0 = vector.load %arg2[%c0, %c0_0] : memref<1x128xf32, #tpu.memory_space<vmem>>, vector<1x128xf32>
    %1 = tpu.iota {dimensions = array<i32: 1>} : vector<1x128xi32>
    %c0_i32 = arith.constant 0 : i32
    %2 = vector.broadcast %c0_i32 : i32 to vector<1x128xi32>
    %3 = arith.cmpi eq, %1, %2 : vector<1x128xi32>
    %cst = arith.constant 0.000000e+00 : f32
    %4 = vector.broadcast %cst : f32 to vector<1x128xf32>
    %5 = arith.select %3, %0, %4 : vector<1x128xi1>, vector<1x128xf32>
    %6 = vector.shape_cast %5 : vector<1x128xf32> to vector<1x1x128xf32>
    %cst_1 = arith.constant dense<0.000000e+00> : vector<1xf32>
    %7 = vector.multi_reduction <add>, %6, %cst_1 [1, 2] : vector<1x1x128xf32> to vector<1xf32>
    %8 = vector.shape_cast %7 : vector<1xf32> to vector<1x1x1xf32>
    %9 = vector.extract %8[0, 0, 0] : f32 from vector<1x1x1xf32>
    %c1_i32 = arith.constant 1 : i32
    %10 = vector.broadcast %c1_i32 : i32 to vector<1x128xi32>
    %11 = arith.cmpi eq, %1, %10 : vector<1x128xi32>
    %cst_2 = arith.constant 0.000000e+00 : f32
    %12 = vector.broadcast %cst_2 : f32 to vector<1x128xf32>
    %13 = arith.select %11, %0, %12 : vector<1x128xi1>, vector<1x128xf32>
    %14 = vector.shape_cast %13 : vector<1x128xf32> to vector<1x1x128xf32>
    %cst_3 = arith.constant dense<0.000000e+00> : vector<1xf32>
    %15 = vector.multi_reduction <add>, %14, %cst_3 [1, 2] : vector<1x1x128xf32> to vector<1xf32>
    %16 = vector.shape_cast %15 : vector<1xf32> to vector<1x1x1xf32>
    %17 = vector.extract %16[0, 0, 0] : f32 from vector<1x1x1xf32>
    %cst_4 = arith.constant 8.000000e+02 : f32
    %18 = arith.divf %9, %cst_4 : f32
    %cst_5 = arith.constant 8.000000e+02 : f32
    %19 = arith.divf %17, %cst_5 : f32
    %20 = arith.mulf %18, %18 : f32
    %21 = arith.subf %19, %20 : f32
    %cst_6 = arith.constant 9.99999974E-6 : f32
    %22 = arith.addf %21, %cst_6 : f32
    %23 = math.rsqrt %22 : f32
    %c0_7 = arith.constant 0 : index
    %c0_8 = arith.constant 0 : index
    %24 = vector.load %arg1[%c0_7, %c0_8] : memref<128x10xf32, #tpu.memory_space<vmem>>, vector<128x10xf32>
    %25 = vector.broadcast %18 : f32 to vector<128x10xf32>
    %26 = arith.subf %24, %25 : vector<128x10xf32>
    %27 = vector.broadcast %23 : f32 to vector<128x10xf32>
    %28 = arith.mulf %26, %27 : vector<128x10xf32>
    %29 = arith.truncf %28 : vector<128x10xf32> to vector<128x10xbf16>
    %c0_9 = arith.constant 0 : index
    %c0_10 = arith.constant 0 : index
    %30 = vector.load %arg3[%c0_9, %c0_10] : memref<10x128xbf16, #tpu.memory_space<vmem>>, vector<10x128xbf16>
    %cst_11 = arith.constant dense<0.000000e+00> : vector<128x128xf32>
    %31 = tpu.matmul %29, %30, %cst_11 {dimension_numbers = #tpu.dot_dimension_numbers<[1], [0], [0], [1], [0, 0, 1, 1], [], []>} : vector<128x10xbf16>, vector<10x128xbf16>, vector<128x128xf32> -> vector<128x128xf32>
    %c0_12 = arith.constant 0 : index
    %c0_13 = arith.constant 0 : index
    %32 = vector.load %arg4[%c0_12, %c0_13] : memref<1x128xf32, #tpu.memory_space<vmem>>, vector<1x128xf32>
    %c0_14 = arith.constant 0 : index
    %c0_15 = arith.constant 0 : index
    %33 = vector.load %arg5[%c0_14, %c0_15] : memref<1x128xf32, #tpu.memory_space<vmem>>, vector<1x128xf32>
    %cst_16 = arith.constant dense<0.000000e+00> : vector<128xf32>
    %34 = vector.multi_reduction <add>, %31, %cst_16 [1] : vector<128x128xf32> to vector<128xf32>
    %35 = vector.shape_cast %34 : vector<128xf32> to vector<128x1xf32>
    %cst_17 = arith.constant 1.280000e+02 : f32
    %36 = vector.broadcast %cst_17 : f32 to vector<128x1xf32>
    %37 = arith.divf %35, %36 : vector<128x1xf32>
    %38 = vector.broadcast %37 : vector<128x1xf32> to vector<128x128xf32>
    %39 = arith.subf %31, %38 : vector<128x128xf32>
    %40 = arith.mulf %39, %39 : vector<128x128xf32>
    %cst_18 = arith.constant dense<0.000000e+00> : vector<128xf32>
    %41 = vector.multi_reduction <add>, %40, %cst_18 [1] : vector<128x128xf32> to vector<128xf32>
    %42 = vector.shape_cast %41 : vector<128xf32> to vector<128x1xf32>
    %cst_19 = arith.constant 1.280000e+02 : f32
    %43 = vector.broadcast %cst_19 : f32 to vector<128x1xf32>
    %44 = arith.divf %42, %43 : vector<128x1xf32>
    %45 = vector.broadcast %37 : vector<128x1xf32> to vector<128x128xf32>
    %46 = arith.subf %31, %45 : vector<128x128xf32>
    %cst_20 = arith.constant 9.99999974E-6 : f32
    %47 = vector.broadcast %cst_20 : f32 to vector<128x1xf32>
    %48 = arith.addf %44, %47 : vector<128x1xf32>
    %49 = math.rsqrt %48 : vector<128x1xf32>
    %50 = vector.broadcast %49 : vector<128x1xf32> to vector<128x128xf32>
    %51 = arith.mulf %46, %50 : vector<128x128xf32>
    %52 = vector.broadcast %32 : vector<1x128xf32> to vector<128x128xf32>
    %53 = arith.mulf %51, %52 : vector<128x128xf32>
    %54 = vector.broadcast %33 : vector<1x128xf32> to vector<128x128xf32>
    %55 = arith.addf %53, %54 : vector<128x128xf32>
    %56 = arith.mulf %55, %55 : vector<128x128xf32>
    %57 = arith.mulf %55, %56 : vector<128x128xf32>
    %cst_21 = arith.constant 4.471500e-02 : f32
    %58 = vector.broadcast %cst_21 : f32 to vector<128x128xf32>
    %59 = arith.mulf %58, %57 : vector<128x128xf32>
    %60 = arith.addf %55, %59 : vector<128x128xf32>
    %cst_22 = arith.constant 0.797884583 : f32
    %61 = vector.broadcast %cst_22 : f32 to vector<128x128xf32>
    %62 = arith.mulf %61, %60 : vector<128x128xf32>
    %63 = math.tanh %62 : vector<128x128xf32>
    %cst_23 = arith.constant 1.000000e+00 : f32
    %64 = vector.broadcast %cst_23 : f32 to vector<128x128xf32>
    %65 = arith.addf %64, %63 : vector<128x128xf32>
    %cst_24 = arith.constant 5.000000e-01 : f32
    %66 = vector.broadcast %cst_24 : f32 to vector<128x128xf32>
    %67 = arith.mulf %66, %65 : vector<128x128xf32>
    %68 = arith.mulf %55, %67 : vector<128x128xf32>
    %c0_25 = arith.constant 0 : index
    %c0_26 = arith.constant 0 : index
    %69 = vector.load %arg6[%c0_25, %c0_26] : memref<128x128xf32, #tpu.memory_space<vmem>>, vector<128x128xf32>
    tpu.vector_store %arg6[%c0_25, %c0_26], %68 {strides = array<i32>} : memref<128x128xf32, #tpu.memory_space<vmem>>, vector<128x128xf32>,
    return
  }
  func.func @transform_0(%arg0: i32) -> (i32, i32) {
    %c0_i32 = arith.constant 0 : i32
    %c0_i32_0 = arith.constant 0 : i32
    return %arg0, %c0_i32 : i32, i32
  }
  func.func @transform_1(%arg0: i32) -> (i32, i32) {
    %c0_i32 = arith.constant 0 : i32
    %c0_i32_0 = arith.constant 0 : i32
    %c0_i32_1 = arith.constant 0 : i32
    return %c0_i32, %c0_i32_0 : i32, i32
  }
  func.func @transform_2(%arg0: i32) -> (i32, i32) {
    %c0_i32 = arith.constant 0 : i32
    %c0_i32_0 = arith.constant 0 : i32
    %c0_i32_1 = arith.constant 0 : i32
    return %c0_i32, %c0_i32_0 : i32, i32
  }
  func.func @transform_3(%arg0: i32) -> (i32, i32) {
    %c0_i32 = arith.constant 0 : i32
    %c0_i32_0 = arith.constant 0 : i32
    %c0_i32_1 = arith.constant 0 : i32
    return %c0_i32, %c0_i32_0 : i32, i32
  }
  func.func @transform_4(%arg0: i32) -> (i32, i32) {
    %c0_i32 = arith.constant 0 : i32
    %c0_i32_0 = arith.constant 0 : i32
    %c0_i32_1 = arith.constant 0 : i32
    return %c0_i32, %c0_i32_0 : i32, i32
  }
  func.func @transform_5(%arg0: i32) -> (i32, i32) {
    %c0_i32 = arith.constant 0 : i32
    %c0_i32_0 = arith.constant 0 : i32
    return %arg0, %c0_i32 : i32, i32
  }
}

module attributes {stable_mosaic.version = 11 : i64} {
  func.func @_conv_ln_gelu_kernel(%arg0: i32, %arg1: memref<80x384xf32, #tpu.memory_space<vmem>>, %arg2: memref<384x128xbf16, #tpu.memory_space<vmem>>, %arg3: memref<1x128xf32, #tpu.memory_space<vmem>>, %arg4: memref<1x128xf32, #tpu.memory_space<vmem>>, %arg5: memref<80x128xf32, #tpu.memory_space<vmem>>) attributes {dimension_semantics = [#tpu.dimension_semantics<parallel>], iteration_bounds = array<i64: 1>, scalar_prefetch = 0 : i64, scratch_operands = 0 : i64, tpu.core_type = #tpu.core_type<tc>, window_params = [{transform_indices = @transform_0, window_bounds = array<i64: 80, 384>}, {pipeline_mode = #tpu.pipeline_mode<synchronous>, transform_indices = @transform_1, window_bounds = array<i64: 384, 128>}, {pipeline_mode = #tpu.pipeline_mode<synchronous>, transform_indices = @transform_2, window_bounds = array<i64: 1, 128>}, {pipeline_mode = #tpu.pipeline_mode<synchronous>, transform_indices = @transform_3, window_bounds = array<i64: 1, 128>}, {transform_indices = @transform_4, window_bounds = array<i64: 80, 128>}]} {
    %c0 = arith.constant 0 : index
    %c0_0 = arith.constant 0 : index
    %0 = vector.load %arg1[%c0, %c0_0] : memref<80x384xf32, #tpu.memory_space<vmem>>, vector<80x384xf32>
    %1 = arith.truncf %0 : vector<80x384xf32> to vector<80x384xbf16>
    %c0_1 = arith.constant 0 : index
    %c0_2 = arith.constant 0 : index
    %2 = vector.load %arg2[%c0_1, %c0_2] : memref<384x128xbf16, #tpu.memory_space<vmem>>, vector<384x128xbf16>
    %cst = arith.constant dense<0.000000e+00> : vector<80x128xf32>
    %3 = tpu.matmul %1, %2, %cst {dimension_numbers = #tpu.dot_dimension_numbers<[1], [0], [0], [1], [0, 0, 1, 1], [], []>} : vector<80x384xbf16>, vector<384x128xbf16>, vector<80x128xf32> -> vector<80x128xf32>
    %c0_3 = arith.constant 0 : index
    %c0_4 = arith.constant 0 : index
    %4 = vector.load %arg3[%c0_3, %c0_4] : memref<1x128xf32, #tpu.memory_space<vmem>>, vector<1x128xf32>
    %c0_5 = arith.constant 0 : index
    %c0_6 = arith.constant 0 : index
    %5 = vector.load %arg4[%c0_5, %c0_6] : memref<1x128xf32, #tpu.memory_space<vmem>>, vector<1x128xf32>
    %cst_7 = arith.constant dense<0.000000e+00> : vector<80xf32>
    %6 = vector.multi_reduction <add>, %3, %cst_7 [1] : vector<80x128xf32> to vector<80xf32>
    %7 = vector.shape_cast %6 : vector<80xf32> to vector<80x1xf32>
    %cst_8 = arith.constant 1.280000e+02 : f32
    %8 = vector.broadcast %cst_8 : f32 to vector<80x1xf32>
    %9 = arith.divf %7, %8 : vector<80x1xf32>
    %10 = vector.broadcast %9 : vector<80x1xf32> to vector<80x128xf32>
    %11 = arith.subf %3, %10 : vector<80x128xf32>
    %12 = arith.mulf %11, %11 : vector<80x128xf32>
    %cst_9 = arith.constant dense<0.000000e+00> : vector<80xf32>
    %13 = vector.multi_reduction <add>, %12, %cst_9 [1] : vector<80x128xf32> to vector<80xf32>
    %14 = vector.shape_cast %13 : vector<80xf32> to vector<80x1xf32>
    %cst_10 = arith.constant 1.280000e+02 : f32
    %15 = vector.broadcast %cst_10 : f32 to vector<80x1xf32>
    %16 = arith.divf %14, %15 : vector<80x1xf32>
    %17 = vector.broadcast %9 : vector<80x1xf32> to vector<80x128xf32>
    %18 = arith.subf %3, %17 : vector<80x128xf32>
    %cst_11 = arith.constant 9.99999974E-6 : f32
    %19 = vector.broadcast %cst_11 : f32 to vector<80x1xf32>
    %20 = arith.addf %16, %19 : vector<80x1xf32>
    %21 = math.rsqrt %20 : vector<80x1xf32>
    %22 = vector.broadcast %21 : vector<80x1xf32> to vector<80x128xf32>
    %23 = arith.mulf %18, %22 : vector<80x128xf32>
    %24 = vector.broadcast %4 : vector<1x128xf32> to vector<80x128xf32>
    %25 = arith.mulf %23, %24 : vector<80x128xf32>
    %26 = vector.broadcast %5 : vector<1x128xf32> to vector<80x128xf32>
    %27 = arith.addf %25, %26 : vector<80x128xf32>
    %28 = arith.mulf %27, %27 : vector<80x128xf32>
    %29 = arith.mulf %27, %28 : vector<80x128xf32>
    %cst_12 = arith.constant 4.471500e-02 : f32
    %30 = vector.broadcast %cst_12 : f32 to vector<80x128xf32>
    %31 = arith.mulf %30, %29 : vector<80x128xf32>
    %32 = arith.addf %27, %31 : vector<80x128xf32>
    %cst_13 = arith.constant 0.797884583 : f32
    %33 = vector.broadcast %cst_13 : f32 to vector<80x128xf32>
    %34 = arith.mulf %33, %32 : vector<80x128xf32>
    %35 = math.tanh %34 : vector<80x128xf32>
    %cst_14 = arith.constant 1.000000e+00 : f32
    %36 = vector.broadcast %cst_14 : f32 to vector<80x128xf32>
    %37 = arith.addf %36, %35 : vector<80x128xf32>
    %cst_15 = arith.constant 5.000000e-01 : f32
    %38 = vector.broadcast %cst_15 : f32 to vector<80x128xf32>
    %39 = arith.mulf %38, %37 : vector<80x128xf32>
    %40 = arith.mulf %27, %39 : vector<80x128xf32>
    %c0_16 = arith.constant 0 : index
    %c0_17 = arith.constant 0 : index
    %41 = vector.load %arg5[%c0_16, %c0_17] : memref<80x128xf32, #tpu.memory_space<vmem>>, vector<80x128xf32>
    tpu.vector_store %arg5[%c0_16, %c0_17], %40 {strides = array<i32>} : memref<80x128xf32, #tpu.memory_space<vmem>>, vector<80x128xf32>,
    return
  }
  func.func @transform_0(%arg0: i32) -> (i32, i32) {
    %c0_i32 = arith.constant 0 : i32
    %c0_i32_0 = arith.constant 0 : i32
    return %arg0, %c0_i32 : i32, i32
  }
  func.func @transform_1(%arg0: i32) -> (i32, i32) {
    %c0_i32 = arith.constant 0 : i32
    %c0_i32_0 = arith.constant 0 : i32
    %c0_i32_1 = arith.constant 0 : i32
    return %c0_i32, %c0_i32_0 : i32, i32
  }
  func.func @transform_2(%arg0: i32) -> (i32, i32) {
    %c0_i32 = arith.constant 0 : i32
    %c0_i32_0 = arith.constant 0 : i32
    %c0_i32_1 = arith.constant 0 : i32
    return %c0_i32, %c0_i32_0 : i32, i32
  }
  func.func @transform_3(%arg0: i32) -> (i32, i32) {
    %c0_i32 = arith.constant 0 : i32
    %c0_i32_0 = arith.constant 0 : i32
    %c0_i32_1 = arith.constant 0 : i32
    return %c0_i32, %c0_i32_0 : i32, i32
  }
  func.func @transform_4(%arg0: i32) -> (i32, i32) {
    %c0_i32 = arith.constant 0 : i32
    %c0_i32_0 = arith.constant 0 : i32
    return %arg0, %c0_i32 : i32, i32
  }
}

module attributes {stable_mosaic.version = 11 : i64} {
  func.func @_ln_proj_kernel(%arg0: i32, %arg1: memref<40x128xf32, #tpu.memory_space<vmem>>, %arg2: memref<1x128xf32, #tpu.memory_space<vmem>>, %arg3: memref<1x128xf32, #tpu.memory_space<vmem>>, %arg4: memref<128x256xbf16, #tpu.memory_space<vmem>>, %arg5: memref<1x256xf32, #tpu.memory_space<vmem>>, %arg6: memref<40x256xf32, #tpu.memory_space<vmem>>) attributes {dimension_semantics = [#tpu.dimension_semantics<parallel>], iteration_bounds = array<i64: 1>, scalar_prefetch = 0 : i64, scratch_operands = 0 : i64, tpu.core_type = #tpu.core_type<tc>, window_params = [{transform_indices = @transform_0, window_bounds = array<i64: 40, 128>}, {pipeline_mode = #tpu.pipeline_mode<synchronous>, transform_indices = @transform_1, window_bounds = array<i64: 1, 128>}, {pipeline_mode = #tpu.pipeline_mode<synchronous>, transform_indices = @transform_2, window_bounds = array<i64: 1, 128>}, {pipeline_mode = #tpu.pipeline_mode<synchronous>, transform_indices = @transform_3, window_bounds = array<i64: 128, 256>}, {pipeline_mode = #tpu.pipeline_mode<synchronous>, transform_indices = @transform_4, window_bounds = array<i64: 1, 256>}, {transform_indices = @transform_5, window_bounds = array<i64: 40, 256>}]} {
    %c0 = arith.constant 0 : index
    %c0_0 = arith.constant 0 : index
    %0 = vector.load %arg1[%c0, %c0_0] : memref<40x128xf32, #tpu.memory_space<vmem>>, vector<40x128xf32>
    %c0_1 = arith.constant 0 : index
    %c0_2 = arith.constant 0 : index
    %1 = vector.load %arg2[%c0_1, %c0_2] : memref<1x128xf32, #tpu.memory_space<vmem>>, vector<1x128xf32>
    %c0_3 = arith.constant 0 : index
    %c0_4 = arith.constant 0 : index
    %2 = vector.load %arg3[%c0_3, %c0_4] : memref<1x128xf32, #tpu.memory_space<vmem>>, vector<1x128xf32>
    %cst = arith.constant dense<0.000000e+00> : vector<40xf32>
    %3 = vector.multi_reduction <add>, %0, %cst [1] : vector<40x128xf32> to vector<40xf32>
    %4 = vector.shape_cast %3 : vector<40xf32> to vector<40x1xf32>
    %cst_5 = arith.constant 1.280000e+02 : f32
    %5 = vector.broadcast %cst_5 : f32 to vector<40x1xf32>
    %6 = arith.divf %4, %5 : vector<40x1xf32>
    %7 = vector.broadcast %6 : vector<40x1xf32> to vector<40x128xf32>
    %8 = arith.subf %0, %7 : vector<40x128xf32>
    %9 = arith.mulf %8, %8 : vector<40x128xf32>
    %cst_6 = arith.constant dense<0.000000e+00> : vector<40xf32>
    %10 = vector.multi_reduction <add>, %9, %cst_6 [1] : vector<40x128xf32> to vector<40xf32>
    %11 = vector.shape_cast %10 : vector<40xf32> to vector<40x1xf32>
    %cst_7 = arith.constant 1.280000e+02 : f32
    %12 = vector.broadcast %cst_7 : f32 to vector<40x1xf32>
    %13 = arith.divf %11, %12 : vector<40x1xf32>
    %14 = vector.broadcast %6 : vector<40x1xf32> to vector<40x128xf32>
    %15 = arith.subf %0, %14 : vector<40x128xf32>
    %cst_8 = arith.constant 9.99999974E-6 : f32
    %16 = vector.broadcast %cst_8 : f32 to vector<40x1xf32>
    %17 = arith.addf %13, %16 : vector<40x1xf32>
    %18 = math.rsqrt %17 : vector<40x1xf32>
    %19 = vector.broadcast %18 : vector<40x1xf32> to vector<40x128xf32>
    %20 = arith.mulf %15, %19 : vector<40x128xf32>
    %21 = vector.broadcast %1 : vector<1x128xf32> to vector<40x128xf32>
    %22 = arith.mulf %20, %21 : vector<40x128xf32>
    %23 = vector.broadcast %2 : vector<1x128xf32> to vector<40x128xf32>
    %24 = arith.addf %22, %23 : vector<40x128xf32>
    %25 = arith.truncf %24 : vector<40x128xf32> to vector<40x128xbf16>
    %c0_9 = arith.constant 0 : index
    %c0_10 = arith.constant 0 : index
    %26 = vector.load %arg4[%c0_9, %c0_10] : memref<128x256xbf16, #tpu.memory_space<vmem>>, vector<128x256xbf16>
    %cst_11 = arith.constant dense<0.000000e+00> : vector<40x256xf32>
    %27 = tpu.matmul %25, %26, %cst_11 {dimension_numbers = #tpu.dot_dimension_numbers<[1], [0], [0], [1], [0, 0, 1, 1], [], []>} : vector<40x128xbf16>, vector<128x256xbf16>, vector<40x256xf32> -> vector<40x256xf32>
    %c0_12 = arith.constant 0 : index
    %c0_13 = arith.constant 0 : index
    %28 = vector.load %arg5[%c0_12, %c0_13] : memref<1x256xf32, #tpu.memory_space<vmem>>, vector<1x256xf32>
    %29 = vector.broadcast %28 : vector<1x256xf32> to vector<40x256xf32>
    %30 = arith.addf %27, %29 : vector<40x256xf32>
    %c0_14 = arith.constant 0 : index
    %c0_15 = arith.constant 0 : index
    %31 = vector.load %arg6[%c0_14, %c0_15] : memref<40x256xf32, #tpu.memory_space<vmem>>, vector<40x256xf32>
    tpu.vector_store %arg6[%c0_14, %c0_15], %30 {strides = array<i32>} : memref<40x256xf32, #tpu.memory_space<vmem>>, vector<40x256xf32>,
    return
  }
  func.func @transform_0(%arg0: i32) -> (i32, i32) {
    %c0_i32 = arith.constant 0 : i32
    %c0_i32_0 = arith.constant 0 : i32
    return %arg0, %c0_i32 : i32, i32
  }
  func.func @transform_1(%arg0: i32) -> (i32, i32) {
    %c0_i32 = arith.constant 0 : i32
    %c0_i32_0 = arith.constant 0 : i32
    %c0_i32_1 = arith.constant 0 : i32
    return %c0_i32, %c0_i32_0 : i32, i32
  }
  func.func @transform_2(%arg0: i32) -> (i32, i32) {
    %c0_i32 = arith.constant 0 : i32
    %c0_i32_0 = arith.constant 0 : i32
    %c0_i32_1 = arith.constant 0 : i32
    return %c0_i32, %c0_i32_0 : i32, i32
  }
  func.func @transform_3(%arg0: i32) -> (i32, i32) {
    %c0_i32 = arith.constant 0 : i32
    %c0_i32_0 = arith.constant 0 : i32
    %c0_i32_1 = arith.constant 0 : i32
    return %c0_i32, %c0_i32_0 : i32, i32
  }
  func.func @transform_4(%arg0: i32) -> (i32, i32) {
    %c0_i32 = arith.constant 0 : i32
    %c0_i32_0 = arith.constant 0 : i32
    %c0_i32_1 = arith.constant 0 : i32
    return %c0_i32, %c0_i32_0 : i32, i32
  }
  func.func @transform_5(%arg0: i32) -> (i32, i32) {
    %c0_i32 = arith.constant 0 : i32
    %c0_i32_0 = arith.constant 0 : i32
    return %arg0, %c0_i32 : i32, i32
  }
}

module attributes {stable_mosaic.version = 11 : i64} {
  func.func @_conv_ln_gelu_kernel(%arg0: i32, %arg1: memref<40x256xf32, #tpu.memory_space<vmem>>, %arg2: memref<256x128xbf16, #tpu.memory_space<vmem>>, %arg3: memref<1x128xf32, #tpu.memory_space<vmem>>, %arg4: memref<1x128xf32, #tpu.memory_space<vmem>>, %arg5: memref<40x128xf32, #tpu.memory_space<vmem>>) attributes {dimension_semantics = [#tpu.dimension_semantics<parallel>], iteration_bounds = array<i64: 1>, scalar_prefetch = 0 : i64, scratch_operands = 0 : i64, tpu.core_type = #tpu.core_type<tc>, window_params = [{transform_indices = @transform_0, window_bounds = array<i64: 40, 256>}, {pipeline_mode = #tpu.pipeline_mode<synchronous>, transform_indices = @transform_1, window_bounds = array<i64: 256, 128>}, {pipeline_mode = #tpu.pipeline_mode<synchronous>, transform_indices = @transform_2, window_bounds = array<i64: 1, 128>}, {pipeline_mode = #tpu.pipeline_mode<synchronous>, transform_indices = @transform_3, window_bounds = array<i64: 1, 128>}, {transform_indices = @transform_4, window_bounds = array<i64: 40, 128>}]} {
    %c0 = arith.constant 0 : index
    %c0_0 = arith.constant 0 : index
    %0 = vector.load %arg1[%c0, %c0_0] : memref<40x256xf32, #tpu.memory_space<vmem>>, vector<40x256xf32>
    %1 = arith.truncf %0 : vector<40x256xf32> to vector<40x256xbf16>
    %c0_1 = arith.constant 0 : index
    %c0_2 = arith.constant 0 : index
    %2 = vector.load %arg2[%c0_1, %c0_2] : memref<256x128xbf16, #tpu.memory_space<vmem>>, vector<256x128xbf16>
    %cst = arith.constant dense<0.000000e+00> : vector<40x128xf32>
    %3 = tpu.matmul %1, %2, %cst {dimension_numbers = #tpu.dot_dimension_numbers<[1], [0], [0], [1], [0, 0, 1, 1], [], []>} : vector<40x256xbf16>, vector<256x128xbf16>, vector<40x128xf32> -> vector<40x128xf32>
    %c0_3 = arith.constant 0 : index
    %c0_4 = arith.constant 0 : index
    %4 = vector.load %arg3[%c0_3, %c0_4] : memref<1x128xf32, #tpu.memory_space<vmem>>, vector<1x128xf32>
    %c0_5 = arith.constant 0 : index
    %c0_6 = arith.constant 0 : index
    %5 = vector.load %arg4[%c0_5, %c0_6] : memref<1x128xf32, #tpu.memory_space<vmem>>, vector<1x128xf32>
    %cst_7 = arith.constant dense<0.000000e+00> : vector<40xf32>
    %6 = vector.multi_reduction <add>, %3, %cst_7 [1] : vector<40x128xf32> to vector<40xf32>
    %7 = vector.shape_cast %6 : vector<40xf32> to vector<40x1xf32>
    %cst_8 = arith.constant 1.280000e+02 : f32
    %8 = vector.broadcast %cst_8 : f32 to vector<40x1xf32>
    %9 = arith.divf %7, %8 : vector<40x1xf32>
    %10 = vector.broadcast %9 : vector<40x1xf32> to vector<40x128xf32>
    %11 = arith.subf %3, %10 : vector<40x128xf32>
    %12 = arith.mulf %11, %11 : vector<40x128xf32>
    %cst_9 = arith.constant dense<0.000000e+00> : vector<40xf32>
    %13 = vector.multi_reduction <add>, %12, %cst_9 [1] : vector<40x128xf32> to vector<40xf32>
    %14 = vector.shape_cast %13 : vector<40xf32> to vector<40x1xf32>
    %cst_10 = arith.constant 1.280000e+02 : f32
    %15 = vector.broadcast %cst_10 : f32 to vector<40x1xf32>
    %16 = arith.divf %14, %15 : vector<40x1xf32>
    %17 = vector.broadcast %9 : vector<40x1xf32> to vector<40x128xf32>
    %18 = arith.subf %3, %17 : vector<40x128xf32>
    %cst_11 = arith.constant 9.99999974E-6 : f32
    %19 = vector.broadcast %cst_11 : f32 to vector<40x1xf32>
    %20 = arith.addf %16, %19 : vector<40x1xf32>
    %21 = math.rsqrt %20 : vector<40x1xf32>
    %22 = vector.broadcast %21 : vector<40x1xf32> to vector<40x128xf32>
    %23 = arith.mulf %18, %22 : vector<40x128xf32>
    %24 = vector.broadcast %4 : vector<1x128xf32> to vector<40x128xf32>
    %25 = arith.mulf %23, %24 : vector<40x128xf32>
    %26 = vector.broadcast %5 : vector<1x128xf32> to vector<40x128xf32>
    %27 = arith.addf %25, %26 : vector<40x128xf32>
    %28 = arith.mulf %27, %27 : vector<40x128xf32>
    %29 = arith.mulf %27, %28 : vector<40x128xf32>
    %cst_12 = arith.constant 4.471500e-02 : f32
    %30 = vector.broadcast %cst_12 : f32 to vector<40x128xf32>
    %31 = arith.mulf %30, %29 : vector<40x128xf32>
    %32 = arith.addf %27, %31 : vector<40x128xf32>
    %cst_13 = arith.constant 0.797884583 : f32
    %33 = vector.broadcast %cst_13 : f32 to vector<40x128xf32>
    %34 = arith.mulf %33, %32 : vector<40x128xf32>
    %35 = math.tanh %34 : vector<40x128xf32>
    %cst_14 = arith.constant 1.000000e+00 : f32
    %36 = vector.broadcast %cst_14 : f32 to vector<40x128xf32>
    %37 = arith.addf %36, %35 : vector<40x128xf32>
    %cst_15 = arith.constant 5.000000e-01 : f32
    %38 = vector.broadcast %cst_15 : f32 to vector<40x128xf32>
    %39 = arith.mulf %38, %37 : vector<40x128xf32>
    %40 = arith.mulf %27, %39 : vector<40x128xf32>
    %c0_16 = arith.constant 0 : index
    %c0_17 = arith.constant 0 : index
    %41 = vector.load %arg5[%c0_16, %c0_17] : memref<40x128xf32, #tpu.memory_space<vmem>>, vector<40x128xf32>
    tpu.vector_store %arg5[%c0_16, %c0_17], %40 {strides = array<i32>} : memref<40x128xf32, #tpu.memory_space<vmem>>, vector<40x128xf32>,
    return
  }
  func.func @transform_0(%arg0: i32) -> (i32, i32) {
    %c0_i32 = arith.constant 0 : i32
    %c0_i32_0 = arith.constant 0 : i32
    return %arg0, %c0_i32 : i32, i32
  }
  func.func @transform_1(%arg0: i32) -> (i32, i32) {
    %c0_i32 = arith.constant 0 : i32
    %c0_i32_0 = arith.constant 0 : i32
    %c0_i32_1 = arith.constant 0 : i32
    return %c0_i32, %c0_i32_0 : i32, i32
  }
  func.func @transform_2(%arg0: i32) -> (i32, i32) {
    %c0_i32 = arith.constant 0 : i32
    %c0_i32_0 = arith.constant 0 : i32
    %c0_i32_1 = arith.constant 0 : i32
    return %c0_i32, %c0_i32_0 : i32, i32
  }
  func.func @transform_3(%arg0: i32) -> (i32, i32) {
    %c0_i32 = arith.constant 0 : i32
    %c0_i32_0 = arith.constant 0 : i32
    %c0_i32_1 = arith.constant 0 : i32
    return %c0_i32, %c0_i32_0 : i32, i32
  }
  func.func @transform_4(%arg0: i32) -> (i32, i32) {
    %c0_i32 = arith.constant 0 : i32
    %c0_i32_0 = arith.constant 0 : i32
    return %arg0, %c0_i32 : i32, i32
  }
}

module attributes {stable_mosaic.version = 11 : i64} {
  func.func @_posconv_kernel(%arg0: i32, %arg1: memref<40x2048xf32, #tpu.memory_space<vmem>>, %arg2: memref<2048x256xbf16, #tpu.memory_space<vmem>>, %arg3: memref<1x256xf32, #tpu.memory_space<vmem>>, %arg4: memref<40x256xf32, #tpu.memory_space<vmem>>, %arg5: memref<40x256xf32, #tpu.memory_space<vmem>>) attributes {dimension_semantics = [#tpu.dimension_semantics<parallel>], iteration_bounds = array<i64: 1>, scalar_prefetch = 0 : i64, scratch_operands = 0 : i64, tpu.core_type = #tpu.core_type<tc>, window_params = [{transform_indices = @transform_0, window_bounds = array<i64: 40, 2048>}, {pipeline_mode = #tpu.pipeline_mode<synchronous>, transform_indices = @transform_1, window_bounds = array<i64: 2048, 256>}, {pipeline_mode = #tpu.pipeline_mode<synchronous>, transform_indices = @transform_2, window_bounds = array<i64: 1, 256>}, {transform_indices = @transform_3, window_bounds = array<i64: 40, 256>}, {transform_indices = @transform_4, window_bounds = array<i64: 40, 256>}]} {
    %c0 = arith.constant 0 : index
    %c0_0 = arith.constant 0 : index
    %0 = vector.load %arg1[%c0, %c0_0] : memref<40x2048xf32, #tpu.memory_space<vmem>>, vector<40x2048xf32>
    %1 = arith.truncf %0 : vector<40x2048xf32> to vector<40x2048xbf16>
    %c0_1 = arith.constant 0 : index
    %c0_2 = arith.constant 0 : index
    %2 = vector.load %arg2[%c0_1, %c0_2] : memref<2048x256xbf16, #tpu.memory_space<vmem>>, vector<2048x256xbf16>
    %cst = arith.constant dense<0.000000e+00> : vector<40x256xf32>
    %3 = tpu.matmul %1, %2, %cst {dimension_numbers = #tpu.dot_dimension_numbers<[1], [0], [0], [1], [0, 0, 1, 1], [], []>} : vector<40x2048xbf16>, vector<2048x256xbf16>, vector<40x256xf32> -> vector<40x256xf32>
    %c0_3 = arith.constant 0 : index
    %c0_4 = arith.constant 0 : index
    %4 = vector.load %arg3[%c0_3, %c0_4] : memref<1x256xf32, #tpu.memory_space<vmem>>, vector<1x256xf32>
    %5 = vector.broadcast %4 : vector<1x256xf32> to vector<40x256xf32>
    %6 = arith.addf %3, %5 : vector<40x256xf32>
    %c0_5 = arith.constant 0 : index
    %c0_6 = arith.constant 0 : index
    %7 = vector.load %arg4[%c0_5, %c0_6] : memref<40x256xf32, #tpu.memory_space<vmem>>, vector<40x256xf32>
    %8 = arith.mulf %6, %6 : vector<40x256xf32>
    %9 = arith.mulf %6, %8 : vector<40x256xf32>
    %cst_7 = arith.constant 4.471500e-02 : f32
    %10 = vector.broadcast %cst_7 : f32 to vector<40x256xf32>
    %11 = arith.mulf %10, %9 : vector<40x256xf32>
    %12 = arith.addf %6, %11 : vector<40x256xf32>
    %cst_8 = arith.constant 0.797884583 : f32
    %13 = vector.broadcast %cst_8 : f32 to vector<40x256xf32>
    %14 = arith.mulf %13, %12 : vector<40x256xf32>
    %15 = math.tanh %14 : vector<40x256xf32>
    %cst_9 = arith.constant 1.000000e+00 : f32
    %16 = vector.broadcast %cst_9 : f32 to vector<40x256xf32>
    %17 = arith.addf %16, %15 : vector<40x256xf32>
    %cst_10 = arith.constant 5.000000e-01 : f32
    %18 = vector.broadcast %cst_10 : f32 to vector<40x256xf32>
    %19 = arith.mulf %18, %17 : vector<40x256xf32>
    %20 = arith.mulf %6, %19 : vector<40x256xf32>
    %21 = arith.addf %7, %20 : vector<40x256xf32>
    %c0_11 = arith.constant 0 : index
    %c0_12 = arith.constant 0 : index
    %22 = vector.load %arg5[%c0_11, %c0_12] : memref<40x256xf32, #tpu.memory_space<vmem>>, vector<40x256xf32>
    tpu.vector_store %arg5[%c0_11, %c0_12], %21 {strides = array<i32>} : memref<40x256xf32, #tpu.memory_space<vmem>>, vector<40x256xf32>,
    return
  }
  func.func @transform_0(%arg0: i32) -> (i32, i32) {
    %c0_i32 = arith.constant 0 : i32
    %c0_i32_0 = arith.constant 0 : i32
    return %arg0, %c0_i32 : i32, i32
  }
  func.func @transform_1(%arg0: i32) -> (i32, i32) {
    %c0_i32 = arith.constant 0 : i32
    %c0_i32_0 = arith.constant 0 : i32
    %c0_i32_1 = arith.constant 0 : i32
    return %c0_i32, %c0_i32_0 : i32, i32
  }
  func.func @transform_2(%arg0: i32) -> (i32, i32) {
    %c0_i32 = arith.constant 0 : i32
    %c0_i32_0 = arith.constant 0 : i32
    %c0_i32_1 = arith.constant 0 : i32
    return %c0_i32, %c0_i32_0 : i32, i32
  }
  func.func @transform_3(%arg0: i32) -> (i32, i32) {
    %c0_i32 = arith.constant 0 : i32
    %c0_i32_0 = arith.constant 0 : i32
    return %arg0, %c0_i32 : i32, i32
  }
  func.func @transform_4(%arg0: i32) -> (i32, i32) {
    %c0_i32 = arith.constant 0 : i32
    %c0_i32_0 = arith.constant 0 : i32
    return %arg0, %c0_i32 : i32, i32
  }
}

module attributes {stable_mosaic.version = 11 : i64} {
  func.func @_encoder_stack_kernel(%arg0: i32, %arg1: i32, %arg2: memref<1x19x256xf32, #tpu.memory_space<vmem>>, %arg3: memref<1x1x256xf32, #tpu.memory_space<vmem>>, %arg4: memref<1x1x256xf32, #tpu.memory_space<vmem>>, %arg5: memref<1x256x256xbf16, #tpu.memory_space<vmem>>, %arg6: memref<1x1x256xf32, #tpu.memory_space<vmem>>, %arg7: memref<1x256x256xbf16, #tpu.memory_space<vmem>>, %arg8: memref<1x1x256xf32, #tpu.memory_space<vmem>>, %arg9: memref<1x256x256xbf16, #tpu.memory_space<vmem>>, %arg10: memref<1x1x256xf32, #tpu.memory_space<vmem>>, %arg11: memref<1x256x256xbf16, #tpu.memory_space<vmem>>, %arg12: memref<1x1x256xf32, #tpu.memory_space<vmem>>, %arg13: memref<1x1x256xf32, #tpu.memory_space<vmem>>, %arg14: memref<1x1x256xf32, #tpu.memory_space<vmem>>, %arg15: memref<1x256x512xbf16, #tpu.memory_space<vmem>>, %arg16: memref<1x1x512xf32, #tpu.memory_space<vmem>>, %arg17: memref<1x512x256xbf16, #tpu.memory_space<vmem>>, %arg18: memref<1x1x256xf32, #tpu.memory_space<vmem>>, %arg19: memref<1x256xf32, #tpu.memory_space<vmem>>, %arg20: memref<1x256xf32, #tpu.memory_space<vmem>>, %arg21: memref<1x19x256xf32, #tpu.memory_space<vmem>>) attributes {dimension_semantics = [#tpu.dimension_semantics<parallel>, #tpu.dimension_semantics<arbitrary>], iteration_bounds = array<i64: 2, 2>, scalar_prefetch = 0 : i64, scratch_operands = 0 : i64, tpu.core_type = #tpu.core_type<tc>, window_params = [{transform_indices = @transform_0, window_bounds = array<i64: 1, 19, 256>}, {transform_indices = @transform_1, window_bounds = array<i64: 1, 1, 256>}, {transform_indices = @transform_2, window_bounds = array<i64: 1, 1, 256>}, {transform_indices = @transform_3, window_bounds = array<i64: 1, 256, 256>}, {transform_indices = @transform_4, window_bounds = array<i64: 1, 1, 256>}, {transform_indices = @transform_5, window_bounds = array<i64: 1, 256, 256>}, {transform_indices = @transform_6, window_bounds = array<i64: 1, 1, 256>}, {transform_indices = @transform_7, window_bounds = array<i64: 1, 256, 256>}, {transform_indices = @transform_8, window_bounds = array<i64: 1, 1, 256>}, {transform_indices = @transform_9, window_bounds = array<i64: 1, 256, 256>}, {transform_indices = @transform_10, window_bounds = array<i64: 1, 1, 256>}, {transform_indices = @transform_11, window_bounds = array<i64: 1, 1, 256>}, {transform_indices = @transform_12, window_bounds = array<i64: 1, 1, 256>}, {transform_indices = @transform_13, window_bounds = array<i64: 1, 256, 512>}, {transform_indices = @transform_14, window_bounds = array<i64: 1, 1, 512>}, {transform_indices = @transform_15, window_bounds = array<i64: 1, 512, 256>}, {transform_indices = @transform_16, window_bounds = array<i64: 1, 1, 256>}, {pipeline_mode = #tpu.pipeline_mode<synchronous>, transform_indices = @transform_17, window_bounds = array<i64: 1, 256>}, {pipeline_mode = #tpu.pipeline_mode<synchronous>, transform_indices = @transform_18, window_bounds = array<i64: 1, 256>}, {transform_indices = @transform_19, window_bounds = array<i64: 1, 19, 256>}]} {
    %c0_i32 = arith.constant 0 : i32
    %0 = arith.cmpi eq, %arg1, %c0_i32 : i32
    %1 = arith.extui %0 : i1 to i32
    %c0_i32_0 = arith.constant 0 : i32
    %2 = arith.cmpi ne, %1, %c0_i32_0 : i32
    scf.if %2 {
      %c0_94 = arith.constant 0 : index
      %c0_95 = arith.constant 0 : index
      %c0_96 = arith.constant 0 : index
      %196 = vector.load %arg2[%c0_94, %c0_95, %c0_96] : memref<1x19x256xf32, #tpu.memory_space<vmem>>, vector<1x19x256xf32>
      %197 = vector.shape_cast %196 : vector<1x19x256xf32> to vector<19x256xf32>
      %c0_97 = arith.constant 0 : index
      %c0_98 = arith.constant 0 : index
      %c0_99 = arith.constant 0 : index
      %198 = vector.load %arg21[%c0_97, %c0_98, %c0_99] : memref<1x19x256xf32, #tpu.memory_space<vmem>>, vector<1x19x256xf32>
      %199 = vector.shape_cast %198 : vector<1x19x256xf32> to vector<19x256xf32>
      %200 = vector.shape_cast %197 : vector<19x256xf32> to vector<1x19x256xf32>
      tpu.vector_store %arg21[%c0_97, %c0_98, %c0_99], %200 {strides = array<i32>} : memref<1x19x256xf32, #tpu.memory_space<vmem>>, vector<1x19x256xf32>,
    } else {
    }
    %c0 = arith.constant 0 : index
    %c0_1 = arith.constant 0 : index
    %c0_2 = arith.constant 0 : index
    %3 = vector.load %arg21[%c0, %c0_1, %c0_2] : memref<1x19x256xf32, #tpu.memory_space<vmem>>, vector<1x19x256xf32>
    %4 = vector.shape_cast %3 : vector<1x19x256xf32> to vector<19x256xf32>
    %c0_3 = arith.constant 0 : index
    %c0_4 = arith.constant 0 : index
    %c0_5 = arith.constant 0 : index
    %5 = vector.load %arg3[%c0_3, %c0_4, %c0_5] : memref<1x1x256xf32, #tpu.memory_space<vmem>>, vector<1x1x256xf32>
    %6 = vector.shape_cast %5 : vector<1x1x256xf32> to vector<1x256xf32>
    %c0_6 = arith.constant 0 : index
    %c0_7 = arith.constant 0 : index
    %c0_8 = arith.constant 0 : index
    %7 = vector.load %arg4[%c0_6, %c0_7, %c0_8] : memref<1x1x256xf32, #tpu.memory_space<vmem>>, vector<1x1x256xf32>
    %8 = vector.shape_cast %7 : vector<1x1x256xf32> to vector<1x256xf32>
    %cst = arith.constant dense<0.000000e+00> : vector<19xf32>
    %9 = vector.multi_reduction <add>, %4, %cst [1] : vector<19x256xf32> to vector<19xf32>
    %10 = vector.shape_cast %9 : vector<19xf32> to vector<19x1xf32>
    %cst_9 = arith.constant 2.560000e+02 : f32
    %11 = vector.broadcast %cst_9 : f32 to vector<19x1xf32>
    %12 = arith.divf %10, %11 : vector<19x1xf32>
    %13 = vector.broadcast %12 : vector<19x1xf32> to vector<19x256xf32>
    %14 = arith.subf %4, %13 : vector<19x256xf32>
    %15 = arith.mulf %14, %14 : vector<19x256xf32>
    %cst_10 = arith.constant dense<0.000000e+00> : vector<19xf32>
    %16 = vector.multi_reduction <add>, %15, %cst_10 [1] : vector<19x256xf32> to vector<19xf32>
    %17 = vector.shape_cast %16 : vector<19xf32> to vector<19x1xf32>
    %cst_11 = arith.constant 2.560000e+02 : f32
    %18 = vector.broadcast %cst_11 : f32 to vector<19x1xf32>
    %19 = arith.divf %17, %18 : vector<19x1xf32>
    %20 = vector.broadcast %12 : vector<19x1xf32> to vector<19x256xf32>
    %21 = arith.subf %4, %20 : vector<19x256xf32>
    %cst_12 = arith.constant 9.99999974E-6 : f32
    %22 = vector.broadcast %cst_12 : f32 to vector<19x1xf32>
    %23 = arith.addf %19, %22 : vector<19x1xf32>
    %24 = math.rsqrt %23 : vector<19x1xf32>
    %25 = vector.broadcast %24 : vector<19x1xf32> to vector<19x256xf32>
    %26 = arith.mulf %21, %25 : vector<19x256xf32>
    %27 = vector.broadcast %6 : vector<1x256xf32> to vector<19x256xf32>
    %28 = arith.mulf %26, %27 : vector<19x256xf32>
    %29 = vector.broadcast %8 : vector<1x256xf32> to vector<19x256xf32>
    %30 = arith.addf %28, %29 : vector<19x256xf32>
    %31 = arith.truncf %30 : vector<19x256xf32> to vector<19x256xbf16>
    %c0_13 = arith.constant 0 : index
    %c0_14 = arith.constant 0 : index
    %c0_15 = arith.constant 0 : index
    %32 = vector.load %arg5[%c0_13, %c0_14, %c0_15] : memref<1x256x256xbf16, #tpu.memory_space<vmem>>, vector<1x256x256xbf16>
    %33 = vector.shape_cast %32 : vector<1x256x256xbf16> to vector<256x256xbf16>
    %cst_16 = arith.constant dense<0.000000e+00> : vector<19x256xf32>
    %34 = tpu.matmul %31, %33, %cst_16 {dimension_numbers = #tpu.dot_dimension_numbers<[1], [0], [0], [1], [0, 0, 1, 1], [], []>} : vector<19x256xbf16>, vector<256x256xbf16>, vector<19x256xf32> -> vector<19x256xf32>
    %c0_17 = arith.constant 0 : index
    %c0_18 = arith.constant 0 : index
    %c0_19 = arith.constant 0 : index
    %35 = vector.load %arg6[%c0_17, %c0_18, %c0_19] : memref<1x1x256xf32, #tpu.memory_space<vmem>>, vector<1x1x256xf32>
    %36 = vector.shape_cast %35 : vector<1x1x256xf32> to vector<1x256xf32>
    %37 = vector.broadcast %36 : vector<1x256xf32> to vector<19x256xf32>
    %38 = arith.addf %34, %37 : vector<19x256xf32>
    %c0_20 = arith.constant 0 : index
    %c0_21 = arith.constant 0 : index
    %c0_22 = arith.constant 0 : index
    %39 = vector.load %arg7[%c0_20, %c0_21, %c0_22] : memref<1x256x256xbf16, #tpu.memory_space<vmem>>, vector<1x256x256xbf16>
    %40 = vector.shape_cast %39 : vector<1x256x256xbf16> to vector<256x256xbf16>
    %cst_23 = arith.constant dense<0.000000e+00> : vector<19x256xf32>
    %41 = tpu.matmul %31, %40, %cst_23 {dimension_numbers = #tpu.dot_dimension_numbers<[1], [0], [0], [1], [0, 0, 1, 1], [], []>} : vector<19x256xbf16>, vector<256x256xbf16>, vector<19x256xf32> -> vector<19x256xf32>
    %c0_24 = arith.constant 0 : index
    %c0_25 = arith.constant 0 : index
    %c0_26 = arith.constant 0 : index
    %42 = vector.load %arg8[%c0_24, %c0_25, %c0_26] : memref<1x1x256xf32, #tpu.memory_space<vmem>>, vector<1x1x256xf32>
    %43 = vector.shape_cast %42 : vector<1x1x256xf32> to vector<1x256xf32>
    %44 = vector.broadcast %43 : vector<1x256xf32> to vector<19x256xf32>
    %45 = arith.addf %41, %44 : vector<19x256xf32>
    %c0_27 = arith.constant 0 : index
    %c0_28 = arith.constant 0 : index
    %c0_29 = arith.constant 0 : index
    %46 = vector.load %arg9[%c0_27, %c0_28, %c0_29] : memref<1x256x256xbf16, #tpu.memory_space<vmem>>, vector<1x256x256xbf16>
    %47 = vector.shape_cast %46 : vector<1x256x256xbf16> to vector<256x256xbf16>
    %cst_30 = arith.constant dense<0.000000e+00> : vector<19x256xf32>
    %48 = tpu.matmul %31, %47, %cst_30 {dimension_numbers = #tpu.dot_dimension_numbers<[1], [0], [0], [1], [0, 0, 1, 1], [], []>} : vector<19x256xbf16>, vector<256x256xbf16>, vector<19x256xf32> -> vector<19x256xf32>
    %c0_31 = arith.constant 0 : index
    %c0_32 = arith.constant 0 : index
    %c0_33 = arith.constant 0 : index
    %49 = vector.load %arg10[%c0_31, %c0_32, %c0_33] : memref<1x1x256xf32, #tpu.memory_space<vmem>>, vector<1x1x256xf32>
    %50 = vector.shape_cast %49 : vector<1x1x256xf32> to vector<1x256xf32>
    %51 = vector.broadcast %50 : vector<1x256xf32> to vector<19x256xf32>
    %52 = arith.addf %48, %51 : vector<19x256xf32>
    %c0_34 = arith.constant 0 : index
    %c0_35 = arith.constant 0 : index
    %c0_36 = arith.constant 0 : index
    %53 = vector.load %arg11[%c0_34, %c0_35, %c0_36] : memref<1x256x256xbf16, #tpu.memory_space<vmem>>, vector<1x256x256xbf16>
    %54 = vector.shape_cast %53 : vector<1x256x256xbf16> to vector<256x256xbf16>
    %cst_37 = arith.constant 0.000000e+00 : f32
    %55 = vector.broadcast %cst_37 : f32 to vector<19x256xf32>
    %56 = vector.extract_strided_slice %38 {offsets = [0, 0], sizes = [19, 128], strides = [1, 1]} : vector<19x256xf32> to vector<19x128xf32>
    %cst_38 = arith.constant 0.0883883461 : f32
    %57 = vector.broadcast %cst_38 : f32 to vector<19x128xf32>
    %58 = arith.mulf %56, %57 : vector<19x128xf32>
    %59 = arith.truncf %58 : vector<19x128xf32> to vector<19x128xbf16>
    %60 = vector.extract_strided_slice %45 {offsets = [0, 0], sizes = [19, 128], strides = [1, 1]} : vector<19x256xf32> to vector<19x128xf32>
    %61 = arith.truncf %60 : vector<19x128xf32> to vector<19x128xbf16>
    %62 = vector.extract_strided_slice %52 {offsets = [0, 0], sizes = [19, 128], strides = [1, 1]} : vector<19x256xf32> to vector<19x128xf32>
    %63 = arith.truncf %62 : vector<19x128xf32> to vector<19x128xbf16>
    "tpu.trace_start"() <{level = 10 : i32, message = "qd,kd->qk"}> : () -> ()
    %cst_39 = arith.constant dense<0.000000e+00> : vector<19x19xf32>
    %64 = tpu.matmul %59, %61, %cst_39 {dimension_numbers = #tpu.dot_dimension_numbers<[1], [1], [0], [0], [0, 0, 1, 0], [], []>} : vector<19x128xbf16>, vector<19x128xbf16>, vector<19x19xf32> -> vector<19x19xf32>
    "tpu.trace_stop"() : () -> ()
    %cst_40 = arith.constant dense<0xFF800000> : vector<19xf32>
    %65 = vector.multi_reduction <maximumf>, %64, %cst_40 [1] : vector<19x19xf32> to vector<19xf32>
    %66 = vector.shape_cast %65 : vector<19xf32> to vector<19x1xf32>
    %67 = vector.broadcast %66 : vector<19x1xf32> to vector<19x19xf32>
    %68 = arith.subf %64, %67 : vector<19x19xf32>
    %69 = math.exp %68 : vector<19x19xf32>
    %cst_41 = arith.constant dense<0.000000e+00> : vector<19xf32>
    %70 = vector.multi_reduction <add>, %69, %cst_41 [1] : vector<19x19xf32> to vector<19xf32>
    %71 = vector.shape_cast %70 : vector<19xf32> to vector<19x1xf32>
    %72 = tpu.reciprocal %71 {approx = true} : vector<19x1xf32> -> vector<19x1xf32>
    %73 = vector.broadcast %72 : vector<19x1xf32> to vector<19x19xf32>
    %74 = arith.mulf %69, %73 : vector<19x19xf32>
    %75 = arith.truncf %74 : vector<19x19xf32> to vector<19x19xbf16>
    %cst_42 = arith.constant dense<0.000000e+00> : vector<19x128xf32>
    %76 = tpu.matmul %75, %63, %cst_42 {dimension_numbers = #tpu.dot_dimension_numbers<[1], [0], [0], [1], [0, 0, 1, 1], [], []>} : vector<19x19xbf16>, vector<19x128xbf16>, vector<19x128xf32> -> vector<19x128xf32>
    %77 = arith.truncf %76 : vector<19x128xf32> to vector<19x128xbf16>
    %78 = vector.extract_strided_slice %54 {offsets = [0, 0], sizes = [128, 256], strides = [1, 1]} : vector<256x256xbf16> to vector<128x256xbf16>
    %cst_43 = arith.constant dense<0.000000e+00> : vector<19x256xf32>
    %79 = tpu.matmul %77, %78, %cst_43 {dimension_numbers = #tpu.dot_dimension_numbers<[1], [0], [0], [1], [0, 0, 1, 1], [], []>} : vector<19x128xbf16>, vector<128x256xbf16>, vector<19x256xf32> -> vector<19x256xf32>
    %80 = arith.addf %55, %79 : vector<19x256xf32>
    %81 = vector.extract_strided_slice %38 {offsets = [0, 128], sizes = [19, 128], strides = [1, 1]} : vector<19x256xf32> to vector<19x128xf32>
    %cst_44 = arith.constant 0.0883883461 : f32
    %82 = vector.broadcast %cst_44 : f32 to vector<19x128xf32>
    %83 = arith.mulf %81, %82 : vector<19x128xf32>
    %84 = arith.truncf %83 : vector<19x128xf32> to vector<19x128xbf16>
    %85 = vector.extract_strided_slice %45 {offsets = [0, 128], sizes = [19, 128], strides = [1, 1]} : vector<19x256xf32> to vector<19x128xf32>
    %86 = arith.truncf %85 : vector<19x128xf32> to vector<19x128xbf16>
    %87 = vector.extract_strided_slice %52 {offsets = [0, 128], sizes = [19, 128], strides = [1, 1]} : vector<19x256xf32> to vector<19x128xf32>
    %88 = arith.truncf %87 : vector<19x128xf32> to vector<19x128xbf16>
    "tpu.trace_start"() <{level = 10 : i32, message = "qd,kd->qk"}> : () -> ()
    %cst_45 = arith.constant dense<0.000000e+00> : vector<19x19xf32>
    %89 = tpu.matmul %84, %86, %cst_45 {dimension_numbers = #tpu.dot_dimension_numbers<[1], [1], [0], [0], [0, 0, 1, 0], [], []>} : vector<19x128xbf16>, vector<19x128xbf16>, vector<19x19xf32> -> vector<19x19xf32>
    "tpu.trace_stop"() : () -> ()
    %cst_46 = arith.constant dense<0xFF800000> : vector<19xf32>
    %90 = vector.multi_reduction <maximumf>, %89, %cst_46 [1] : vector<19x19xf32> to vector<19xf32>
    %91 = vector.shape_cast %90 : vector<19xf32> to vector<19x1xf32>
    %92 = vector.broadcast %91 : vector<19x1xf32> to vector<19x19xf32>
    %93 = arith.subf %89, %92 : vector<19x19xf32>
    %94 = math.exp %93 : vector<19x19xf32>
    %cst_47 = arith.constant dense<0.000000e+00> : vector<19xf32>
    %95 = vector.multi_reduction <add>, %94, %cst_47 [1] : vector<19x19xf32> to vector<19xf32>
    %96 = vector.shape_cast %95 : vector<19xf32> to vector<19x1xf32>
    %97 = tpu.reciprocal %96 {approx = true} : vector<19x1xf32> -> vector<19x1xf32>
    %98 = vector.broadcast %97 : vector<19x1xf32> to vector<19x19xf32>
    %99 = arith.mulf %94, %98 : vector<19x19xf32>
    %100 = arith.truncf %99 : vector<19x19xf32> to vector<19x19xbf16>
    %cst_48 = arith.constant dense<0.000000e+00> : vector<19x128xf32>
    %101 = tpu.matmul %100, %88, %cst_48 {dimension_numbers = #tpu.dot_dimension_numbers<[1], [0], [0], [1], [0, 0, 1, 1], [], []>} : vector<19x19xbf16>, vector<19x128xbf16>, vector<19x128xf32> -> vector<19x128xf32>
    %102 = arith.truncf %101 : vector<19x128xf32> to vector<19x128xbf16>
    %103 = vector.extract_strided_slice %54 {offsets = [128, 0], sizes = [128, 256], strides = [1, 1]} : vector<256x256xbf16> to vector<128x256xbf16>
    %cst_49 = arith.constant dense<0.000000e+00> : vector<19x256xf32>
    %104 = tpu.matmul %102, %103, %cst_49 {dimension_numbers = #tpu.dot_dimension_numbers<[1], [0], [0], [1], [0, 0, 1, 1], [], []>} : vector<19x128xbf16>, vector<128x256xbf16>, vector<19x256xf32> -> vector<19x256xf32>
    %105 = arith.addf %80, %104 : vector<19x256xf32>
    %106 = arith.addf %4, %105 : vector<19x256xf32>
    %c0_50 = arith.constant 0 : index
    %c0_51 = arith.constant 0 : index
    %c0_52 = arith.constant 0 : index
    %107 = vector.load %arg12[%c0_50, %c0_51, %c0_52] : memref<1x1x256xf32, #tpu.memory_space<vmem>>, vector<1x1x256xf32>
    %108 = vector.shape_cast %107 : vector<1x1x256xf32> to vector<1x256xf32>
    %109 = vector.broadcast %108 : vector<1x256xf32> to vector<19x256xf32>
    %110 = arith.addf %106, %109 : vector<19x256xf32>
    %c0_53 = arith.constant 0 : index
    %c0_54 = arith.constant 0 : index
    %c0_55 = arith.constant 0 : index
    %111 = vector.load %arg13[%c0_53, %c0_54, %c0_55] : memref<1x1x256xf32, #tpu.memory_space<vmem>>, vector<1x1x256xf32>
    %112 = vector.shape_cast %111 : vector<1x1x256xf32> to vector<1x256xf32>
    %c0_56 = arith.constant 0 : index
    %c0_57 = arith.constant 0 : index
    %c0_58 = arith.constant 0 : index
    %113 = vector.load %arg14[%c0_56, %c0_57, %c0_58] : memref<1x1x256xf32, #tpu.memory_space<vmem>>, vector<1x1x256xf32>
    %114 = vector.shape_cast %113 : vector<1x1x256xf32> to vector<1x256xf32>
    %cst_59 = arith.constant dense<0.000000e+00> : vector<19xf32>
    %115 = vector.multi_reduction <add>, %110, %cst_59 [1] : vector<19x256xf32> to vector<19xf32>
    %116 = vector.shape_cast %115 : vector<19xf32> to vector<19x1xf32>
    %cst_60 = arith.constant 2.560000e+02 : f32
    %117 = vector.broadcast %cst_60 : f32 to vector<19x1xf32>
    %118 = arith.divf %116, %117 : vector<19x1xf32>
    %119 = vector.broadcast %118 : vector<19x1xf32> to vector<19x256xf32>
    %120 = arith.subf %110, %119 : vector<19x256xf32>
    %121 = arith.mulf %120, %120 : vector<19x256xf32>
    %cst_61 = arith.constant dense<0.000000e+00> : vector<19xf32>
    %122 = vector.multi_reduction <add>, %121, %cst_61 [1] : vector<19x256xf32> to vector<19xf32>
    %123 = vector.shape_cast %122 : vector<19xf32> to vector<19x1xf32>
    %cst_62 = arith.constant 2.560000e+02 : f32
    %124 = vector.broadcast %cst_62 : f32 to vector<19x1xf32>
    %125 = arith.divf %123, %124 : vector<19x1xf32>
    %126 = vector.broadcast %118 : vector<19x1xf32> to vector<19x256xf32>
    %127 = arith.subf %110, %126 : vector<19x256xf32>
    %cst_63 = arith.constant 9.99999974E-6 : f32
    %128 = vector.broadcast %cst_63 : f32 to vector<19x1xf32>
    %129 = arith.addf %125, %128 : vector<19x1xf32>
    %130 = math.rsqrt %129 : vector<19x1xf32>
    %131 = vector.broadcast %130 : vector<19x1xf32> to vector<19x256xf32>
    %132 = arith.mulf %127, %131 : vector<19x256xf32>
    %133 = vector.broadcast %112 : vector<1x256xf32> to vector<19x256xf32>
    %134 = arith.mulf %132, %133 : vector<19x256xf32>
    %135 = vector.broadcast %114 : vector<1x256xf32> to vector<19x256xf32>
    %136 = arith.addf %134, %135 : vector<19x256xf32>
    %137 = arith.truncf %136 : vector<19x256xf32> to vector<19x256xbf16>
    %c0_64 = arith.constant 0 : index
    %c0_65 = arith.constant 0 : index
    %c0_66 = arith.constant 0 : index
    %138 = vector.load %arg15[%c0_64, %c0_65, %c0_66] : memref<1x256x512xbf16, #tpu.memory_space<vmem>>, vector<1x256x512xbf16>
    %139 = vector.shape_cast %138 : vector<1x256x512xbf16> to vector<256x512xbf16>
    %cst_67 = arith.constant dense<0.000000e+00> : vector<19x512xf32>
    %140 = tpu.matmul %137, %139, %cst_67 {dimension_numbers = #tpu.dot_dimension_numbers<[1], [0], [0], [1], [0, 0, 1, 1], [], []>} : vector<19x256xbf16>, vector<256x512xbf16>, vector<19x512xf32> -> vector<19x512xf32>
    %c0_68 = arith.constant 0 : index
    %c0_69 = arith.constant 0 : index
    %c0_70 = arith.constant 0 : index
    %141 = vector.load %arg16[%c0_68, %c0_69, %c0_70] : memref<1x1x512xf32, #tpu.memory_space<vmem>>, vector<1x1x512xf32>
    %142 = vector.shape_cast %141 : vector<1x1x512xf32> to vector<1x512xf32>
    %143 = vector.broadcast %142 : vector<1x512xf32> to vector<19x512xf32>
    %144 = arith.addf %140, %143 : vector<19x512xf32>
    %145 = arith.mulf %144, %144 : vector<19x512xf32>
    %146 = arith.mulf %144, %145 : vector<19x512xf32>
    %cst_71 = arith.constant 4.471500e-02 : f32
    %147 = vector.broadcast %cst_71 : f32 to vector<19x512xf32>
    %148 = arith.mulf %147, %146 : vector<19x512xf32>
    %149 = arith.addf %144, %148 : vector<19x512xf32>
    %cst_72 = arith.constant 0.797884583 : f32
    %150 = vector.broadcast %cst_72 : f32 to vector<19x512xf32>
    %151 = arith.mulf %150, %149 : vector<19x512xf32>
    %152 = math.tanh %151 : vector<19x512xf32>
    %cst_73 = arith.constant 1.000000e+00 : f32
    %153 = vector.broadcast %cst_73 : f32 to vector<19x512xf32>
    %154 = arith.addf %153, %152 : vector<19x512xf32>
    %cst_74 = arith.constant 5.000000e-01 : f32
    %155 = vector.broadcast %cst_74 : f32 to vector<19x512xf32>
    %156 = arith.mulf %155, %154 : vector<19x512xf32>
    %157 = arith.mulf %144, %156 : vector<19x512xf32>
    %158 = arith.truncf %157 : vector<19x512xf32> to vector<19x512xbf16>
    %c0_75 = arith.constant 0 : index
    %c0_76 = arith.constant 0 : index
    %c0_77 = arith.constant 0 : index
    %159 = vector.load %arg17[%c0_75, %c0_76, %c0_77] : memref<1x512x256xbf16, #tpu.memory_space<vmem>>, vector<1x512x256xbf16>
    %160 = vector.shape_cast %159 : vector<1x512x256xbf16> to vector<512x256xbf16>
    %cst_78 = arith.constant dense<0.000000e+00> : vector<19x256xf32>
    %161 = tpu.matmul %158, %160, %cst_78 {dimension_numbers = #tpu.dot_dimension_numbers<[1], [0], [0], [1], [0, 0, 1, 1], [], []>} : vector<19x512xbf16>, vector<512x256xbf16>, vector<19x256xf32> -> vector<19x256xf32>
    %c0_79 = arith.constant 0 : index
    %c0_80 = arith.constant 0 : index
    %c0_81 = arith.constant 0 : index
    %162 = vector.load %arg18[%c0_79, %c0_80, %c0_81] : memref<1x1x256xf32, #tpu.memory_space<vmem>>, vector<1x1x256xf32>
    %163 = vector.shape_cast %162 : vector<1x1x256xf32> to vector<1x256xf32>
    %164 = vector.broadcast %163 : vector<1x256xf32> to vector<19x256xf32>
    %165 = arith.addf %161, %164 : vector<19x256xf32>
    %166 = arith.addf %110, %165 : vector<19x256xf32>
    %c1_i32 = arith.constant 1 : i32
    %167 = arith.cmpi eq, %arg1, %c1_i32 : i32
    %c0_82 = arith.constant 0 : index
    %c0_83 = arith.constant 0 : index
    %168 = vector.load %arg19[%c0_82, %c0_83] : memref<1x256xf32, #tpu.memory_space<vmem>>, vector<1x256xf32>
    %c0_84 = arith.constant 0 : index
    %c0_85 = arith.constant 0 : index
    %169 = vector.load %arg20[%c0_84, %c0_85] : memref<1x256xf32, #tpu.memory_space<vmem>>, vector<1x256xf32>
    %cst_86 = arith.constant dense<0.000000e+00> : vector<19xf32>
    %170 = vector.multi_reduction <add>, %166, %cst_86 [1] : vector<19x256xf32> to vector<19xf32>
    %171 = vector.shape_cast %170 : vector<19xf32> to vector<19x1xf32>
    %cst_87 = arith.constant 2.560000e+02 : f32
    %172 = vector.broadcast %cst_87 : f32 to vector<19x1xf32>
    %173 = arith.divf %171, %172 : vector<19x1xf32>
    %174 = vector.broadcast %173 : vector<19x1xf32> to vector<19x256xf32>
    %175 = arith.subf %166, %174 : vector<19x256xf32>
    %176 = arith.mulf %175, %175 : vector<19x256xf32>
    %cst_88 = arith.constant dense<0.000000e+00> : vector<19xf32>
    %177 = vector.multi_reduction <add>, %176, %cst_88 [1] : vector<19x256xf32> to vector<19xf32>
    %178 = vector.shape_cast %177 : vector<19xf32> to vector<19x1xf32>
    %cst_89 = arith.constant 2.560000e+02 : f32
    %179 = vector.broadcast %cst_89 : f32 to vector<19x1xf32>
    %180 = arith.divf %178, %179 : vector<19x1xf32>
    %181 = vector.broadcast %173 : vector<19x1xf32> to vector<19x256xf32>
    %182 = arith.subf %166, %181 : vector<19x256xf32>
    %cst_90 = arith.constant 9.99999974E-6 : f32
    %183 = vector.broadcast %cst_90 : f32 to vector<19x1xf32>
    %184 = arith.addf %180, %183 : vector<19x1xf32>
    %185 = math.rsqrt %184 : vector<19x1xf32>
    %186 = vector.broadcast %185 : vector<19x1xf32> to vector<19x256xf32>
    %187 = arith.mulf %182, %186 : vector<19x256xf32>
    %188 = vector.broadcast %168 : vector<1x256xf32> to vector<19x256xf32>
    %189 = arith.mulf %187, %188 : vector<19x256xf32>
    %190 = vector.broadcast %169 : vector<1x256xf32> to vector<19x256xf32>
    %191 = arith.addf %189, %190 : vector<19x256xf32>
    %192 = arith.select %167, %191, %166 : vector<19x256xf32>
    %c0_91 = arith.constant 0 : index
    %c0_92 = arith.constant 0 : index
    %c0_93 = arith.constant 0 : index
    %193 = vector.load %arg21[%c0_91, %c0_92, %c0_93] : memref<1x19x256xf32, #tpu.memory_space<vmem>>, vector<1x19x256xf32>
    %194 = vector.shape_cast %193 : vector<1x19x256xf32> to vector<19x256xf32>
    %195 = vector.shape_cast %192 : vector<19x256xf32> to vector<1x19x256xf32>
    tpu.vector_store %arg21[%c0_91, %c0_92, %c0_93], %195 {strides = array<i32>} : memref<1x19x256xf32, #tpu.memory_space<vmem>>, vector<1x19x256xf32>,
    return
  }
  func.func @transform_0(%arg0: i32, %arg1: i32) -> (i32, i32, i32) {
    %c0_i32 = arith.constant 0 : i32
    %c0_i32_0 = arith.constant 0 : i32
    %c0_i32_1 = arith.constant 0 : i32
    return %arg0, %c0_i32, %c0_i32_0 : i32, i32, i32
  }
  func.func @transform_1(%arg0: i32, %arg1: i32) -> (i32, i32, i32) {
    %c0_i32 = arith.constant 0 : i32
    %c0_i32_0 = arith.constant 0 : i32
    %c0_i32_1 = arith.constant 0 : i32
    return %arg1, %c0_i32, %c0_i32_0 : i32, i32, i32
  }
  func.func @transform_2(%arg0: i32, %arg1: i32) -> (i32, i32, i32) {
    %c0_i32 = arith.constant 0 : i32
    %c0_i32_0 = arith.constant 0 : i32
    %c0_i32_1 = arith.constant 0 : i32
    return %arg1, %c0_i32, %c0_i32_0 : i32, i32, i32
  }
  func.func @transform_3(%arg0: i32, %arg1: i32) -> (i32, i32, i32) {
    %c0_i32 = arith.constant 0 : i32
    %c0_i32_0 = arith.constant 0 : i32
    %c0_i32_1 = arith.constant 0 : i32
    return %arg1, %c0_i32, %c0_i32_0 : i32, i32, i32
  }
  func.func @transform_4(%arg0: i32, %arg1: i32) -> (i32, i32, i32) {
    %c0_i32 = arith.constant 0 : i32
    %c0_i32_0 = arith.constant 0 : i32
    %c0_i32_1 = arith.constant 0 : i32
    return %arg1, %c0_i32, %c0_i32_0 : i32, i32, i32
  }
  func.func @transform_5(%arg0: i32, %arg1: i32) -> (i32, i32, i32) {
    %c0_i32 = arith.constant 0 : i32
    %c0_i32_0 = arith.constant 0 : i32
    %c0_i32_1 = arith.constant 0 : i32
    return %arg1, %c0_i32, %c0_i32_0 : i32, i32, i32
  }
  func.func @transform_6(%arg0: i32, %arg1: i32) -> (i32, i32, i32) {
    %c0_i32 = arith.constant 0 : i32
    %c0_i32_0 = arith.constant 0 : i32
    %c0_i32_1 = arith.constant 0 : i32
    return %arg1, %c0_i32, %c0_i32_0 : i32, i32, i32
  }
  func.func @transform_7(%arg0: i32, %arg1: i32) -> (i32, i32, i32) {
    %c0_i32 = arith.constant 0 : i32
    %c0_i32_0 = arith.constant 0 : i32
    %c0_i32_1 = arith.constant 0 : i32
    return %arg1, %c0_i32, %c0_i32_0 : i32, i32, i32
  }
  func.func @transform_8(%arg0: i32, %arg1: i32) -> (i32, i32, i32) {
    %c0_i32 = arith.constant 0 : i32
    %c0_i32_0 = arith.constant 0 : i32
    %c0_i32_1 = arith.constant 0 : i32
    return %arg1, %c0_i32, %c0_i32_0 : i32, i32, i32
  }
  func.func @transform_9(%arg0: i32, %arg1: i32) -> (i32, i32, i32) {
    %c0_i32 = arith.constant 0 : i32
    %c0_i32_0 = arith.constant 0 : i32
    %c0_i32_1 = arith.constant 0 : i32
    return %arg1, %c0_i32, %c0_i32_0 : i32, i32, i32
  }
  func.func @transform_10(%arg0: i32, %arg1: i32) -> (i32, i32, i32) {
    %c0_i32 = arith.constant 0 : i32
    %c0_i32_0 = arith.constant 0 : i32
    %c0_i32_1 = arith.constant 0 : i32
    return %arg1, %c0_i32, %c0_i32_0 : i32, i32, i32
  }
  func.func @transform_11(%arg0: i32, %arg1: i32) -> (i32, i32, i32) {
    %c0_i32 = arith.constant 0 : i32
    %c0_i32_0 = arith.constant 0 : i32
    %c0_i32_1 = arith.constant 0 : i32
    return %arg1, %c0_i32, %c0_i32_0 : i32, i32, i32
  }
  func.func @transform_12(%arg0: i32, %arg1: i32) -> (i32, i32, i32) {
    %c0_i32 = arith.constant 0 : i32
    %c0_i32_0 = arith.constant 0 : i32
    %c0_i32_1 = arith.constant 0 : i32
    return %arg1, %c0_i32, %c0_i32_0 : i32, i32, i32
  }
  func.func @transform_13(%arg0: i32, %arg1: i32) -> (i32, i32, i32) {
    %c0_i32 = arith.constant 0 : i32
    %c0_i32_0 = arith.constant 0 : i32
    %c0_i32_1 = arith.constant 0 : i32
    return %arg1, %c0_i32, %c0_i32_0 : i32, i32, i32
  }
  func.func @transform_14(%arg0: i32, %arg1: i32) -> (i32, i32, i32) {
    %c0_i32 = arith.constant 0 : i32
    %c0_i32_0 = arith.constant 0 : i32
    %c0_i32_1 = arith.constant 0 : i32
    return %arg1, %c0_i32, %c0_i32_0 : i32, i32, i32
  }
  func.func @transform_15(%arg0: i32, %arg1: i32) -> (i32, i32, i32) {
    %c0_i32 = arith.constant 0 : i32
    %c0_i32_0 = arith.constant 0 : i32
    %c0_i32_1 = arith.constant 0 : i32
    return %arg1, %c0_i32, %c0_i32_0 : i32, i32, i32
  }
  func.func @transform_16(%arg0: i32, %arg1: i32) -> (i32, i32, i32) {
    %c0_i32 = arith.constant 0 : i32
    %c0_i32_0 = arith.constant 0 : i32
    %c0_i32_1 = arith.constant 0 : i32
    return %arg1, %c0_i32, %c0_i32_0 : i32, i32, i32
  }
  func.func @transform_17(%arg0: i32, %arg1: i32) -> (i32, i32) {
    %c0_i32 = arith.constant 0 : i32
    %c0_i32_0 = arith.constant 0 : i32
    %c0_i32_1 = arith.constant 0 : i32
    return %c0_i32, %c0_i32_0 : i32, i32
  }
  func.func @transform_18(%arg0: i32, %arg1: i32) -> (i32, i32) {
    %c0_i32 = arith.constant 0 : i32
    %c0_i32_0 = arith.constant 0 : i32
    %c0_i32_1 = arith.constant 0 : i32
    return %c0_i32, %c0_i32_0 : i32, i32
  }
  func.func @transform_19(%arg0: i32, %arg1: i32) -> (i32, i32, i32) {
    %c0_i32 = arith.constant 0 : i32
    %c0_i32_0 = arith.constant 0 : i32
    %c0_i32_1 = arith.constant 0 : i32
    return %arg0, %c0_i32, %c0_i32_0 : i32, i32, i32
  }
}

</mosaic_0001>

<llo_original>
// kernel: _lambda_.7
$region0: #{_lambda_.7}
  #allocation0 [shape = 'u32[]', space=smem, size = 0x4, offset = 0x4, fixed_abs, tag = 'smem constant byte address 0x4 - core index']
  #allocation1 [shape = 'u32[144,128]{1,0:T(1,128)}', space=vmem, size = 0x12000, scoped, tag = 'internal scratch']
  %s0 = inlined_call_operand.vmem [shape: f32[2,512], index: 0, kind: input, shape index: {}]
  %s1 = inlined_call_operand.vmem [shape: f32[1,128], index: 1, kind: output, shape index: {}]
  %s2 = sld [smem:[#allocation0]]
  $region41: #{_lambda_.7} parent=0
    _
  %s4 = ssub.s32 1, %s2
  %s5 = scalar_select 0, %s4, %s2
  loop: start=0, step=1, limit=4
  $region2: #{_lambda_.7} parent=0 // loop_pre_header
    _
  $region3: #{_lambda_.7} parent=0 // loop_header
    %s7 = sphi 0, %s11
    %p8 = scmp.ge.s32.totalorder %s7, 4
    %s17 = sphi 0, %s19
    %s20 = sphi 0, %s17
    %s21 = sphi 0, %s20
    %s37 = sphi 0, %s21
    %s41 = sphi 0, %s41
    %s43 = sphi 0, %s41
    %s44 = sphi 0, %s43
    %s58 = sphi 0, %s44
  $region4: #{_lambda_.7} parent=0 // loop_header_branch
    %10 = sbr.rel (%p8) target = $region8
  $region5: #{_lambda_.7} parent=0 // loop_body
    %s12 = ssub.s32 %s7, 1
    %s13 = ssub.s32 %s7, 2
    %s14 = sadd.s32 %s7, 1
    %s15 = ssub.s32 %s7, %s14
    %p16 = scmp.eq.s32.totalorder %s15, 0
    %s18 = sadd.s32 %s17, 1
    %s19 = scalar_select %p16, %s17, %s18
    %p22 = pneg %p16
    %p23 = scmp.eq.s32.totalorder %s7, 1
    %p24 = por %p22, %p23
    %p25 = scmp.ne.s32.totalorder %s17, %s20
    %p26 = scmp.eq.s32.totalorder %s7, 0
    %p27 = por %p25, %p26
    %p28 = scmp.ne.s32.totalorder %s17, %s20
    %p29 = scmp.eq.s32.totalorder %s12, 1
    %p30 = por %p28, %p29
    %p31 = scmp.ne.s32.totalorder %s20, %s21
    %p32 = scmp.eq.s32.totalorder %s12, 0
    %p33 = por %p31, %p32
    %p34 = scmp.ne.s32.totalorder %s20, %s21
    %p35 = scmp.eq.s32.totalorder %s13, 1
    %p36 = por %p34, %p35
    %p38 = scmp.ne.s32.totalorder %s21, %s37
    %p39 = scmp.eq.s32.totalorder %s13, 0
    %p40 = por %p38, %p39
    %s42 = sadd.s32 %s41, 1
    %p45 = scmp.eq.s32.totalorder %s7, 1
    %p46 = scmp.ne.s32.totalorder %s41, %s43
    %p47 = scmp.eq.s32.totalorder %s7, 0
    %p48 = por %p46, %p47
    %p49 = scmp.ne.s32.totalorder %s41, %s43
    %p50 = scmp.eq.s32.totalorder %s12, 1
    %p51 = por %p49, %p50
    %p52 = scmp.ne.s32.totalorder %s43, %s44
    %p53 = scmp.eq.s32.totalorder %s12, 0
    %p54 = por %p52, %p53
    %p55 = scmp.ne.s32.totalorder %s43, %s44
    %p56 = scmp.eq.s32.totalorder %s13, 1
    %p57 = por %p55, %p56
    %p59 = scmp.ne.s32.totalorder %s44, %s58
    %p60 = scmp.eq.s32.totalorder %s13, 0
    %p61 = por %p59, %p60
    %p62 = scmp.le.s32.totalorder 1, %s7
    %p63 = scmp.lt.s32.totalorder %s7, 3
    %p64 = pnand %p62, %p63
    %p65 = pneg %p64
    // Predicated region
    $region9: #{_lambda_.7} parent=5 // pred_check
      _
    $region10: #{_lambda_.7} parent=5 // pred_check_branch
      %67 = sbr.rel (%p64) target = $region12
    $region11: #{_lambda_.7} parent=5 // pred_region
      %s68 = ssub.s32 %s7, 1
    $region12: #{_lambda_.7} parent=5 // pred_fallthru
      _
    %p69 = scmp.lt.s32.totalorder %s7, 2
    // Predicated region
    $region13: #{_lambda_.7} parent=5 // pred_check
      %p70 = pneg %p69
    $region14: #{_lambda_.7} parent=5 // pred_check_branch
      %72 = sbr.rel (%p70) target = $region16
    $region15: #{_lambda_.7} parent=5 // pred_region
      // Predicated region
      $region17: #{_lambda_.7} parent=15 // pred_check
        %p73 = pneg %p27
      $region18: #{_lambda_.7} parent=15 // pred_check_branch
        %75 = sbr.rel (%p73) target = $region20
      $region19: #{_lambda_.7} parent=15 // pred_region
        %s76 = smul.u32 2, %s7
        %p77 = scmp.lt.s32.totalorder %s76, 3
        %s78 = scalar_select %p77, %s76, 3
        %s79 = smul.addr %s78, 2
        %s80 = scalar_lea.vmem %s0, %s79
        %s81 = smul.u32 2, %s7
      $region20: #{_lambda_.7} parent=15 // pred_fallthru
        _
    $region16: #{_lambda_.7} parent=5 // pred_fallthru
      _
    %p82 = scmp.le.s32.totalorder 1, %s7
    %p83 = scmp.lt.s32.totalorder %s7, 3
    %p84 = pnand %p82, %p83
    %p85 = pneg %p84
    // Predicated region
    $region21: #{_lambda_.7} parent=5 // pred_check
      _
    $region22: #{_lambda_.7} parent=5 // pred_check_branch
      %87 = sbr.rel (%p84) target = $region24
    $region23: #{_lambda_.7} parent=5 // pred_region
      %s88 = ssub.s32 %s7, 1
      %s89 = smul.u32 2, %s12
      %p90 = scmp.lt.s32.totalorder %s89, 3
      %s91 = scalar_select %p90, %s89, 3
      %s92 = smul.addr %s91, 2
      %s93 = scalar_lea.vmem %s0, %s92
      %p94 = pneg %p33
      %p95 = pneg %p30
      %p96 = pneg %p54
      %p97 = pneg %p51
      %s98 = smul.u32 2, %s12
      %p99 = scmp.lt.s32.totalorder %s98, 3
      %s100 = scalar_select %p99, %s98, 3
      %s101 = smul.addr %s100, 2
      %s102 = scalar_lea.vmem %s0, %s101
      %s103 = smul.u32 2, %s12
      %p104 = scmp.eq.s32.totalorder %s12, 0
      // Predicated region
      $region25: #{_lambda_.7} parent=23 // pred_check
        %p105 = pneg %p104
      $region26: #{_lambda_.7} parent=23 // pred_check_branch
        %107 = sbr.rel (%p105) target = $region28
      $region27: #{_lambda_.7} parent=23 // pred_region
        %108 = vst [vmem:[%s1] sm:$0x1] 0.0
      $region28: #{_lambda_.7} parent=23 // pred_fallthru
        _
      %v109 = vld [vmem:[%s102] sm:$0xf]
      %v112 = vunpack.c.l.s4 1983009808
      %v113 = vunpack.c.0.s8 %v112
      %v114 = vlaneseq
      %v115 = vshrl.u32 %v114, 7
      %v116 = vsub.s32 %v113, %v115
      %v117 = vrot.slane %v109, %v116
      %v118 = vcombine.high %v117, %v117
      %vm121 = vcmask 1041408
      %v122 = vsel %vm121, %v117, 0.0
      %v123 = vsel %vm121, %v118, 0.0
      %v124 = vadd.f32 %v122, %v123
      %125 = vadd.xlane.f32.xlu0 %v124
      %v126 = vpop.xlane.xlu0 %125
      %v127 = vrot.slane %v126, 4
      %v128 = vadd.f32 %v126, %v127
      %v129 = vrot.slane %v128, 2
      %v130 = vadd.f32 %v128, %v129
      %v131 = vrot.slane %v130, 1
      %v132 = vadd.f32 %v130, %v131
      %s133 = vtos %v132
      %v134 = vmul.f32 %v109, %v109
      %v137 = vunpack.c.l.s4 1983009808
      %v138 = vunpack.c.0.s8 %v137
      %v139 = vlaneseq
      %v140 = vshrl.u32 %v139, 7
      %v141 = vsub.s32 %v138, %v140
      %v142 = vrot.slane %v134, %v141
      %v143 = vcombine.high %v142, %v142
      %v146 = vsel %vm121, %v142, 0.0
      %v147 = vsel %vm121, %v143, 0.0
      %v148 = vadd.f32 %v146, %v147
      %149 = vadd.xlane.f32.xlu0 %v148
      %v150 = vpop.xlane.xlu0 %149
      %v151 = vrot.slane %v150, 4
      %v152 = vadd.f32 %v150, %v151
      %v153 = vrot.slane %v152, 2
      %v154 = vadd.f32 %v152, %v153
      %v155 = vrot.slane %v154, 1
      %v156 = vadd.f32 %v154, %v155
      %s157 = vtos %v156
      %v158 = vlaneseq
      %v159 = vand.u32 %v158, 127
      %v160 = vld [vmem:[%s1] sm:$0x1]
      %vm161 = vcmp.eq.s32.totalorder %v159, 0
      %vm162 = vcmp.eq.s32.totalorder %v159, 1
      %v163 = vstv %s157
      %v164 = vsel %vm162, %v163, 0.0
      %v165 = vstv %s133
      %v166 = vsel %vm161, %v165, %v164
      %v167 = vadd.f32 %v160, %v166
      %168 = vst [vmem:[%s1] sm:$0x1] %v167
      // Predicated region
      $region29: #{_lambda_.7} parent=23 // pred_check
        %p169 = pneg %p51
      $region30: #{_lambda_.7} parent=23 // pred_check_branch
        %171 = sbr.rel (%p169) target = $region32
      $region31: #{_lambda_.7} parent=23 // pred_region
        _
      $region32: #{_lambda_.7} parent=23 // pred_fallthru
        _
      // Predicated region
      $region33: #{_lambda_.7} parent=23 // pred_check
        %p172 = pneg %p51
      $region34: #{_lambda_.7} parent=23 // pred_check_branch
        %174 = sbr.rel (%p172) target = $region36
      $region35: #{_lambda_.7} parent=23 // pred_region
        _
      $region36: #{_lambda_.7} parent=23 // pred_fallthru
        _
    $region24: #{_lambda_.7} parent=5 // pred_fallthru
      _
    %p175 = scmp.le.s32.totalorder 2, %s7
    // Predicated region
    $region37: #{_lambda_.7} parent=5 // pred_check
      %p176 = pneg %p175
    $region38: #{_lambda_.7} parent=5 // pred_check_branch
      %178 = sbr.rel (%p176) target = $region40
    $region39: #{_lambda_.7} parent=5 // pred_region
      %s179 = ssub.s32 %s7, 2
    $region40: #{_lambda_.7} parent=5 // pred_fallthru
      _
  $region6: #{_lambda_.7} parent=0 // loop_footer
    %s11 = sadd.s32 1, %s7
  $region7: #{_lambda_.7} parent=0 // loop_footer_branch
    %6 = sbr.rel target = $region3
  $region8: #{_lambda_.7} parent=0 // loop_exit
    _

// kernel: _lambda_.8
$region0: #{_lambda_.8}
  #allocation0 [shape = 'u32[]', space=smem, size = 0x4, offset = 0x4, fixed_abs, tag = 'smem constant byte address 0x4 - core index']
  #allocation1 [shape = 'u32[144,128]{1,0:T(1,128)}', space=vmem, size = 0x12000, scoped, tag = 'internal scratch']
  %s0 = inlined_call_operand.vmem [shape: f32[256,10], index: 0, kind: input, shape index: {}]
  %s1 = inlined_call_operand.vmem [shape: f32[1,128], index: 1, kind: input, shape index: {}]
  %s2 = inlined_call_operand.vmem [shape: bf16[10,128], index: 2, kind: input, shape index: {}]
  %s3 = inlined_call_operand.vmem [shape: f32[1,128], index: 3, kind: input, shape index: {}]
  %s4 = inlined_call_operand.vmem [shape: f32[1,128], index: 4, kind: input, shape index: {}]
  %s5 = inlined_call_operand.vmem [shape: f32[256,128], index: 5, kind: output, shape index: {}]
  %s6 = sld [smem:[#allocation0]]
  $region53: #{_lambda_.8} parent=0
    _
  %s8 = ssub.s32 1, %s6
  %s9 = scalar_select 0, %s8, %s6
  loop: start=0, step=1, limit=4
  $region2: #{_lambda_.8} parent=0 // loop_pre_header
    _
  $region3: #{_lambda_.8} parent=0 // loop_header
    %s11 = sphi 0, %s15
    %p12 = scmp.ge.s32.totalorder %s11, 4
    %s21 = sphi 0, %s23
    %s24 = sphi 0, %s21
    %s25 = sphi 0, %s24
    %s41 = sphi 0, %s25
    %s45 = sphi 0, %s45
    %s47 = sphi 0, %s45
    %s48 = sphi 0, %s47
    %s62 = sphi 0, %s48
    %s66 = sphi 0, %s66
    %s68 = sphi 0, %s66
    %s69 = sphi 0, %s68
    %s83 = sphi 0, %s69
    %s87 = sphi 0, %s87
    %s89 = sphi 0, %s87
    %s90 = sphi 0, %s89
    %s104 = sphi 0, %s90
    %s108 = sphi 0, %s108
    %s110 = sphi 0, %s108
    %s111 = sphi 0, %s110
    %s125 = sphi 0, %s111
    %s131 = sphi 0, %s133
    %s134 = sphi 0, %s131
    %s135 = sphi 0, %s134
    %s151 = sphi 0, %s135
  $region4: #{_lambda_.8} parent=0 // loop_header_branch
    %14 = sbr.rel (%p12) target = $region8
  $region5: #{_lambda_.8} parent=0 // loop_body
    %s16 = ssub.s32 %s11, 1
    %s17 = ssub.s32 %s11, 2
    %s18 = sadd.s32 %s11, 1
    %s19 = ssub.s32 %s11, %s18
    %p20 = scmp.eq.s32.totalorder %s19, 0
    %s22 = sadd.s32 %s21, 1
    %s23 = scalar_select %p20, %s21, %s22
    %p26 = pneg %p20
    %p27 = scmp.eq.s32.totalorder %s11, 1
    %p28 = por %p26, %p27
    %p29 = scmp.ne.s32.totalorder %s21, %s24
    %p30 = scmp.eq.s32.totalorder %s11, 0
    %p31 = por %p29, %p30
    %p32 = scmp.ne.s32.totalorder %s21, %s24
    %p33 = scmp.eq.s32.totalorder %s16, 1
    %p34 = por %p32, %p33
    %p35 = scmp.ne.s32.totalorder %s24, %s25
    %p36 = scmp.eq.s32.totalorder %s16, 0
    %p37 = por %p35, %p36
    %p38 = scmp.ne.s32.totalorder %s24, %s25
    %p39 = scmp.eq.s32.totalorder %s17, 1
    %p40 = por %p38, %p39
    %p42 = scmp.ne.s32.totalorder %s25, %s41
    %p43 = scmp.eq.s32.totalorder %s17, 0
    %p44 = por %p42, %p43
    %s46 = sadd.s32 %s45, 1
    %p49 = scmp.eq.s32.totalorder %s11, 1
    %p50 = scmp.ne.s32.totalorder %s45, %s47
    %p51 = scmp.eq.s32.totalorder %s11, 0
    %p52 = por %p50, %p51
    %p53 = scmp.ne.s32.totalorder %s45, %s47
    %p54 = scmp.eq.s32.totalorder %s16, 1
    %p55 = por %p53, %p54
    %p56 = scmp.ne.s32.totalorder %s47, %s48
    %p57 = scmp.eq.s32.totalorder %s16, 0
    %p58 = por %p56, %p57
    %p59 = scmp.ne.s32.totalorder %s47, %s48
    %p60 = scmp.eq.s32.totalorder %s17, 1
    %p61 = por %p59, %p60
    %p63 = scmp.ne.s32.totalorder %s48, %s62
    %p64 = scmp.eq.s32.totalorder %s17, 0
    %p65 = por %p63, %p64
    %s67 = sadd.s32 %s66, 1
    %p70 = scmp.eq.s32.totalorder %s11, 1
    %p71 = scmp.ne.s32.totalorder %s66, %s68
    %p72 = scmp.eq.s32.totalorder %s11, 0
    %p73 = por %p71, %p72
    %p74 = scmp.ne.s32.totalorder %s66, %s68
    %p75 = scmp.eq.s32.totalorder %s16, 1
    %p76 = por %p74, %p75
    %p77 = scmp.ne.s32.totalorder %s68, %s69
    %p78 = scmp.eq.s32.totalorder %s16, 0
    %p79 = por %p77, %p78
    %p80 = scmp.ne.s32.totalorder %s68, %s69
    %p81 = scmp.eq.s32.totalorder %s17, 1
    %p82 = por %p80, %p81
    %p84 = scmp.ne.s32.totalorder %s69, %s83
    %p85 = scmp.eq.s32.totalorder %s17, 0
    %p86 = por %p84, %p85
    %s88 = sadd.s32 %s87, 1
    %p91 = scmp.eq.s32.totalorder %s11, 1
    %p92 = scmp.ne.s32.totalorder %s87, %s89
    %p93 = scmp.eq.s32.totalorder %s11, 0
    %p94 = por %p92, %p93
    %p95 = scmp.ne.s32.totalorder %s87, %s89
    %p96 = scmp.eq.s32.totalorder %s16, 1
    %p97 = por %p95, %p96
    %p98 = scmp.ne.s32.totalorder %s89, %s90
    %p99 = scmp.eq.s32.totalorder %s16, 0
    %p100 = por %p98, %p99
    %p101 = scmp.ne.s32.totalorder %s89, %s90
    %p102 = scmp.eq.s32.totalorder %s17, 1
    %p103 = por %p101, %p102
    %p105 = scmp.ne.s32.totalorder %s90, %s104
    %p106 = scmp.eq.s32.totalorder %s17, 0
    %p107 = por %p105, %p106
    %s109 = sadd.s32 %s108, 1
    %p112 = scmp.eq.s32.totalorder %s11, 1
    %p113 = scmp.ne.s32.totalorder %s108, %s110
    %p114 = scmp.eq.s32.totalorder %s11, 0
    %p115 = por %p113, %p114
    %p116 = scmp.ne.s32.totalorder %s108, %s110
    %p117 = scmp.eq.s32.totalorder %s16, 1
    %p118 = por %p116, %p117
    %p119 = scmp.ne.s32.totalorder %s110, %s111
    %p120 = scmp.eq.s32.totalorder %s16, 0
    %p121 = por %p119, %p120
    %p122 = scmp.ne.s32.totalorder %s110, %s111
    %p123 = scmp.eq.s32.totalorder %s17, 1
    %p124 = por %p122, %p123
    %p126 = scmp.ne.s32.totalorder %s111, %s125
    %p127 = scmp.eq.s32.totalorder %s17, 0
    %p128 = por %p126, %p127
    %s129 = ssub.s32 %s11, %s18
    %p130 = scmp.eq.s32.totalorder %s129, 0
    %s132 = sadd.s32 %s131, 1
    %s133 = scalar_select %p130, %s131, %s132
    %p136 = pneg %p130
    %p137 = scmp.eq.s32.totalorder %s11, 1
    %p138 = por %p136, %p137
    %p139 = scmp.ne.s32.totalorder %s131, %s134
    %p140 = scmp.eq.s32.totalorder %s11, 0
    %p141 = por %p139, %p140
    %p142 = scmp.ne.s32.totalorder %s131, %s134
    %p143 = scmp.eq.s32.totalorder %s16, 1
    %p144 = por %p142, %p143
    %p145 = scmp.ne.s32.totalorder %s134, %s135
    %p146 = scmp.eq.s32.totalorder %s16, 0
    %p147 = por %p145, %p146
    %p148 = scmp.ne.s32.totalorder %s134, %s135
    %p149 = scmp.eq.s32.totalorder %s17, 1
    %p150 = por %p148, %p149
    %p152 = scmp.ne.s32.totalorder %s135, %s151
    %p153 = scmp.eq.s32.totalorder %s17, 0
    %p154 = por %p152, %p153
    %p155 = scmp.le.s32.totalorder 1, %s11
    %p156 = scmp.lt.s32.totalorder %s11, 3
    %p157 = pnand %p155, %p156
    %p158 = pneg %p157
    // Predicated region
    $region9: #{_lambda_.8} parent=5 // pred_check
      _
    $region10: #{_lambda_.8} parent=5 // pred_check_branch
      %160 = sbr.rel (%p157) target = $region12
    $region11: #{_lambda_.8} parent=5 // pred_region
      %s161 = ssub.s32 %s11, 1
      // Predicated region
      $region13: #{_lambda_.8} parent=11 // pred_check
        %p162 = pneg %p58
      $region14: #{_lambda_.8} parent=11 // pred_check_branch
        %164 = sbr.rel (%p162) target = $region16
      $region15: #{_lambda_.8} parent=11 // pred_region
        _
      $region16: #{_lambda_.8} parent=11 // pred_fallthru
        _
      // Predicated region
      $region17: #{_lambda_.8} parent=11 // pred_check
        %p165 = pneg %p79
      $region18: #{_lambda_.8} parent=11 // pred_check_branch
        %167 = sbr.rel (%p165) target = $region20
      $region19: #{_lambda_.8} parent=11 // pred_region
        _
      $region20: #{_lambda_.8} parent=11 // pred_fallthru
        _
      // Predicated region
      $region21: #{_lambda_.8} parent=11 // pred_check
        %p168 = pneg %p100
      $region22: #{_lambda_.8} parent=11 // pred_check_branch
        %170 = sbr.rel (%p168) target = $region24
      $region23: #{_lambda_.8} parent=11 // pred_region
        _
      $region24: #{_lambda_.8} parent=11 // pred_fallthru
        _
      // Predicated region
      $region25: #{_lambda_.8} parent=11 // pred_check
        %p171 = pneg %p121
      $region26: #{_lambda_.8} parent=11 // pred_check_branch
        %173 = sbr.rel (%p171) target = $region28
      $region27: #{_lambda_.8} parent=11 // pred_region
        _
      $region28: #{_lambda_.8} parent=11 // pred_fallthru
        _
    $region12: #{_lambda_.8} parent=5 // pred_fallthru
      _
    %p174 = scmp.lt.s32.totalorder %s11, 2
    // Predicated region
    $region29: #{_lambda_.8} parent=5 // pred_check
      %p175 = pneg %p174
    $region30: #{_lambda_.8} parent=5 // pred_check_branch
      %177 = sbr.rel (%p175) target = $region32
    $region31: #{_lambda_.8} parent=5 // pred_region
      // Predicated region
      $region33: #{_lambda_.8} parent=31 // pred_check
        %p178 = pneg %p31
      $region34: #{_lambda_.8} parent=31 // pred_check_branch
        %180 = sbr.rel (%p178) target = $region36
      $region35: #{_lambda_.8} parent=31 // pred_region
        %s181 = smul.u32 16, %s11
        %p182 = scmp.lt.s32.totalorder %s181, 31
        %s183 = scalar_select %p182, %s181, 31
        %s184 = smul.addr %s183, 8
        %s185 = scalar_lea.vmem %s0, %s184
        %s186 = smul.u32 16, %s11
      $region36: #{_lambda_.8} parent=31 // pred_fallthru
        _
    $region32: #{_lambda_.8} parent=5 // pred_fallthru
      _
    %p187 = scmp.le.s32.totalorder 1, %s11
    %p188 = scmp.lt.s32.totalorder %s11, 3
    %p189 = pnand %p187, %p188
    %p190 = pneg %p189
    // Predicated region
    $region37: #{_lambda_.8} parent=5 // pred_check
      _
    $region38: #{_lambda_.8} parent=5 // pred_check_branch
      %192 = sbr.rel (%p189) target = $region40
    $region39: #{_lambda_.8} parent=5 // pred_region
      %s193 = ssub.s32 %s11, 1
      %s194 = smul.u32 16, %s16
      %p195 = scmp.lt.s32.totalorder %s194, 31
      %s196 = scalar_select %p195, %s194, 31
      %s197 = smul.addr %s196, 8
      %s198 = scalar_lea.vmem %s0, %s197
      %p199 = pneg %p37
      %p200 = pneg %p34
      %p201 = pneg %p58
      %p202 = pneg %p55
      %p203 = pneg %p79
      %p204 = pneg %p76
      %p205 = pneg %p100
      %p206 = pneg %p97
      %p207 = pneg %p121
      %p208 = pneg %p118
      %p209 = pneg %p147
      %p210 = pneg %p144
      %s211 = smul.u32 16, %s16
      %p212 = scmp.lt.s32.totalorder %s211, 31
      %s213 = scalar_select %p212, %s211, 31
      %s214 = smul.addr %s213, 8
      %s215 = scalar_lea.vmem %s5, %s214
      %s216 = smul.u32 16, %s16
      %p217 = scmp.lt.s32.totalorder %s216, 31
      %s218 = scalar_select %p217, %s216, 31
      %s219 = smul.addr %s218, 8
      %s220 = scalar_lea.vmem %s0, %s219
      %s221 = smul.u32 16, %s16
      %s222 = smul.u32 16, %s16
      %p223 = scmp.lt.s32.totalorder %s222, 31
      %s224 = scalar_select %p223, %s222, 31
      %s225 = smul.addr %s224, 8
      %s226 = scalar_lea.vmem %s5, %s225
      %s227 = smul.u32 16, %s16
      %v229 = vld [vmem:[%s1] sm:$0x1]
      %v230 = vlaneseq
      %v231 = vand.u32 %v230, 127
      %vm232 = vcmp.eq.s32.totalorder %v231, 0
      %v233 = vsel %vm232, %v229, 0.0
      %vm234 = vcmask 1040384
      %v235 = vsel %vm234, %v233, 0.0
      %236 = vadd.xlane.f32.xlu0 %v235
      %v237 = vpop.xlane.xlu0 %236
      %v238 = vrot.slane %v237, 4
      %v239 = vadd.f32 %v237, %v238
      %v240 = vrot.slane %v239, 2
      %v241 = vadd.f32 %v239, %v240
      %v242 = vrot.slane %v241, 1
      %v243 = vadd.f32 %v241, %v242
      %s244 = vtos %v243
      %vm245 = vcmp.eq.s32.totalorder %v231, 1
      %v246 = vsel %vm245, %v229, 0.0
      %v247 = vsel %vm234, %v246, 0.0
      %248 = vadd.xlane.f32.xlu0 %v247
      %v249 = vpop.xlane.xlu0 %248
      %v250 = vrot.slane %v249, 4
      %v251 = vadd.f32 %v249, %v250
      %v252 = vrot.slane %v251, 2
      %v253 = vadd.f32 %v251, %v252
      %v254 = vrot.slane %v253, 1
      %v255 = vadd.f32 %v253, %v254
      %s256 = vtos %v255
      %v257 = vrcp.pop 800.0
      %s258 = vtos %v257
      %s259 = smul.f32 %s244, %s258
      %v260 = vrcp.pop 800.0
      %s261 = vtos %v260
      %s262 = smul.f32 %s256, %s261
      %s263 = smul.f32 %s259, %s259
      %s264 = ssub.f32 %s262, %s263
      %s265 = sadd.f32 %s264, 1e-05
      %v266 = vstv %s265
      %v267 = vrsqrt.pop %v266
      %s268 = vtos %v267
      %v269 = vld [vmem:[%s220] sm:$0xff]
      %v270 = vld [vmem:[%s220 + $0x8] sm:$0xff]
      %v271 = vld [vmem:[%s220 + $0x10] sm:$0xff]
      %v272 = vld [vmem:[%s220 + $0x18] sm:$0xff]
      %v273 = vld [vmem:[%s220 + $0x20] sm:$0xff]
      %v274 = vld [vmem:[%s220 + $0x28] sm:$0xff]
      %v275 = vld [vmem:[%s220 + $0x30] sm:$0xff]
      %v276 = vld [vmem:[%s220 + $0x38] sm:$0xff]
      %v277 = vld [vmem:[%s220 + $0x40] sm:$0xff]
      %v278 = vld [vmem:[%s220 + $0x48] sm:$0xff]
      %v279 = vld [vmem:[%s220 + $0x50] sm:$0xff]
      %v280 = vld [vmem:[%s220 + $0x58] sm:$0xff]
      %v281 = vld [vmem:[%s220 + $0x60] sm:$0xff]
      %v282 = vld [vmem:[%s220 + $0x68] sm:$0xff]
      %v283 = vld [vmem:[%s220 + $0x70] sm:$0xff]
      %v284 = vld [vmem:[%s220 + $0x78] sm:$0xff]
      %v285 = vstv %s259
      %v286 = vsub.f32 %v269, %v285
      %v287 = vsub.f32 %v270, %v285
      %v288 = vsub.f32 %v271, %v285
      %v289 = vsub.f32 %v272, %v285
      %v290 = vsub.f32 %v273, %v285
      %v291 = vsub.f32 %v274, %v285
      %v292 = vsub.f32 %v275, %v285
      %v293 = vsub.f32 %v276, %v285
      %v294 = vsub.f32 %v277, %v285
      %v295 = vsub.f32 %v278, %v285
      %v296 = vsub.f32 %v279, %v285
      %v297 = vsub.f32 %v280, %v285
      %v298 = vsub.f32 %v281, %v285
      %v299 = vsub.f32 %v282, %v285
      %v300 = vsub.f32 %v283, %v285
      %v301 = vsub.f32 %v284, %v285
      %v302 = vstv %s268
      %v303 = vmul.f32 %v286, %v302
      %v304 = vmul.f32 %v287, %v302
      %v305 = vmul.f32 %v288, %v302
      %v306 = vmul.f32 %v289, %v302
      %v307 = vmul.f32 %v290, %v302
      %v308 = vmul.f32 %v291, %v302
      %v309 = vmul.f32 %v292, %v302
      %v310 = vmul.f32 %v293, %v302
      %v311 = vmul.f32 %v294, %v302
      %v312 = vmul.f32 %v295, %v302
      %v313 = vmul.f32 %v296, %v302
      %v314 = vmul.f32 %v297, %v302
      %v315 = vmul.f32 %v298, %v302
      %v316 = vmul.f32 %v299, %v302
      %v317 = vmul.f32 %v300, %v302
      %v318 = vmul.f32 %v301, %v302
      %v319 = vpack.c.bf16 %v304, %v303
      %v320 = vpack.c.bf16 %v306, %v305
      %v321 = vpack.c.bf16 %v308, %v307
      %v322 = vpack.c.bf16 %v310, %v309
      %v323 = vpack.c.bf16 %v312, %v311
      %v324 = vpack.c.bf16 %v314, %v313
      %v325 = vpack.c.bf16 %v316, %v315
      %v326 = vpack.c.bf16 %v318, %v317
      %v327 = vld [vmem:[%s2] sm:$0xf]
      %v328 = vld [vmem:[%s2 + $0x4] sm:$0x1]
      %v331 = vunpack.c.l.b16 %v327
      %v332 = vunpack.c.l.b16 %v328
      %v333 = vpack.c.b16 %v332, %v331
      %vm334 = vcmask 80896
      %v336 = vsel %vm334, %v319, 0
      %v339 = vsel %vm334, %v320, 0
      %v342 = vsel %vm334, %v321, 0
      %v345 = vsel %vm334, %v322, 0
      %v348 = vsel %vm334, %v323, 0
      %v351 = vsel %vm334, %v324, 0
      %v354 = vsel %vm334, %v325, 0
      %v357 = vsel %vm334, %v326, 0
      %vm359 = vcmask 1044480
      %v361 = vsel %vm359, %v333, 0
      %363 = vmatprep.subr.bf16.mxu0 0
      %364 = vmatpush1.bf16.msra.mxu0 %v361
      %365 = vmatprep.subr.bf16.mxu0 0
      %366 = vmatpush1.bf16.msra.mxu0 0
      %367 = vmatprep.subr.bf16.mxu0 0
      %368 = vmatpush1.bf16.msra.mxu0 0
      %369 = vmatprep.subr.bf16.mxu0 0
      %370 = vmatpush1.bf16.msra.mxu0 0
      %371 = vmatprep.subr.bf16.mxu0 0
      %372 = vmatpush1.bf16.msra.mxu0 0
      %373 = vmatprep.subr.bf16.mxu0 0
      %374 = vmatpush1.bf16.msra.mxu0 0
      %375 = vmatprep.subr.bf16.mxu0 0
      %376 = vmatpush1.bf16.msra.mxu0 0
      %377 = vmatprep.subr.bf16.mxu0 0
      %378 = vmatpush1.bf16.msra.mxu0 0
      %379 = vmatprep.subr.bf16.mxu0 0
      %380 = vmatpush1.bf16.msra.mxu0 0
      %381 = vmatprep.subr.bf16.mxu0 0
      %382 = vmatpush1.bf16.msra.mxu0 0
      %383 = vmatprep.subr.bf16.mxu0 0
      %384 = vmatpush1.bf16.msra.mxu0 0
      %385 = vmatprep.subr.bf16.mxu0 0
      %386 = vmatpush1.bf16.msra.mxu0 0
      %387 = vmatprep.subr.bf16.mxu0 0
      %388 = vmatpush1.bf16.msra.mxu0 0
      %389 = vmatprep.subr.bf16.mxu0 0
      %390 = vmatpush1.bf16.msra.mxu0 0
      %391 = vmatprep.subr.bf16.mxu0 0
      %392 = vmatpush1.bf16.msra.mxu0 0
      %393 = vmatprep.subr.bf16.mxu0 0
      %394 = vmatpush1.bf16.msra.mxu0 0
      %395 = vmatprep.mubr.bf16.mxu0 0
      %396 = vmatmul.mubr.bf16.gmra.mrb[0].mxu0 %v336
      %v397 = vpop.f32.mrb[0].mxu0
      %v398 = vadd.f32 0.0, %v397
      %v399 = vpop.f32.mrb[0].mxu0
      %v400 = vpop.f32.mrb[0].mxu0
      %v401 = vadd.f32 0.0, %v400
      %v402 = vpop.f32.mrb[0].mxu0
      %403 = vmatprep.mubr.bf16.mxu0 0
      %404 = vmatmul.mubr.bf16.gmra.mrb[0].mxu0 %v339
      %v405 = vpop.f32.mrb[0].mxu0
      %v406 = vadd.f32 0.0, %v405
      %v407 = vpop.f32.mrb[0].mxu0
      %v408 = vpop.f32.mrb[0].mxu0
      %v409 = vadd.f32 0.0, %v408
      %v410 = vpop.f32.mrb[0].mxu0
      %411 = vmatprep.mubr.bf16.mxu0 0
      %412 = vmatmul.mubr.bf16.gmra.mrb[0].mxu0 %v342
      %v413 = vpop.f32.mrb[0].mxu0
      %v414 = vadd.f32 0.0, %v413
      %v415 = vpop.f32.mrb[0].mxu0
      %v416 = vpop.f32.mrb[0].mxu0
      %v417 = vadd.f32 0.0, %v416
      %v418 = vpop.f32.mrb[0].mxu0
      %419 = vmatprep.mubr.bf16.mxu0 0
      %420 = vmatmul.mubr.bf16.gmra.mrb[0].mxu0 %v345
      %v421 = vpop.f32.mrb[0].mxu0
      %v422 = vadd.f32 0.0, %v421
      %v423 = vpop.f32.mrb[0].mxu0
      %v424 = vpop.f32.mrb[0].mxu0
      %v425 = vadd.f32 0.0, %v424
      %v426 = vpop.f32.mrb[0].mxu0
      %427 = vmatprep.mubr.bf16.mxu0 0
      %428 = vmatmul.mubr.bf16.gmra.mrb[0].mxu0 %v348
      %v429 = vpop.f32.mrb[0].mxu0
      %v430 = vadd.f32 0.0, %v429
      %v431 = vpop.f32.mrb[0].mxu0
      %v432 = vpop.f32.mrb[0].mxu0
      %v433 = vadd.f32 0.0, %v432
      %v434 = vpop.f32.mrb[0].mxu0
      %435 = vmatprep.mubr.bf16.mxu0 0
      %436 = vmatmul.mubr.bf16.gmra.mrb[0].mxu0 %v351
      %v437 = vpop.f32.mrb[0].mxu0
      %v438 = vadd.f32 0.0, %v437
      %v439 = vpop.f32.mrb[0].mxu0
      %v440 = vpop.f32.mrb[0].mxu0
      %v441 = vadd.f32 0.0, %v440
      %v442 = vpop.f32.mrb[0].mxu0
      %443 = vmatprep.mubr.bf16.mxu0 0
      %444 = vmatmul.mubr.bf16.gmra.mrb[0].mxu0 %v354
      %v445 = vpop.f32.mrb[0].mxu0
      %v446 = vadd.f32 0.0, %v445
      %v447 = vpop.f32.mrb[0].mxu0
      %v448 = vpop.f32.mrb[0].mxu0
      %v449 = vadd.f32 0.0, %v448
      %v450 = vpop.f32.mrb[0].mxu0
      %451 = vmatprep.mubr.bf16.mxu0 0
      %452 = vmatmul.mubr.bf16.gmra.mrb[0].mxu0 %v357
      %v453 = vpop.f32.mrb[0].mxu0
      %v454 = vadd.f32 0.0, %v453
      %v455 = vpop.f32.mrb[0].mxu0
      %v456 = vpop.f32.mrb[0].mxu0
      %v457 = vadd.f32 0.0, %v456
      %v458 = vpop.f32.mrb[0].mxu0
      %459 = vdwg.mxu0
      %v460 = vld [vmem:[%s3] sm:$0x1]
      %v461 = vld [vmem:[%s4] sm:$0x1]
      %462 = vadd.xlane.f32.xlu0 %v398
      %v463 = vpop.xlane.xlu0 %462
      %464 = vadd.xlane.f32.xlu0 %v401
      %v465 = vpop.xlane.xlu0 %464
      %466 = vadd.xlane.f32.xlu0 %v406
      %v467 = vpop.xlane.xlu0 %466
      %468 = vadd.xlane.f32.xlu0 %v409
      %v469 = vpop.xlane.xlu0 %468
      %470 = vadd.xlane.f32.xlu0 %v414
      %v471 = vpop.xlane.xlu0 %470
      %472 = vadd.xlane.f32.xlu0 %v417
      %v473 = vpop.xlane.xlu0 %472
      %474 = vadd.xlane.f32.xlu0 %v422
      %v475 = vpop.xlane.xlu0 %474
      %476 = vadd.xlane.f32.xlu0 %v425
      %v477 = vpop.xlane.xlu0 %476
      %478 = vadd.xlane.f32.xlu0 %v430
      %v479 = vpop.xlane.xlu0 %478
      %480 = vadd.xlane.f32.xlu0 %v433
      %v481 = vpop.xlane.xlu0 %480
      %482 = vadd.xlane.f32.xlu0 %v438
      %v483 = vpop.xlane.xlu0 %482
      %484 = vadd.xlane.f32.xlu0 %v441
      %v485 = vpop.xlane.xlu0 %484
      %486 = vadd.xlane.f32.xlu0 %v446
      %v487 = vpop.xlane.xlu0 %486
      %488 = vadd.xlane.f32.xlu0 %v449
      %v489 = vpop.xlane.xlu0 %488
      %490 = vadd.xlane.f32.xlu0 %v454
      %v491 = vpop.xlane.xlu0 %490
      %492 = vadd.xlane.f32.xlu0 %v457
      %v493 = vpop.xlane.xlu0 %492
      %v494 = vrcp.pop 128.0
      %v495 = vmul.f32 %v463, %v494
      %v496 = vmul.f32 %v465, %v494
      %v497 = vmul.f32 %v467, %v494
      %v498 = vmul.f32 %v469, %v494
      %v499 = vmul.f32 %v471, %v494
      %v500 = vmul.f32 %v473, %v494
      %v501 = vmul.f32 %v475, %v494
      %v502 = vmul.f32 %v477, %v494
      %v503 = vmul.f32 %v479, %v494
      %v504 = vmul.f32 %v481, %v494
      %v505 = vmul.f32 %v483, %v494
      %v506 = vmul.f32 %v485, %v494
      %v507 = vmul.f32 %v487, %v494
      %v508 = vmul.f32 %v489, %v494
      %v509 = vmul.f32 %v491, %v494
      %v510 = vmul.f32 %v493, %v494
      %v511 = vsub.f32 %v398, %v495
      %v512 = vsub.f32 %v401, %v496
      %v513 = vsub.f32 %v406, %v497
      %v514 = vsub.f32 %v409, %v498
      %v515 = vsub.f32 %v414, %v499
      %v516 = vsub.f32 %v417, %v500
      %v517 = vsub.f32 %v422, %v501
      %v518 = vsub.f32 %v425, %v502
      %v519 = vsub.f32 %v430, %v503
      %v520 = vsub.f32 %v433, %v504
      %v521 = vsub.f32 %v438, %v505
      %v522 = vsub.f32 %v441, %v506
      %v523 = vsub.f32 %v446, %v507
      %v524 = vsub.f32 %v449, %v508
      %v525 = vsub.f32 %v454, %v509
      %v526 = vsub.f32 %v457, %v510
      %v527 = vmul.f32 %v511, %v511
      %v528 = vmul.f32 %v512, %v512
      %v529 = vmul.f32 %v513, %v513
      %v530 = vmul.f32 %v514, %v514
      %v531 = vmul.f32 %v515, %v515
      %v532 = vmul.f32 %v516, %v516
      %v533 = vmul.f32 %v517, %v517
      %v534 = vmul.f32 %v518, %v518
      %v535 = vmul.f32 %v519, %v519
      %v536 = vmul.f32 %v520, %v520
      %v537 = vmul.f32 %v521, %v521
      %v538 = vmul.f32 %v522, %v522
      %v539 = vmul.f32 %v523, %v523
      %v540 = vmul.f32 %v524, %v524
      %v541 = vmul.f32 %v525, %v525
      %v542 = vmul.f32 %v526, %v526
      %543 = vadd.xlane.f32.xlu0 %v527
      %v544 = vpop.xlane.xlu0 %543
      %545 = vadd.xlane.f32.xlu0 %v528
      %v546 = vpop.xlane.xlu0 %545
      %547 = vadd.xlane.f32.xlu0 %v529
      %v548 = vpop.xlane.xlu0 %547
      %549 = vadd.xlane.f32.xlu0 %v530
      %v550 = vpop.xlane.xlu0 %549
      %551 = vadd.xlane.f32.xlu0 %v531
      %v552 = vpop.xlane.xlu0 %551
      %553 = vadd.xlane.f32.xlu0 %v532
      %v554 = vpop.xlane.xlu0 %553
      %555 = vadd.xlane.f32.xlu0 %v533
      %v556 = vpop.xlane.xlu0 %555
      %557 = vadd.xlane.f32.xlu0 %v534
      %v558 = vpop.xlane.xlu0 %557
      %559 = vadd.xlane.f32.xlu0 %v535
      %v560 = vpop.xlane.xlu0 %559
      %561 = vadd.xlane.f32.xlu0 %v536
      %v562 = vpop.xlane.xlu0 %561
      %563 = vadd.xlane.f32.xlu0 %v537
      %v564 = vpop.xlane.xlu0 %563
      %565 = vadd.xlane.f32.xlu0 %v538
      %v566 = vpop.xlane.xlu0 %565
      %567 = vadd.xlane.f32.xlu0 %v539
      %v568 = vpop.xlane.xlu0 %567
      %569 = vadd.xlane.f32.xlu0 %v540
      %v570 = vpop.xlane.xlu0 %569
      %571 = vadd.xlane.f32.xlu0 %v541
      %v572 = vpop.xlane.xlu0 %571
      %573 = vadd.xlane.f32.xlu0 %v542
      %v574 = vpop.xlane.xlu0 %573
      %v575 = vmul.f32 %v544, %v494
      %v576 = vmul.f32 %v546, %v494
      %v577 = vmul.f32 %v548, %v494
      %v578 = vmul.f32 %v550, %v494
      %v579 = vmul.f32 %v552, %v494
      %v580 = vmul.f32 %v554, %v494
      %v581 = vmul.f32 %v556, %v494
      %v582 = vmul.f32 %v558, %v494
      %v583 = vmul.f32 %v560, %v494
      %v584 = vmul.f32 %v562, %v494
      %v585 = vmul.f32 %v564, %v494
      %v586 = vmul.f32 %v566, %v494
      %v587 = vmul.f32 %v568, %v494
      %v588 = vmul.f32 %v570, %v494
      %v589 = vmul.f32 %v572, %v494
      %v590 = vmul.f32 %v574, %v494
      %v591 = vadd.f32 %v575, 1e-05
      %v592 = vadd.f32 %v576, 1e-05
      %v593 = vadd.f32 %v577, 1e-05
      %v594 = vadd.f32 %v578, 1e-05
      %v595 = vadd.f32 %v579, 1e-05
      %v596 = vadd.f32 %v580, 1e-05
      %v597 = vadd.f32 %v581, 1e-05
      %v598 = vadd.f32 %v582, 1e-05
      %v599 = vadd.f32 %v583, 1e-05
      %v600 = vadd.f32 %v584, 1e-05
      %v601 = vadd.f32 %v585, 1e-05
      %v602 = vadd.f32 %v586, 1e-05
      %v603 = vadd.f32 %v587, 1e-05
      %v604 = vadd.f32 %v588, 1e-05
      %v605 = vadd.f32 %v589, 1e-05
      %v606 = vadd.f32 %v590, 1e-05
      %v607 = vrsqrt.pop %v591
      %v608 = vrsqrt.pop %v592
      %v609 = vrsqrt.pop %v593
      %v610 = vrsqrt.pop %v594
      %v611 = vrsqrt.pop %v595
      %v612 = vrsqrt.pop %v596
      %v613 = vrsqrt.pop %v597
      %v614 = vrsqrt.pop %v598
      %v615 = vrsqrt.pop %v599
      %v616 = vrsqrt.pop %v600
      %v617 = vrsqrt.pop %v601
      %v618 = vrsqrt.pop %v602
      %v619 = vrsqrt.pop %v603
      %v620 = vrsqrt.pop %v604
      %v621 = vrsqrt.pop %v605
      %v622 = vrsqrt.pop %v606
      %v623 = vmul.f32 %v511, %v607
      %v624 = vmul.f32 %v512, %v608
      %v625 = vmul.f32 %v513, %v609
      %v626 = vmul.f32 %v514, %v610
      %v627 = vmul.f32 %v515, %v611
      %v628 = vmul.f32 %v516, %v612
      %v629 = vmul.f32 %v517, %v613
      %v630 = vmul.f32 %v518, %v614
      %v631 = vmul.f32 %v519, %v615
      %v632 = vmul.f32 %v520, %v616
      %v633 = vmul.f32 %v521, %v617
      %v634 = vmul.f32 %v522, %v618
      %v635 = vmul.f32 %v523, %v619
      %v636 = vmul.f32 %v524, %v620
      %v637 = vmul.f32 %v525, %v621
      %v638 = vmul.f32 %v526, %v622
      %v640 = vlaneseq
      %v641 = vshrl.u32 %v640, 7
      %v642 = vsub.s32 0, %v641
      %v643 = vrot.slane %v460, %v642
      %v645 = vmul.f32 %v623, %v643
      %v646 = vmul.f32 %v624, %v643
      %v647 = vmul.f32 %v625, %v643
      %v648 = vmul.f32 %v626, %v643
      %v649 = vmul.f32 %v627, %v643
      %v650 = vmul.f32 %v628, %v643
      %v651 = vmul.f32 %v629, %v643
      %v652 = vmul.f32 %v630, %v643
      %v653 = vmul.f32 %v631, %v643
      %v654 = vmul.f32 %v632, %v643
      %v655 = vmul.f32 %v633, %v643
      %v656 = vmul.f32 %v634, %v643
      %v657 = vmul.f32 %v635, %v643
      %v658 = vmul.f32 %v636, %v643
      %v659 = vmul.f32 %v637, %v643
      %v660 = vmul.f32 %v638, %v643
      %v662 = vlaneseq
      %v663 = vshrl.u32 %v662, 7
      %v664 = vsub.s32 0, %v663
      %v665 = vrot.slane %v461, %v664
      %v667 = vadd.f32 %v645, %v665
      %v668 = vadd.f32 %v646, %v665
      %v669 = vadd.f32 %v647, %v665
      %v670 = vadd.f32 %v648, %v665
      %v671 = vadd.f32 %v649, %v665
      %v672 = vadd.f32 %v650, %v665
      %v673 = vadd.f32 %v651, %v665
      %v674 = vadd.f32 %v652, %v665
      %v675 = vadd.f32 %v653, %v665
      %v676 = vadd.f32 %v654, %v665
      %v677 = vadd.f32 %v655, %v665
      %v678 = vadd.f32 %v656, %v665
      %v679 = vadd.f32 %v657, %v665
      %v680 = vadd.f32 %v658, %v665
      %v681 = vadd.f32 %v659, %v665
      %v682 = vadd.f32 %v660, %v665
      %v683 = vmul.f32 %v667, %v667
      %v684 = vmul.f32 %v668, %v668
      %v685 = vmul.f32 %v669, %v669
      %v686 = vmul.f32 %v670, %v670
      %v687 = vmul.f32 %v671, %v671
      %v688 = vmul.f32 %v672, %v672
      %v689 = vmul.f32 %v673, %v673
      %v690 = vmul.f32 %v674, %v674
      %v691 = vmul.f32 %v675, %v675
      %v692 = vmul.f32 %v676, %v676
      %v693 = vmul.f32 %v677, %v677
      %v694 = vmul.f32 %v678, %v678
      %v695 = vmul.f32 %v679, %v679
      %v696 = vmul.f32 %v680, %v680
      %v697 = vmul.f32 %v681, %v681
      %v698 = vmul.f32 %v682, %v682
      %v699 = vmul.f32 %v667, %v683
      %v700 = vmul.f32 %v668, %v684
      %v701 = vmul.f32 %v669, %v685
      %v702 = vmul.f32 %v670, %v686
      %v703 = vmul.f32 %v671, %v687
      %v704 = vmul.f32 %v672, %v688
      %v705 = vmul.f32 %v673, %v689
      %v706 = vmul.f32 %v674, %v690
      %v707 = vmul.f32 %v675, %v691
      %v708 = vmul.f32 %v676, %v692
      %v709 = vmul.f32 %v677, %v693
      %v710 = vmul.f32 %v678, %v694
      %v711 = vmul.f32 %v679, %v695
      %v712 = vmul.f32 %v680, %v696
      %v713 = vmul.f32 %v681, %v697
      %v714 = vmul.f32 %v682, %v698
      %v715 = vmul.f32 %v699, 0.044715
      %v716 = vmul.f32 %v700, 0.044715
      %v717 = vmul.f32 %v701, 0.044715
      %v718 = vmul.f32 %v702, 0.044715
      %v719 = vmul.f32 %v703, 0.044715
      %v720 = vmul.f32 %v704, 0.044715
      %v721 = vmul.f32 %v705, 0.044715
      %v722 = vmul.f32 %v706, 0.044715
      %v723 = vmul.f32 %v707, 0.044715
      %v724 = vmul.f32 %v708, 0.044715
      %v725 = vmul.f32 %v709, 0.044715
      %v726 = vmul.f32 %v710, 0.044715
      %v727 = vmul.f32 %v711, 0.044715
      %v728 = vmul.f32 %v712, 0.044715
      %v729 = vmul.f32 %v713, 0.044715
      %v730 = vmul.f32 %v714, 0.044715
      %v731 = vadd.f32 %v667, %v715
      %v732 = vadd.f32 %v668, %v716
      %v733 = vadd.f32 %v669, %v717
      %v734 = vadd.f32 %v670, %v718
      %v735 = vadd.f32 %v671, %v719
      %v736 = vadd.f32 %v672, %v720
      %v737 = vadd.f32 %v673, %v721
      %v738 = vadd.f32 %v674, %v722
      %v739 = vadd.f32 %v675, %v723
      %v740 = vadd.f32 %v676, %v724
      %v741 = vadd.f32 %v677, %v725
      %v742 = vadd.f32 %v678, %v726
      %v743 = vadd.f32 %v679, %v727
      %v744 = vadd.f32 %v680, %v728
      %v745 = vadd.f32 %v681, %v729
      %v746 = vadd.f32 %v682, %v730
      %v747 = vmul.f32 %v731, 0.7978846
      %v748 = vmul.f32 %v732, 0.7978846
      %v749 = vmul.f32 %v733, 0.7978846
      %v750 = vmul.f32 %v734, 0.7978846
      %v751 = vmul.f32 %v735, 0.7978846
      %v752 = vmul.f32 %v736, 0.7978846
      %v753 = vmul.f32 %v737, 0.7978846
      %v754 = vmul.f32 %v738, 0.7978846
      %v755 = vmul.f32 %v739, 0.7978846
      %v756 = vmul.f32 %v740, 0.7978846
      %v757 = vmul.f32 %v741, 0.7978846
      %v758 = vmul.f32 %v742, 0.7978846
      %v759 = vmul.f32 %v743, 0.7978846
      %v760 = vmul.f32 %v744, 0.7978846
      %v761 = vmul.f32 %v745, 0.7978846
      %v762 = vmul.f32 %v746, 0.7978846
      %v763 = vtanh.pop %v747
      %v764 = vtanh.pop %v748
      %v765 = vtanh.pop %v749
      %v766 = vtanh.pop %v750
      %v767 = vtanh.pop %v751
      %v768 = vtanh.pop %v752
      %v769 = vtanh.pop %v753
      %v770 = vtanh.pop %v754
      %v771 = vtanh.pop %v755
      %v772 = vtanh.pop %v756
      %v773 = vtanh.pop %v757
      %v774 = vtanh.pop %v758
      %v775 = vtanh.pop %v759
      %v776 = vtanh.pop %v760
      %v777 = vtanh.pop %v761
      %v778 = vtanh.pop %v762
      %v779 = vadd.f32 %v763, 1.0
      %v780 = vadd.f32 %v764, 1.0
      %v781 = vadd.f32 %v765, 1.0
      %v782 = vadd.f32 %v766, 1.0
      %v783 = vadd.f32 %v767, 1.0
      %v784 = vadd.f32 %v768, 1.0
      %v785 = vadd.f32 %v769, 1.0
      %v786 = vadd.f32 %v770, 1.0
      %v787 = vadd.f32 %v771, 1.0
      %v788 = vadd.f32 %v772, 1.0
      %v789 = vadd.f32 %v773, 1.0
      %v790 = vadd.f32 %v774, 1.0
      %v791 = vadd.f32 %v775, 1.0
      %v792 = vadd.f32 %v776, 1.0
      %v793 = vadd.f32 %v777, 1.0
      %v794 = vadd.f32 %v778, 1.0
      %v795 = vmul.f32 %v779, 0.5
      %v796 = vmul.f32 %v780, 0.5
      %v797 = vmul.f32 %v781, 0.5
      %v798 = vmul.f32 %v782, 0.5
      %v799 = vmul.f32 %v783, 0.5
      %v800 = vmul.f32 %v784, 0.5
      %v801 = vmul.f32 %v785, 0.5
      %v802 = vmul.f32 %v786, 0.5
      %v803 = vmul.f32 %v787, 0.5
      %v804 = vmul.f32 %v788, 0.5
      %v805 = vmul.f32 %v789, 0.5
      %v806 = vmul.f32 %v790, 0.5
      %v807 = vmul.f32 %v791, 0.5
      %v808 = vmul.f32 %v792, 0.5
      %v809 = vmul.f32 %v793, 0.5
      %v810 = vmul.f32 %v794, 0.5
      %v811 = vmul.f32 %v667, %v795
      %v812 = vmul.f32 %v668, %v796
      %v813 = vmul.f32 %v669, %v797
      %v814 = vmul.f32 %v670, %v798
      %v815 = vmul.f32 %v671, %v799
      %v816 = vmul.f32 %v672, %v800
      %v817 = vmul.f32 %v673, %v801
      %v818 = vmul.f32 %v674, %v802
      %v819 = vmul.f32 %v675, %v803
      %v820 = vmul.f32 %v676, %v804
      %v821 = vmul.f32 %v677, %v805
      %v822 = vmul.f32 %v678, %v806
      %v823 = vmul.f32 %v679, %v807
      %v824 = vmul.f32 %v680, %v808
      %v825 = vmul.f32 %v681, %v809
      %v826 = vmul.f32 %v682, %v810
      %827 = vst [vmem:[%s226] sm:$0xff] %v811
      %828 = vst [vmem:[%s226 + $0x8] sm:$0xff] %v812
      %829 = vst [vmem:[%s226 + $0x10] sm:$0xff] %v813
      %830 = vst [vmem:[%s226 + $0x18] sm:$0xff] %v814
      %831 = vst [vmem:[%s226 + $0x20] sm:$0xff] %v815
      %832 = vst [vmem:[%s226 + $0x28] sm:$0xff] %v816
      %833 = vst [vmem:[%s226 + $0x30] sm:$0xff] %v817
      %834 = vst [vmem:[%s226 + $0x38] sm:$0xff] %v818
      %835 = vst [vmem:[%s226 + $0x40] sm:$0xff] %v819
      %836 = vst [vmem:[%s226 + $0x48] sm:$0xff] %v820
      %837 = vst [vmem:[%s226 + $0x50] sm:$0xff] %v821
      %838 = vst [vmem:[%s226 + $0x58] sm:$0xff] %v822
      %839 = vst [vmem:[%s226 + $0x60] sm:$0xff] %v823
      %840 = vst [vmem:[%s226 + $0x68] sm:$0xff] %v824
      %841 = vst [vmem:[%s226 + $0x70] sm:$0xff] %v825
      %842 = vst [vmem:[%s226 + $0x78] sm:$0xff] %v826
      %s843 = smul.u32 16, %s16
      %p844 = scmp.lt.s32.totalorder %s843, 31
      %s845 = scalar_select %p844, %s843, 31
      %s846 = smul.addr %s845, 8
      %s847 = scalar_lea.vmem %s5, %s846
      // Predicated region
      $region41: #{_lambda_.8} parent=39 // pred_check
        %p848 = pneg %p144
      $region42: #{_lambda_.8} parent=39 // pred_check_branch
        %850 = sbr.rel (%p848) target = $region44
      $region43: #{_lambda_.8} parent=39 // pred_region
        %s851 = smul.u32 16, %s16
      $region44: #{_lambda_.8} parent=39 // pred_fallthru
        _
    $region40: #{_lambda_.8} parent=5 // pred_fallthru
      _
    %p852 = scmp.le.s32.totalorder 2, %s11
    // Predicated region
    $region45: #{_lambda_.8} parent=5 // pred_check
      %p853 = pneg %p852
    $region46: #{_lambda_.8} parent=5 // pred_check_branch
      %855 = sbr.rel (%p853) target = $region48
    $region47: #{_lambda_.8} parent=5 // pred_region
      %s856 = ssub.s32 %s11, 2
      // Predicated region
      $region49: #{_lambda_.8} parent=47 // pred_check
        %p857 = pneg %p150
      $region50: #{_lambda_.8} parent=47 // pred_check_branch
        %859 = sbr.rel (%p857) target = $region52
      $region51: #{_lambda_.8} parent=47 // pred_region
        %s860 = smul.u32 16, %s17
        %p861 = scmp.lt.s32.totalorder %s860, 31
        %s862 = scalar_select %p861, %s860, 31
        %s863 = smul.addr %s862, 8
        %s864 = scalar_lea.vmem %s5, %s863
      $region52: #{_lambda_.8} parent=47 // pred_fallthru
        _
    $region48: #{_lambda_.8} parent=5 // pred_fallthru
      _
  $region6: #{_lambda_.8} parent=0 // loop_footer
    %s15 = sadd.s32 1, %s11
  $region7: #{_lambda_.8} parent=0 // loop_footer_branch
    %10 = sbr.rel target = $region3
  $region8: #{_lambda_.8} parent=0 // loop_exit
    _

// kernel: _lambda_.9
$region0: #{_lambda_.9}
  #allocation0 [shape = 'u32[]', space=smem, size = 0x4, offset = 0x4, fixed_abs, tag = 'smem constant byte address 0x4 - core index']
  #allocation1 [shape = 'u32[144,128]{1,0:T(1,128)}', space=vmem, size = 0x12000, scoped, tag = 'internal scratch']
  %s0 = inlined_call_operand.vmem [shape: f32[80,384], index: 0, kind: input, shape index: {}]
  %s1 = inlined_call_operand.vmem [shape: bf16[384,128], index: 1, kind: input, shape index: {}]
  %s2 = inlined_call_operand.vmem [shape: f32[1,128], index: 2, kind: input, shape index: {}]
  %s3 = inlined_call_operand.vmem [shape: f32[1,128], index: 3, kind: input, shape index: {}]
  %s4 = inlined_call_operand.vmem [shape: f32[80,128], index: 4, kind: output, shape index: {}]
  %s5 = sld [smem:[#allocation0]]
  $region26: #{_lambda_.9} parent=0
    _
  %s7 = ssub.s32 1, %s5
  %s8 = scalar_select 0, %s7, %s5
  // Predicated region
  $region2: #{_lambda_.9} parent=0 // pred_check
    _
  $region3: #{_lambda_.9} parent=0 // pred_check_branch
    %10 = sbr.rel (0) target = $region5
  $region4: #{_lambda_.9} parent=0 // pred_region
    _
  $region5: #{_lambda_.9} parent=0 // pred_fallthru
    _
  // Predicated region
  $region6: #{_lambda_.9} parent=0 // pred_check
    _
  $region7: #{_lambda_.9} parent=0 // pred_check_branch
    %12 = sbr.rel (0) target = $region9
  $region8: #{_lambda_.9} parent=0 // pred_region
    _
  $region9: #{_lambda_.9} parent=0 // pred_fallthru
    _
  // Predicated region
  $region10: #{_lambda_.9} parent=0 // pred_check
    _
  $region11: #{_lambda_.9} parent=0 // pred_check_branch
    %14 = sbr.rel (0) target = $region13
  $region12: #{_lambda_.9} parent=0 // pred_region
    _
  $region13: #{_lambda_.9} parent=0 // pred_fallthru
    _
  // Predicated region
  $region14: #{_lambda_.9} parent=0 // pred_check
    _
  $region15: #{_lambda_.9} parent=0 // pred_check_branch
    %16 = sbr.rel (0) target = $region17
  $region16: #{_lambda_.9} parent=0 // pred_region
    _
  $region17: #{_lambda_.9} parent=0 // pred_fallthru
    _
  %v18 = vld [vmem:[%s0] sm:$0xff]
  %v19 = vld [vmem:[%s0 + $0x8] sm:$0xff]
  %v20 = vld [vmem:[%s0 + $0x10] sm:$0xff]
  %v21 = vld [vmem:[%s0 + $0x18] sm:$0xff]
  %v22 = vld [vmem:[%s0 + $0x20] sm:$0xff]
  %v23 = vld [vmem:[%s0 + $0x28] sm:$0xff]
  %v24 = vld [vmem:[%s0 + $0x30] sm:$0xff]
  %v25 = vld [vmem:[%s0 + $0x38] sm:$0xff]
  %v26 = vld [vmem:[%s0 + $0x40] sm:$0xff]
  %v27 = vld [vmem:[%s0 + $0x48] sm:$0xff]
  %v28 = vld [vmem:[%s0 + $0x50] sm:$0xff]
  %v29 = vld [vmem:[%s0 + $0x58] sm:$0xff]
  %v30 = vld [vmem:[%s0 + $0x60] sm:$0xff]
  %v31 = vld [vmem:[%s0 + $0x68] sm:$0xff]
  %v32 = vld [vmem:[%s0 + $0x70] sm:$0xff]
  %v33 = vld [vmem:[%s0 + $0x78] sm:$0xff]
  %v34 = vld [vmem:[%s0 + $0x80] sm:$0xff]
  %v35 = vld [vmem:[%s0 + $0x88] sm:$0xff]
  %v36 = vld [vmem:[%s0 + $0x90] sm:$0xff]
  %v37 = vld [vmem:[%s0 + $0x98] sm:$0xff]
  %v38 = vld [vmem:[%s0 + $0xa0] sm:$0xff]
  %v39 = vld [vmem:[%s0 + $0xa8] sm:$0xff]
  %v40 = vld [vmem:[%s0 + $0xb0] sm:$0xff]
  %v41 = vld [vmem:[%s0 + $0xb8] sm:$0xff]
  %v42 = vld [vmem:[%s0 + $0xc0] sm:$0xff]
  %v43 = vld [vmem:[%s0 + $0xc8] sm:$0xff]
  %v44 = vld [vmem:[%s0 + $0xd0] sm:$0xff]
  %v45 = vld [vmem:[%s0 + $0xd8] sm:$0xff]
  %v46 = vld [vmem:[%s0 + $0xe0] sm:$0xff]
  %v47 = vld [vmem:[%s0 + $0xe8] sm:$0xff]
  %v48 = vpack.c.bf16 %v21, %v18
  %v49 = vpack.c.bf16 %v22, %v19
  %v50 = vpack.c.bf16 %v23, %v20
  %v51 = vpack.c.bf16 %v27, %v24
  %v52 = vpack.c.bf16 %v28, %v25
  %v53 = vpack.c.bf16 %v29, %v26
  %v54 = vpack.c.bf16 %v33, %v30
  %v55 = vpack.c.bf16 %v34, %v31
  %v56 = vpack.c.bf16 %v35, %v32
  %v57 = vpack.c.bf16 %v39, %v36
  %v58 = vpack.c.bf16 %v40, %v37
  %v59 = vpack.c.bf16 %v41, %v38
  %v60 = vpack.c.bf16 %v45, %v42
  %v61 = vpack.c.bf16 %v46, %v43
  %v62 = vpack.c.bf16 %v47, %v44
  %v63 = vld [vmem:[%s1] sm:$0xf]
  %v64 = vld [vmem:[%s1 + $0x4] sm:$0xf]
  %v65 = vld [vmem:[%s1 + $0x8] sm:$0xf]
  %v66 = vld [vmem:[%s1 + $0xc] sm:$0xf]
  %v67 = vld [vmem:[%s1 + $0x10] sm:$0xf]
  %v68 = vld [vmem:[%s1 + $0x14] sm:$0xf]
  %v69 = vld [vmem:[%s1 + $0x18] sm:$0xf]
  %v70 = vld [vmem:[%s1 + $0x1c] sm:$0xf]
  %v71 = vld [vmem:[%s1 + $0x20] sm:$0xf]
  %v72 = vld [vmem:[%s1 + $0x24] sm:$0xf]
  %v73 = vld [vmem:[%s1 + $0x28] sm:$0xf]
  %v74 = vld [vmem:[%s1 + $0x2c] sm:$0xf]
  %v75 = vld [vmem:[%s1 + $0x30] sm:$0xf]
  %v76 = vld [vmem:[%s1 + $0x34] sm:$0xf]
  %v77 = vld [vmem:[%s1 + $0x38] sm:$0xf]
  %v78 = vld [vmem:[%s1 + $0x3c] sm:$0xf]
  %v79 = vld [vmem:[%s1 + $0x40] sm:$0xf]
  %v80 = vld [vmem:[%s1 + $0x44] sm:$0xf]
  %v81 = vld [vmem:[%s1 + $0x48] sm:$0xf]
  %v82 = vld [vmem:[%s1 + $0x4c] sm:$0xf]
  %v83 = vld [vmem:[%s1 + $0x50] sm:$0xf]
  %v84 = vld [vmem:[%s1 + $0x54] sm:$0xf]
  %v85 = vld [vmem:[%s1 + $0x58] sm:$0xf]
  %v86 = vld [vmem:[%s1 + $0x5c] sm:$0xf]
  %v87 = vld [vmem:[%s1 + $0x60] sm:$0xf]
  %v88 = vld [vmem:[%s1 + $0x64] sm:$0xf]
  %v89 = vld [vmem:[%s1 + $0x68] sm:$0xf]
  %v90 = vld [vmem:[%s1 + $0x6c] sm:$0xf]
  %v91 = vld [vmem:[%s1 + $0x70] sm:$0xf]
  %v92 = vld [vmem:[%s1 + $0x74] sm:$0xf]
  %v93 = vld [vmem:[%s1 + $0x78] sm:$0xf]
  %v94 = vld [vmem:[%s1 + $0x7c] sm:$0xf]
  %v95 = vld [vmem:[%s1 + $0x80] sm:$0xf]
  %v96 = vld [vmem:[%s1 + $0x84] sm:$0xf]
  %v97 = vld [vmem:[%s1 + $0x88] sm:$0xf]
  %v98 = vld [vmem:[%s1 + $0x8c] sm:$0xf]
  %v99 = vld [vmem:[%s1 + $0x90] sm:$0xf]
  %v100 = vld [vmem:[%s1 + $0x94] sm:$0xf]
  %v101 = vld [vmem:[%s1 + $0x98] sm:$0xf]
  %v102 = vld [vmem:[%s1 + $0x9c] sm:$0xf]
  %v103 = vld [vmem:[%s1 + $0xa0] sm:$0xf]
  %v104 = vld [vmem:[%s1 + $0xa4] sm:$0xf]
  %v105 = vld [vmem:[%s1 + $0xa8] sm:$0xf]
  %v106 = vld [vmem:[%s1 + $0xac] sm:$0xf]
  %v107 = vld [vmem:[%s1 + $0xb0] sm:$0xf]
  %v108 = vld [vmem:[%s1 + $0xb4] sm:$0xf]
  %v109 = vld [vmem:[%s1 + $0xb8] sm:$0xf]
  %v110 = vld [vmem:[%s1 + $0xbc] sm:$0xf]
  %v159 = vunpack.c.l.b16 %v63
  %v160 = vunpack.c.l.b16 %v64
  %v161 = vunpack.c.l.b16 %v65
  %v162 = vunpack.c.l.b16 %v66
  %v163 = vunpack.c.l.b16 %v67
  %v164 = vunpack.c.l.b16 %v68
  %v165 = vunpack.c.l.b16 %v69
  %v166 = vunpack.c.l.b16 %v70
  %v167 = vunpack.c.l.b16 %v71
  %v168 = vunpack.c.l.b16 %v72
  %v169 = vunpack.c.l.b16 %v73
  %v170 = vunpack.c.l.b16 %v74
  %v171 = vunpack.c.l.b16 %v75
  %v172 = vunpack.c.l.b16 %v76
  %v173 = vunpack.c.l.b16 %v77
  %v174 = vunpack.c.l.b16 %v78
  %v175 = vunpack.c.l.b16 %v79
  %v176 = vunpack.c.l.b16 %v80
  %v177 = vunpack.c.l.b16 %v81
  %v178 = vunpack.c.l.b16 %v82
  %v179 = vunpack.c.l.b16 %v83
  %v180 = vunpack.c.l.b16 %v84
  %v181 = vunpack.c.l.b16 %v85
  %v182 = vunpack.c.l.b16 %v86
  %v183 = vunpack.c.l.b16 %v87
  %v184 = vunpack.c.l.b16 %v88
  %v185 = vunpack.c.l.b16 %v89
  %v186 = vunpack.c.l.b16 %v90
  %v187 = vunpack.c.l.b16 %v91
  %v188 = vunpack.c.l.b16 %v92
  %v189 = vunpack.c.l.b16 %v93
  %v190 = vunpack.c.l.b16 %v94
  %v191 = vunpack.c.l.b16 %v95
  %v192 = vunpack.c.l.b16 %v96
  %v193 = vunpack.c.l.b16 %v97
  %v194 = vunpack.c.l.b16 %v98
  %v195 = vunpack.c.l.b16 %v99
  %v196 = vunpack.c.l.b16 %v100
  %v197 = vunpack.c.l.b16 %v101
  %v198 = vunpack.c.l.b16 %v102
  %v199 = vunpack.c.l.b16 %v103
  %v200 = vunpack.c.l.b16 %v104
  %v201 = vunpack.c.l.b16 %v105
  %v202 = vunpack.c.l.b16 %v106
  %v203 = vunpack.c.l.b16 %v107
  %v204 = vunpack.c.l.b16 %v108
  %v205 = vunpack.c.l.b16 %v109
  %v206 = vunpack.c.l.b16 %v110
  %v207 = vpack.c.b16 %v160, %v159
  %v208 = vpack.c.b16 %v162, %v161
  %v209 = vpack.c.b16 %v164, %v163
  %v210 = vpack.c.b16 %v166, %v165
  %v211 = vpack.c.b16 %v168, %v167
  %v212 = vpack.c.b16 %v170, %v169
  %v213 = vpack.c.b16 %v172, %v171
  %v214 = vpack.c.b16 %v174, %v173
  %v215 = vpack.c.b16 %v176, %v175
  %v216 = vpack.c.b16 %v178, %v177
  %v217 = vpack.c.b16 %v180, %v179
  %v218 = vpack.c.b16 %v182, %v181
  %v219 = vpack.c.b16 %v184, %v183
  %v220 = vpack.c.b16 %v186, %v185
  %v221 = vpack.c.b16 %v188, %v187
  %v222 = vpack.c.b16 %v190, %v189
  %v223 = vpack.c.b16 %v192, %v191
  %v224 = vpack.c.b16 %v194, %v193
  %v225 = vpack.c.b16 %v196, %v195
  %v226 = vpack.c.b16 %v198, %v197
  %v227 = vpack.c.b16 %v200, %v199
  %v228 = vpack.c.b16 %v202, %v201
  %v229 = vpack.c.b16 %v204, %v203
  %v230 = vpack.c.b16 %v206, %v205
  %255 = vmatprep.subr.bf16.mxu0 0
  %256 = vmatpush1.bf16.msra.mxu0 %v207
  %257 = vmatprep.subr.bf16.mxu0 0
  %258 = vmatpush1.bf16.msra.mxu0 %v208
  %259 = vmatprep.subr.bf16.mxu0 0
  %260 = vmatpush1.bf16.msra.mxu0 %v209
  %261 = vmatprep.subr.bf16.mxu0 0
  %262 = vmatpush1.bf16.msra.mxu0 %v210
  %263 = vmatprep.subr.bf16.mxu0 0
  %264 = vmatpush1.bf16.msra.mxu0 %v211
  %265 = vmatprep.subr.bf16.mxu0 0
  %266 = vmatpush1.bf16.msra.mxu0 %v212
  %267 = vmatprep.subr.bf16.mxu0 0
  %268 = vmatpush1.bf16.msra.mxu0 %v213
  %269 = vmatprep.subr.bf16.mxu0 0
  %270 = vmatpush1.bf16.msra.mxu0 %v214
  %271 = vmatprep.subr.bf16.mxu0 0
  %272 = vmatpush1.bf16.msra.mxu0 %v215
  %273 = vmatprep.subr.bf16.mxu0 0
  %274 = vmatpush1.bf16.msra.mxu0 %v216
  %275 = vmatprep.subr.bf16.mxu0 0
  %276 = vmatpush1.bf16.msra.mxu0 %v217
  %277 = vmatprep.subr.bf16.mxu0 0
  %278 = vmatpush1.bf16.msra.mxu0 %v218
  %279 = vmatprep.subr.bf16.mxu0 0
  %280 = vmatpush1.bf16.msra.mxu0 %v219
  %281 = vmatprep.subr.bf16.mxu0 0
  %282 = vmatpush1.bf16.msra.mxu0 %v220
  %283 = vmatprep.subr.bf16.mxu0 0
  %284 = vmatpush1.bf16.msra.mxu0 %v221
  %285 = vmatprep.subr.bf16.mxu0 0
  %286 = vmatpush1.bf16.msra.mxu0 %v222
  %287 = vmatprep.mubr.bf16.mxu0 %v49
  %288 = vmatmul.mubr.bf16.gmra.mrb[0].mxu0 %v48
  %v289 = vpop.f32.mrb[0].mxu0
  %v290 = vadd.f32 0.0, %v289
  %v291 = vpop.f32.mrb[0].mxu0
  %v292 = vpop.f32.mrb[0].mxu0
  %v293 = vadd.f32 0.0, %v292
  %v294 = vpop.f32.mrb[0].mxu0
  %295 = vmatprep.mubr.bf16.mxu0 %v52
  %296 = vmatmul.mubr.bf16.gmra.mrb[0].mxu0 %v51
  %v297 = vpop.f32.mrb[0].mxu0
  %v298 = vadd.f32 0.0, %v297
  %v299 = vpop.f32.mrb[0].mxu0
  %v300 = vpop.f32.mrb[0].mxu0
  %v301 = vadd.f32 0.0, %v300
  %v302 = vpop.f32.mrb[0].mxu0
  %303 = vmatprep.mubr.bf16.mxu0 %v55
  %304 = vmatmul.mubr.bf16.gmra.mrb[0].mxu0 %v54
  %v305 = vpop.f32.mrb[0].mxu0
  %v306 = vadd.f32 0.0, %v305
  %v307 = vpop.f32.mrb[0].mxu0
  %v308 = vpop.f32.mrb[0].mxu0
  %v309 = vadd.f32 0.0, %v308
  %v310 = vpop.f32.mrb[0].mxu0
  %311 = vmatprep.mubr.bf16.mxu0 %v58
  %312 = vmatmul.mubr.bf16.gmra.mrb[0].mxu0 %v57
  %v313 = vpop.f32.mrb[0].mxu0
  %v314 = vadd.f32 0.0, %v313
  %v315 = vpop.f32.mrb[0].mxu0
  %v316 = vpop.f32.mrb[0].mxu0
  %v317 = vadd.f32 0.0, %v316
  %v318 = vpop.f32.mrb[0].mxu0
  %319 = vmatprep.mubr.bf16.mxu0 %v61
  %320 = vmatmul.mubr.bf16.gmra.mrb[0].mxu0 %v60
  %v321 = vpop.f32.mrb[0].mxu0
  %v322 = vadd.f32 0.0, %v321
  %v323 = vpop.f32.mrb[0].mxu0
  %v324 = vpop.f32.mrb[0].mxu0
  %v325 = vadd.f32 0.0, %v324
  %v326 = vpop.f32.mrb[0].mxu0
  %327 = vdwg.mxu0
  %328 = vmatprep.subr.bf16.mxu0 0
  %329 = vmatpush1.bf16.msra.mxu0 %v223
  %330 = vmatprep.subr.bf16.mxu0 0
  %331 = vmatpush1.bf16.msra.mxu0 %v224
  %332 = vmatprep.subr.bf16.mxu0 0
  %333 = vmatpush1.bf16.msra.mxu0 %v225
  %334 = vmatprep.subr.bf16.mxu0 0
  %335 = vmatpush1.bf16.msra.mxu0 %v226
  %336 = vmatprep.subr.bf16.mxu0 0
  %337 = vmatpush1.bf16.msra.mxu0 %v227
  %338 = vmatprep.subr.bf16.mxu0 0
  %339 = vmatpush1.bf16.msra.mxu0 %v228
  %340 = vmatprep.subr.bf16.mxu0 0
  %341 = vmatpush1.bf16.msra.mxu0 %v229
  %342 = vmatprep.subr.bf16.mxu0 0
  %343 = vmatpush1.bf16.msra.mxu0 %v230
  %344 = vmatprep.subr.bf16.mxu0 0
  %345 = vmatpush1.bf16.msra.mxu0 0
  %346 = vmatprep.subr.bf16.mxu0 0
  %347 = vmatpush1.bf16.msra.mxu0 0
  %348 = vmatprep.subr.bf16.mxu0 0
  %349 = vmatpush1.bf16.msra.mxu0 0
  %350 = vmatprep.subr.bf16.mxu0 0
  %351 = vmatpush1.bf16.msra.mxu0 0
  %352 = vmatprep.subr.bf16.mxu0 0
  %353 = vmatpush1.bf16.msra.mxu0 0
  %354 = vmatprep.subr.bf16.mxu0 0
  %355 = vmatpush1.bf16.msra.mxu0 0
  %356 = vmatprep.subr.bf16.mxu0 0
  %357 = vmatpush1.bf16.msra.mxu0 0
  %358 = vmatprep.subr.bf16.mxu0 0
  %359 = vmatpush1.bf16.msra.mxu0 0
  %360 = vmatprep.mubr.bf16.mxu0 0
  %361 = vmatmul.mubr.bf16.gmra.mrb[0].mxu0 %v50
  %v362 = vpop.f32.mrb[0].mxu0
  %v363 = vadd.f32 %v290, %v362
  %v364 = vpop.f32.mrb[0].mxu0
  %v365 = vpop.f32.mrb[0].mxu0
  %v366 = vadd.f32 %v293, %v365
  %v367 = vpop.f32.mrb[0].mxu0
  %368 = vmatprep.mubr.bf16.mxu0 0
  %369 = vmatmul.mubr.bf16.gmra.mrb[0].mxu0 %v53
  %v370 = vpop.f32.mrb[0].mxu0
  %v371 = vadd.f32 %v298, %v370
  %v372 = vpop.f32.mrb[0].mxu0
  %v373 = vpop.f32.mrb[0].mxu0
  %v374 = vadd.f32 %v301, %v373
  %v375 = vpop.f32.mrb[0].mxu0
  %376 = vmatprep.mubr.bf16.mxu0 0
  %377 = vmatmul.mubr.bf16.gmra.mrb[0].mxu0 %v56
  %v378 = vpop.f32.mrb[0].mxu0
  %v379 = vadd.f32 %v306, %v378
  %v380 = vpop.f32.mrb[0].mxu0
  %v381 = vpop.f32.mrb[0].mxu0
  %v382 = vadd.f32 %v309, %v381
  %v383 = vpop.f32.mrb[0].mxu0
  %384 = vmatprep.mubr.bf16.mxu0 0
  %385 = vmatmul.mubr.bf16.gmra.mrb[0].mxu0 %v59
  %v386 = vpop.f32.mrb[0].mxu0
  %v387 = vadd.f32 %v314, %v386
  %v388 = vpop.f32.mrb[0].mxu0
  %v389 = vpop.f32.mrb[0].mxu0
  %v390 = vadd.f32 %v317, %v389
  %v391 = vpop.f32.mrb[0].mxu0
  %392 = vmatprep.mubr.bf16.mxu0 0
  %393 = vmatmul.mubr.bf16.gmra.mrb[0].mxu0 %v62
  %v394 = vpop.f32.mrb[0].mxu0
  %v395 = vadd.f32 %v322, %v394
  %v396 = vpop.f32.mrb[0].mxu0
  %v397 = vpop.f32.mrb[0].mxu0
  %v398 = vadd.f32 %v325, %v397
  %v399 = vpop.f32.mrb[0].mxu0
  %400 = vdwg.mxu0
  %v401 = vld [vmem:[%s2] sm:$0x1]
  %v402 = vld [vmem:[%s3] sm:$0x1]
  %403 = vadd.xlane.f32.xlu0 %v363
  %v404 = vpop.xlane.xlu0 %403
  %405 = vadd.xlane.f32.xlu0 %v366
  %v406 = vpop.xlane.xlu0 %405
  %407 = vadd.xlane.f32.xlu0 %v371
  %v408 = vpop.xlane.xlu0 %407
  %409 = vadd.xlane.f32.xlu0 %v374
  %v410 = vpop.xlane.xlu0 %409
  %411 = vadd.xlane.f32.xlu0 %v379
  %v412 = vpop.xlane.xlu0 %411
  %413 = vadd.xlane.f32.xlu0 %v382
  %v414 = vpop.xlane.xlu0 %413
  %415 = vadd.xlane.f32.xlu0 %v387
  %v416 = vpop.xlane.xlu0 %415
  %417 = vadd.xlane.f32.xlu0 %v390
  %v418 = vpop.xlane.xlu0 %417
  %419 = vadd.xlane.f32.xlu0 %v395
  %v420 = vpop.xlane.xlu0 %419
  %421 = vadd.xlane.f32.xlu0 %v398
  %v422 = vpop.xlane.xlu0 %421
  %v423 = vrcp.pop 128.0
  %v424 = vmul.f32 %v404, %v423
  %v425 = vmul.f32 %v406, %v423
  %v426 = vmul.f32 %v408, %v423
  %v427 = vmul.f32 %v410, %v423
  %v428 = vmul.f32 %v412, %v423
  %v429 = vmul.f32 %v414, %v423
  %v430 = vmul.f32 %v416, %v423
  %v431 = vmul.f32 %v418, %v423
  %v432 = vmul.f32 %v420, %v423
  %v433 = vmul.f32 %v422, %v423
  %v434 = vsub.f32 %v363, %v424
  %v435 = vsub.f32 %v366, %v425
  %v436 = vsub.f32 %v371, %v426
  %v437 = vsub.f32 %v374, %v427
  %v438 = vsub.f32 %v379, %v428
  %v439 = vsub.f32 %v382, %v429
  %v440 = vsub.f32 %v387, %v430
  %v441 = vsub.f32 %v390, %v431
  %v442 = vsub.f32 %v395, %v432
  %v443 = vsub.f32 %v398, %v433
  %v444 = vmul.f32 %v434, %v434
  %v445 = vmul.f32 %v435, %v435
  %v446 = vmul.f32 %v436, %v436
  %v447 = vmul.f32 %v437, %v437
  %v448 = vmul.f32 %v438, %v438
  %v449 = vmul.f32 %v439, %v439
  %v450 = vmul.f32 %v440, %v440
  %v451 = vmul.f32 %v441, %v441
  %v452 = vmul.f32 %v442, %v442
  %v453 = vmul.f32 %v443, %v443
  %454 = vadd.xlane.f32.xlu0 %v444
  %v455 = vpop.xlane.xlu0 %454
  %456 = vadd.xlane.f32.xlu0 %v445
  %v457 = vpop.xlane.xlu0 %456
  %458 = vadd.xlane.f32.xlu0 %v446
  %v459 = vpop.xlane.xlu0 %458
  %460 = vadd.xlane.f32.xlu0 %v447
  %v461 = vpop.xlane.xlu0 %460
  %462 = vadd.xlane.f32.xlu0 %v448
  %v463 = vpop.xlane.xlu0 %462
  %464 = vadd.xlane.f32.xlu0 %v449
  %v465 = vpop.xlane.xlu0 %464
  %466 = vadd.xlane.f32.xlu0 %v450
  %v467 = vpop.xlane.xlu0 %466
  %468 = vadd.xlane.f32.xlu0 %v451
  %v469 = vpop.xlane.xlu0 %468
  %470 = vadd.xlane.f32.xlu0 %v452
  %v471 = vpop.xlane.xlu0 %470
  %472 = vadd.xlane.f32.xlu0 %v453
  %v473 = vpop.xlane.xlu0 %472
  %v474 = vmul.f32 %v455, %v423
  %v475 = vmul.f32 %v457, %v423
  %v476 = vmul.f32 %v459, %v423
  %v477 = vmul.f32 %v461, %v423
  %v478 = vmul.f32 %v463, %v423
  %v479 = vmul.f32 %v465, %v423
  %v480 = vmul.f32 %v467, %v423
  %v481 = vmul.f32 %v469, %v423
  %v482 = vmul.f32 %v471, %v423
  %v483 = vmul.f32 %v473, %v423
  %v484 = vadd.f32 %v474, 1e-05
  %v485 = vadd.f32 %v475, 1e-05
  %v486 = vadd.f32 %v476, 1e-05
  %v487 = vadd.f32 %v477, 1e-05
  %v488 = vadd.f32 %v478, 1e-05
  %v489 = vadd.f32 %v479, 1e-05
  %v490 = vadd.f32 %v480, 1e-05
  %v491 = vadd.f32 %v481, 1e-05
  %v492 = vadd.f32 %v482, 1e-05
  %v493 = vadd.f32 %v483, 1e-05
  %v494 = vrsqrt.pop %v484
  %v495 = vrsqrt.pop %v485
  %v496 = vrsqrt.pop %v486
  %v497 = vrsqrt.pop %v487
  %v498 = vrsqrt.pop %v488
  %v499 = vrsqrt.pop %v489
  %v500 = vrsqrt.pop %v490
  %v501 = vrsqrt.pop %v491
  %v502 = vrsqrt.pop %v492
  %v503 = vrsqrt.pop %v493
  %v504 = vmul.f32 %v434, %v494
  %v505 = vmul.f32 %v435, %v495
  %v506 = vmul.f32 %v436, %v496
  %v507 = vmul.f32 %v437, %v497
  %v508 = vmul.f32 %v438, %v498
  %v509 = vmul.f32 %v439, %v499
  %v510 = vmul.f32 %v440, %v500
  %v511 = vmul.f32 %v441, %v501
  %v512 = vmul.f32 %v442, %v502
  %v513 = vmul.f32 %v443, %v503
  %v515 = vlaneseq
  %v516 = vshrl.u32 %v515, 7
  %v517 = vsub.s32 0, %v516
  %v518 = vrot.slane %v401, %v517
  %v520 = vmul.f32 %v504, %v518
  %v521 = vmul.f32 %v505, %v518
  %v522 = vmul.f32 %v506, %v518
  %v523 = vmul.f32 %v507, %v518
  %v524 = vmul.f32 %v508, %v518
  %v525 = vmul.f32 %v509, %v518
  %v526 = vmul.f32 %v510, %v518
  %v527 = vmul.f32 %v511, %v518
  %v528 = vmul.f32 %v512, %v518
  %v529 = vmul.f32 %v513, %v518
  %v531 = vlaneseq
  %v532 = vshrl.u32 %v531, 7
  %v533 = vsub.s32 0, %v532
  %v534 = vrot.slane %v402, %v533
  %v536 = vadd.f32 %v520, %v534
  %v537 = vadd.f32 %v521, %v534
  %v538 = vadd.f32 %v522, %v534
  %v539 = vadd.f32 %v523, %v534
  %v540 = vadd.f32 %v524, %v534
  %v541 = vadd.f32 %v525, %v534
  %v542 = vadd.f32 %v526, %v534
  %v543 = vadd.f32 %v527, %v534
  %v544 = vadd.f32 %v528, %v534
  %v545 = vadd.f32 %v529, %v534
  %v546 = vmul.f32 %v536, %v536
  %v547 = vmul.f32 %v537, %v537
  %v548 = vmul.f32 %v538, %v538
  %v549 = vmul.f32 %v539, %v539
  %v550 = vmul.f32 %v540, %v540
  %v551 = vmul.f32 %v541, %v541
  %v552 = vmul.f32 %v542, %v542
  %v553 = vmul.f32 %v543, %v543
  %v554 = vmul.f32 %v544, %v544
  %v555 = vmul.f32 %v545, %v545
  %v556 = vmul.f32 %v536, %v546
  %v557 = vmul.f32 %v537, %v547
  %v558 = vmul.f32 %v538, %v548
  %v559 = vmul.f32 %v539, %v549
  %v560 = vmul.f32 %v540, %v550
  %v561 = vmul.f32 %v541, %v551
  %v562 = vmul.f32 %v542, %v552
  %v563 = vmul.f32 %v543, %v553
  %v564 = vmul.f32 %v544, %v554
  %v565 = vmul.f32 %v545, %v555
  %v566 = vmul.f32 %v556, 0.044715
  %v567 = vmul.f32 %v557, 0.044715
  %v568 = vmul.f32 %v558, 0.044715
  %v569 = vmul.f32 %v559, 0.044715
  %v570 = vmul.f32 %v560, 0.044715
  %v571 = vmul.f32 %v561, 0.044715
  %v572 = vmul.f32 %v562, 0.044715
  %v573 = vmul.f32 %v563, 0.044715
  %v574 = vmul.f32 %v564, 0.044715
  %v575 = vmul.f32 %v565, 0.044715
  %v576 = vadd.f32 %v536, %v566
  %v577 = vadd.f32 %v537, %v567
  %v578 = vadd.f32 %v538, %v568
  %v579 = vadd.f32 %v539, %v569
  %v580 = vadd.f32 %v540, %v570
  %v581 = vadd.f32 %v541, %v571
  %v582 = vadd.f32 %v542, %v572
  %v583 = vadd.f32 %v543, %v573
  %v584 = vadd.f32 %v544, %v574
  %v585 = vadd.f32 %v545, %v575
  %v586 = vmul.f32 %v576, 0.7978846
  %v587 = vmul.f32 %v577, 0.7978846
  %v588 = vmul.f32 %v578, 0.7978846
  %v589 = vmul.f32 %v579, 0.7978846
  %v590 = vmul.f32 %v580, 0.7978846
  %v591 = vmul.f32 %v581, 0.7978846
  %v592 = vmul.f32 %v582, 0.7978846
  %v593 = vmul.f32 %v583, 0.7978846
  %v594 = vmul.f32 %v584, 0.7978846
  %v595 = vmul.f32 %v585, 0.7978846
  %v596 = vtanh.pop %v586
  %v597 = vtanh.pop %v587
  %v598 = vtanh.pop %v588
  %v599 = vtanh.pop %v589
  %v600 = vtanh.pop %v590
  %v601 = vtanh.pop %v591
  %v602 = vtanh.pop %v592
  %v603 = vtanh.pop %v593
  %v604 = vtanh.pop %v594
  %v605 = vtanh.pop %v595
  %v606 = vadd.f32 %v596, 1.0
  %v607 = vadd.f32 %v597, 1.0
  %v608 = vadd.f32 %v598, 1.0
  %v609 = vadd.f32 %v599, 1.0
  %v610 = vadd.f32 %v600, 1.0
  %v611 = vadd.f32 %v601, 1.0
  %v612 = vadd.f32 %v602, 1.0
  %v613 = vadd.f32 %v603, 1.0
  %v614 = vadd.f32 %v604, 1.0
  %v615 = vadd.f32 %v605, 1.0
  %v616 = vmul.f32 %v606, 0.5
  %v617 = vmul.f32 %v607, 0.5
  %v618 = vmul.f32 %v608, 0.5
  %v619 = vmul.f32 %v609, 0.5
  %v620 = vmul.f32 %v610, 0.5
  %v621 = vmul.f32 %v611, 0.5
  %v622 = vmul.f32 %v612, 0.5
  %v623 = vmul.f32 %v613, 0.5
  %v624 = vmul.f32 %v614, 0.5
  %v625 = vmul.f32 %v615, 0.5
  %v626 = vmul.f32 %v536, %v616
  %v627 = vmul.f32 %v537, %v617
  %v628 = vmul.f32 %v538, %v618
  %v629 = vmul.f32 %v539, %v619
  %v630 = vmul.f32 %v540, %v620
  %v631 = vmul.f32 %v541, %v621
  %v632 = vmul.f32 %v542, %v622
  %v633 = vmul.f32 %v543, %v623
  %v634 = vmul.f32 %v544, %v624
  %v635 = vmul.f32 %v545, %v625
  %636 = vst [vmem:[%s4] sm:$0xff] %v626
  %637 = vst [vmem:[%s4 + $0x8] sm:$0xff] %v627
  %638 = vst [vmem:[%s4 + $0x10] sm:$0xff] %v628
  %639 = vst [vmem:[%s4 + $0x18] sm:$0xff] %v629
  %640 = vst [vmem:[%s4 + $0x20] sm:$0xff] %v630
  %641 = vst [vmem:[%s4 + $0x28] sm:$0xff] %v631
  %642 = vst [vmem:[%s4 + $0x30] sm:$0xff] %v632
  %643 = vst [vmem:[%s4 + $0x38] sm:$0xff] %v633
  %644 = vst [vmem:[%s4 + $0x40] sm:$0xff] %v634
  %645 = vst [vmem:[%s4 + $0x48] sm:$0xff] %v635
  // Predicated region
  $region18: #{_lambda_.9} parent=0 // pred_check
    _
  $region19: #{_lambda_.9} parent=0 // pred_check_branch
    %647 = sbr.rel (0) target = $region21
  $region20: #{_lambda_.9} parent=0 // pred_region
    _
  $region21: #{_lambda_.9} parent=0 // pred_fallthru
    _
  // Predicated region
  $region22: #{_lambda_.9} parent=0 // pred_check
    _
  $region23: #{_lambda_.9} parent=0 // pred_check_branch
    %649 = sbr.rel (0) target = $region25
  $region24: #{_lambda_.9} parent=0 // pred_region
    _
  $region25: #{_lambda_.9} parent=0 // pred_fallthru
    _

// kernel: _lambda_.11
$region0: #{_lambda_.11}
  #allocation0 [shape = 'u32[]', space=smem, size = 0x4, offset = 0x4, fixed_abs, tag = 'smem constant byte address 0x4 - core index']
  #allocation1 [shape = 'u32[144,128]{1,0:T(1,128)}', space=vmem, size = 0x12000, scoped, tag = 'internal scratch']
  %s0 = inlined_call_operand.vmem [shape: f32[40,128], index: 0, kind: input, shape index: {}]
  %s1 = inlined_call_operand.vmem [shape: f32[1,128], index: 1, kind: input, shape index: {}]
  %s2 = inlined_call_operand.vmem [shape: f32[1,128], index: 2, kind: input, shape index: {}]
  %s3 = inlined_call_operand.vmem [shape: bf16[128,256], index: 3, kind: input, shape index: {}]
  %s4 = inlined_call_operand.vmem [shape: f32[1,256], index: 4, kind: input, shape index: {}]
  %s5 = inlined_call_operand.vmem [shape: f32[40,256], index: 5, kind: output, shape index: {}]
  %s6 = sld [smem:[#allocation0]]
  $region30: #{_lambda_.11} parent=0
    _
  %s8 = ssub.s32 1, %s6
  %s9 = scalar_select 0, %s8, %s6
  // Predicated region
  $region2: #{_lambda_.11} parent=0 // pred_check
    _
  $region3: #{_lambda_.11} parent=0 // pred_check_branch
    %11 = sbr.rel (0) target = $region5
  $region4: #{_lambda_.11} parent=0 // pred_region
    _
  $region5: #{_lambda_.11} parent=0 // pred_fallthru
    _
  // Predicated region
  $region6: #{_lambda_.11} parent=0 // pred_check
    _
  $region7: #{_lambda_.11} parent=0 // pred_check_branch
    %13 = sbr.rel (0) target = $region9
  $region8: #{_lambda_.11} parent=0 // pred_region
    _
  $region9: #{_lambda_.11} parent=0 // pred_fallthru
    _
  // Predicated region
  $region10: #{_lambda_.11} parent=0 // pred_check
    _
  $region11: #{_lambda_.11} parent=0 // pred_check_branch
    %15 = sbr.rel (0) target = $region13
  $region12: #{_lambda_.11} parent=0 // pred_region
    _
  $region13: #{_lambda_.11} parent=0 // pred_fallthru
    _
  // Predicated region
  $region14: #{_lambda_.11} parent=0 // pred_check
    _
  $region15: #{_lambda_.11} parent=0 // pred_check_branch
    %17 = sbr.rel (0) target = $region17
  $region16: #{_lambda_.11} parent=0 // pred_region
    _
  $region17: #{_lambda_.11} parent=0 // pred_fallthru
    _
  // Predicated region
  $region18: #{_lambda_.11} parent=0 // pred_check
    _
  $region19: #{_lambda_.11} parent=0 // pred_check_branch
    %19 = sbr.rel (0) target = $region21
  $region20: #{_lambda_.11} parent=0 // pred_region
    _
  $region21: #{_lambda_.11} parent=0 // pred_fallthru
    _
  %v21 = vld [vmem:[%s0] sm:$0xff]
  %v22 = vld [vmem:[%s0 + $0x8] sm:$0xff]
  %v23 = vld [vmem:[%s0 + $0x10] sm:$0xff]
  %v24 = vld [vmem:[%s0 + $0x18] sm:$0xff]
  %v25 = vld [vmem:[%s0 + $0x20] sm:$0xff]
  %v26 = vld [vmem:[%s1] sm:$0x1]
  %v27 = vld [vmem:[%s2] sm:$0x1]
  %28 = vadd.xlane.f32.xlu0 %v21
  %v29 = vpop.xlane.xlu0 %28
  %30 = vadd.xlane.f32.xlu0 %v22
  %v31 = vpop.xlane.xlu0 %30
  %32 = vadd.xlane.f32.xlu0 %v23
  %v33 = vpop.xlane.xlu0 %32
  %34 = vadd.xlane.f32.xlu0 %v24
  %v35 = vpop.xlane.xlu0 %34
  %36 = vadd.xlane.f32.xlu0 %v25
  %v37 = vpop.xlane.xlu0 %36
  %v38 = vrcp.pop 128.0
  %v39 = vmul.f32 %v29, %v38
  %v40 = vmul.f32 %v31, %v38
  %v41 = vmul.f32 %v33, %v38
  %v42 = vmul.f32 %v35, %v38
  %v43 = vmul.f32 %v37, %v38
  %v44 = vsub.f32 %v21, %v39
  %v45 = vsub.f32 %v22, %v40
  %v46 = vsub.f32 %v23, %v41
  %v47 = vsub.f32 %v24, %v42
  %v48 = vsub.f32 %v25, %v43
  %v49 = vmul.f32 %v44, %v44
  %v50 = vmul.f32 %v45, %v45
  %v51 = vmul.f32 %v46, %v46
  %v52 = vmul.f32 %v47, %v47
  %v53 = vmul.f32 %v48, %v48
  %54 = vadd.xlane.f32.xlu0 %v49
  %v55 = vpop.xlane.xlu0 %54
  %56 = vadd.xlane.f32.xlu0 %v50
  %v57 = vpop.xlane.xlu0 %56
  %58 = vadd.xlane.f32.xlu0 %v51
  %v59 = vpop.xlane.xlu0 %58
  %60 = vadd.xlane.f32.xlu0 %v52
  %v61 = vpop.xlane.xlu0 %60
  %62 = vadd.xlane.f32.xlu0 %v53
  %v63 = vpop.xlane.xlu0 %62
  %v64 = vmul.f32 %v55, %v38
  %v65 = vmul.f32 %v57, %v38
  %v66 = vmul.f32 %v59, %v38
  %v67 = vmul.f32 %v61, %v38
  %v68 = vmul.f32 %v63, %v38
  %v69 = vadd.f32 %v64, 1e-05
  %v70 = vadd.f32 %v65, 1e-05
  %v71 = vadd.f32 %v66, 1e-05
  %v72 = vadd.f32 %v67, 1e-05
  %v73 = vadd.f32 %v68, 1e-05
  %v74 = vrsqrt.pop %v69
  %v75 = vrsqrt.pop %v70
  %v76 = vrsqrt.pop %v71
  %v77 = vrsqrt.pop %v72
  %v78 = vrsqrt.pop %v73
  %v79 = vmul.f32 %v44, %v74
  %v80 = vmul.f32 %v45, %v75
  %v81 = vmul.f32 %v46, %v76
  %v82 = vmul.f32 %v47, %v77
  %v83 = vmul.f32 %v48, %v78
  %v85 = vlaneseq
  %v86 = vshrl.u32 %v85, 7
  %v87 = vsub.s32 0, %v86
  %v88 = vrot.slane %v26, %v87
  %v90 = vmul.f32 %v79, %v88
  %v91 = vmul.f32 %v80, %v88
  %v92 = vmul.f32 %v81, %v88
  %v93 = vmul.f32 %v82, %v88
  %v94 = vmul.f32 %v83, %v88
  %v96 = vlaneseq
  %v97 = vshrl.u32 %v96, 7
  %v98 = vsub.s32 0, %v97
  %v99 = vrot.slane %v27, %v98
  %v101 = vadd.f32 %v90, %v99
  %v102 = vadd.f32 %v91, %v99
  %v103 = vadd.f32 %v92, %v99
  %v104 = vadd.f32 %v93, %v99
  %v105 = vadd.f32 %v94, %v99
  %v106 = vpack.c.bf16 %v102, %v101
  %v107 = vpack.c.bf16 %v104, %v103
  %v108 = vpack.c.bf16 %v105, %v105
  %v109 = vld [vmem:[%s3] sm:$0xff]
  %v110 = vld [vmem:[%s3 + $0x8] sm:$0xff]
  %v111 = vld [vmem:[%s3 + $0x10] sm:$0xff]
  %v112 = vld [vmem:[%s3 + $0x18] sm:$0xff]
  %v113 = vld [vmem:[%s3 + $0x20] sm:$0xff]
  %v114 = vld [vmem:[%s3 + $0x28] sm:$0xff]
  %v115 = vld [vmem:[%s3 + $0x30] sm:$0xff]
  %v116 = vld [vmem:[%s3 + $0x38] sm:$0xff]
  %v117 = vld [vmem:[%s3 + $0x40] sm:$0xff]
  %v118 = vld [vmem:[%s3 + $0x48] sm:$0xff]
  %v119 = vld [vmem:[%s3 + $0x50] sm:$0xff]
  %v120 = vld [vmem:[%s3 + $0x58] sm:$0xff]
  %v121 = vld [vmem:[%s3 + $0x60] sm:$0xff]
  %v122 = vld [vmem:[%s3 + $0x68] sm:$0xff]
  %v123 = vld [vmem:[%s3 + $0x70] sm:$0xff]
  %v124 = vld [vmem:[%s3 + $0x78] sm:$0xff]
  %v125 = vld [vmem:[%s4] sm:$0x3]
  %v127 = vlaneseq
  %v128 = vshrl.u32 %v127, 7
  %v129 = vsub.s32 0, %v128
  %v130 = vrot.slane %v125, %v129
  %v131 = vlaneseq
  %v132 = vshrl.u32 %v131, 7
  %v133 = vsub.s32 1, %v132
  %v134 = vrot.slane %v125, %v133
  %v153 = vunpack.c.l.b16 %v109
  %v154 = vunpack.c.h.b16 %v109
  %v155 = vunpack.c.l.b16 %v110
  %v156 = vunpack.c.h.b16 %v110
  %v157 = vunpack.c.l.b16 %v111
  %v158 = vunpack.c.h.b16 %v111
  %v159 = vunpack.c.l.b16 %v112
  %v160 = vunpack.c.h.b16 %v112
  %v161 = vunpack.c.l.b16 %v113
  %v162 = vunpack.c.h.b16 %v113
  %v163 = vunpack.c.l.b16 %v114
  %v164 = vunpack.c.h.b16 %v114
  %v165 = vunpack.c.l.b16 %v115
  %v166 = vunpack.c.h.b16 %v115
  %v167 = vunpack.c.l.b16 %v116
  %v168 = vunpack.c.h.b16 %v116
  %v169 = vunpack.c.l.b16 %v117
  %v170 = vunpack.c.h.b16 %v117
  %v171 = vunpack.c.l.b16 %v118
  %v172 = vunpack.c.h.b16 %v118
  %v173 = vunpack.c.l.b16 %v119
  %v174 = vunpack.c.h.b16 %v119
  %v175 = vunpack.c.l.b16 %v120
  %v176 = vunpack.c.h.b16 %v120
  %v177 = vunpack.c.l.b16 %v121
  %v178 = vunpack.c.h.b16 %v121
  %v179 = vunpack.c.l.b16 %v122
  %v180 = vunpack.c.h.b16 %v122
  %v181 = vunpack.c.l.b16 %v123
  %v182 = vunpack.c.h.b16 %v123
  %v183 = vunpack.c.l.b16 %v124
  %v184 = vunpack.c.h.b16 %v124
  %v185 = vpack.c.b16 %v155, %v153
  %v186 = vpack.c.b16 %v156, %v154
  %v187 = vpack.c.b16 %v159, %v157
  %v188 = vpack.c.b16 %v160, %v158
  %v189 = vpack.c.b16 %v163, %v161
  %v190 = vpack.c.b16 %v164, %v162
  %v191 = vpack.c.b16 %v167, %v165
  %v192 = vpack.c.b16 %v168, %v166
  %v193 = vpack.c.b16 %v171, %v169
  %v194 = vpack.c.b16 %v172, %v170
  %v195 = vpack.c.b16 %v175, %v173
  %v196 = vpack.c.b16 %v176, %v174
  %v197 = vpack.c.b16 %v179, %v177
  %v198 = vpack.c.b16 %v180, %v178
  %v199 = vpack.c.b16 %v183, %v181
  %v200 = vpack.c.b16 %v184, %v182
  %217 = vmatprep.subr.bf16.mxu0 %v186
  %218 = vmatpush1.bf16.msra.mxu0 %v185
  %219 = vmatprep.subr.bf16.mxu0 %v188
  %220 = vmatpush1.bf16.msra.mxu0 %v187
  %221 = vmatprep.subr.bf16.mxu0 %v190
  %222 = vmatpush1.bf16.msra.mxu0 %v189
  %223 = vmatprep.subr.bf16.mxu0 %v192
  %224 = vmatpush1.bf16.msra.mxu0 %v191
  %225 = vmatprep.subr.bf16.mxu0 %v194
  %226 = vmatpush1.bf16.msra.mxu0 %v193
  %227 = vmatprep.subr.bf16.mxu0 %v196
  %228 = vmatpush1.bf16.msra.mxu0 %v195
  %229 = vmatprep.subr.bf16.mxu0 %v198
  %230 = vmatpush1.bf16.msra.mxu0 %v197
  %231 = vmatprep.subr.bf16.mxu0 %v200
  %232 = vmatpush1.bf16.msra.mxu0 %v199
  %233 = vmatprep.subr.bf16.mxu0 0
  %234 = vmatpush1.bf16.msra.mxu0 0
  %235 = vmatprep.subr.bf16.mxu0 0
  %236 = vmatpush1.bf16.msra.mxu0 0
  %237 = vmatprep.subr.bf16.mxu0 0
  %238 = vmatpush1.bf16.msra.mxu0 0
  %239 = vmatprep.subr.bf16.mxu0 0
  %240 = vmatpush1.bf16.msra.mxu0 0
  %241 = vmatprep.subr.bf16.mxu0 0
  %242 = vmatpush1.bf16.msra.mxu0 0
  %243 = vmatprep.subr.bf16.mxu0 0
  %244 = vmatpush1.bf16.msra.mxu0 0
  %245 = vmatprep.subr.bf16.mxu0 0
  %246 = vmatpush1.bf16.msra.mxu0 0
  %247 = vmatprep.subr.bf16.mxu0 0
  %248 = vmatpush1.bf16.msra.mxu0 0
  %249 = vmatprep.mubr.bf16.mxu0 0
  %250 = vmatmul.mubr.bf16.gmra.mrb[0].mxu0 %v106
  %v251 = vpop.f32.mrb[0].mxu0
  %v252 = vadd.f32 %v130, %v251
  %v253 = vpop.f32.mrb[0].mxu0
  %v254 = vadd.f32 %v134, %v253
  %v255 = vpop.f32.mrb[0].mxu0
  %v256 = vadd.f32 %v130, %v255
  %v257 = vpop.f32.mrb[0].mxu0
  %v258 = vadd.f32 %v134, %v257
  %259 = vmatprep.mubr.bf16.mxu0 0
  %260 = vmatmul.mubr.bf16.gmra.mrb[0].mxu0 %v107
  %v261 = vpop.f32.mrb[0].mxu0
  %v262 = vadd.f32 %v130, %v261
  %v263 = vpop.f32.mrb[0].mxu0
  %v264 = vadd.f32 %v134, %v263
  %v265 = vpop.f32.mrb[0].mxu0
  %v266 = vadd.f32 %v130, %v265
  %v267 = vpop.f32.mrb[0].mxu0
  %v268 = vadd.f32 %v134, %v267
  %269 = vmatprep.mubr.bf16.mxu0 0
  %270 = vmatmul.mubr.bf16.gmra.mrb[0].mxu0 %v108
  %v271 = vpop.f32.mrb[0].mxu0
  %v272 = vadd.f32 %v130, %v271
  %v273 = vpop.f32.mrb[0].mxu0
  %v274 = vadd.f32 %v134, %v273
  %v275 = vpop.f32.mrb[0].mxu0
  %v276 = vpop.f32.mrb[0].mxu0
  %277 = vdwg.mxu0
  %278 = vst [vmem:[%s5] sm:$0xff] %v252
  %279 = vst [vmem:[%s5 + $0x8] sm:$0xff] %v254
  %280 = vst [vmem:[%s5 + $0x10] sm:$0xff] %v256
  %281 = vst [vmem:[%s5 + $0x18] sm:$0xff] %v258
  %282 = vst [vmem:[%s5 + $0x20] sm:$0xff] %v262
  %283 = vst [vmem:[%s5 + $0x28] sm:$0xff] %v264
  %284 = vst [vmem:[%s5 + $0x30] sm:$0xff] %v266
  %285 = vst [vmem:[%s5 + $0x38] sm:$0xff] %v268
  %286 = vst [vmem:[%s5 + $0x40] sm:$0xff] %v272
  %287 = vst [vmem:[%s5 + $0x48] sm:$0xff] %v274
  // Predicated region
  $region22: #{_lambda_.11} parent=0 // pred_check
    _
  $region23: #{_lambda_.11} parent=0 // pred_check_branch
    %289 = sbr.rel (0) target = $region25
  $region24: #{_lambda_.11} parent=0 // pred_region
    _
  $region25: #{_lambda_.11} parent=0 // pred_fallthru
    _
  // Predicated region
  $region26: #{_lambda_.11} parent=0 // pred_check
    _
  $region27: #{_lambda_.11} parent=0 // pred_check_branch
    %291 = sbr.rel (0) target = $region29
  $region28: #{_lambda_.11} parent=0 // pred_region
    _
  $region29: #{_lambda_.11} parent=0 // pred_fallthru
    _

// kernel: _lambda_.10
$region0: #{_lambda_.10}
  #allocation0 [shape = 'u32[]', space=smem, size = 0x4, offset = 0x4, fixed_abs, tag = 'smem constant byte address 0x4 - core index']
  #allocation1 [shape = 'u32[144,128]{1,0:T(1,128)}', space=vmem, size = 0x12000, scoped, tag = 'internal scratch']
  %s0 = inlined_call_operand.vmem [shape: f32[40,256], index: 0, kind: input, shape index: {}]
  %s1 = inlined_call_operand.vmem [shape: bf16[256,128], index: 1, kind: input, shape index: {}]
  %s2 = inlined_call_operand.vmem [shape: f32[1,128], index: 2, kind: input, shape index: {}]
  %s3 = inlined_call_operand.vmem [shape: f32[1,128], index: 3, kind: input, shape index: {}]
  %s4 = inlined_call_operand.vmem [shape: f32[40,128], index: 4, kind: output, shape index: {}]
  %s5 = sld [smem:[#allocation0]]
  $region26: #{_lambda_.10} parent=0
    _
  %s7 = ssub.s32 1, %s5
  %s8 = scalar_select 0, %s7, %s5
  // Predicated region
  $region2: #{_lambda_.10} parent=0 // pred_check
    _
  $region3: #{_lambda_.10} parent=0 // pred_check_branch
    %10 = sbr.rel (0) target = $region5
  $region4: #{_lambda_.10} parent=0 // pred_region
    _
  $region5: #{_lambda_.10} parent=0 // pred_fallthru
    _
  // Predicated region
  $region6: #{_lambda_.10} parent=0 // pred_check
    _
  $region7: #{_lambda_.10} parent=0 // pred_check_branch
    %12 = sbr.rel (0) target = $region9
  $region8: #{_lambda_.10} parent=0 // pred_region
    _
  $region9: #{_lambda_.10} parent=0 // pred_fallthru
    _
  // Predicated region
  $region10: #{_lambda_.10} parent=0 // pred_check
    _
  $region11: #{_lambda_.10} parent=0 // pred_check_branch
    %14 = sbr.rel (0) target = $region13
  $region12: #{_lambda_.10} parent=0 // pred_region
    _
  $region13: #{_lambda_.10} parent=0 // pred_fallthru
    _
  // Predicated region
  $region14: #{_lambda_.10} parent=0 // pred_check
    _
  $region15: #{_lambda_.10} parent=0 // pred_check_branch
    %16 = sbr.rel (0) target = $region17
  $region16: #{_lambda_.10} parent=0 // pred_region
    _
  $region17: #{_lambda_.10} parent=0 // pred_fallthru
    _
  %v18 = vld [vmem:[%s0] sm:$0xff]
  %v19 = vld [vmem:[%s0 + $0x8] sm:$0xff]
  %v20 = vld [vmem:[%s0 + $0x10] sm:$0xff]
  %v21 = vld [vmem:[%s0 + $0x18] sm:$0xff]
  %v22 = vld [vmem:[%s0 + $0x20] sm:$0xff]
  %v23 = vld [vmem:[%s0 + $0x28] sm:$0xff]
  %v24 = vld [vmem:[%s0 + $0x30] sm:$0xff]
  %v25 = vld [vmem:[%s0 + $0x38] sm:$0xff]
  %v26 = vld [vmem:[%s0 + $0x40] sm:$0xff]
  %v27 = vld [vmem:[%s0 + $0x48] sm:$0xff]
  %v28 = vpack.c.bf16 %v20, %v18
  %v29 = vpack.c.bf16 %v21, %v19
  %v30 = vpack.c.bf16 %v24, %v22
  %v31 = vpack.c.bf16 %v25, %v23
  %v32 = vpack.c.bf16 %v26, %v26
  %v33 = vpack.c.bf16 %v27, %v27
  %v34 = vld [vmem:[%s1] sm:$0xf]
  %v35 = vld [vmem:[%s1 + $0x4] sm:$0xf]
  %v36 = vld [vmem:[%s1 + $0x8] sm:$0xf]
  %v37 = vld [vmem:[%s1 + $0xc] sm:$0xf]
  %v38 = vld [vmem:[%s1 + $0x10] sm:$0xf]
  %v39 = vld [vmem:[%s1 + $0x14] sm:$0xf]
  %v40 = vld [vmem:[%s1 + $0x18] sm:$0xf]
  %v41 = vld [vmem:[%s1 + $0x1c] sm:$0xf]
  %v42 = vld [vmem:[%s1 + $0x20] sm:$0xf]
  %v43 = vld [vmem:[%s1 + $0x24] sm:$0xf]
  %v44 = vld [vmem:[%s1 + $0x28] sm:$0xf]
  %v45 = vld [vmem:[%s1 + $0x2c] sm:$0xf]
  %v46 = vld [vmem:[%s1 + $0x30] sm:$0xf]
  %v47 = vld [vmem:[%s1 + $0x34] sm:$0xf]
  %v48 = vld [vmem:[%s1 + $0x38] sm:$0xf]
  %v49 = vld [vmem:[%s1 + $0x3c] sm:$0xf]
  %v50 = vld [vmem:[%s1 + $0x40] sm:$0xf]
  %v51 = vld [vmem:[%s1 + $0x44] sm:$0xf]
  %v52 = vld [vmem:[%s1 + $0x48] sm:$0xf]
  %v53 = vld [vmem:[%s1 + $0x4c] sm:$0xf]
  %v54 = vld [vmem:[%s1 + $0x50] sm:$0xf]
  %v55 = vld [vmem:[%s1 + $0x54] sm:$0xf]
  %v56 = vld [vmem:[%s1 + $0x58] sm:$0xf]
  %v57 = vld [vmem:[%s1 + $0x5c] sm:$0xf]
  %v58 = vld [vmem:[%s1 + $0x60] sm:$0xf]
  %v59 = vld [vmem:[%s1 + $0x64] sm:$0xf]
  %v60 = vld [vmem:[%s1 + $0x68] sm:$0xf]
  %v61 = vld [vmem:[%s1 + $0x6c] sm:$0xf]
  %v62 = vld [vmem:[%s1 + $0x70] sm:$0xf]
  %v63 = vld [vmem:[%s1 + $0x74] sm:$0xf]
  %v64 = vld [vmem:[%s1 + $0x78] sm:$0xf]
  %v65 = vld [vmem:[%s1 + $0x7c] sm:$0xf]
  %v98 = vunpack.c.l.b16 %v34
  %v99 = vunpack.c.l.b16 %v35
  %v100 = vunpack.c.l.b16 %v36
  %v101 = vunpack.c.l.b16 %v37
  %v102 = vunpack.c.l.b16 %v38
  %v103 = vunpack.c.l.b16 %v39
  %v104 = vunpack.c.l.b16 %v40
  %v105 = vunpack.c.l.b16 %v41
  %v106 = vunpack.c.l.b16 %v42
  %v107 = vunpack.c.l.b16 %v43
  %v108 = vunpack.c.l.b16 %v44
  %v109 = vunpack.c.l.b16 %v45
  %v110 = vunpack.c.l.b16 %v46
  %v111 = vunpack.c.l.b16 %v47
  %v112 = vunpack.c.l.b16 %v48
  %v113 = vunpack.c.l.b16 %v49
  %v114 = vunpack.c.l.b16 %v50
  %v115 = vunpack.c.l.b16 %v51
  %v116 = vunpack.c.l.b16 %v52
  %v117 = vunpack.c.l.b16 %v53
  %v118 = vunpack.c.l.b16 %v54
  %v119 = vunpack.c.l.b16 %v55
  %v120 = vunpack.c.l.b16 %v56
  %v121 = vunpack.c.l.b16 %v57
  %v122 = vunpack.c.l.b16 %v58
  %v123 = vunpack.c.l.b16 %v59
  %v124 = vunpack.c.l.b16 %v60
  %v125 = vunpack.c.l.b16 %v61
  %v126 = vunpack.c.l.b16 %v62
  %v127 = vunpack.c.l.b16 %v63
  %v128 = vunpack.c.l.b16 %v64
  %v129 = vunpack.c.l.b16 %v65
  %v130 = vpack.c.b16 %v99, %v98
  %v131 = vpack.c.b16 %v101, %v100
  %v132 = vpack.c.b16 %v103, %v102
  %v133 = vpack.c.b16 %v105, %v104
  %v134 = vpack.c.b16 %v107, %v106
  %v135 = vpack.c.b16 %v109, %v108
  %v136 = vpack.c.b16 %v111, %v110
  %v137 = vpack.c.b16 %v113, %v112
  %v138 = vpack.c.b16 %v115, %v114
  %v139 = vpack.c.b16 %v117, %v116
  %v140 = vpack.c.b16 %v119, %v118
  %v141 = vpack.c.b16 %v121, %v120
  %v142 = vpack.c.b16 %v123, %v122
  %v143 = vpack.c.b16 %v125, %v124
  %v144 = vpack.c.b16 %v127, %v126
  %v145 = vpack.c.b16 %v129, %v128
  %162 = vmatprep.subr.bf16.mxu0 0
  %163 = vmatpush1.bf16.msra.mxu0 %v130
  %164 = vmatprep.subr.bf16.mxu0 0
  %165 = vmatpush1.bf16.msra.mxu0 %v131
  %166 = vmatprep.subr.bf16.mxu0 0
  %167 = vmatpush1.bf16.msra.mxu0 %v132
  %168 = vmatprep.subr.bf16.mxu0 0
  %169 = vmatpush1.bf16.msra.mxu0 %v133
  %170 = vmatprep.subr.bf16.mxu0 0
  %171 = vmatpush1.bf16.msra.mxu0 %v134
  %172 = vmatprep.subr.bf16.mxu0 0
  %173 = vmatpush1.bf16.msra.mxu0 %v135
  %174 = vmatprep.subr.bf16.mxu0 0
  %175 = vmatpush1.bf16.msra.mxu0 %v136
  %176 = vmatprep.subr.bf16.mxu0 0
  %177 = vmatpush1.bf16.msra.mxu0 %v137
  %178 = vmatprep.subr.bf16.mxu0 0
  %179 = vmatpush1.bf16.msra.mxu0 %v138
  %180 = vmatprep.subr.bf16.mxu0 0
  %181 = vmatpush1.bf16.msra.mxu0 %v139
  %182 = vmatprep.subr.bf16.mxu0 0
  %183 = vmatpush1.bf16.msra.mxu0 %v140
  %184 = vmatprep.subr.bf16.mxu0 0
  %185 = vmatpush1.bf16.msra.mxu0 %v141
  %186 = vmatprep.subr.bf16.mxu0 0
  %187 = vmatpush1.bf16.msra.mxu0 %v142
  %188 = vmatprep.subr.bf16.mxu0 0
  %189 = vmatpush1.bf16.msra.mxu0 %v143
  %190 = vmatprep.subr.bf16.mxu0 0
  %191 = vmatpush1.bf16.msra.mxu0 %v144
  %192 = vmatprep.subr.bf16.mxu0 0
  %193 = vmatpush1.bf16.msra.mxu0 %v145
  %194 = vmatprep.mubr.bf16.mxu0 %v29
  %195 = vmatmul.mubr.bf16.gmra.mrb[0].mxu0 %v28
  %v196 = vpop.f32.mrb[0].mxu0
  %v197 = vadd.f32 0.0, %v196
  %v198 = vpop.f32.mrb[0].mxu0
  %v199 = vpop.f32.mrb[0].mxu0
  %v200 = vadd.f32 0.0, %v199
  %v201 = vpop.f32.mrb[0].mxu0
  %202 = vmatprep.mubr.bf16.mxu0 %v31
  %203 = vmatmul.mubr.bf16.gmra.mrb[0].mxu0 %v30
  %v204 = vpop.f32.mrb[0].mxu0
  %v205 = vadd.f32 0.0, %v204
  %v206 = vpop.f32.mrb[0].mxu0
  %v207 = vpop.f32.mrb[0].mxu0
  %v208 = vadd.f32 0.0, %v207
  %v209 = vpop.f32.mrb[0].mxu0
  %210 = vmatprep.mubr.bf16.mxu0 %v33
  %211 = vmatmul.mubr.bf16.gmra.mrb[0].mxu0 %v32
  %v212 = vpop.f32.mrb[0].mxu0
  %v213 = vadd.f32 0.0, %v212
  %v214 = vpop.f32.mrb[0].mxu0
  %v215 = vpop.f32.mrb[0].mxu0
  %v216 = vpop.f32.mrb[0].mxu0
  %217 = vdwg.mxu0
  %v218 = vld [vmem:[%s2] sm:$0x1]
  %v219 = vld [vmem:[%s3] sm:$0x1]
  %220 = vadd.xlane.f32.xlu0 %v197
  %v221 = vpop.xlane.xlu0 %220
  %222 = vadd.xlane.f32.xlu0 %v200
  %v223 = vpop.xlane.xlu0 %222
  %224 = vadd.xlane.f32.xlu0 %v205
  %v225 = vpop.xlane.xlu0 %224
  %226 = vadd.xlane.f32.xlu0 %v208
  %v227 = vpop.xlane.xlu0 %226
  %228 = vadd.xlane.f32.xlu0 %v213
  %v229 = vpop.xlane.xlu0 %228
  %v230 = vrcp.pop 128.0
  %v231 = vmul.f32 %v221, %v230
  %v232 = vmul.f32 %v223, %v230
  %v233 = vmul.f32 %v225, %v230
  %v234 = vmul.f32 %v227, %v230
  %v235 = vmul.f32 %v229, %v230
  %v236 = vsub.f32 %v197, %v231
  %v237 = vsub.f32 %v200, %v232
  %v238 = vsub.f32 %v205, %v233
  %v239 = vsub.f32 %v208, %v234
  %v240 = vsub.f32 %v213, %v235
  %v241 = vmul.f32 %v236, %v236
  %v242 = vmul.f32 %v237, %v237
  %v243 = vmul.f32 %v238, %v238
  %v244 = vmul.f32 %v239, %v239
  %v245 = vmul.f32 %v240, %v240
  %246 = vadd.xlane.f32.xlu0 %v241
  %v247 = vpop.xlane.xlu0 %246
  %248 = vadd.xlane.f32.xlu0 %v242
  %v249 = vpop.xlane.xlu0 %248
  %250 = vadd.xlane.f32.xlu0 %v243
  %v251 = vpop.xlane.xlu0 %250
  %252 = vadd.xlane.f32.xlu0 %v244
  %v253 = vpop.xlane.xlu0 %252
  %254 = vadd.xlane.f32.xlu0 %v245
  %v255 = vpop.xlane.xlu0 %254
  %v256 = vmul.f32 %v247, %v230
  %v257 = vmul.f32 %v249, %v230
  %v258 = vmul.f32 %v251, %v230
  %v259 = vmul.f32 %v253, %v230
  %v260 = vmul.f32 %v255, %v230
  %v261 = vadd.f32 %v256, 1e-05
  %v262 = vadd.f32 %v257, 1e-05
  %v263 = vadd.f32 %v258, 1e-05
  %v264 = vadd.f32 %v259, 1e-05
  %v265 = vadd.f32 %v260, 1e-05
  %v266 = vrsqrt.pop %v261
  %v267 = vrsqrt.pop %v262
  %v268 = vrsqrt.pop %v263
  %v269 = vrsqrt.pop %v264
  %v270 = vrsqrt.pop %v265
  %v271 = vmul.f32 %v236, %v266
  %v272 = vmul.f32 %v237, %v267
  %v273 = vmul.f32 %v238, %v268
  %v274 = vmul.f32 %v239, %v269
  %v275 = vmul.f32 %v240, %v270
  %v277 = vlaneseq
  %v278 = vshrl.u32 %v277, 7
  %v279 = vsub.s32 0, %v278
  %v280 = vrot.slane %v218, %v279
  %v282 = vmul.f32 %v271, %v280
  %v283 = vmul.f32 %v272, %v280
  %v284 = vmul.f32 %v273, %v280
  %v285 = vmul.f32 %v274, %v280
  %v286 = vmul.f32 %v275, %v280
  %v288 = vlaneseq
  %v289 = vshrl.u32 %v288, 7
  %v290 = vsub.s32 0, %v289
  %v291 = vrot.slane %v219, %v290
  %v293 = vadd.f32 %v282, %v291
  %v294 = vadd.f32 %v283, %v291
  %v295 = vadd.f32 %v284, %v291
  %v296 = vadd.f32 %v285, %v291
  %v297 = vadd.f32 %v286, %v291
  %v298 = vmul.f32 %v293, %v293
  %v299 = vmul.f32 %v294, %v294
  %v300 = vmul.f32 %v295, %v295
  %v301 = vmul.f32 %v296, %v296
  %v302 = vmul.f32 %v297, %v297
  %v303 = vmul.f32 %v293, %v298
  %v304 = vmul.f32 %v294, %v299
  %v305 = vmul.f32 %v295, %v300
  %v306 = vmul.f32 %v296, %v301
  %v307 = vmul.f32 %v297, %v302
  %v308 = vmul.f32 %v303, 0.044715
  %v309 = vmul.f32 %v304, 0.044715
  %v310 = vmul.f32 %v305, 0.044715
  %v311 = vmul.f32 %v306, 0.044715
  %v312 = vmul.f32 %v307, 0.044715
  %v313 = vadd.f32 %v293, %v308
  %v314 = vadd.f32 %v294, %v309
  %v315 = vadd.f32 %v295, %v310
  %v316 = vadd.f32 %v296, %v311
  %v317 = vadd.f32 %v297, %v312
  %v318 = vmul.f32 %v313, 0.7978846
  %v319 = vmul.f32 %v314, 0.7978846
  %v320 = vmul.f32 %v315, 0.7978846
  %v321 = vmul.f32 %v316, 0.7978846
  %v322 = vmul.f32 %v317, 0.7978846
  %v323 = vtanh.pop %v318
  %v324 = vtanh.pop %v319
  %v325 = vtanh.pop %v320
  %v326 = vtanh.pop %v321
  %v327 = vtanh.pop %v322
  %v328 = vadd.f32 %v323, 1.0
  %v329 = vadd.f32 %v324, 1.0
  %v330 = vadd.f32 %v325, 1.0
  %v331 = vadd.f32 %v326, 1.0
  %v332 = vadd.f32 %v327, 1.0
  %v333 = vmul.f32 %v328, 0.5
  %v334 = vmul.f32 %v329, 0.5
  %v335 = vmul.f32 %v330, 0.5
  %v336 = vmul.f32 %v331, 0.5
  %v337 = vmul.f32 %v332, 0.5
  %v338 = vmul.f32 %v293, %v333
  %v339 = vmul.f32 %v294, %v334
  %v340 = vmul.f32 %v295, %v335
  %v341 = vmul.f32 %v296, %v336
  %v342 = vmul.f32 %v297, %v337
  %343 = vst [vmem:[%s4] sm:$0xff] %v338
  %344 = vst [vmem:[%s4 + $0x8] sm:$0xff] %v339
  %345 = vst [vmem:[%s4 + $0x10] sm:$0xff] %v340
  %346 = vst [vmem:[%s4 + $0x18] sm:$0xff] %v341
  %347 = vst [vmem:[%s4 + $0x20] sm:$0xff] %v342
  // Predicated region
  $region18: #{_lambda_.10} parent=0 // pred_check
    _
  $region19: #{_lambda_.10} parent=0 // pred_check_branch
    %349 = sbr.rel (0) target = $region21
  $region20: #{_lambda_.10} parent=0 // pred_region
    _
  $region21: #{_lambda_.10} parent=0 // pred_fallthru
    _
  // Predicated region
  $region22: #{_lambda_.10} parent=0 // pred_check
    _
  $region23: #{_lambda_.10} parent=0 // pred_check_branch
    %351 = sbr.rel (0) target = $region25
  $region24: #{_lambda_.10} parent=0 // pred_region
    _
  $region25: #{_lambda_.10} parent=0 // pred_fallthru
    _

// kernel: _lambda_.12
$region0: #{_lambda_.12}
  #allocation0 [shape = 'u32[]', space=smem, size = 0x4, offset = 0x4, fixed_abs, tag = 'smem constant byte address 0x4 - core index']
  #allocation1 [shape = 'u32[144,128]{1,0:T(1,128)}', space=vmem, size = 0x12000, scoped, tag = 'internal scratch']
  %s0 = inlined_call_operand.vmem [shape: f32[40,2048], index: 0, kind: input, shape index: {}]
  %s1 = inlined_call_operand.vmem [shape: bf16[2048,256], index: 1, kind: input, shape index: {}]
  %s2 = inlined_call_operand.vmem [shape: f32[1,256], index: 2, kind: input, shape index: {}]
  %s3 = inlined_call_operand.vmem [shape: f32[40,256], index: 3, kind: input, shape index: {}]
  %s4 = inlined_call_operand.vmem [shape: f32[40,256], index: 4, kind: output, shape index: {}]
  %s5 = sld [smem:[#allocation0]]
  $region26: #{_lambda_.12} parent=0
    _
  %s7 = ssub.s32 1, %s5
  %s8 = scalar_select 0, %s7, %s5
  // Predicated region
  $region2: #{_lambda_.12} parent=0 // pred_check
    _
  $region3: #{_lambda_.12} parent=0 // pred_check_branch
    %10 = sbr.rel (0) target = $region5
  $region4: #{_lambda_.12} parent=0 // pred_region
    _
  $region5: #{_lambda_.12} parent=0 // pred_fallthru
    _
  // Predicated region
  $region6: #{_lambda_.12} parent=0 // pred_check
    _
  $region7: #{_lambda_.12} parent=0 // pred_check_branch
    %12 = sbr.rel (0) target = $region9
  $region8: #{_lambda_.12} parent=0 // pred_region
    _
  $region9: #{_lambda_.12} parent=0 // pred_fallthru
    _
  // Predicated region
  $region10: #{_lambda_.12} parent=0 // pred_check
    _
  $region11: #{_lambda_.12} parent=0 // pred_check_branch
    %14 = sbr.rel (0) target = $region13
  $region12: #{_lambda_.12} parent=0 // pred_region
    _
  $region13: #{_lambda_.12} parent=0 // pred_fallthru
    _
  // Predicated region
  $region14: #{_lambda_.12} parent=0 // pred_check
    _
  $region15: #{_lambda_.12} parent=0 // pred_check_branch
    %16 = sbr.rel (0) target = $region17
  $region16: #{_lambda_.12} parent=0 // pred_region
    _
  $region17: #{_lambda_.12} parent=0 // pred_fallthru
    _
  %v17 = vld [vmem:[%s0] sm:$0xff]
  %v18 = vld [vmem:[%s0 + $0x8] sm:$0xff]
  %v19 = vld [vmem:[%s0 + $0x10] sm:$0xff]
  %v20 = vld [vmem:[%s0 + $0x18] sm:$0xff]
  %v21 = vld [vmem:[%s0 + $0x20] sm:$0xff]
  %v22 = vld [vmem:[%s0 + $0x28] sm:$0xff]
  %v23 = vld [vmem:[%s0 + $0x30] sm:$0xff]
  %v24 = vld [vmem:[%s0 + $0x38] sm:$0xff]
  %v25 = vld [vmem:[%s0 + $0x40] sm:$0xff]
  %v26 = vld [vmem:[%s0 + $0x48] sm:$0xff]
  %v27 = vld [vmem:[%s0 + $0x50] sm:$0xff]
  %v28 = vld [vmem:[%s0 + $0x58] sm:$0xff]
  %v29 = vld [vmem:[%s0 + $0x60] sm:$0xff]
  %v30 = vld [vmem:[%s0 + $0x68] sm:$0xff]
  %v31 = vld [vmem:[%s0 + $0x70] sm:$0xff]
  %v32 = vld [vmem:[%s0 + $0x78] sm:$0xff]
  %v33 = vld [vmem:[%s0 + $0x80] sm:$0xff]
  %v34 = vld [vmem:[%s0 + $0x88] sm:$0xff]
  %v35 = vld [vmem:[%s0 + $0x90] sm:$0xff]
  %v36 = vld [vmem:[%s0 + $0x98] sm:$0xff]
  %v37 = vld [vmem:[%s0 + $0xa0] sm:$0xff]
  %v38 = vld [vmem:[%s0 + $0xa8] sm:$0xff]
  %v39 = vld [vmem:[%s0 + $0xb0] sm:$0xff]
  %v40 = vld [vmem:[%s0 + $0xb8] sm:$0xff]
  %v41 = vld [vmem:[%s0 + $0xc0] sm:$0xff]
  %v42 = vld [vmem:[%s0 + $0xc8] sm:$0xff]
  %v43 = vld [vmem:[%s0 + $0xd0] sm:$0xff]
  %v44 = vld [vmem:[%s0 + $0xd8] sm:$0xff]
  %v45 = vld [vmem:[%s0 + $0xe0] sm:$0xff]
  %v46 = vld [vmem:[%s0 + $0xe8] sm:$0xff]
  %v47 = vld [vmem:[%s0 + $0xf0] sm:$0xff]
  %v48 = vld [vmem:[%s0 + $0xf8] sm:$0xff]
  %v49 = vld [vmem:[%s0 + $0x100] sm:$0xff]
  %v50 = vld [vmem:[%s0 + $0x108] sm:$0xff]
  %v51 = vld [vmem:[%s0 + $0x110] sm:$0xff]
  %v52 = vld [vmem:[%s0 + $0x118] sm:$0xff]
  %v53 = vld [vmem:[%s0 + $0x120] sm:$0xff]
  %v54 = vld [vmem:[%s0 + $0x128] sm:$0xff]
  %v55 = vld [vmem:[%s0 + $0x130] sm:$0xff]
  %v56 = vld [vmem:[%s0 + $0x138] sm:$0xff]
  %v57 = vld [vmem:[%s0 + $0x140] sm:$0xff]
  %v58 = vld [vmem:[%s0 + $0x148] sm:$0xff]
  %v59 = vld [vmem:[%s0 + $0x150] sm:$0xff]
  %v60 = vld [vmem:[%s0 + $0x158] sm:$0xff]
  %v61 = vld [vmem:[%s0 + $0x160] sm:$0xff]
  %v62 = vld [vmem:[%s0 + $0x168] sm:$0xff]
  %v63 = vld [vmem:[%s0 + $0x170] sm:$0xff]
  %v64 = vld [vmem:[%s0 + $0x178] sm:$0xff]
  %v65 = vld [vmem:[%s0 + $0x180] sm:$0xff]
  %v66 = vld [vmem:[%s0 + $0x188] sm:$0xff]
  %v67 = vld [vmem:[%s0 + $0x190] sm:$0xff]
  %v68 = vld [vmem:[%s0 + $0x198] sm:$0xff]
  %v69 = vld [vmem:[%s0 + $0x1a0] sm:$0xff]
  %v70 = vld [vmem:[%s0 + $0x1a8] sm:$0xff]
  %v71 = vld [vmem:[%s0 + $0x1b0] sm:$0xff]
  %v72 = vld [vmem:[%s0 + $0x1b8] sm:$0xff]
  %v73 = vld [vmem:[%s0 + $0x1c0] sm:$0xff]
  %v74 = vld [vmem:[%s0 + $0x1c8] sm:$0xff]
  %v75 = vld [vmem:[%s0 + $0x1d0] sm:$0xff]
  %v76 = vld [vmem:[%s0 + $0x1d8] sm:$0xff]
  %v77 = vld [vmem:[%s0 + $0x1e0] sm:$0xff]
  %v78 = vld [vmem:[%s0 + $0x1e8] sm:$0xff]
  %v79 = vld [vmem:[%s0 + $0x1f0] sm:$0xff]
  %v80 = vld [vmem:[%s0 + $0x1f8] sm:$0xff]
  %v81 = vld [vmem:[%s0 + $0x200] sm:$0xff]
  %v82 = vld [vmem:[%s0 + $0x208] sm:$0xff]
  %v83 = vld [vmem:[%s0 + $0x210] sm:$0xff]
  %v84 = vld [vmem:[%s0 + $0x218] sm:$0xff]
  %v85 = vld [vmem:[%s0 + $0x220] sm:$0xff]
  %v86 = vld [vmem:[%s0 + $0x228] sm:$0xff]
  %v87 = vld [vmem:[%s0 + $0x230] sm:$0xff]
  %v88 = vld [vmem:[%s0 + $0x238] sm:$0xff]
  %v89 = vld [vmem:[%s0 + $0x240] sm:$0xff]
  %v90 = vld [vmem:[%s0 + $0x248] sm:$0xff]
  %v91 = vld [vmem:[%s0 + $0x250] sm:$0xff]
  %v92 = vld [vmem:[%s0 + $0x258] sm:$0xff]
  %v93 = vld [vmem:[%s0 + $0x260] sm:$0xff]
  %v94 = vld [vmem:[%s0 + $0x268] sm:$0xff]
  %v95 = vld [vmem:[%s0 + $0x270] sm:$0xff]
  %v96 = vld [vmem:[%s0 + $0x278] sm:$0xff]
  %v97 = vpack.c.bf16 %v33, %v17
  %v98 = vpack.c.bf16 %v34, %v18
  %v99 = vpack.c.bf16 %v35, %v19
  %v100 = vpack.c.bf16 %v36, %v20
  %v101 = vpack.c.bf16 %v37, %v21
  %v102 = vpack.c.bf16 %v38, %v22
  %v103 = vpack.c.bf16 %v39, %v23
  %v104 = vpack.c.bf16 %v40, %v24
  %v105 = vpack.c.bf16 %v41, %v25
  %v106 = vpack.c.bf16 %v42, %v26
  %v107 = vpack.c.bf16 %v43, %v27
  %v108 = vpack.c.bf16 %v44, %v28
  %v109 = vpack.c.bf16 %v45, %v29
  %v110 = vpack.c.bf16 %v46, %v30
  %v111 = vpack.c.bf16 %v47, %v31
  %v112 = vpack.c.bf16 %v48, %v32
  %v113 = vpack.c.bf16 %v65, %v49
  %v114 = vpack.c.bf16 %v66, %v50
  %v115 = vpack.c.bf16 %v67, %v51
  %v116 = vpack.c.bf16 %v68, %v52
  %v117 = vpack.c.bf16 %v69, %v53
  %v118 = vpack.c.bf16 %v70, %v54
  %v119 = vpack.c.bf16 %v71, %v55
  %v120 = vpack.c.bf16 %v72, %v56
  %v121 = vpack.c.bf16 %v73, %v57
  %v122 = vpack.c.bf16 %v74, %v58
  %v123 = vpack.c.bf16 %v75, %v59
  %v124 = vpack.c.bf16 %v76, %v60
  %v125 = vpack.c.bf16 %v77, %v61
  %v126 = vpack.c.bf16 %v78, %v62
  %v127 = vpack.c.bf16 %v79, %v63
  %v128 = vpack.c.bf16 %v80, %v64
  %v129 = vpack.c.bf16 %v81, %v81
  %v130 = vpack.c.bf16 %v82, %v82
  %v131 = vpack.c.bf16 %v83, %v83
  %v132 = vpack.c.bf16 %v84, %v84
  %v133 = vpack.c.bf16 %v85, %v85
  %v134 = vpack.c.bf16 %v86, %v86
  %v135 = vpack.c.bf16 %v87, %v87
  %v136 = vpack.c.bf16 %v88, %v88
  %v137 = vpack.c.bf16 %v89, %v89
  %v138 = vpack.c.bf16 %v90, %v90
  %v139 = vpack.c.bf16 %v91, %v91
  %v140 = vpack.c.bf16 %v92, %v92
  %v141 = vpack.c.bf16 %v93, %v93
  %v142 = vpack.c.bf16 %v94, %v94
  %v143 = vpack.c.bf16 %v95, %v95
  %v144 = vpack.c.bf16 %v96, %v96
  %v145 = vld [vmem:[%s1] sm:$0xff]
  %v146 = vld [vmem:[%s1 + $0x8] sm:$0xff]
  %v147 = vld [vmem:[%s1 + $0x10] sm:$0xff]
  %v148 = vld [vmem:[%s1 + $0x18] sm:$0xff]
  %v149 = vld [vmem:[%s1 + $0x20] sm:$0xff]
  %v150 = vld [vmem:[%s1 + $0x28] sm:$0xff]
  %v151 = vld [vmem:[%s1 + $0x30] sm:$0xff]
  %v152 = vld [vmem:[%s1 + $0x38] sm:$0xff]
  %v153 = vld [vmem:[%s1 + $0x40] sm:$0xff]
  %v154 = vld [vmem:[%s1 + $0x48] sm:$0xff]
  %v155 = vld [vmem:[%s1 + $0x50] sm:$0xff]
  %v156 = vld [vmem:[%s1 + $0x58] sm:$0xff]
  %v157 = vld [vmem:[%s1 + $0x60] sm:$0xff]
  %v158 = vld [vmem:[%s1 + $0x68] sm:$0xff]
  %v159 = vld [vmem:[%s1 + $0x70] sm:$0xff]
  %v160 = vld [vmem:[%s1 + $0x78] sm:$0xff]
  %v161 = vld [vmem:[%s1 + $0x80] sm:$0xff]
  %v162 = vld [vmem:[%s1 + $0x88] sm:$0xff]
  %v163 = vld [vmem:[%s1 + $0x90] sm:$0xff]
  %v164 = vld [vmem:[%s1 + $0x98] sm:$0xff]
  %v165 = vld [vmem:[%s1 + $0xa0] sm:$0xff]
  %v166 = vld [vmem:[%s1 + $0xa8] sm:$0xff]
  %v167 = vld [vmem:[%s1 + $0xb0] sm:$0xff]
  %v168 = vld [vmem:[%s1 + $0xb8] sm:$0xff]
  %v169 = vld [vmem:[%s1 + $0xc0] sm:$0xff]
  %v170 = vld [vmem:[%s1 + $0xc8] sm:$0xff]
  %v171 = vld [vmem:[%s1 + $0xd0] sm:$0xff]
  %v172 = vld [vmem:[%s1 + $0xd8] sm:$0xff]
  %v173 = vld [vmem:[%s1 + $0xe0] sm:$0xff]
  %v174 = vld [vmem:[%s1 + $0xe8] sm:$0xff]
  %v175 = vld [vmem:[%s1 + $0xf0] sm:$0xff]
  %v176 = vld [vmem:[%s1 + $0xf8] sm:$0xff]
  %v177 = vld [vmem:[%s1 + $0x100] sm:$0xff]
  %v178 = vld [vmem:[%s1 + $0x108] sm:$0xff]
  %v179 = vld [vmem:[%s1 + $0x110] sm:$0xff]
  %v180 = vld [vmem:[%s1 + $0x118] sm:$0xff]
  %v181 = vld [vmem:[%s1 + $0x120] sm:$0xff]
  %v182 = vld [vmem:[%s1 + $0x128] sm:$0xff]
  %v183 = vld [vmem:[%s1 + $0x130] sm:$0xff]
  %v184 = vld [vmem:[%s1 + $0x138] sm:$0xff]
  %v185 = vld [vmem:[%s1 + $0x140] sm:$0xff]
  %v186 = vld [vmem:[%s1 + $0x148] sm:$0xff]
  %v187 = vld [vmem:[%s1 + $0x150] sm:$0xff]
  %v188 = vld [vmem:[%s1 + $0x158] sm:$0xff]
  %v189 = vld [vmem:[%s1 + $0x160] sm:$0xff]
  %v190 = vld [vmem:[%s1 + $0x168] sm:$0xff]
  %v191 = vld [vmem:[%s1 + $0x170] sm:$0xff]
  %v192 = vld [vmem:[%s1 + $0x178] sm:$0xff]
  %v193 = vld [vmem:[%s1 + $0x180] sm:$0xff]
  %v194 = vld [vmem:[%s1 + $0x188] sm:$0xff]
  %v195 = vld [vmem:[%s1 + $0x190] sm:$0xff]
  %v196 = vld [vmem:[%s1 + $0x198] sm:$0xff]
  %v197 = vld [vmem:[%s1 + $0x1a0] sm:$0xff]
  %v198 = vld [vmem:[%s1 + $0x1a8] sm:$0xff]
  %v199 = vld [vmem:[%s1 + $0x1b0] sm:$0xff]
  %v200 = vld [vmem:[%s1 + $0x1b8] sm:$0xff]
  %v201 = vld [vmem:[%s1 + $0x1c0] sm:$0xff]
  %v202 = vld [vmem:[%s1 + $0x1c8] sm:$0xff]
  %v203 = vld [vmem:[%s1 + $0x1d0] sm:$0xff]
  %v204 = vld [vmem:[%s1 + $0x1d8] sm:$0xff]
  %v205 = vld [vmem:[%s1 + $0x1e0] sm:$0xff]
  %v206 = vld [vmem:[%s1 + $0x1e8] sm:$0xff]
  %v207 = vld [vmem:[%s1 + $0x1f0] sm:$0xff]
  %v208 = vld [vmem:[%s1 + $0x1f8] sm:$0xff]
  %v209 = vld [vmem:[%s1 + $0x200] sm:$0xff]
  %v210 = vld [vmem:[%s1 + $0x208] sm:$0xff]
  %v211 = vld [vmem:[%s1 + $0x210] sm:$0xff]
  %v212 = vld [vmem:[%s1 + $0x218] sm:$0xff]
  %v213 = vld [vmem:[%s1 + $0x220] sm:$0xff]
  %v214 = vld [vmem:[%s1 + $0x228] sm:$0xff]
  %v215 = vld [vmem:[%s1 + $0x230] sm:$0xff]
  %v216 = vld [vmem:[%s1 + $0x238] sm:$0xff]
  %v217 = vld [vmem:[%s1 + $0x240] sm:$0xff]
  %v218 = vld [vmem:[%s1 + $0x248] sm:$0xff]
  %v219 = vld [vmem:[%s1 + $0x250] sm:$0xff]
  %v220 = vld [vmem:[%s1 + $0x258] sm:$0xff]
  %v221 = vld [vmem:[%s1 + $0x260] sm:$0xff]
  %v222 = vld [vmem:[%s1 + $0x268] sm:$0xff]
  %v223 = vld [vmem:[%s1 + $0x270] sm:$0xff]
  %v224 = vld [vmem:[%s1 + $0x278] sm:$0xff]
  %v225 = vld [vmem:[%s1 + $0x280] sm:$0xff]
  %v226 = vld [vmem:[%s1 + $0x288] sm:$0xff]
  %v227 = vld [vmem:[%s1 + $0x290] sm:$0xff]
  %v228 = vld [vmem:[%s1 + $0x298] sm:$0xff]
  %v229 = vld [vmem:[%s1 + $0x2a0] sm:$0xff]
  %v230 = vld [vmem:[%s1 + $0x2a8] sm:$0xff]
  %v231 = vld [vmem:[%s1 + $0x2b0] sm:$0xff]
  %v232 = vld [vmem:[%s1 + $0x2b8] sm:$0xff]
  %v233 = vld [vmem:[%s1 + $0x2c0] sm:$0xff]
  %v234 = vld [vmem:[%s1 + $0x2c8] sm:$0xff]
  %v235 = vld [vmem:[%s1 + $0x2d0] sm:$0xff]
  %v236 = vld [vmem:[%s1 + $0x2d8] sm:$0xff]
  %v237 = vld [vmem:[%s1 + $0x2e0] sm:$0xff]
  %v238 = vld [vmem:[%s1 + $0x2e8] sm:$0xff]
  %v239 = vld [vmem:[%s1 + $0x2f0] sm:$0xff]
  %v240 = vld [vmem:[%s1 + $0x2f8] sm:$0xff]
  %v241 = vld [vmem:[%s1 + $0x300] sm:$0xff]
  %v242 = vld [vmem:[%s1 + $0x308] sm:$0xff]
  %v243 = vld [vmem:[%s1 + $0x310] sm:$0xff]
  %v244 = vld [vmem:[%s1 + $0x318] sm:$0xff]
  %v245 = vld [vmem:[%s1 + $0x320] sm:$0xff]
  %v246 = vld [vmem:[%s1 + $0x328] sm:$0xff]
  %v247 = vld [vmem:[%s1 + $0x330] sm:$0xff]
  %v248 = vld [vmem:[%s1 + $0x338] sm:$0xff]
  %v249 = vld [vmem:[%s1 + $0x340] sm:$0xff]
  %v250 = vld [vmem:[%s1 + $0x348] sm:$0xff]
  %v251 = vld [vmem:[%s1 + $0x350] sm:$0xff]
  %v252 = vld [vmem:[%s1 + $0x358] sm:$0xff]
  %v253 = vld [vmem:[%s1 + $0x360] sm:$0xff]
  %v254 = vld [vmem:[%s1 + $0x368] sm:$0xff]
  %v255 = vld [vmem:[%s1 + $0x370] sm:$0xff]
  %v256 = vld [vmem:[%s1 + $0x378] sm:$0xff]
  %v257 = vld [vmem:[%s1 + $0x380] sm:$0xff]
  %v258 = vld [vmem:[%s1 + $0x388] sm:$0xff]
  %v259 = vld [vmem:[%s1 + $0x390] sm:$0xff]
  %v260 = vld [vmem:[%s1 + $0x398] sm:$0xff]
  %v261 = vld [vmem:[%s1 + $0x3a0] sm:$0xff]
  %v262 = vld [vmem:[%s1 + $0x3a8] sm:$0xff]
  %v263 = vld [vmem:[%s1 + $0x3b0] sm:$0xff]
  %v264 = vld [vmem:[%s1 + $0x3b8] sm:$0xff]
  %v265 = vld [vmem:[%s1 + $0x3c0] sm:$0xff]
  %v266 = vld [vmem:[%s1 + $0x3c8] sm:$0xff]
  %v267 = vld [vmem:[%s1 + $0x3d0] sm:$0xff]
  %v268 = vld [vmem:[%s1 + $0x3d8] sm:$0xff]
  %v269 = vld [vmem:[%s1 + $0x3e0] sm:$0xff]
  %v270 = vld [vmem:[%s1 + $0x3e8] sm:$0xff]
  %v271 = vld [vmem:[%s1 + $0x3f0] sm:$0xff]
  %v272 = vld [vmem:[%s1 + $0x3f8] sm:$0xff]
  %v273 = vld [vmem:[%s1 + $0x400] sm:$0xff]
  %v274 = vld [vmem:[%s1 + $0x408] sm:$0xff]
  %v275 = vld [vmem:[%s1 + $0x410] sm:$0xff]
  %v276 = vld [vmem:[%s1 + $0x418] sm:$0xff]
  %v277 = vld [vmem:[%s1 + $0x420] sm:$0xff]
  %v278 = vld [vmem:[%s1 + $0x428] sm:$0xff]
  %v279 = vld [vmem:[%s1 + $0x430] sm:$0xff]
  %v280 = vld [vmem:[%s1 + $0x438] sm:$0xff]
  %v281 = vld [vmem:[%s1 + $0x440] sm:$0xff]
  %v282 = vld [vmem:[%s1 + $0x448] sm:$0xff]
  %v283 = vld [vmem:[%s1 + $0x450] sm:$0xff]
  %v284 = vld [vmem:[%s1 + $0x458] sm:$0xff]
  %v285 = vld [vmem:[%s1 + $0x460] sm:$0xff]
  %v286 = vld [vmem:[%s1 + $0x468] sm:$0xff]
  %v287 = vld [vmem:[%s1 + $0x470] sm:$0xff]
  %v288 = vld [vmem:[%s1 + $0x478] sm:$0xff]
  %v289 = vld [vmem:[%s1 + $0x480] sm:$0xff]
  %v290 = vld [vmem:[%s1 + $0x488] sm:$0xff]
  %v291 = vld [vmem:[%s1 + $0x490] sm:$0xff]
  %v292 = vld [vmem:[%s1 + $0x498] sm:$0xff]
  %v293 = vld [vmem:[%s1 + $0x4a0] sm:$0xff]
  %v294 = vld [vmem:[%s1 + $0x4a8] sm:$0xff]
  %v295 = vld [vmem:[%s1 + $0x4b0] sm:$0xff]
  %v296 = vld [vmem:[%s1 + $0x4b8] sm:$0xff]
  %v297 = vld [vmem:[%s1 + $0x4c0] sm:$0xff]
  %v298 = vld [vmem:[%s1 + $0x4c8] sm:$0xff]
  %v299 = vld [vmem:[%s1 + $0x4d0] sm:$0xff]
  %v300 = vld [vmem:[%s1 + $0x4d8] sm:$0xff]
  %v301 = vld [vmem:[%s1 + $0x4e0] sm:$0xff]
  %v302 = vld [vmem:[%s1 + $0x4e8] sm:$0xff]
  %v303 = vld [vmem:[%s1 + $0x4f0] sm:$0xff]
  %v304 = vld [vmem:[%s1 + $0x4f8] sm:$0xff]
  %v305 = vld [vmem:[%s1 + $0x500] sm:$0xff]
  %v306 = vld [vmem:[%s1 + $0x508] sm:$0xff]
  %v307 = vld [vmem:[%s1 + $0x510] sm:$0xff]
  %v308 = vld [vmem:[%s1 + $0x518] sm:$0xff]
  %v309 = vld [vmem:[%s1 + $0x520] sm:$0xff]
  %v310 = vld [vmem:[%s1 + $0x528] sm:$0xff]
  %v311 = vld [vmem:[%s1 + $0x530] sm:$0xff]
  %v312 = vld [vmem:[%s1 + $0x538] sm:$0xff]
  %v313 = vld [vmem:[%s1 + $0x540] sm:$0xff]
  %v314 = vld [vmem:[%s1 + $0x548] sm:$0xff]
  %v315 = vld [vmem:[%s1 + $0x550] sm:$0xff]
  %v316 = vld [vmem:[%s1 + $0x558] sm:$0xff]
  %v317 = vld [vmem:[%s1 + $0x560] sm:$0xff]
  %v318 = vld [vmem:[%s1 + $0x568] sm:$0xff]
  %v319 = vld [vmem:[%s1 + $0x570] sm:$0xff]
  %v320 = vld [vmem:[%s1 + $0x578] sm:$0xff]
  %v321 = vld [vmem:[%s1 + $0x580] sm:$0xff]
  %v322 = vld [vmem:[%s1 + $0x588] sm:$0xff]
  %v323 = vld [vmem:[%s1 + $0x590] sm:$0xff]
  %v324 = vld [vmem:[%s1 + $0x598] sm:$0xff]
  %v325 = vld [vmem:[%s1 + $0x5a0] sm:$0xff]
  %v326 = vld [vmem:[%s1 + $0x5a8] sm:$0xff]
  %v327 = vld [vmem:[%s1 + $0x5b0] sm:$0xff]
  %v328 = vld [vmem:[%s1 + $0x5b8] sm:$0xff]
  %v329 = vld [vmem:[%s1 + $0x5c0] sm:$0xff]
  %v330 = vld [vmem:[%s1 + $0x5c8] sm:$0xff]
  %v331 = vld [vmem:[%s1 + $0x5d0] sm:$0xff]
  %v332 = vld [vmem:[%s1 + $0x5d8] sm:$0xff]
  %v333 = vld [vmem:[%s1 + $0x5e0] sm:$0xff]
  %v334 = vld [vmem:[%s1 + $0x5e8] sm:$0xff]
  %v335 = vld [vmem:[%s1 + $0x5f0] sm:$0xff]
  %v336 = vld [vmem:[%s1 + $0x5f8] sm:$0xff]
  %v337 = vld [vmem:[%s1 + $0x600] sm:$0xff]
  %v338 = vld [vmem:[%s1 + $0x608] sm:$0xff]
  %v339 = vld [vmem:[%s1 + $0x610] sm:$0xff]
  %v340 = vld [vmem:[%s1 + $0x618] sm:$0xff]
  %v341 = vld [vmem:[%s1 + $0x620] sm:$0xff]
  %v342 = vld [vmem:[%s1 + $0x628] sm:$0xff]
  %v343 = vld [vmem:[%s1 + $0x630] sm:$0xff]
  %v344 = vld [vmem:[%s1 + $0x638] sm:$0xff]
  %v345 = vld [vmem:[%s1 + $0x640] sm:$0xff]
  %v346 = vld [vmem:[%s1 + $0x648] sm:$0xff]
  %v347 = vld [vmem:[%s1 + $0x650] sm:$0xff]
  %v348 = vld [vmem:[%s1 + $0x658] sm:$0xff]
  %v349 = vld [vmem:[%s1 + $0x660] sm:$0xff]
  %v350 = vld [vmem:[%s1 + $0x668] sm:$0xff]
  %v351 = vld [vmem:[%s1 + $0x670] sm:$0xff]
  %v352 = vld [vmem:[%s1 + $0x678] sm:$0xff]
  %v353 = vld [vmem:[%s1 + $0x680] sm:$0xff]
  %v354 = vld [vmem:[%s1 + $0x688] sm:$0xff]
  %v355 = vld [vmem:[%s1 + $0x690] sm:$0xff]
  %v356 = vld [vmem:[%s1 + $0x698] sm:$0xff]
  %v357 = vld [vmem:[%s1 + $0x6a0] sm:$0xff]
  %v358 = vld [vmem:[%s1 + $0x6a8] sm:$0xff]
  %v359 = vld [vmem:[%s1 + $0x6b0] sm:$0xff]
  %v360 = vld [vmem:[%s1 + $0x6b8] sm:$0xff]
  %v361 = vld [vmem:[%s1 + $0x6c0] sm:$0xff]
  %v362 = vld [vmem:[%s1 + $0x6c8] sm:$0xff]
  %v363 = vld [vmem:[%s1 + $0x6d0] sm:$0xff]
  %v364 = vld [vmem:[%s1 + $0x6d8] sm:$0xff]
  %v365 = vld [vmem:[%s1 + $0x6e0] sm:$0xff]
  %v366 = vld [vmem:[%s1 + $0x6e8] sm:$0xff]
  %v367 = vld [vmem:[%s1 + $0x6f0] sm:$0xff]
  %v368 = vld [vmem:[%s1 + $0x6f8] sm:$0xff]
  %v369 = vld [vmem:[%s1 + $0x700] sm:$0xff]
  %v370 = vld [vmem:[%s1 + $0x708] sm:$0xff]
  %v371 = vld [vmem:[%s1 + $0x710] sm:$0xff]
  %v372 = vld [vmem:[%s1 + $0x718] sm:$0xff]
  %v373 = vld [vmem:[%s1 + $0x720] sm:$0xff]
  %v374 = vld [vmem:[%s1 + $0x728] sm:$0xff]
  %v375 = vld [vmem:[%s1 + $0x730] sm:$0xff]
  %v376 = vld [vmem:[%s1 + $0x738] sm:$0xff]
  %v377 = vld [vmem:[%s1 + $0x740] sm:$0xff]
  %v378 = vld [vmem:[%s1 + $0x748] sm:$0xff]
  %v379 = vld [vmem:[%s1 + $0x750] sm:$0xff]
  %v380 = vld [vmem:[%s1 + $0x758] sm:$0xff]
  %v381 = vld [vmem:[%s1 + $0x760] sm:$0xff]
  %v382 = vld [vmem:[%s1 + $0x768] sm:$0xff]
  %v383 = vld [vmem:[%s1 + $0x770] sm:$0xff]
  %v384 = vld [vmem:[%s1 + $0x778] sm:$0xff]
  %v385 = vld [vmem:[%s1 + $0x780] sm:$0xff]
  %v386 = vld [vmem:[%s1 + $0x788] sm:$0xff]
  %v387 = vld [vmem:[%s1 + $0x790] sm:$0xff]
  %v388 = vld [vmem:[%s1 + $0x798] sm:$0xff]
  %v389 = vld [vmem:[%s1 + $0x7a0] sm:$0xff]
  %v390 = vld [vmem:[%s1 + $0x7a8] sm:$0xff]
  %v391 = vld [vmem:[%s1 + $0x7b0] sm:$0xff]
  %v392 = vld [vmem:[%s1 + $0x7b8] sm:$0xff]
  %v393 = vld [vmem:[%s1 + $0x7c0] sm:$0xff]
  %v394 = vld [vmem:[%s1 + $0x7c8] sm:$0xff]
  %v395 = vld [vmem:[%s1 + $0x7d0] sm:$0xff]
  %v396 = vld [vmem:[%s1 + $0x7d8] sm:$0xff]
  %v397 = vld [vmem:[%s1 + $0x7e0] sm:$0xff]
  %v398 = vld [vmem:[%s1 + $0x7e8] sm:$0xff]
  %v399 = vld [vmem:[%s1 + $0x7f0] sm:$0xff]
  %v400 = vld [vmem:[%s1 + $0x7f8] sm:$0xff]
  %v401 = vld [vmem:[%s2] sm:$0x3]
  %v403 = vlaneseq
  %v404 = vshrl.u32 %v403, 7
  %v405 = vsub.s32 0, %v404
  %v406 = vrot.slane %v401, %v405
  %v407 = vlaneseq
  %v408 = vshrl.u32 %v407, 7
  %v409 = vsub.s32 1, %v408
  %v410 = vrot.slane %v401, %v409
  %v669 = vunpack.c.l.b16 %v145
  %v670 = vunpack.c.h.b16 %v145
  %v671 = vunpack.c.l.b16 %v146
  %v672 = vunpack.c.h.b16 %v146
  %v673 = vunpack.c.l.b16 %v147
  %v674 = vunpack.c.h.b16 %v147
  %v675 = vunpack.c.l.b16 %v148
  %v676 = vunpack.c.h.b16 %v148
  %v677 = vunpack.c.l.b16 %v149
  %v678 = vunpack.c.h.b16 %v149
  %v679 = vunpack.c.l.b16 %v150
  %v680 = vunpack.c.h.b16 %v150
  %v681 = vunpack.c.l.b16 %v151
  %v682 = vunpack.c.h.b16 %v151
  %v683 = vunpack.c.l.b16 %v152
  %v684 = vunpack.c.h.b16 %v152
  %v685 = vunpack.c.l.b16 %v153
  %v686 = vunpack.c.h.b16 %v153
  %v687 = vunpack.c.l.b16 %v154
  %v688 = vunpack.c.h.b16 %v154
  %v689 = vunpack.c.l.b16 %v155
  %v690 = vunpack.c.h.b16 %v155
  %v691 = vunpack.c.l.b16 %v156
  %v692 = vunpack.c.h.b16 %v156
  %v693 = vunpack.c.l.b16 %v157
  %v694 = vunpack.c.h.b16 %v157
  %v695 = vunpack.c.l.b16 %v158
  %v696 = vunpack.c.h.b16 %v158
  %v697 = vunpack.c.l.b16 %v159
  %v698 = vunpack.c.h.b16 %v159
  %v699 = vunpack.c.l.b16 %v160
  %v700 = vunpack.c.h.b16 %v160
  %v701 = vunpack.c.l.b16 %v161
  %v702 = vunpack.c.h.b16 %v161
  %v703 = vunpack.c.l.b16 %v162
  %v704 = vunpack.c.h.b16 %v162
  %v705 = vunpack.c.l.b16 %v163
  %v706 = vunpack.c.h.b16 %v163
  %v707 = vunpack.c.l.b16 %v164
  %v708 = vunpack.c.h.b16 %v164
  %v709 = vunpack.c.l.b16 %v165
  %v710 = vunpack.c.h.b16 %v165
  %v711 = vunpack.c.l.b16 %v166
  %v712 = vunpack.c.h.b16 %v166
  %v713 = vunpack.c.l.b16 %v167
  %v714 = vunpack.c.h.b16 %v167
  %v715 = vunpack.c.l.b16 %v168
  %v716 = vunpack.c.h.b16 %v168
  %v717 = vunpack.c.l.b16 %v169
  %v718 = vunpack.c.h.b16 %v169
  %v719 = vunpack.c.l.b16 %v170
  %v720 = vunpack.c.h.b16 %v170
  %v721 = vunpack.c.l.b16 %v171
  %v722 = vunpack.c.h.b16 %v171
  %v723 = vunpack.c.l.b16 %v172
  %v724 = vunpack.c.h.b16 %v172
  %v725 = vunpack.c.l.b16 %v173
  %v726 = vunpack.c.h.b16 %v173
  %v727 = vunpack.c.l.b16 %v174
  %v728 = vunpack.c.h.b16 %v174
  %v729 = vunpack.c.l.b16 %v175
  %v730 = vunpack.c.h.b16 %v175
  %v731 = vunpack.c.l.b16 %v176
  %v732 = vunpack.c.h.b16 %v176
  %v733 = vunpack.c.l.b16 %v177
  %v734 = vunpack.c.h.b16 %v177
  %v735 = vunpack.c.l.b16 %v178
  %v736 = vunpack.c.h.b16 %v178
  %v737 = vunpack.c.l.b16 %v179
  %v738 = vunpack.c.h.b16 %v179
  %v739 = vunpack.c.l.b16 %v180
  %v740 = vunpack.c.h.b16 %v180
  %v741 = vunpack.c.l.b16 %v181
  %v742 = vunpack.c.h.b16 %v181
  %v743 = vunpack.c.l.b16 %v182
  %v744 = vunpack.c.h.b16 %v182
  %v745 = vunpack.c.l.b16 %v183
  %v746 = vunpack.c.h.b16 %v183
  %v747 = vunpack.c.l.b16 %v184
  %v748 = vunpack.c.h.b16 %v184
  %v749 = vunpack.c.l.b16 %v185
  %v750 = vunpack.c.h.b16 %v185
  %v751 = vunpack.c.l.b16 %v186
  %v752 = vunpack.c.h.b16 %v186
  %v753 = vunpack.c.l.b16 %v187
  %v754 = vunpack.c.h.b16 %v187
  %v755 = vunpack.c.l.b16 %v188
  %v756 = vunpack.c.h.b16 %v188
  %v757 = vunpack.c.l.b16 %v189
  %v758 = vunpack.c.h.b16 %v189
  %v759 = vunpack.c.l.b16 %v190
  %v760 = vunpack.c.h.b16 %v190
  %v761 = vunpack.c.l.b16 %v191
  %v762 = vunpack.c.h.b16 %v191
  %v763 = vunpack.c.l.b16 %v192
  %v764 = vunpack.c.h.b16 %v192
  %v765 = vunpack.c.l.b16 %v193
  %v766 = vunpack.c.h.b16 %v193
  %v767 = vunpack.c.l.b16 %v194
  %v768 = vunpack.c.h.b16 %v194
  %v769 = vunpack.c.l.b16 %v195
  %v770 = vunpack.c.h.b16 %v195
  %v771 = vunpack.c.l.b16 %v196
  %v772 = vunpack.c.h.b16 %v196
  %v773 = vunpack.c.l.b16 %v197
  %v774 = vunpack.c.h.b16 %v197
  %v775 = vunpack.c.l.b16 %v198
  %v776 = vunpack.c.h.b16 %v198
  %v777 = vunpack.c.l.b16 %v199
  %v778 = vunpack.c.h.b16 %v199
  %v779 = vunpack.c.l.b16 %v200
  %v780 = vunpack.c.h.b16 %v200
  %v781 = vunpack.c.l.b16 %v201
  %v782 = vunpack.c.h.b16 %v201
  %v783 = vunpack.c.l.b16 %v202
  %v784 = vunpack.c.h.b16 %v202
  %v785 = vunpack.c.l.b16 %v203
  %v786 = vunpack.c.h.b16 %v203
  %v787 = vunpack.c.l.b16 %v204
  %v788 = vunpack.c.h.b16 %v204
  %v789 = vunpack.c.l.b16 %v205
  %v790 = vunpack.c.h.b16 %v205
  %v791 = vunpack.c.l.b16 %v206
  %v792 = vunpack.c.h.b16 %v206
  %v793 = vunpack.c.l.b16 %v207
  %v794 = vunpack.c.h.b16 %v207
  %v795 = vunpack.c.l.b16 %v208
  %v796 = vunpack.c.h.b16 %v208
  %v797 = vunpack.c.l.b16 %v209
  %v798 = vunpack.c.h.b16 %v209
  %v799 = vunpack.c.l.b16 %v210
  %v800 = vunpack.c.h.b16 %v210
  %v801 = vunpack.c.l.b16 %v211
  %v802 = vunpack.c.h.b16 %v211
  %v803 = vunpack.c.l.b16 %v212
  %v804 = vunpack.c.h.b16 %v212
  %v805 = vunpack.c.l.b16 %v213
  %v806 = vunpack.c.h.b16 %v213
  %v807 = vunpack.c.l.b16 %v214
  %v808 = vunpack.c.h.b16 %v214
  %v809 = vunpack.c.l.b16 %v215
  %v810 = vunpack.c.h.b16 %v215
  %v811 = vunpack.c.l.b16 %v216
  %v812 = vunpack.c.h.b16 %v216
  %v813 = vunpack.c.l.b16 %v217
  %v814 = vunpack.c.h.b16 %v217
  %v815 = vunpack.c.l.b16 %v218
  %v816 = vunpack.c.h.b16 %v218
  %v817 = vunpack.c.l.b16 %v219
  %v818 = vunpack.c.h.b16 %v219
  %v819 = vunpack.c.l.b16 %v220
  %v820 = vunpack.c.h.b16 %v220
  %v821 = vunpack.c.l.b16 %v221
  %v822 = vunpack.c.h.b16 %v221
  %v823 = vunpack.c.l.b16 %v222
  %v824 = vunpack.c.h.b16 %v222
  %v825 = vunpack.c.l.b16 %v223
  %v826 = vunpack.c.h.b16 %v223
  %v827 = vunpack.c.l.b16 %v224
  %v828 = vunpack.c.h.b16 %v224
  %v829 = vunpack.c.l.b16 %v225
  %v830 = vunpack.c.h.b16 %v225
  %v831 = vunpack.c.l.b16 %v226
  %v832 = vunpack.c.h.b16 %v226
  %v833 = vunpack.c.l.b16 %v227
  %v834 = vunpack.c.h.b16 %v227
  %v835 = vunpack.c.l.b16 %v228
  %v836 = vunpack.c.h.b16 %v228
  %v837 = vunpack.c.l.b16 %v229
  %v838 = vunpack.c.h.b16 %v229
  %v839 = vunpack.c.l.b16 %v230
  %v840 = vunpack.c.h.b16 %v230
  %v841 = vunpack.c.l.b16 %v231
  %v842 = vunpack.c.h.b16 %v231
  %v843 = vunpack.c.l.b16 %v232
  %v844 = vunpack.c.h.b16 %v232
  %v845 = vunpack.c.l.b16 %v233
  %v846 = vunpack.c.h.b16 %v233
  %v847 = vunpack.c.l.b16 %v234
  %v848 = vunpack.c.h.b16 %v234
  %v849 = vunpack.c.l.b16 %v235
  %v850 = vunpack.c.h.b16 %v235
  %v851 = vunpack.c.l.b16 %v236
  %v852 = vunpack.c.h.b16 %v236
  %v853 = vunpack.c.l.b16 %v237
  %v854 = vunpack.c.h.b16 %v237
  %v855 = vunpack.c.l.b16 %v238
  %v856 = vunpack.c.h.b16 %v238
  %v857 = vunpack.c.l.b16 %v239
  %v858 = vunpack.c.h.b16 %v239
  %v859 = vunpack.c.l.b16 %v240
  %v860 = vunpack.c.h.b16 %v240
  %v861 = vunpack.c.l.b16 %v241
  %v862 = vunpack.c.h.b16 %v241
  %v863 = vunpack.c.l.b16 %v242
  %v864 = vunpack.c.h.b16 %v242
  %v865 = vunpack.c.l.b16 %v243
  %v866 = vunpack.c.h.b16 %v243
  %v867 = vunpack.c.l.b16 %v244
  %v868 = vunpack.c.h.b16 %v244
  %v869 = vunpack.c.l.b16 %v245
  %v870 = vunpack.c.h.b16 %v245
  %v871 = vunpack.c.l.b16 %v246
  %v872 = vunpack.c.h.b16 %v246
  %v873 = vunpack.c.l.b16 %v247
  %v874 = vunpack.c.h.b16 %v247
  %v875 = vunpack.c.l.b16 %v248
  %v876 = vunpack.c.h.b16 %v248
  %v877 = vunpack.c.l.b16 %v249
  %v878 = vunpack.c.h.b16 %v249
  %v879 = vunpack.c.l.b16 %v250
  %v880 = vunpack.c.h.b16 %v250
  %v881 = vunpack.c.l.b16 %v251
  %v882 = vunpack.c.h.b16 %v251
  %v883 = vunpack.c.l.b16 %v252
  %v884 = vunpack.c.h.b16 %v252
  %v885 = vunpack.c.l.b16 %v253
  %v886 = vunpack.c.h.b16 %v253
  %v887 = vunpack.c.l.b16 %v254
  %v888 = vunpack.c.h.b16 %v254
  %v889 = vunpack.c.l.b16 %v255
  %v890 = vunpack.c.h.b16 %v255
  %v891 = vunpack.c.l.b16 %v256
  %v892 = vunpack.c.h.b16 %v256
  %v893 = vunpack.c.l.b16 %v257
  %v894 = vunpack.c.h.b16 %v257
  %v895 = vunpack.c.l.b16 %v258
  %v896 = vunpack.c.h.b16 %v258
  %v897 = vunpack.c.l.b16 %v259
  %v898 = vunpack.c.h.b16 %v259
  %v899 = vunpack.c.l.b16 %v260
  %v900 = vunpack.c.h.b16 %v260
  %v901 = vunpack.c.l.b16 %v261
  %v902 = vunpack.c.h.b16 %v261
  %v903 = vunpack.c.l.b16 %v262
  %v904 = vunpack.c.h.b16 %v262
  %v905 = vunpack.c.l.b16 %v263
  %v906 = vunpack.c.h.b16 %v263
  %v907 = vunpack.c.l.b16 %v264
  %v908 = vunpack.c.h.b16 %v264
  %v909 = vunpack.c.l.b16 %v265
  %v910 = vunpack.c.h.b16 %v265
  %v911 = vunpack.c.l.b16 %v266
  %v912 = vunpack.c.h.b16 %v266
  %v913 = vunpack.c.l.b16 %v267
  %v914 = vunpack.c.h.b16 %v267
  %v915 = vunpack.c.l.b16 %v268
  %v916 = vunpack.c.h.b16 %v268
  %v917 = vunpack.c.l.b16 %v269
  %v918 = vunpack.c.h.b16 %v269
  %v919 = vunpack.c.l.b16 %v270
  %v920 = vunpack.c.h.b16 %v270
  %v921 = vunpack.c.l.b16 %v271
  %v922 = vunpack.c.h.b16 %v271
  %v923 = vunpack.c.l.b16 %v272
  %v924 = vunpack.c.h.b16 %v272
  %v925 = vunpack.c.l.b16 %v273
  %v926 = vunpack.c.h.b16 %v273
  %v927 = vunpack.c.l.b16 %v274
  %v928 = vunpack.c.h.b16 %v274
  %v929 = vunpack.c.l.b16 %v275
  %v930 = vunpack.c.h.b16 %v275
  %v931 = vunpack.c.l.b16 %v276
  %v932 = vunpack.c.h.b16 %v276
  %v933 = vunpack.c.l.b16 %v277
  %v934 = vunpack.c.h.b16 %v277
  %v935 = vunpack.c.l.b16 %v278
  %v936 = vunpack.c.h.b16 %v278
  %v937 = vunpack.c.l.b16 %v279
  %v938 = vunpack.c.h.b16 %v279
  %v939 = vunpack.c.l.b16 %v280
  %v940 = vunpack.c.h.b16 %v280
  %v941 = vunpack.c.l.b16 %v281
  %v942 = vunpack.c.h.b16 %v281
  %v943 = vunpack.c.l.b16 %v282
  %v944 = vunpack.c.h.b16 %v282
  %v945 = vunpack.c.l.b16 %v283
  %v946 = vunpack.c.h.b16 %v283
  %v947 = vunpack.c.l.b16 %v284
  %v948 = vunpack.c.h.b16 %v284
  %v949 = vunpack.c.l.b16 %v285
  %v950 = vunpack.c.h.b16 %v285
  %v951 = vunpack.c.l.b16 %v286
  %v952 = vunpack.c.h.b16 %v286
  %v953 = vunpack.c.l.b16 %v287
  %v954 = vunpack.c.h.b16 %v287
  %v955 = vunpack.c.l.b16 %v288
  %v956 = vunpack.c.h.b16 %v288
  %v957 = vunpack.c.l.b16 %v289
  %v958 = vunpack.c.h.b16 %v289
  %v959 = vunpack.c.l.b16 %v290
  %v960 = vunpack.c.h.b16 %v290
  %v961 = vunpack.c.l.b16 %v291
  %v962 = vunpack.c.h.b16 %v291
  %v963 = vunpack.c.l.b16 %v292
  %v964 = vunpack.c.h.b16 %v292
  %v965 = vunpack.c.l.b16 %v293
  %v966 = vunpack.c.h.b16 %v293
  %v967 = vunpack.c.l.b16 %v294
  %v968 = vunpack.c.h.b16 %v294
  %v969 = vunpack.c.l.b16 %v295
  %v970 = vunpack.c.h.b16 %v295
  %v971 = vunpack.c.l.b16 %v296
  %v972 = vunpack.c.h.b16 %v296
  %v973 = vunpack.c.l.b16 %v297
  %v974 = vunpack.c.h.b16 %v297
  %v975 = vunpack.c.l.b16 %v298
  %v976 = vunpack.c.h.b16 %v298
  %v977 = vunpack.c.l.b16 %v299
  %v978 = vunpack.c.h.b16 %v299
  %v979 = vunpack.c.l.b16 %v300
  %v980 = vunpack.c.h.b16 %v300
  %v981 = vunpack.c.l.b16 %v301
  %v982 = vunpack.c.h.b16 %v301
  %v983 = vunpack.c.l.b16 %v302
  %v984 = vunpack.c.h.b16 %v302
  %v985 = vunpack.c.l.b16 %v303
  %v986 = vunpack.c.h.b16 %v303
  %v987 = vunpack.c.l.b16 %v304
  %v988 = vunpack.c.h.b16 %v304
  %v989 = vunpack.c.l.b16 %v305
  %v990 = vunpack.c.h.b16 %v305
  %v991 = vunpack.c.l.b16 %v306
  %v992 = vunpack.c.h.b16 %v306
  %v993 = vunpack.c.l.b16 %v307
  %v994 = vunpack.c.h.b16 %v307
  %v995 = vunpack.c.l.b16 %v308
  %v996 = vunpack.c.h.b16 %v308
  %v997 = vunpack.c.l.b16 %v309
  %v998 = vunpack.c.h.b16 %v309
  %v999 = vunpack.c.l.b16 %v310
  %v1000 = vunpack.c.h.b16 %v310
  %v1001 = vunpack.c.l.b16 %v311
  %v1002 = vunpack.c.h.b16 %v311
  %v1003 = vunpack.c.l.b16 %v312
  %v1004 = vunpack.c.h.b16 %v312
  %v1005 = vunpack.c.l.b16 %v313
  %v1006 = vunpack.c.h.b16 %v313
  %v1007 = vunpack.c.l.b16 %v314
  %v1008 = vunpack.c.h.b16 %v314
  %v1009 = vunpack.c.l.b16 %v315
  %v1010 = vunpack.c.h.b16 %v315
  %v1011 = vunpack.c.l.b16 %v316
  %v1012 = vunpack.c.h.b16 %v316
  %v1013 = vunpack.c.l.b16 %v317
  %v1014 = vunpack.c.h.b16 %v317
  %v1015 = vunpack.c.l.b16 %v318
  %v1016 = vunpack.c.h.b16 %v318
  %v1017 = vunpack.c.l.b16 %v319
  %v1018 = vunpack.c.h.b16 %v319
  %v1019 = vunpack.c.l.b16 %v320
  %v1020 = vunpack.c.h.b16 %v320
  %v1021 = vunpack.c.l.b16 %v321
  %v1022 = vunpack.c.h.b16 %v321
  %v1023 = vunpack.c.l.b16 %v322
  %v1024 = vunpack.c.h.b16 %v322
  %v1025 = vunpack.c.l.b16 %v323
  %v1026 = vunpack.c.h.b16 %v323
  %v1027 = vunpack.c.l.b16 %v324
  %v1028 = vunpack.c.h.b16 %v324
  %v1029 = vunpack.c.l.b16 %v325
  %v1030 = vunpack.c.h.b16 %v325
  %v1031 = vunpack.c.l.b16 %v326
  %v1032 = vunpack.c.h.b16 %v326
  %v1033 = vunpack.c.l.b16 %v327
  %v1034 = vunpack.c.h.b16 %v327
  %v1035 = vunpack.c.l.b16 %v328
  %v1036 = vunpack.c.h.b16 %v328
  %v1037 = vunpack.c.l.b16 %v329
  %v1038 = vunpack.c.h.b16 %v329
  %v1039 = vunpack.c.l.b16 %v330
  %v1040 = vunpack.c.h.b16 %v330
  %v1041 = vunpack.c.l.b16 %v331
  %v1042 = vunpack.c.h.b16 %v331
  %v1043 = vunpack.c.l.b16 %v332
  %v1044 = vunpack.c.h.b16 %v332
  %v1045 = vunpack.c.l.b16 %v333
  %v1046 = vunpack.c.h.b16 %v333
  %v1047 = vunpack.c.l.b16 %v334
  %v1048 = vunpack.c.h.b16 %v334
  %v1049 = vunpack.c.l.b16 %v335
  %v1050 = vunpack.c.h.b16 %v335
  %v1051 = vunpack.c.l.b16 %v336
  %v1052 = vunpack.c.h.b16 %v336
  %v1053 = vunpack.c.l.b16 %v337
  %v1054 = vunpack.c.h.b16 %v337
  %v1055 = vunpack.c.l.b16 %v338
  %v1056 = vunpack.c.h.b16 %v338
  %v1057 = vunpack.c.l.b16 %v339
  %v1058 = vunpack.c.h.b16 %v339
  %v1059 = vunpack.c.l.b16 %v340
  %v1060 = vunpack.c.h.b16 %v340
  %v1061 = vunpack.c.l.b16 %v341
  %v1062 = vunpack.c.h.b16 %v341
  %v1063 = vunpack.c.l.b16 %v342
  %v1064 = vunpack.c.h.b16 %v342
  %v1065 = vunpack.c.l.b16 %v343
  %v1066 = vunpack.c.h.b16 %v343
  %v1067 = vunpack.c.l.b16 %v344
  %v1068 = vunpack.c.h.b16 %v344
  %v1069 = vunpack.c.l.b16 %v345
  %v1070 = vunpack.c.h.b16 %v345
  %v1071 = vunpack.c.l.b16 %v346
  %v1072 = vunpack.c.h.b16 %v346
  %v1073 = vunpack.c.l.b16 %v347
  %v1074 = vunpack.c.h.b16 %v347
  %v1075 = vunpack.c.l.b16 %v348
  %v1076 = vunpack.c.h.b16 %v348
  %v1077 = vunpack.c.l.b16 %v349
  %v1078 = vunpack.c.h.b16 %v349
  %v1079 = vunpack.c.l.b16 %v350
  %v1080 = vunpack.c.h.b16 %v350
  %v1081 = vunpack.c.l.b16 %v351
  %v1082 = vunpack.c.h.b16 %v351
  %v1083 = vunpack.c.l.b16 %v352
  %v1084 = vunpack.c.h.b16 %v352
  %v1085 = vunpack.c.l.b16 %v353
  %v1086 = vunpack.c.h.b16 %v353
  %v1087 = vunpack.c.l.b16 %v354
  %v1088 = vunpack.c.h.b16 %v354
  %v1089 = vunpack.c.l.b16 %v355
  %v1090 = vunpack.c.h.b16 %v355
  %v1091 = vunpack.c.l.b16 %v356
  %v1092 = vunpack.c.h.b16 %v356
  %v1093 = vunpack.c.l.b16 %v357
  %v1094 = vunpack.c.h.b16 %v357
  %v1095 = vunpack.c.l.b16 %v358
  %v1096 = vunpack.c.h.b16 %v358
  %v1097 = vunpack.c.l.b16 %v359
  %v1098 = vunpack.c.h.b16 %v359
  %v1099 = vunpack.c.l.b16 %v360
  %v1100 = vunpack.c.h.b16 %v360
  %v1101 = vunpack.c.l.b16 %v361
  %v1102 = vunpack.c.h.b16 %v361
  %v1103 = vunpack.c.l.b16 %v362
  %v1104 = vunpack.c.h.b16 %v362
  %v1105 = vunpack.c.l.b16 %v363
  %v1106 = vunpack.c.h.b16 %v363
  %v1107 = vunpack.c.l.b16 %v364
  %v1108 = vunpack.c.h.b16 %v364
  %v1109 = vunpack.c.l.b16 %v365
  %v1110 = vunpack.c.h.b16 %v365
  %v1111 = vunpack.c.l.b16 %v366
  %v1112 = vunpack.c.h.b16 %v366
  %v1113 = vunpack.c.l.b16 %v367
  %v1114 = vunpack.c.h.b16 %v367
  %v1115 = vunpack.c.l.b16 %v368
  %v1116 = vunpack.c.h.b16 %v368
  %v1117 = vunpack.c.l.b16 %v369
  %v1118 = vunpack.c.h.b16 %v369
  %v1119 = vunpack.c.l.b16 %v370
  %v1120 = vunpack.c.h.b16 %v370
  %v1121 = vunpack.c.l.b16 %v371
  %v1122 = vunpack.c.h.b16 %v371
  %v1123 = vunpack.c.l.b16 %v372
  %v1124 = vunpack.c.h.b16 %v372
  %v1125 = vunpack.c.l.b16 %v373
  %v1126 = vunpack.c.h.b16 %v373
  %v1127 = vunpack.c.l.b16 %v374
  %v1128 = vunpack.c.h.b16 %v374
  %v1129 = vunpack.c.l.b16 %v375
  %v1130 = vunpack.c.h.b16 %v375
  %v1131 = vunpack.c.l.b16 %v376
  %v1132 = vunpack.c.h.b16 %v376
  %v1133 = vunpack.c.l.b16 %v377
  %v1134 = vunpack.c.h.b16 %v377
  %v1135 = vunpack.c.l.b16 %v378
  %v1136 = vunpack.c.h.b16 %v378
  %v1137 = vunpack.c.l.b16 %v379
  %v1138 = vunpack.c.h.b16 %v379
  %v1139 = vunpack.c.l.b16 %v380
  %v1140 = vunpack.c.h.b16 %v380
  %v1141 = vunpack.c.l.b16 %v381
  %v1142 = vunpack.c.h.b16 %v381
  %v1143 = vunpack.c.l.b16 %v382
  %v1144 = vunpack.c.h.b16 %v382
  %v1145 = vunpack.c.l.b16 %v383
  %v1146 = vunpack.c.h.b16 %v383
  %v1147 = vunpack.c.l.b16 %v384
  %v1148 = vunpack.c.h.b16 %v384
  %v1149 = vunpack.c.l.b16 %v385
  %v1150 = vunpack.c.h.b16 %v385
  %v1151 = vunpack.c.l.b16 %v386
  %v1152 = vunpack.c.h.b16 %v386
  %v1153 = vunpack.c.l.b16 %v387
  %v1154 = vunpack.c.h.b16 %v387
  %v1155 = vunpack.c.l.b16 %v388
  %v1156 = vunpack.c.h.b16 %v388
  %v1157 = vunpack.c.l.b16 %v389
  %v1158 = vunpack.c.h.b16 %v389
  %v1159 = vunpack.c.l.b16 %v390
  %v1160 = vunpack.c.h.b16 %v390
  %v1161 = vunpack.c.l.b16 %v391
  %v1162 = vunpack.c.h.b16 %v391
  %v1163 = vunpack.c.l.b16 %v392
  %v1164 = vunpack.c.h.b16 %v392
  %v1165 = vunpack.c.l.b16 %v393
  %v1166 = vunpack.c.h.b16 %v393
  %v1167 = vunpack.c.l.b16 %v394
  %v1168 = vunpack.c.h.b16 %v394
  %v1169 = vunpack.c.l.b16 %v395
  %v1170 = vunpack.c.h.b16 %v395
  %v1171 = vunpack.c.l.b16 %v396
  %v1172 = vunpack.c.h.b16 %v396
  %v1173 = vunpack.c.l.b16 %v397
  %v1174 = vunpack.c.h.b16 %v397
  %v1175 = vunpack.c.l.b16 %v398
  %v1176 = vunpack.c.h.b16 %v398
  %v1177 = vunpack.c.l.b16 %v399
  %v1178 = vunpack.c.h.b16 %v399
  %v1179 = vunpack.c.l.b16 %v400
  %v1180 = vunpack.c.h.b16 %v400
  %v1181 = vpack.c.b16 %v671, %v669
  %v1182 = vpack.c.b16 %v672, %v670
  %v1183 = vpack.c.b16 %v675, %v673
  %v1184 = vpack.c.b16 %v676, %v674
  %v1185 = vpack.c.b16 %v679, %v677
  %v1186 = vpack.c.b16 %v680, %v678
  %v1187 = vpack.c.b16 %v683, %v681
  %v1188 = vpack.c.b16 %v684, %v682
  %v1189 = vpack.c.b16 %v687, %v685
  %v1190 = vpack.c.b16 %v688, %v686
  %v1191 = vpack.c.b16 %v691, %v689
  %v1192 = vpack.c.b16 %v692, %v690
  %v1193 = vpack.c.b16 %v695, %v693
  %v1194 = vpack.c.b16 %v696, %v694
  %v1195 = vpack.c.b16 %v699, %v697
  %v1196 = vpack.c.b16 %v700, %v698
  %v1197 = vpack.c.b16 %v703, %v701
  %v1198 = vpack.c.b16 %v704, %v702
  %v1199 = vpack.c.b16 %v707, %v705
  %v1200 = vpack.c.b16 %v708, %v706
  %v1201 = vpack.c.b16 %v711, %v709
  %v1202 = vpack.c.b16 %v712, %v710
  %v1203 = vpack.c.b16 %v715, %v713
  %v1204 = vpack.c.b16 %v716, %v714
  %v1205 = vpack.c.b16 %v719, %v717
  %v1206 = vpack.c.b16 %v720, %v718
  %v1207 = vpack.c.b16 %v723, %v721
  %v1208 = vpack.c.b16 %v724, %v722
  %v1209 = vpack.c.b16 %v727, %v725
  %v1210 = vpack.c.b16 %v728, %v726
  %v1211 = vpack.c.b16 %v731, %v729
  %v1212 = vpack.c.b16 %v732, %v730
  %v1213 = vpack.c.b16 %v735, %v733
  %v1214 = vpack.c.b16 %v736, %v734
  %v1215 = vpack.c.b16 %v739, %v737
  %v1216 = vpack.c.b16 %v740, %v738
  %v1217 = vpack.c.b16 %v743, %v741
  %v1218 = vpack.c.b16 %v744, %v742
  %v1219 = vpack.c.b16 %v747, %v745
  %v1220 = vpack.c.b16 %v748, %v746
  %v1221 = vpack.c.b16 %v751, %v749
  %v1222 = vpack.c.b16 %v752, %v750
  %v1223 = vpack.c.b16 %v755, %v753
  %v1224 = vpack.c.b16 %v756, %v754
  %v1225 = vpack.c.b16 %v759, %v757
  %v1226 = vpack.c.b16 %v760, %v758
  %v1227 = vpack.c.b16 %v763, %v761
  %v1228 = vpack.c.b16 %v764, %v762
  %v1229 = vpack.c.b16 %v767, %v765
  %v1230 = vpack.c.b16 %v768, %v766
  %v1231 = vpack.c.b16 %v771, %v769
  %v1232 = vpack.c.b16 %v772, %v770
  %v1233 = vpack.c.b16 %v775, %v773
  %v1234 = vpack.c.b16 %v776, %v774
  %v1235 = vpack.c.b16 %v779, %v777
  %v1236 = vpack.c.b16 %v780, %v778
  %v1237 = vpack.c.b16 %v783, %v781
  %v1238 = vpack.c.b16 %v784, %v782
  %v1239 = vpack.c.b16 %v787, %v785
  %v1240 = vpack.c.b16 %v788, %v786
  %v1241 = vpack.c.b16 %v791, %v789
  %v1242 = vpack.c.b16 %v792, %v790
  %v1243 = vpack.c.b16 %v795, %v793
  %v1244 = vpack.c.b16 %v796, %v794
  %v1245 = vpack.c.b16 %v799, %v797
  %v1246 = vpack.c.b16 %v800, %v798
  %v1247 = vpack.c.b16 %v803, %v801
  %v1248 = vpack.c.b16 %v804, %v802
  %v1249 = vpack.c.b16 %v807, %v805
  %v1250 = vpack.c.b16 %v808, %v806
  %v1251 = vpack.c.b16 %v811, %v809
  %v1252 = vpack.c.b16 %v812, %v810
  %v1253 = vpack.c.b16 %v815, %v813
  %v1254 = vpack.c.b16 %v816, %v814
  %v1255 = vpack.c.b16 %v819, %v817
  %v1256 = vpack.c.b16 %v820, %v818
  %v1257 = vpack.c.b16 %v823, %v821
  %v1258 = vpack.c.b16 %v824, %v822
  %v1259 = vpack.c.b16 %v827, %v825
  %v1260 = vpack.c.b16 %v828, %v826
  %v1261 = vpack.c.b16 %v831, %v829
  %v1262 = vpack.c.b16 %v832, %v830
  %v1263 = vpack.c.b16 %v835, %v833
  %v1264 = vpack.c.b16 %v836, %v834
  %v1265 = vpack.c.b16 %v839, %v837
  %v1266 = vpack.c.b16 %v840, %v838
  %v1267 = vpack.c.b16 %v843, %v841
  %v1268 = vpack.c.b16 %v844, %v842
  %v1269 = vpack.c.b16 %v847, %v845
  %v1270 = vpack.c.b16 %v848, %v846
  %v1271 = vpack.c.b16 %v851, %v849
  %v1272 = vpack.c.b16 %v852, %v850
  %v1273 = vpack.c.b16 %v855, %v853
  %v1274 = vpack.c.b16 %v856, %v854
  %v1275 = vpack.c.b16 %v859, %v857
  %v1276 = vpack.c.b16 %v860, %v858
  %v1277 = vpack.c.b16 %v863, %v861
  %v1278 = vpack.c.b16 %v864, %v862
  %v1279 = vpack.c.b16 %v867, %v865
  %v1280 = vpack.c.b16 %v868, %v866
  %v1281 = vpack.c.b16 %v871, %v869
  %v1282 = vpack.c.b16 %v872, %v870
  %v1283 = vpack.c.b16 %v875, %v873
  %v1284 = vpack.c.b16 %v876, %v874
  %v1285 = vpack.c.b16 %v879, %v877
  %v1286 = vpack.c.b16 %v880, %v878
  %v1287 = vpack.c.b16 %v883, %v881
  %v1288 = vpack.c.b16 %v884, %v882
  %v1289 = vpack.c.b16 %v887, %v885
  %v1290 = vpack.c.b16 %v888, %v886
  %v1291 = vpack.c.b16 %v891, %v889
  %v1292 = vpack.c.b16 %v892, %v890
  %v1293 = vpack.c.b16 %v895, %v893
  %v1294 = vpack.c.b16 %v896, %v894
  %v1295 = vpack.c.b16 %v899, %v897
  %v1296 = vpack.c.b16 %v900, %v898
  %v1297 = vpack.c.b16 %v903, %v901
  %v1298 = vpack.c.b16 %v904, %v902
  %v1299 = vpack.c.b16 %v907, %v905
  %v1300 = vpack.c.b16 %v908, %v906
  %v1301 = vpack.c.b16 %v911, %v909
  %v1302 = vpack.c.b16 %v912, %v910
  %v1303 = vpack.c.b16 %v915, %v913
  %v1304 = vpack.c.b16 %v916, %v914
  %v1305 = vpack.c.b16 %v919, %v917
  %v1306 = vpack.c.b16 %v920, %v918
  %v1307 = vpack.c.b16 %v923, %v921
  %v1308 = vpack.c.b16 %v924, %v922
  %v1309 = vpack.c.b16 %v927, %v925
  %v1310 = vpack.c.b16 %v928, %v926
  %v1311 = vpack.c.b16 %v931, %v929
  %v1312 = vpack.c.b16 %v932, %v930
  %v1313 = vpack.c.b16 %v935, %v933
  %v1314 = vpack.c.b16 %v936, %v934
  %v1315 = vpack.c.b16 %v939, %v937
  %v1316 = vpack.c.b16 %v940, %v938
  %v1317 = vpack.c.b16 %v943, %v941
  %v1318 = vpack.c.b16 %v944, %v942
  %v1319 = vpack.c.b16 %v947, %v945
  %v1320 = vpack.c.b16 %v948, %v946
  %v1321 = vpack.c.b16 %v951, %v949
  %v1322 = vpack.c.b16 %v952, %v950
  %v1323 = vpack.c.b16 %v955, %v953
  %v1324 = vpack.c.b16 %v956, %v954
  %v1325 = vpack.c.b16 %v959, %v957
  %v1326 = vpack.c.b16 %v960, %v958
  %v1327 = vpack.c.b16 %v963, %v961
  %v1328 = vpack.c.b16 %v964, %v962
  %v1329 = vpack.c.b16 %v967, %v965
  %v1330 = vpack.c.b16 %v968, %v966
  %v1331 = vpack.c.b16 %v971, %v969
  %v1332 = vpack.c.b16 %v972, %v970
  %v1333 = vpack.c.b16 %v975, %v973
  %v1334 = vpack.c.b16 %v976, %v974
  %v1335 = vpack.c.b16 %v979, %v977
  %v1336 = vpack.c.b16 %v980, %v978
  %v1337 = vpack.c.b16 %v983, %v981
  %v1338 = vpack.c.b16 %v984, %v982
  %v1339 = vpack.c.b16 %v987, %v985
  %v1340 = vpack.c.b16 %v988, %v986
  %v1341 = vpack.c.b16 %v991, %v989
  %v1342 = vpack.c.b16 %v992, %v990
  %v1343 = vpack.c.b16 %v995, %v993
  %v1344 = vpack.c.b16 %v996, %v994
  %v1345 = vpack.c.b16 %v999, %v997
  %v1346 = vpack.c.b16 %v1000, %v998
  %v1347 = vpack.c.b16 %v1003, %v1001
  %v1348 = vpack.c.b16 %v1004, %v1002
  %v1349 = vpack.c.b16 %v1007, %v1005
  %v1350 = vpack.c.b16 %v1008, %v1006
  %v1351 = vpack.c.b16 %v1011, %v1009
  %v1352 = vpack.c.b16 %v1012, %v1010
  %v1353 = vpack.c.b16 %v1015, %v1013
  %v1354 = vpack.c.b16 %v1016, %v1014
  %v1355 = vpack.c.b16 %v1019, %v1017
  %v1356 = vpack.c.b16 %v1020, %v1018
  %v1357 = vpack.c.b16 %v1023, %v1021
  %v1358 = vpack.c.b16 %v1024, %v1022
  %v1359 = vpack.c.b16 %v1027, %v1025
  %v1360 = vpack.c.b16 %v1028, %v1026
  %v1361 = vpack.c.b16 %v1031, %v1029
  %v1362 = vpack.c.b16 %v1032, %v1030
  %v1363 = vpack.c.b16 %v1035, %v1033
  %v1364 = vpack.c.b16 %v1036, %v1034
  %v1365 = vpack.c.b16 %v1039, %v1037
  %v1366 = vpack.c.b16 %v1040, %v1038
  %v1367 = vpack.c.b16 %v1043, %v1041
  %v1368 = vpack.c.b16 %v1044, %v1042
  %v1369 = vpack.c.b16 %v1047, %v1045
  %v1370 = vpack.c.b16 %v1048, %v1046
  %v1371 = vpack.c.b16 %v1051, %v1049
  %v1372 = vpack.c.b16 %v1052, %v1050
  %v1373 = vpack.c.b16 %v1055, %v1053
  %v1374 = vpack.c.b16 %v1056, %v1054
  %v1375 = vpack.c.b16 %v1059, %v1057
  %v1376 = vpack.c.b16 %v1060, %v1058
  %v1377 = vpack.c.b16 %v1063, %v1061
  %v1378 = vpack.c.b16 %v1064, %v1062
  %v1379 = vpack.c.b16 %v1067, %v1065
  %v1380 = vpack.c.b16 %v1068, %v1066
  %v1381 = vpack.c.b16 %v1071, %v1069
  %v1382 = vpack.c.b16 %v1072, %v1070
  %v1383 = vpack.c.b16 %v1075, %v1073
  %v1384 = vpack.c.b16 %v1076, %v1074
  %v1385 = vpack.c.b16 %v1079, %v1077
  %v1386 = vpack.c.b16 %v1080, %v1078
  %v1387 = vpack.c.b16 %v1083, %v1081
  %v1388 = vpack.c.b16 %v1084, %v1082
  %v1389 = vpack.c.b16 %v1087, %v1085
  %v1390 = vpack.c.b16 %v1088, %v1086
  %v1391 = vpack.c.b16 %v1091, %v1089
  %v1392 = vpack.c.b16 %v1092, %v1090
  %v1393 = vpack.c.b16 %v1095, %v1093
  %v1394 = vpack.c.b16 %v1096, %v1094
  %v1395 = vpack.c.b16 %v1099, %v1097
  %v1396 = vpack.c.b16 %v1100, %v1098
  %v1397 = vpack.c.b16 %v1103, %v1101
  %v1398 = vpack.c.b16 %v1104, %v1102
  %v1399 = vpack.c.b16 %v1107, %v1105
  %v1400 = vpack.c.b16 %v1108, %v1106
  %v1401 = vpack.c.b16 %v1111, %v1109
  %v1402 = vpack.c.b16 %v1112, %v1110
  %v1403 = vpack.c.b16 %v1115, %v1113
  %v1404 = vpack.c.b16 %v1116, %v1114
  %v1405 = vpack.c.b16 %v1119, %v1117
  %v1406 = vpack.c.b16 %v1120, %v1118
  %v1407 = vpack.c.b16 %v1123, %v1121
  %v1408 = vpack.c.b16 %v1124, %v1122
  %v1409 = vpack.c.b16 %v1127, %v1125
  %v1410 = vpack.c.b16 %v1128, %v1126
  %v1411 = vpack.c.b16 %v1131, %v1129
  %v1412 = vpack.c.b16 %v1132, %v1130
  %v1413 = vpack.c.b16 %v1135, %v1133
  %v1414 = vpack.c.b16 %v1136, %v1134
  %v1415 = vpack.c.b16 %v1139, %v1137
  %v1416 = vpack.c.b16 %v1140, %v1138
  %v1417 = vpack.c.b16 %v1143, %v1141
  %v1418 = vpack.c.b16 %v1144, %v1142
  %v1419 = vpack.c.b16 %v1147, %v1145
  %v1420 = vpack.c.b16 %v1148, %v1146
  %v1421 = vpack.c.b16 %v1151, %v1149
  %v1422 = vpack.c.b16 %v1152, %v1150
  %v1423 = vpack.c.b16 %v1155, %v1153
  %v1424 = vpack.c.b16 %v1156, %v1154
  %v1425 = vpack.c.b16 %v1159, %v1157
  %v1426 = vpack.c.b16 %v1160, %v1158
  %v1427 = vpack.c.b16 %v1163, %v1161
  %v1428 = vpack.c.b16 %v1164, %v1162
  %v1429 = vpack.c.b16 %v1167, %v1165
  %v1430 = vpack.c.b16 %v1168, %v1166
  %v1431 = vpack.c.b16 %v1171, %v1169
  %v1432 = vpack.c.b16 %v1172, %v1170
  %v1433 = vpack.c.b16 %v1175, %v1173
  %v1434 = vpack.c.b16 %v1176, %v1174
  %v1435 = vpack.c.b16 %v1179, %v1177
  %v1436 = vpack.c.b16 %v1180, %v1178
  %1693 = vmatprep.subr.bf16.mxu0 %v1182
  %1694 = vmatpush1.bf16.msra.mxu0 %v1181
  %1695 = vmatprep.subr.bf16.mxu0 %v1184
  %1696 = vmatpush1.bf16.msra.mxu0 %v1183
  %1697 = vmatprep.subr.bf16.mxu0 %v1186
  %1698 = vmatpush1.bf16.msra.mxu0 %v1185
  %1699 = vmatprep.subr.bf16.mxu0 %v1188
  %1700 = vmatpush1.bf16.msra.mxu0 %v1187
  %1701 = vmatprep.subr.bf16.mxu0 %v1190
  %1702 = vmatpush1.bf16.msra.mxu0 %v1189
  %1703 = vmatprep.subr.bf16.mxu0 %v1192
  %1704 = vmatpush1.bf16.msra.mxu0 %v1191
  %1705 = vmatprep.subr.bf16.mxu0 %v1194
  %1706 = vmatpush1.bf16.msra.mxu0 %v1193
  %1707 = vmatprep.subr.bf16.mxu0 %v1196
  %1708 = vmatpush1.bf16.msra.mxu0 %v1195
  %1709 = vmatprep.subr.bf16.mxu0 %v1198
  %1710 = vmatpush1.bf16.msra.mxu0 %v1197
  %1711 = vmatprep.subr.bf16.mxu0 %v1200
  %1712 = vmatpush1.bf16.msra.mxu0 %v1199
  %1713 = vmatprep.subr.bf16.mxu0 %v1202
  %1714 = vmatpush1.bf16.msra.mxu0 %v1201
  %1715 = vmatprep.subr.bf16.mxu0 %v1204
  %1716 = vmatpush1.bf16.msra.mxu0 %v1203
  %1717 = vmatprep.subr.bf16.mxu0 %v1206
  %1718 = vmatpush1.bf16.msra.mxu0 %v1205
  %1719 = vmatprep.subr.bf16.mxu0 %v1208
  %1720 = vmatpush1.bf16.msra.mxu0 %v1207
  %1721 = vmatprep.subr.bf16.mxu0 %v1210
  %1722 = vmatpush1.bf16.msra.mxu0 %v1209
  %1723 = vmatprep.subr.bf16.mxu0 %v1212
  %1724 = vmatpush1.bf16.msra.mxu0 %v1211
  %1725 = vmatprep.mubr.bf16.mxu0 %v98
  %1726 = vmatmul.mubr.bf16.gmra.mrb[0].mxu0 %v97
  %v1727 = vpop.f32.mrb[0].mxu0
  %v1728 = vadd.f32 %v406, %v1727
  %v1729 = vpop.f32.mrb[0].mxu0
  %v1730 = vadd.f32 %v410, %v1729
  %v1731 = vpop.f32.mrb[0].mxu0
  %v1732 = vadd.f32 %v406, %v1731
  %v1733 = vpop.f32.mrb[0].mxu0
  %v1734 = vadd.f32 %v410, %v1733
  %1735 = vmatprep.mubr.bf16.mxu0 %v114
  %1736 = vmatmul.mubr.bf16.gmra.mrb[0].mxu0 %v113
  %v1737 = vpop.f32.mrb[0].mxu0
  %v1738 = vadd.f32 %v406, %v1737
  %v1739 = vpop.f32.mrb[0].mxu0
  %v1740 = vadd.f32 %v410, %v1739
  %v1741 = vpop.f32.mrb[0].mxu0
  %v1742 = vadd.f32 %v406, %v1741
  %v1743 = vpop.f32.mrb[0].mxu0
  %v1744 = vadd.f32 %v410, %v1743
  %1745 = vmatprep.mubr.bf16.mxu0 %v130
  %1746 = vmatmul.mubr.bf16.gmra.mrb[0].mxu0 %v129
  %v1747 = vpop.f32.mrb[0].mxu0
  %v1748 = vadd.f32 %v406, %v1747
  %v1749 = vpop.f32.mrb[0].mxu0
  %v1750 = vadd.f32 %v410, %v1749
  %v1751 = vpop.f32.mrb[0].mxu0
  %v1752 = vpop.f32.mrb[0].mxu0
  %1753 = vdwg.mxu0
  %1754 = vmatprep.subr.bf16.mxu0 %v1214
  %1755 = vmatpush1.bf16.msra.mxu0 %v1213
  %1756 = vmatprep.subr.bf16.mxu0 %v1216
  %1757 = vmatpush1.bf16.msra.mxu0 %v1215
  %1758 = vmatprep.subr.bf16.mxu0 %v1218
  %1759 = vmatpush1.bf16.msra.mxu0 %v1217
  %1760 = vmatprep.subr.bf16.mxu0 %v1220
  %1761 = vmatpush1.bf16.msra.mxu0 %v1219
  %1762 = vmatprep.subr.bf16.mxu0 %v1222
  %1763 = vmatpush1.bf16.msra.mxu0 %v1221
  %1764 = vmatprep.subr.bf16.mxu0 %v1224
  %1765 = vmatpush1.bf16.msra.mxu0 %v1223
  %1766 = vmatprep.subr.bf16.mxu0 %v1226
  %1767 = vmatpush1.bf16.msra.mxu0 %v1225
  %1768 = vmatprep.subr.bf16.mxu0 %v1228
  %1769 = vmatpush1.bf16.msra.mxu0 %v1227
  %1770 = vmatprep.subr.bf16.mxu0 %v1230
  %1771 = vmatpush1.bf16.msra.mxu0 %v1229
  %1772 = vmatprep.subr.bf16.mxu0 %v1232
  %1773 = vmatpush1.bf16.msra.mxu0 %v1231
  %1774 = vmatprep.subr.bf16.mxu0 %v1234
  %1775 = vmatpush1.bf16.msra.mxu0 %v1233
  %1776 = vmatprep.subr.bf16.mxu0 %v1236
  %1777 = vmatpush1.bf16.msra.mxu0 %v1235
  %1778 = vmatprep.subr.bf16.mxu0 %v1238
  %1779 = vmatpush1.bf16.msra.mxu0 %v1237
  %1780 = vmatprep.subr.bf16.mxu0 %v1240
  %1781 = vmatpush1.bf16.msra.mxu0 %v1239
  %1782 = vmatprep.subr.bf16.mxu0 %v1242
  %1783 = vmatpush1.bf16.msra.mxu0 %v1241
  %1784 = vmatprep.subr.bf16.mxu0 %v1244
  %1785 = vmatpush1.bf16.msra.mxu0 %v1243
  %1786 = vmatprep.mubr.bf16.mxu0 %v100
  %1787 = vmatmul.mubr.bf16.gmra.mrb[0].mxu0 %v99
  %v1788 = vpop.f32.mrb[0].mxu0
  %v1789 = vadd.f32 %v1728, %v1788
  %v1790 = vpop.f32.mrb[0].mxu0
  %v1791 = vadd.f32 %v1730, %v1790
  %v1792 = vpop.f32.mrb[0].mxu0
  %v1793 = vadd.f32 %v1732, %v1792
  %v1794 = vpop.f32.mrb[0].mxu0
  %v1795 = vadd.f32 %v1734, %v1794
  %1796 = vmatprep.mubr.bf16.mxu0 %v116
  %1797 = vmatmul.mubr.bf16.gmra.mrb[0].mxu0 %v115
  %v1798 = vpop.f32.mrb[0].mxu0
  %v1799 = vadd.f32 %v1738, %v1798
  %v1800 = vpop.f32.mrb[0].mxu0
  %v1801 = vadd.f32 %v1740, %v1800
  %v1802 = vpop.f32.mrb[0].mxu0
  %v1803 = vadd.f32 %v1742, %v1802
  %v1804 = vpop.f32.mrb[0].mxu0
  %v1805 = vadd.f32 %v1744, %v1804
  %1806 = vmatprep.mubr.bf16.mxu0 %v132
  %1807 = vmatmul.mubr.bf16.gmra.mrb[0].mxu0 %v131
  %v1808 = vpop.f32.mrb[0].mxu0
  %v1809 = vadd.f32 %v1748, %v1808
  %v1810 = vpop.f32.mrb[0].mxu0
  %v1811 = vadd.f32 %v1750, %v1810
  %v1812 = vpop.f32.mrb[0].mxu0
  %v1813 = vpop.f32.mrb[0].mxu0
  %1814 = vdwg.mxu0
  %1815 = vmatprep.subr.bf16.mxu0 %v1246
  %1816 = vmatpush1.bf16.msra.mxu0 %v1245
  %1817 = vmatprep.subr.bf16.mxu0 %v1248
  %1818 = vmatpush1.bf16.msra.mxu0 %v1247
  %1819 = vmatprep.subr.bf16.mxu0 %v1250
  %1820 = vmatpush1.bf16.msra.mxu0 %v1249
  %1821 = vmatprep.subr.bf16.mxu0 %v1252
  %1822 = vmatpush1.bf16.msra.mxu0 %v1251
  %1823 = vmatprep.subr.bf16.mxu0 %v1254
  %1824 = vmatpush1.bf16.msra.mxu0 %v1253
  %1825 = vmatprep.subr.bf16.mxu0 %v1256
  %1826 = vmatpush1.bf16.msra.mxu0 %v1255
  %1827 = vmatprep.subr.bf16.mxu0 %v1258
  %1828 = vmatpush1.bf16.msra.mxu0 %v1257
  %1829 = vmatprep.subr.bf16.mxu0 %v1260
  %1830 = vmatpush1.bf16.msra.mxu0 %v1259
  %1831 = vmatprep.subr.bf16.mxu0 %v1262
  %1832 = vmatpush1.bf16.msra.mxu0 %v1261
  %1833 = vmatprep.subr.bf16.mxu0 %v1264
  %1834 = vmatpush1.bf16.msra.mxu0 %v1263
  %1835 = vmatprep.subr.bf16.mxu0 %v1266
  %1836 = vmatpush1.bf16.msra.mxu0 %v1265
  %1837 = vmatprep.subr.bf16.mxu0 %v1268
  %1838 = vmatpush1.bf16.msra.mxu0 %v1267
  %1839 = vmatprep.subr.bf16.mxu0 %v1270
  %1840 = vmatpush1.bf16.msra.mxu0 %v1269
  %1841 = vmatprep.subr.bf16.mxu0 %v1272
  %1842 = vmatpush1.bf16.msra.mxu0 %v1271
  %1843 = vmatprep.subr.bf16.mxu0 %v1274
  %1844 = vmatpush1.bf16.msra.mxu0 %v1273
  %1845 = vmatprep.subr.bf16.mxu0 %v1276
  %1846 = vmatpush1.bf16.msra.mxu0 %v1275
  %1847 = vmatprep.mubr.bf16.mxu0 %v102
  %1848 = vmatmul.mubr.bf16.gmra.mrb[0].mxu0 %v101
  %v1849 = vpop.f32.mrb[0].mxu0
  %v1850 = vadd.f32 %v1789, %v1849
  %v1851 = vpop.f32.mrb[0].mxu0
  %v1852 = vadd.f32 %v1791, %v1851
  %v1853 = vpop.f32.mrb[0].mxu0
  %v1854 = vadd.f32 %v1793, %v1853
  %v1855 = vpop.f32.mrb[0].mxu0
  %v1856 = vadd.f32 %v1795, %v1855
  %1857 = vmatprep.mubr.bf16.mxu0 %v118
  %1858 = vmatmul.mubr.bf16.gmra.mrb[0].mxu0 %v117
  %v1859 = vpop.f32.mrb[0].mxu0
  %v1860 = vadd.f32 %v1799, %v1859
  %v1861 = vpop.f32.mrb[0].mxu0
  %v1862 = vadd.f32 %v1801, %v1861
  %v1863 = vpop.f32.mrb[0].mxu0
  %v1864 = vadd.f32 %v1803, %v1863
  %v1865 = vpop.f32.mrb[0].mxu0
  %v1866 = vadd.f32 %v1805, %v1865
  %1867 = vmatprep.mubr.bf16.mxu0 %v134
  %1868 = vmatmul.mubr.bf16.gmra.mrb[0].mxu0 %v133
  %v1869 = vpop.f32.mrb[0].mxu0
  %v1870 = vadd.f32 %v1809, %v1869
  %v1871 = vpop.f32.mrb[0].mxu0
  %v1872 = vadd.f32 %v1811, %v1871
  %v1873 = vpop.f32.mrb[0].mxu0
  %v1874 = vpop.f32.mrb[0].mxu0
  %1875 = vdwg.mxu0
  %1876 = vmatprep.subr.bf16.mxu0 %v1278
  %1877 = vmatpush1.bf16.msra.mxu0 %v1277
  %1878 = vmatprep.subr.bf16.mxu0 %v1280
  %1879 = vmatpush1.bf16.msra.mxu0 %v1279
  %1880 = vmatprep.subr.bf16.mxu0 %v1282
  %1881 = vmatpush1.bf16.msra.mxu0 %v1281
  %1882 = vmatprep.subr.bf16.mxu0 %v1284
  %1883 = vmatpush1.bf16.msra.mxu0 %v1283
  %1884 = vmatprep.subr.bf16.mxu0 %v1286
  %1885 = vmatpush1.bf16.msra.mxu0 %v1285
  %1886 = vmatprep.subr.bf16.mxu0 %v1288
  %1887 = vmatpush1.bf16.msra.mxu0 %v1287
  %1888 = vmatprep.subr.bf16.mxu0 %v1290
  %1889 = vmatpush1.bf16.msra.mxu0 %v1289
  %1890 = vmatprep.subr.bf16.mxu0 %v1292
  %1891 = vmatpush1.bf16.msra.mxu0 %v1291
  %1892 = vmatprep.subr.bf16.mxu0 %v1294
  %1893 = vmatpush1.bf16.msra.mxu0 %v1293
  %1894 = vmatprep.subr.bf16.mxu0 %v1296
  %1895 = vmatpush1.bf16.msra.mxu0 %v1295
  %1896 = vmatprep.subr.bf16.mxu0 %v1298
  %1897 = vmatpush1.bf16.msra.mxu0 %v1297
  %1898 = vmatprep.subr.bf16.mxu0 %v1300
  %1899 = vmatpush1.bf16.msra.mxu0 %v1299
  %1900 = vmatprep.subr.bf16.mxu0 %v1302
  %1901 = vmatpush1.bf16.msra.mxu0 %v1301
  %1902 = vmatprep.subr.bf16.mxu0 %v1304
  %1903 = vmatpush1.bf16.msra.mxu0 %v1303
  %1904 = vmatprep.subr.bf16.mxu0 %v1306
  %1905 = vmatpush1.bf16.msra.mxu0 %v1305
  %1906 = vmatprep.subr.bf16.mxu0 %v1308
  %1907 = vmatpush1.bf16.msra.mxu0 %v1307
  %1908 = vmatprep.mubr.bf16.mxu0 %v104
  %1909 = vmatmul.mubr.bf16.gmra.mrb[0].mxu0 %v103
  %v1910 = vpop.f32.mrb[0].mxu0
  %v1911 = vadd.f32 %v1850, %v1910
  %v1912 = vpop.f32.mrb[0].mxu0
  %v1913 = vadd.f32 %v1852, %v1912
  %v1914 = vpop.f32.mrb[0].mxu0
  %v1915 = vadd.f32 %v1854, %v1914
  %v1916 = vpop.f32.mrb[0].mxu0
  %v1917 = vadd.f32 %v1856, %v1916
  %1918 = vmatprep.mubr.bf16.mxu0 %v120
  %1919 = vmatmul.mubr.bf16.gmra.mrb[0].mxu0 %v119
  %v1920 = vpop.f32.mrb[0].mxu0
  %v1921 = vadd.f32 %v1860, %v1920
  %v1922 = vpop.f32.mrb[0].mxu0
  %v1923 = vadd.f32 %v1862, %v1922
  %v1924 = vpop.f32.mrb[0].mxu0
  %v1925 = vadd.f32 %v1864, %v1924
  %v1926 = vpop.f32.mrb[0].mxu0
  %v1927 = vadd.f32 %v1866, %v1926
  %1928 = vmatprep.mubr.bf16.mxu0 %v136
  %1929 = vmatmul.mubr.bf16.gmra.mrb[0].mxu0 %v135
  %v1930 = vpop.f32.mrb[0].mxu0
  %v1931 = vadd.f32 %v1870, %v1930
  %v1932 = vpop.f32.mrb[0].mxu0
  %v1933 = vadd.f32 %v1872, %v1932
  %v1934 = vpop.f32.mrb[0].mxu0
  %v1935 = vpop.f32.mrb[0].mxu0
  %1936 = vdwg.mxu0
  %1937 = vmatprep.subr.bf16.mxu0 %v1310
  %1938 = vmatpush1.bf16.msra.mxu0 %v1309
  %1939 = vmatprep.subr.bf16.mxu0 %v1312
  %1940 = vmatpush1.bf16.msra.mxu0 %v1311
  %1941 = vmatprep.subr.bf16.mxu0 %v1314
  %1942 = vmatpush1.bf16.msra.mxu0 %v1313
  %1943 = vmatprep.subr.bf16.mxu0 %v1316
  %1944 = vmatpush1.bf16.msra.mxu0 %v1315
  %1945 = vmatprep.subr.bf16.mxu0 %v1318
  %1946 = vmatpush1.bf16.msra.mxu0 %v1317
  %1947 = vmatprep.subr.bf16.mxu0 %v1320
  %1948 = vmatpush1.bf16.msra.mxu0 %v1319
  %1949 = vmatprep.subr.bf16.mxu0 %v1322
  %1950 = vmatpush1.bf16.msra.mxu0 %v1321
  %1951 = vmatprep.subr.bf16.mxu0 %v1324
  %1952 = vmatpush1.bf16.msra.mxu0 %v1323
  %1953 = vmatprep.subr.bf16.mxu0 %v1326
  %1954 = vmatpush1.bf16.msra.mxu0 %v1325
  %1955 = vmatprep.subr.bf16.mxu0 %v1328
  %1956 = vmatpush1.bf16.msra.mxu0 %v1327
  %1957 = vmatprep.subr.bf16.mxu0 %v1330
  %1958 = vmatpush1.bf16.msra.mxu0 %v1329
  %1959 = vmatprep.subr.bf16.mxu0 %v1332
  %1960 = vmatpush1.bf16.msra.mxu0 %v1331
  %1961 = vmatprep.subr.bf16.mxu0 %v1334
  %1962 = vmatpush1.bf16.msra.mxu0 %v1333
  %1963 = vmatprep.subr.bf16.mxu0 %v1336
  %1964 = vmatpush1.bf16.msra.mxu0 %v1335
  %1965 = vmatprep.subr.bf16.mxu0 %v1338
  %1966 = vmatpush1.bf16.msra.mxu0 %v1337
  %1967 = vmatprep.subr.bf16.mxu0 %v1340
  %1968 = vmatpush1.bf16.msra.mxu0 %v1339
  %1969 = vmatprep.mubr.bf16.mxu0 %v106
  %1970 = vmatmul.mubr.bf16.gmra.mrb[0].mxu0 %v105
  %v1971 = vpop.f32.mrb[0].mxu0
  %v1972 = vadd.f32 %v1911, %v1971
  %v1973 = vpop.f32.mrb[0].mxu0
  %v1974 = vadd.f32 %v1913, %v1973
  %v1975 = vpop.f32.mrb[0].mxu0
  %v1976 = vadd.f32 %v1915, %v1975
  %v1977 = vpop.f32.mrb[0].mxu0
  %v1978 = vadd.f32 %v1917, %v1977
  %1979 = vmatprep.mubr.bf16.mxu0 %v122
  %1980 = vmatmul.mubr.bf16.gmra.mrb[0].mxu0 %v121
  %v1981 = vpop.f32.mrb[0].mxu0
  %v1982 = vadd.f32 %v1921, %v1981
  %v1983 = vpop.f32.mrb[0].mxu0
  %v1984 = vadd.f32 %v1923, %v1983
  %v1985 = vpop.f32.mrb[0].mxu0
  %v1986 = vadd.f32 %v1925, %v1985
  %v1987 = vpop.f32.mrb[0].mxu0
  %v1988 = vadd.f32 %v1927, %v1987
  %1989 = vmatprep.mubr.bf16.mxu0 %v138
  %1990 = vmatmul.mubr.bf16.gmra.mrb[0].mxu0 %v137
  %v1991 = vpop.f32.mrb[0].mxu0
  %v1992 = vadd.f32 %v1931, %v1991
  %v1993 = vpop.f32.mrb[0].mxu0
  %v1994 = vadd.f32 %v1933, %v1993
  %v1995 = vpop.f32.mrb[0].mxu0
  %v1996 = vpop.f32.mrb[0].mxu0
  %1997 = vdwg.mxu0
  %1998 = vmatprep.subr.bf16.mxu0 %v1342
  %1999 = vmatpush1.bf16.msra.mxu0 %v1341
  %2000 = vmatprep.subr.bf16.mxu0 %v1344
  %2001 = vmatpush1.bf16.msra.mxu0 %v1343
  %2002 = vmatprep.subr.bf16.mxu0 %v1346
  %2003 = vmatpush1.bf16.msra.mxu0 %v1345
  %2004 = vmatprep.subr.bf16.mxu0 %v1348
  %2005 = vmatpush1.bf16.msra.mxu0 %v1347
  %2006 = vmatprep.subr.bf16.mxu0 %v1350
  %2007 = vmatpush1.bf16.msra.mxu0 %v1349
  %2008 = vmatprep.subr.bf16.mxu0 %v1352
  %2009 = vmatpush1.bf16.msra.mxu0 %v1351
  %2010 = vmatprep.subr.bf16.mxu0 %v1354
  %2011 = vmatpush1.bf16.msra.mxu0 %v1353
  %2012 = vmatprep.subr.bf16.mxu0 %v1356
  %2013 = vmatpush1.bf16.msra.mxu0 %v1355
  %2014 = vmatprep.subr.bf16.mxu0 %v1358
  %2015 = vmatpush1.bf16.msra.mxu0 %v1357
  %2016 = vmatprep.subr.bf16.mxu0 %v1360
  %2017 = vmatpush1.bf16.msra.mxu0 %v1359
  %2018 = vmatprep.subr.bf16.mxu0 %v1362
  %2019 = vmatpush1.bf16.msra.mxu0 %v1361
  %2020 = vmatprep.subr.bf16.mxu0 %v1364
  %2021 = vmatpush1.bf16.msra.mxu0 %v1363
  %2022 = vmatprep.subr.bf16.mxu0 %v1366
  %2023 = vmatpush1.bf16.msra.mxu0 %v1365
  %2024 = vmatprep.subr.bf16.mxu0 %v1368
  %2025 = vmatpush1.bf16.msra.mxu0 %v1367
  %2026 = vmatprep.subr.bf16.mxu0 %v1370
  %2027 = vmatpush1.bf16.msra.mxu0 %v1369
  %2028 = vmatprep.subr.bf16.mxu0 %v1372
  %2029 = vmatpush1.bf16.msra.mxu0 %v1371
  %2030 = vmatprep.mubr.bf16.mxu0 %v108
  %2031 = vmatmul.mubr.bf16.gmra.mrb[0].mxu0 %v107
  %v2032 = vpop.f32.mrb[0].mxu0
  %v2033 = vadd.f32 %v1972, %v2032
  %v2034 = vpop.f32.mrb[0].mxu0
  %v2035 = vadd.f32 %v1974, %v2034
  %v2036 = vpop.f32.mrb[0].mxu0
  %v2037 = vadd.f32 %v1976, %v2036
  %v2038 = vpop.f32.mrb[0].mxu0
  %v2039 = vadd.f32 %v1978, %v2038
  %2040 = vmatprep.mubr.bf16.mxu0 %v124
  %2041 = vmatmul.mubr.bf16.gmra.mrb[0].mxu0 %v123
  %v2042 = vpop.f32.mrb[0].mxu0
  %v2043 = vadd.f32 %v1982, %v2042
  %v2044 = vpop.f32.mrb[0].mxu0
  %v2045 = vadd.f32 %v1984, %v2044
  %v2046 = vpop.f32.mrb[0].mxu0
  %v2047 = vadd.f32 %v1986, %v2046
  %v2048 = vpop.f32.mrb[0].mxu0
  %v2049 = vadd.f32 %v1988, %v2048
  %2050 = vmatprep.mubr.bf16.mxu0 %v140
  %2051 = vmatmul.mubr.bf16.gmra.mrb[0].mxu0 %v139
  %v2052 = vpop.f32.mrb[0].mxu0
  %v2053 = vadd.f32 %v1992, %v2052
  %v2054 = vpop.f32.mrb[0].mxu0
  %v2055 = vadd.f32 %v1994, %v2054
  %v2056 = vpop.f32.mrb[0].mxu0
  %v2057 = vpop.f32.mrb[0].mxu0
  %2058 = vdwg.mxu0
  %2059 = vmatprep.subr.bf16.mxu0 %v1374
  %2060 = vmatpush1.bf16.msra.mxu0 %v1373
  %2061 = vmatprep.subr.bf16.mxu0 %v1376
  %2062 = vmatpush1.bf16.msra.mxu0 %v1375
  %2063 = vmatprep.subr.bf16.mxu0 %v1378
  %2064 = vmatpush1.bf16.msra.mxu0 %v1377
  %2065 = vmatprep.subr.bf16.mxu0 %v1380
  %2066 = vmatpush1.bf16.msra.mxu0 %v1379
  %2067 = vmatprep.subr.bf16.mxu0 %v1382
  %2068 = vmatpush1.bf16.msra.mxu0 %v1381
  %2069 = vmatprep.subr.bf16.mxu0 %v1384
  %2070 = vmatpush1.bf16.msra.mxu0 %v1383
  %2071 = vmatprep.subr.bf16.mxu0 %v1386
  %2072 = vmatpush1.bf16.msra.mxu0 %v1385
  %2073 = vmatprep.subr.bf16.mxu0 %v1388
  %2074 = vmatpush1.bf16.msra.mxu0 %v1387
  %2075 = vmatprep.subr.bf16.mxu0 %v1390
  %2076 = vmatpush1.bf16.msra.mxu0 %v1389
  %2077 = vmatprep.subr.bf16.mxu0 %v1392
  %2078 = vmatpush1.bf16.msra.mxu0 %v1391
  %2079 = vmatprep.subr.bf16.mxu0 %v1394
  %2080 = vmatpush1.bf16.msra.mxu0 %v1393
  %2081 = vmatprep.subr.bf16.mxu0 %v1396
  %2082 = vmatpush1.bf16.msra.mxu0 %v1395
  %2083 = vmatprep.subr.bf16.mxu0 %v1398
  %2084 = vmatpush1.bf16.msra.mxu0 %v1397
  %2085 = vmatprep.subr.bf16.mxu0 %v1400
  %2086 = vmatpush1.bf16.msra.mxu0 %v1399
  %2087 = vmatprep.subr.bf16.mxu0 %v1402
  %2088 = vmatpush1.bf16.msra.mxu0 %v1401
  %2089 = vmatprep.subr.bf16.mxu0 %v1404
  %2090 = vmatpush1.bf16.msra.mxu0 %v1403
  %2091 = vmatprep.mubr.bf16.mxu0 %v110
  %2092 = vmatmul.mubr.bf16.gmra.mrb[0].mxu0 %v109
  %v2093 = vpop.f32.mrb[0].mxu0
  %v2094 = vadd.f32 %v2033, %v2093
  %v2095 = vpop.f32.mrb[0].mxu0
  %v2096 = vadd.f32 %v2035, %v2095
  %v2097 = vpop.f32.mrb[0].mxu0
  %v2098 = vadd.f32 %v2037, %v2097
  %v2099 = vpop.f32.mrb[0].mxu0
  %v2100 = vadd.f32 %v2039, %v2099
  %2101 = vmatprep.mubr.bf16.mxu0 %v126
  %2102 = vmatmul.mubr.bf16.gmra.mrb[0].mxu0 %v125
  %v2103 = vpop.f32.mrb[0].mxu0
  %v2104 = vadd.f32 %v2043, %v2103
  %v2105 = vpop.f32.mrb[0].mxu0
  %v2106 = vadd.f32 %v2045, %v2105
  %v2107 = vpop.f32.mrb[0].mxu0
  %v2108 = vadd.f32 %v2047, %v2107
  %v2109 = vpop.f32.mrb[0].mxu0
  %v2110 = vadd.f32 %v2049, %v2109
  %2111 = vmatprep.mubr.bf16.mxu0 %v142
  %2112 = vmatmul.mubr.bf16.gmra.mrb[0].mxu0 %v141
  %v2113 = vpop.f32.mrb[0].mxu0
  %v2114 = vadd.f32 %v2053, %v2113
  %v2115 = vpop.f32.mrb[0].mxu0
  %v2116 = vadd.f32 %v2055, %v2115
  %v2117 = vpop.f32.mrb[0].mxu0
  %v2118 = vpop.f32.mrb[0].mxu0
  %2119 = vdwg.mxu0
  %2120 = vmatprep.subr.bf16.mxu0 %v1406
  %2121 = vmatpush1.bf16.msra.mxu0 %v1405
  %2122 = vmatprep.subr.bf16.mxu0 %v1408
  %2123 = vmatpush1.bf16.msra.mxu0 %v1407
  %2124 = vmatprep.subr.bf16.mxu0 %v1410
  %2125 = vmatpush1.bf16.msra.mxu0 %v1409
  %2126 = vmatprep.subr.bf16.mxu0 %v1412
  %2127 = vmatpush1.bf16.msra.mxu0 %v1411
  %2128 = vmatprep.subr.bf16.mxu0 %v1414
  %2129 = vmatpush1.bf16.msra.mxu0 %v1413
  %2130 = vmatprep.subr.bf16.mxu0 %v1416
  %2131 = vmatpush1.bf16.msra.mxu0 %v1415
  %2132 = vmatprep.subr.bf16.mxu0 %v1418
  %2133 = vmatpush1.bf16.msra.mxu0 %v1417
  %2134 = vmatprep.subr.bf16.mxu0 %v1420
  %2135 = vmatpush1.bf16.msra.mxu0 %v1419
  %2136 = vmatprep.subr.bf16.mxu0 %v1422
  %2137 = vmatpush1.bf16.msra.mxu0 %v1421
  %2138 = vmatprep.subr.bf16.mxu0 %v1424
  %2139 = vmatpush1.bf16.msra.mxu0 %v1423
  %2140 = vmatprep.subr.bf16.mxu0 %v1426
  %2141 = vmatpush1.bf16.msra.mxu0 %v1425
  %2142 = vmatprep.subr.bf16.mxu0 %v1428
  %2143 = vmatpush1.bf16.msra.mxu0 %v1427
  %2144 = vmatprep.subr.bf16.mxu0 %v1430
  %2145 = vmatpush1.bf16.msra.mxu0 %v1429
  %2146 = vmatprep.subr.bf16.mxu0 %v1432
  %2147 = vmatpush1.bf16.msra.mxu0 %v1431
  %2148 = vmatprep.subr.bf16.mxu0 %v1434
  %2149 = vmatpush1.bf16.msra.mxu0 %v1433
  %2150 = vmatprep.subr.bf16.mxu0 %v1436
  %2151 = vmatpush1.bf16.msra.mxu0 %v1435
  %2152 = vmatprep.mubr.bf16.mxu0 %v112
  %2153 = vmatmul.mubr.bf16.gmra.mrb[0].mxu0 %v111
  %v2154 = vpop.f32.mrb[0].mxu0
  %v2155 = vadd.f32 %v2094, %v2154
  %v2156 = vpop.f32.mrb[0].mxu0
  %v2157 = vadd.f32 %v2096, %v2156
  %v2158 = vpop.f32.mrb[0].mxu0
  %v2159 = vadd.f32 %v2098, %v2158
  %v2160 = vpop.f32.mrb[0].mxu0
  %v2161 = vadd.f32 %v2100, %v2160
  %2162 = vmatprep.mubr.bf16.mxu0 %v128
  %2163 = vmatmul.mubr.bf16.gmra.mrb[0].mxu0 %v127
  %v2164 = vpop.f32.mrb[0].mxu0
  %v2165 = vadd.f32 %v2104, %v2164
  %v2166 = vpop.f32.mrb[0].mxu0
  %v2167 = vadd.f32 %v2106, %v2166
  %v2168 = vpop.f32.mrb[0].mxu0
  %v2169 = vadd.f32 %v2108, %v2168
  %v2170 = vpop.f32.mrb[0].mxu0
  %v2171 = vadd.f32 %v2110, %v2170
  %2172 = vmatprep.mubr.bf16.mxu0 %v144
  %2173 = vmatmul.mubr.bf16.gmra.mrb[0].mxu0 %v143
  %v2174 = vpop.f32.mrb[0].mxu0
  %v2175 = vadd.f32 %v2114, %v2174
  %v2176 = vpop.f32.mrb[0].mxu0
  %v2177 = vadd.f32 %v2116, %v2176
  %v2178 = vpop.f32.mrb[0].mxu0
  %v2179 = vpop.f32.mrb[0].mxu0
  %2180 = vdwg.mxu0
  %v2181 = vld [vmem:[%s3] sm:$0xff]
  %v2182 = vld [vmem:[%s3 + $0x8] sm:$0xff]
  %v2183 = vld [vmem:[%s3 + $0x10] sm:$0xff]
  %v2184 = vld [vmem:[%s3 + $0x18] sm:$0xff]
  %v2185 = vld [vmem:[%s3 + $0x20] sm:$0xff]
  %v2186 = vld [vmem:[%s3 + $0x28] sm:$0xff]
  %v2187 = vld [vmem:[%s3 + $0x30] sm:$0xff]
  %v2188 = vld [vmem:[%s3 + $0x38] sm:$0xff]
  %v2189 = vld [vmem:[%s3 + $0x40] sm:$0xff]
  %v2190 = vld [vmem:[%s3 + $0x48] sm:$0xff]
  %v2191 = vmul.f32 %v2155, %v2155
  %v2192 = vmul.f32 %v2157, %v2157
  %v2193 = vmul.f32 %v2159, %v2159
  %v2194 = vmul.f32 %v2161, %v2161
  %v2195 = vmul.f32 %v2165, %v2165
  %v2196 = vmul.f32 %v2167, %v2167
  %v2197 = vmul.f32 %v2169, %v2169
  %v2198 = vmul.f32 %v2171, %v2171
  %v2199 = vmul.f32 %v2175, %v2175
  %v2200 = vmul.f32 %v2177, %v2177
  %v2201 = vmul.f32 %v2155, %v2191
  %v2202 = vmul.f32 %v2157, %v2192
  %v2203 = vmul.f32 %v2159, %v2193
  %v2204 = vmul.f32 %v2161, %v2194
  %v2205 = vmul.f32 %v2165, %v2195
  %v2206 = vmul.f32 %v2167, %v2196
  %v2207 = vmul.f32 %v2169, %v2197
  %v2208 = vmul.f32 %v2171, %v2198
  %v2209 = vmul.f32 %v2175, %v2199
  %v2210 = vmul.f32 %v2177, %v2200
  %v2211 = vmul.f32 %v2201, 0.044715
  %v2212 = vmul.f32 %v2202, 0.044715
  %v2213 = vmul.f32 %v2203, 0.044715
  %v2214 = vmul.f32 %v2204, 0.044715
  %v2215 = vmul.f32 %v2205, 0.044715
  %v2216 = vmul.f32 %v2206, 0.044715
  %v2217 = vmul.f32 %v2207, 0.044715
  %v2218 = vmul.f32 %v2208, 0.044715
  %v2219 = vmul.f32 %v2209, 0.044715
  %v2220 = vmul.f32 %v2210, 0.044715
  %v2221 = vadd.f32 %v2155, %v2211
  %v2222 = vadd.f32 %v2157, %v2212
  %v2223 = vadd.f32 %v2159, %v2213
  %v2224 = vadd.f32 %v2161, %v2214
  %v2225 = vadd.f32 %v2165, %v2215
  %v2226 = vadd.f32 %v2167, %v2216
  %v2227 = vadd.f32 %v2169, %v2217
  %v2228 = vadd.f32 %v2171, %v2218
  %v2229 = vadd.f32 %v2175, %v2219
  %v2230 = vadd.f32 %v2177, %v2220
  %v2231 = vmul.f32 %v2221, 0.7978846
  %v2232 = vmul.f32 %v2222, 0.7978846
  %v2233 = vmul.f32 %v2223, 0.7978846
  %v2234 = vmul.f32 %v2224, 0.7978846
  %v2235 = vmul.f32 %v2225, 0.7978846
  %v2236 = vmul.f32 %v2226, 0.7978846
  %v2237 = vmul.f32 %v2227, 0.7978846
  %v2238 = vmul.f32 %v2228, 0.7978846
  %v2239 = vmul.f32 %v2229, 0.7978846
  %v2240 = vmul.f32 %v2230, 0.7978846
  %v2241 = vtanh.pop %v2231
  %v2242 = vtanh.pop %v2232
  %v2243 = vtanh.pop %v2233
  %v2244 = vtanh.pop %v2234
  %v2245 = vtanh.pop %v2235
  %v2246 = vtanh.pop %v2236
  %v2247 = vtanh.pop %v2237
  %v2248 = vtanh.pop %v2238
  %v2249 = vtanh.pop %v2239
  %v2250 = vtanh.pop %v2240
  %v2251 = vadd.f32 %v2241, 1.0
  %v2252 = vadd.f32 %v2242, 1.0
  %v2253 = vadd.f32 %v2243, 1.0
  %v2254 = vadd.f32 %v2244, 1.0
  %v2255 = vadd.f32 %v2245, 1.0
  %v2256 = vadd.f32 %v2246, 1.0
  %v2257 = vadd.f32 %v2247, 1.0
  %v2258 = vadd.f32 %v2248, 1.0
  %v2259 = vadd.f32 %v2249, 1.0
  %v2260 = vadd.f32 %v2250, 1.0
  %v2261 = vmul.f32 %v2251, 0.5
  %v2262 = vmul.f32 %v2252, 0.5
  %v2263 = vmul.f32 %v2253, 0.5
  %v2264 = vmul.f32 %v2254, 0.5
  %v2265 = vmul.f32 %v2255, 0.5
  %v2266 = vmul.f32 %v2256, 0.5
  %v2267 = vmul.f32 %v2257, 0.5
  %v2268 = vmul.f32 %v2258, 0.5
  %v2269 = vmul.f32 %v2259, 0.5
  %v2270 = vmul.f32 %v2260, 0.5
  %v2271 = vmul.f32 %v2155, %v2261
  %v2272 = vmul.f32 %v2157, %v2262
  %v2273 = vmul.f32 %v2159, %v2263
  %v2274 = vmul.f32 %v2161, %v2264
  %v2275 = vmul.f32 %v2165, %v2265
  %v2276 = vmul.f32 %v2167, %v2266
  %v2277 = vmul.f32 %v2169, %v2267
  %v2278 = vmul.f32 %v2171, %v2268
  %v2279 = vmul.f32 %v2175, %v2269
  %v2280 = vmul.f32 %v2177, %v2270
  %v2281 = vadd.f32 %v2181, %v2271
  %v2282 = vadd.f32 %v2182, %v2272
  %v2283 = vadd.f32 %v2183, %v2273
  %v2284 = vadd.f32 %v2184, %v2274
  %v2285 = vadd.f32 %v2185, %v2275
  %v2286 = vadd.f32 %v2186, %v2276
  %v2287 = vadd.f32 %v2187, %v2277
  %v2288 = vadd.f32 %v2188, %v2278
  %v2289 = vadd.f32 %v2189, %v2279
  %v2290 = vadd.f32 %v2190, %v2280
  %2291 = vst [vmem:[%s4] sm:$0xff] %v2281
  %2292 = vst [vmem:[%s4 + $0x8] sm:$0xff] %v2282
  %2293 = vst [vmem:[%s4 + $0x10] sm:$0xff] %v2283
  %2294 = vst [vmem:[%s4 + $0x18] sm:$0xff] %v2284
  %2295 = vst [vmem:[%s4 + $0x20] sm:$0xff] %v2285
  %2296 = vst [vmem:[%s4 + $0x28] sm:$0xff] %v2286
  %2297 = vst [vmem:[%s4 + $0x30] sm:$0xff] %v2287
  %2298 = vst [vmem:[%s4 + $0x38] sm:$0xff] %v2288
  %2299 = vst [vmem:[%s4 + $0x40] sm:$0xff] %v2289
  %2300 = vst [vmem:[%s4 + $0x48] sm:$0xff] %v2290
  // Predicated region
  $region18: #{_lambda_.12} parent=0 // pred_check
    _
  $region19: #{_lambda_.12} parent=0 // pred_check_branch
    %2302 = sbr.rel (0) target = $region21
  $region20: #{_lambda_.12} parent=0 // pred_region
    _
  $region21: #{_lambda_.12} parent=0 // pred_fallthru
    _
  // Predicated region
  $region22: #{_lambda_.12} parent=0 // pred_check
    _
  $region23: #{_lambda_.12} parent=0 // pred_check_branch
    %2304 = sbr.rel (0) target = $region25
  $region24: #{_lambda_.12} parent=0 // pred_region
    _
  $region25: #{_lambda_.12} parent=0 // pred_fallthru
    _

// kernel: _lambda_.13
$region0: #{_lambda_.13}
  #allocation0 [shape = 'u32[]', space=smem, size = 0x4, offset = 0x4, fixed_abs, tag = 'smem constant byte address 0x4 - core index']
  #allocation1 [shape = 'u32[144,128]{1,0:T(1,128)}', space=vmem, size = 0x12000, scoped, tag = 'internal scratch']
  %s0 = inlined_call_operand.vmem [shape: f32[2,19,256], index: 0, kind: input, shape index: {}]
  %s1 = inlined_call_operand.vmem [shape: f32[2,1,256], index: 1, kind: input, shape index: {}]
  %s2 = inlined_call_operand.vmem [shape: f32[2,1,256], index: 2, kind: input, shape index: {}]
  %s3 = inlined_call_operand.vmem [shape: bf16[2,256,256], index: 3, kind: input, shape index: {}]
  %s4 = inlined_call_operand.vmem [shape: f32[2,1,256], index: 4, kind: input, shape index: {}]
  %s5 = inlined_call_operand.vmem [shape: bf16[2,256,256], index: 5, kind: input, shape index: {}]
  %s6 = inlined_call_operand.vmem [shape: f32[2,1,256], index: 6, kind: input, shape index: {}]
  %s7 = inlined_call_operand.vmem [shape: bf16[2,256,256], index: 7, kind: input, shape index: {}]
  %s8 = inlined_call_operand.vmem [shape: f32[2,1,256], index: 8, kind: input, shape index: {}]
  %s9 = inlined_call_operand.vmem [shape: bf16[2,256,256], index: 9, kind: input, shape index: {}]
  %s10 = inlined_call_operand.vmem [shape: f32[2,1,256], index: 10, kind: input, shape index: {}]
  %s11 = inlined_call_operand.vmem [shape: f32[2,1,256], index: 11, kind: input, shape index: {}]
  %s12 = inlined_call_operand.vmem [shape: f32[2,1,256], index: 12, kind: input, shape index: {}]
  %s13 = inlined_call_operand.vmem [shape: bf16[2,256,512], index: 13, kind: input, shape index: {}]
  %s14 = inlined_call_operand.vmem [shape: f32[2,1,512], index: 14, kind: input, shape index: {}]
  %s15 = inlined_call_operand.vmem [shape: bf16[2,512,256], index: 15, kind: input, shape index: {}]
  %s16 = inlined_call_operand.vmem [shape: f32[2,1,256], index: 16, kind: input, shape index: {}]
  %s17 = inlined_call_operand.vmem [shape: f32[1,256], index: 17, kind: input, shape index: {}]
  %s18 = inlined_call_operand.vmem [shape: f32[1,256], index: 18, kind: input, shape index: {}]
  %s19 = inlined_call_operand.vmem [shape: f32[2,19,256], index: 19, kind: output, shape index: {}]
  %s20 = sld [smem:[#allocation0]]
  $region113: #{_lambda_.13} parent=0
    _
  %s22 = ssub.s32 1, %s20
  %s23 = scalar_select 0, %s22, %s20
  loop: start=0, step=1, limit=6
  $region2: #{_lambda_.13} parent=0 // loop_pre_header
    _
  $region3: #{_lambda_.13} parent=0 // loop_header
    %s25 = sphi 0, %s29
    %p26 = scmp.ge.s32.totalorder %s25, 6
    %s32 = sphi 0, %s44
    %s33 = sphi 0, %s40
    %s34 = sphi 0, %s32
    %s35 = sphi 0, %s33
    %s36 = sphi 0, %s34
    %s37 = sphi 0, %s35
    %s47 = sphi 0, %s49
    %s50 = sphi 0, %s47
    %s51 = sphi 0, %s50
    %s67 = sphi 0, %s51
    %s73 = sphi 0, %s75
    %s76 = sphi 0, %s73
    %s77 = sphi 0, %s76
    %s93 = sphi 0, %s77
    %s99 = sphi 0, %s101
    %s102 = sphi 0, %s99
    %s103 = sphi 0, %s102
    %s119 = sphi 0, %s103
    %s125 = sphi 0, %s127
    %s128 = sphi 0, %s125
    %s129 = sphi 0, %s128
    %s145 = sphi 0, %s129
    %s151 = sphi 0, %s153
    %s154 = sphi 0, %s151
    %s155 = sphi 0, %s154
    %s171 = sphi 0, %s155
    %s177 = sphi 0, %s179
    %s180 = sphi 0, %s177
    %s181 = sphi 0, %s180
    %s197 = sphi 0, %s181
    %s203 = sphi 0, %s205
    %s206 = sphi 0, %s203
    %s207 = sphi 0, %s206
    %s223 = sphi 0, %s207
    %s229 = sphi 0, %s231
    %s232 = sphi 0, %s229
    %s233 = sphi 0, %s232
    %s249 = sphi 0, %s233
    %s255 = sphi 0, %s257
    %s258 = sphi 0, %s255
    %s259 = sphi 0, %s258
    %s275 = sphi 0, %s259
    %s281 = sphi 0, %s283
    %s284 = sphi 0, %s281
    %s285 = sphi 0, %s284
    %s301 = sphi 0, %s285
    %s307 = sphi 0, %s309
    %s310 = sphi 0, %s307
    %s311 = sphi 0, %s310
    %s327 = sphi 0, %s311
    %s333 = sphi 0, %s335
    %s336 = sphi 0, %s333
    %s337 = sphi 0, %s336
    %s353 = sphi 0, %s337
    %s359 = sphi 0, %s361
    %s362 = sphi 0, %s359
    %s363 = sphi 0, %s362
    %s379 = sphi 0, %s363
    %s385 = sphi 0, %s387
    %s388 = sphi 0, %s385
    %s389 = sphi 0, %s388
    %s405 = sphi 0, %s389
    %s411 = sphi 0, %s413
    %s414 = sphi 0, %s411
    %s415 = sphi 0, %s414
    %s431 = sphi 0, %s415
    %s437 = sphi 0, %s439
    %s440 = sphi 0, %s437
    %s441 = sphi 0, %s440
    %s457 = sphi 0, %s441
    %s463 = sphi 0, %s465
    %s466 = sphi 0, %s463
    %s467 = sphi 0, %s466
    %s483 = sphi 0, %s467
    %s487 = sphi 0, %s487
    %s489 = sphi 0, %s487
    %s490 = sphi 0, %s489
    %s504 = sphi 0, %s490
    %s508 = sphi 0, %s508
    %s510 = sphi 0, %s508
    %s511 = sphi 0, %s510
    %s525 = sphi 0, %s511
    %s531 = sphi 0, %s533
    %s534 = sphi 0, %s531
    %s535 = sphi 0, %s534
    %s551 = sphi 0, %s535
  $region4: #{_lambda_.13} parent=0 // loop_header_branch
    %28 = sbr.rel (%p26) target = $region8
  $region5: #{_lambda_.13} parent=0 // loop_body
    %s30 = ssub.s32 %s25, 1
    %s31 = ssub.s32 %s25, 2
    %s38 = sadd.s32 1, %s33
    %p39 = scmp.ge.s32.totalorder %s38, 2
    %s40 = scalar_select %p39, 0, %s38
    %s41 = sadd.s32 1, %s32
    %s42 = scalar_select %p39, %s41, %s32
    %p43 = scmp.ge.s32.totalorder %s42, 2
    %s44 = scalar_select %p43, 0, %s42
    %s45 = ssub.s32 %s32, %s44
    %p46 = scmp.eq.s32.totalorder %s45, 0
    %s48 = sadd.s32 %s47, 1
    %s49 = scalar_select %p46, %s47, %s48
    %p52 = pneg %p46
    %p53 = scmp.eq.s32.totalorder %s25, 3
    %p54 = por %p52, %p53
    %p55 = scmp.ne.s32.totalorder %s47, %s50
    %p56 = scmp.eq.s32.totalorder %s25, 0
    %p57 = por %p55, %p56
    %p58 = scmp.ne.s32.totalorder %s47, %s50
    %p59 = scmp.eq.s32.totalorder %s30, 3
    %p60 = por %p58, %p59
    %p61 = scmp.ne.s32.totalorder %s50, %s51
    %p62 = scmp.eq.s32.totalorder %s30, 0
    %p63 = por %p61, %p62
    %p64 = scmp.ne.s32.totalorder %s50, %s51
    %p65 = scmp.eq.s32.totalorder %s31, 3
    %p66 = por %p64, %p65
    %p68 = scmp.ne.s32.totalorder %s51, %s67
    %p69 = scmp.eq.s32.totalorder %s31, 0
    %p70 = por %p68, %p69
    %s71 = ssub.s32 %s33, %s40
    %p72 = scmp.eq.s32.totalorder %s71, 0
    %s74 = sadd.s32 %s73, 1
    %s75 = scalar_select %p72, %s73, %s74
    %p78 = pneg %p72
    %p79 = scmp.eq.s32.totalorder %s25, 3
    %p80 = por %p78, %p79
    %p81 = scmp.ne.s32.totalorder %s73, %s76
    %p82 = scmp.eq.s32.totalorder %s25, 0
    %p83 = por %p81, %p82
    %p84 = scmp.ne.s32.totalorder %s73, %s76
    %p85 = scmp.eq.s32.totalorder %s30, 3
    %p86 = por %p84, %p85
    %p87 = scmp.ne.s32.totalorder %s76, %s77
    %p88 = scmp.eq.s32.totalorder %s30, 0
    %p89 = por %p87, %p88
    %p90 = scmp.ne.s32.totalorder %s76, %s77
    %p91 = scmp.eq.s32.totalorder %s31, 3
    %p92 = por %p90, %p91
    %p94 = scmp.ne.s32.totalorder %s77, %s93
    %p95 = scmp.eq.s32.totalorder %s31, 0
    %p96 = por %p94, %p95
    %s97 = ssub.s32 %s33, %s40
    %p98 = scmp.eq.s32.totalorder %s97, 0
    %s100 = sadd.s32 %s99, 1
    %s101 = scalar_select %p98, %s99, %s100
    %p104 = pneg %p98
    %p105 = scmp.eq.s32.totalorder %s25, 3
    %p106 = por %p104, %p105
    %p107 = scmp.ne.s32.totalorder %s99, %s102
    %p108 = scmp.eq.s32.totalorder %s25, 0
    %p109 = por %p107, %p108
    %p110 = scmp.ne.s32.totalorder %s99, %s102
    %p111 = scmp.eq.s32.totalorder %s30, 3
    %p112 = por %p110, %p111
    %p113 = scmp.ne.s32.totalorder %s102, %s103
    %p114 = scmp.eq.s32.totalorder %s30, 0
    %p115 = por %p113, %p114
    %p116 = scmp.ne.s32.totalorder %s102, %s103
    %p117 = scmp.eq.s32.totalorder %s31, 3
    %p118 = por %p116, %p117
    %p120 = scmp.ne.s32.totalorder %s103, %s119
    %p121 = scmp.eq.s32.totalorder %s31, 0
    %p122 = por %p120, %p121
    %s123 = ssub.s32 %s33, %s40
    %p124 = scmp.eq.s32.totalorder %s123, 0
    %s126 = sadd.s32 %s125, 1
    %s127 = scalar_select %p124, %s125, %s126
    %p130 = pneg %p124
    %p131 = scmp.eq.s32.totalorder %s25, 3
    %p132 = por %p130, %p131
    %p133 = scmp.ne.s32.totalorder %s125, %s128
    %p134 = scmp.eq.s32.totalorder %s25, 0
    %p135 = por %p133, %p134
    %p136 = scmp.ne.s32.totalorder %s125, %s128
    %p137 = scmp.eq.s32.totalorder %s30, 3
    %p138 = por %p136, %p137
    %p139 = scmp.ne.s32.totalorder %s128, %s129
    %p140 = scmp.eq.s32.totalorder %s30, 0
    %p141 = por %p139, %p140
    %p142 = scmp.ne.s32.totalorder %s128, %s129
    %p143 = scmp.eq.s32.totalorder %s31, 3
    %p144 = por %p142, %p143
    %p146 = scmp.ne.s32.totalorder %s129, %s145
    %p147 = scmp.eq.s32.totalorder %s31, 0
    %p148 = por %p146, %p147
    %s149 = ssub.s32 %s33, %s40
    %p150 = scmp.eq.s32.totalorder %s149, 0
    %s152 = sadd.s32 %s151, 1
    %s153 = scalar_select %p150, %s151, %s152
    %p156 = pneg %p150
    %p157 = scmp.eq.s32.totalorder %s25, 3
    %p158 = por %p156, %p157
    %p159 = scmp.ne.s32.totalorder %s151, %s154
    %p160 = scmp.eq.s32.totalorder %s25, 0
    %p161 = por %p159, %p160
    %p162 = scmp.ne.s32.totalorder %s151, %s154
    %p163 = scmp.eq.s32.totalorder %s30, 3
    %p164 = por %p162, %p163
    %p165 = scmp.ne.s32.totalorder %s154, %s155
    %p166 = scmp.eq.s32.totalorder %s30, 0
    %p167 = por %p165, %p166
    %p168 = scmp.ne.s32.totalorder %s154, %s155
    %p169 = scmp.eq.s32.totalorder %s31, 3
    %p170 = por %p168, %p169
    %p172 = scmp.ne.s32.totalorder %s155, %s171
    %p173 = scmp.eq.s32.totalorder %s31, 0
    %p174 = por %p172, %p173
    %s175 = ssub.s32 %s33, %s40
    %p176 = scmp.eq.s32.totalorder %s175, 0
    %s178 = sadd.s32 %s177, 1
    %s179 = scalar_select %p176, %s177, %s178
    %p182 = pneg %p176
    %p183 = scmp.eq.s32.totalorder %s25, 3
    %p184 = por %p182, %p183
    %p185 = scmp.ne.s32.totalorder %s177, %s180
    %p186 = scmp.eq.s32.totalorder %s25, 0
    %p187 = por %p185, %p186
    %p188 = scmp.ne.s32.totalorder %s177, %s180
    %p189 = scmp.eq.s32.totalorder %s30, 3
    %p190 = por %p188, %p189
    %p191 = scmp.ne.s32.totalorder %s180, %s181
    %p192 = scmp.eq.s32.totalorder %s30, 0
    %p193 = por %p191, %p192
    %p194 = scmp.ne.s32.totalorder %s180, %s181
    %p195 = scmp.eq.s32.totalorder %s31, 3
    %p196 = por %p194, %p195
    %p198 = scmp.ne.s32.totalorder %s181, %s197
    %p199 = scmp.eq.s32.totalorder %s31, 0
    %p200 = por %p198, %p199
    %s201 = ssub.s32 %s33, %s40
    %p202 = scmp.eq.s32.totalorder %s201, 0
    %s204 = sadd.s32 %s203, 1
    %s205 = scalar_select %p202, %s203, %s204
    %p208 = pneg %p202
    %p209 = scmp.eq.s32.totalorder %s25, 3
    %p210 = por %p208, %p209
    %p211 = scmp.ne.s32.totalorder %s203, %s206
    %p212 = scmp.eq.s32.totalorder %s25, 0
    %p213 = por %p211, %p212
    %p214 = scmp.ne.s32.totalorder %s203, %s206
    %p215 = scmp.eq.s32.totalorder %s30, 3
    %p216 = por %p214, %p215
    %p217 = scmp.ne.s32.totalorder %s206, %s207
    %p218 = scmp.eq.s32.totalorder %s30, 0
    %p219 = por %p217, %p218
    %p220 = scmp.ne.s32.totalorder %s206, %s207
    %p221 = scmp.eq.s32.totalorder %s31, 3
    %p222 = por %p220, %p221
    %p224 = scmp.ne.s32.totalorder %s207, %s223
    %p225 = scmp.eq.s32.totalorder %s31, 0
    %p226 = por %p224, %p225
    %s227 = ssub.s32 %s33, %s40
    %p228 = scmp.eq.s32.totalorder %s227, 0
    %s230 = sadd.s32 %s229, 1
    %s231 = scalar_select %p228, %s229, %s230
    %p234 = pneg %p228
    %p235 = scmp.eq.s32.totalorder %s25, 3
    %p236 = por %p234, %p235
    %p237 = scmp.ne.s32.totalorder %s229, %s232
    %p238 = scmp.eq.s32.totalorder %s25, 0
    %p239 = por %p237, %p238
    %p240 = scmp.ne.s32.totalorder %s229, %s232
    %p241 = scmp.eq.s32.totalorder %s30, 3
    %p242 = por %p240, %p241
    %p243 = scmp.ne.s32.totalorder %s232, %s233
    %p244 = scmp.eq.s32.totalorder %s30, 0
    %p245 = por %p243, %p244
    %p246 = scmp.ne.s32.totalorder %s232, %s233
    %p247 = scmp.eq.s32.totalorder %s31, 3
    %p248 = por %p246, %p247
    %p250 = scmp.ne.s32.totalorder %s233, %s249
    %p251 = scmp.eq.s32.totalorder %s31, 0
    %p252 = por %p250, %p251
    %s253 = ssub.s32 %s33, %s40
    %p254 = scmp.eq.s32.totalorder %s253, 0
    %s256 = sadd.s32 %s255, 1
    %s257 = scalar_select %p254, %s255, %s256
    %p260 = pneg %p254
    %p261 = scmp.eq.s32.totalorder %s25, 3
    %p262 = por %p260, %p261
    %p263 = scmp.ne.s32.totalorder %s255, %s258
    %p264 = scmp.eq.s32.totalorder %s25, 0
    %p265 = por %p263, %p264
    %p266 = scmp.ne.s32.totalorder %s255, %s258
    %p267 = scmp.eq.s32.totalorder %s30, 3
    %p268 = por %p266, %p267
    %p269 = scmp.ne.s32.totalorder %s258, %s259
    %p270 = scmp.eq.s32.totalorder %s30, 0
    %p271 = por %p269, %p270
    %p272 = scmp.ne.s32.totalorder %s258, %s259
    %p273 = scmp.eq.s32.totalorder %s31, 3
    %p274 = por %p272, %p273
    %p276 = scmp.ne.s32.totalorder %s259, %s275
    %p277 = scmp.eq.s32.totalorder %s31, 0
    %p278 = por %p276, %p277
    %s279 = ssub.s32 %s33, %s40
    %p280 = scmp.eq.s32.totalorder %s279, 0
    %s282 = sadd.s32 %s281, 1
    %s283 = scalar_select %p280, %s281, %s282
    %p286 = pneg %p280
    %p287 = scmp.eq.s32.totalorder %s25, 3
    %p288 = por %p286, %p287
    %p289 = scmp.ne.s32.totalorder %s281, %s284
    %p290 = scmp.eq.s32.totalorder %s25, 0
    %p291 = por %p289, %p290
    %p292 = scmp.ne.s32.totalorder %s281, %s284
    %p293 = scmp.eq.s32.totalorder %s30, 3
    %p294 = por %p292, %p293
    %p295 = scmp.ne.s32.totalorder %s284, %s285
    %p296 = scmp.eq.s32.totalorder %s30, 0
    %p297 = por %p295, %p296
    %p298 = scmp.ne.s32.totalorder %s284, %s285
    %p299 = scmp.eq.s32.totalorder %s31, 3
    %p300 = por %p298, %p299
    %p302 = scmp.ne.s32.totalorder %s285, %s301
    %p303 = scmp.eq.s32.totalorder %s31, 0
    %p304 = por %p302, %p303
    %s305 = ssub.s32 %s33, %s40
    %p306 = scmp.eq.s32.totalorder %s305, 0
    %s308 = sadd.s32 %s307, 1
    %s309 = scalar_select %p306, %s307, %s308
    %p312 = pneg %p306
    %p313 = scmp.eq.s32.totalorder %s25, 3
    %p314 = por %p312, %p313
    %p315 = scmp.ne.s32.totalorder %s307, %s310
    %p316 = scmp.eq.s32.totalorder %s25, 0
    %p317 = por %p315, %p316
    %p318 = scmp.ne.s32.totalorder %s307, %s310
    %p319 = scmp.eq.s32.totalorder %s30, 3
    %p320 = por %p318, %p319
    %p321 = scmp.ne.s32.totalorder %s310, %s311
    %p322 = scmp.eq.s32.totalorder %s30, 0
    %p323 = por %p321, %p322
    %p324 = scmp.ne.s32.totalorder %s310, %s311
    %p325 = scmp.eq.s32.totalorder %s31, 3
    %p326 = por %p324, %p325
    %p328 = scmp.ne.s32.totalorder %s311, %s327
    %p329 = scmp.eq.s32.totalorder %s31, 0
    %p330 = por %p328, %p329
    %s331 = ssub.s32 %s33, %s40
    %p332 = scmp.eq.s32.totalorder %s331, 0
    %s334 = sadd.s32 %s333, 1
    %s335 = scalar_select %p332, %s333, %s334
    %p338 = pneg %p332
    %p339 = scmp.eq.s32.totalorder %s25, 3
    %p340 = por %p338, %p339
    %p341 = scmp.ne.s32.totalorder %s333, %s336
    %p342 = scmp.eq.s32.totalorder %s25, 0
    %p343 = por %p341, %p342
    %p344 = scmp.ne.s32.totalorder %s333, %s336
    %p345 = scmp.eq.s32.totalorder %s30, 3
    %p346 = por %p344, %p345
    %p347 = scmp.ne.s32.totalorder %s336, %s337
    %p348 = scmp.eq.s32.totalorder %s30, 0
    %p349 = por %p347, %p348
    %p350 = scmp.ne.s32.totalorder %s336, %s337
    %p351 = scmp.eq.s32.totalorder %s31, 3
    %p352 = por %p350, %p351
    %p354 = scmp.ne.s32.totalorder %s337, %s353
    %p355 = scmp.eq.s32.totalorder %s31, 0
    %p356 = por %p354, %p355
    %s357 = ssub.s32 %s33, %s40
    %p358 = scmp.eq.s32.totalorder %s357, 0
    %s360 = sadd.s32 %s359, 1
    %s361 = scalar_select %p358, %s359, %s360
    %p364 = pneg %p358
    %p365 = scmp.eq.s32.totalorder %s25, 3
    %p366 = por %p364, %p365
    %p367 = scmp.ne.s32.totalorder %s359, %s362
    %p368 = scmp.eq.s32.totalorder %s25, 0
    %p369 = por %p367, %p368
    %p370 = scmp.ne.s32.totalorder %s359, %s362
    %p371 = scmp.eq.s32.totalorder %s30, 3
    %p372 = por %p370, %p371
    %p373 = scmp.ne.s32.totalorder %s362, %s363
    %p374 = scmp.eq.s32.totalorder %s30, 0
    %p375 = por %p373, %p374
    %p376 = scmp.ne.s32.totalorder %s362, %s363
    %p377 = scmp.eq.s32.totalorder %s31, 3
    %p378 = por %p376, %p377
    %p380 = scmp.ne.s32.totalorder %s363, %s379
    %p381 = scmp.eq.s32.totalorder %s31, 0
    %p382 = por %p380, %p381
    %s383 = ssub.s32 %s33, %s40
    %p384 = scmp.eq.s32.totalorder %s383, 0
    %s386 = sadd.s32 %s385, 1
    %s387 = scalar_select %p384, %s385, %s386
    %p390 = pneg %p384
    %p391 = scmp.eq.s32.totalorder %s25, 3
    %p392 = por %p390, %p391
    %p393 = scmp.ne.s32.totalorder %s385, %s388
    %p394 = scmp.eq.s32.totalorder %s25, 0
    %p395 = por %p393, %p394
    %p396 = scmp.ne.s32.totalorder %s385, %s388
    %p397 = scmp.eq.s32.totalorder %s30, 3
    %p398 = por %p396, %p397
    %p399 = scmp.ne.s32.totalorder %s388, %s389
    %p400 = scmp.eq.s32.totalorder %s30, 0
    %p401 = por %p399, %p400
    %p402 = scmp.ne.s32.totalorder %s388, %s389
    %p403 = scmp.eq.s32.totalorder %s31, 3
    %p404 = por %p402, %p403
    %p406 = scmp.ne.s32.totalorder %s389, %s405
    %p407 = scmp.eq.s32.totalorder %s31, 0
    %p408 = por %p406, %p407
    %s409 = ssub.s32 %s33, %s40
    %p410 = scmp.eq.s32.totalorder %s409, 0
    %s412 = sadd.s32 %s411, 1
    %s413 = scalar_select %p410, %s411, %s412
    %p416 = pneg %p410
    %p417 = scmp.eq.s32.totalorder %s25, 3
    %p418 = por %p416, %p417
    %p419 = scmp.ne.s32.totalorder %s411, %s414
    %p420 = scmp.eq.s32.totalorder %s25, 0
    %p421 = por %p419, %p420
    %p422 = scmp.ne.s32.totalorder %s411, %s414
    %p423 = scmp.eq.s32.totalorder %s30, 3
    %p424 = por %p422, %p423
    %p425 = scmp.ne.s32.totalorder %s414, %s415
    %p426 = scmp.eq.s32.totalorder %s30, 0
    %p427 = por %p425, %p426
    %p428 = scmp.ne.s32.totalorder %s414, %s415
    %p429 = scmp.eq.s32.totalorder %s31, 3
    %p430 = por %p428, %p429
    %p432 = scmp.ne.s32.totalorder %s415, %s431
    %p433 = scmp.eq.s32.totalorder %s31, 0
    %p434 = por %p432, %p433
    %s435 = ssub.s32 %s33, %s40
    %p436 = scmp.eq.s32.totalorder %s435, 0
    %s438 = sadd.s32 %s437, 1
    %s439 = scalar_select %p436, %s437, %s438
    %p442 = pneg %p436
    %p443 = scmp.eq.s32.totalorder %s25, 3
    %p444 = por %p442, %p443
    %p445 = scmp.ne.s32.totalorder %s437, %s440
    %p446 = scmp.eq.s32.totalorder %s25, 0
    %p447 = por %p445, %p446
    %p448 = scmp.ne.s32.totalorder %s437, %s440
    %p449 = scmp.eq.s32.totalorder %s30, 3
    %p450 = por %p448, %p449
    %p451 = scmp.ne.s32.totalorder %s440, %s441
    %p452 = scmp.eq.s32.totalorder %s30, 0
    %p453 = por %p451, %p452
    %p454 = scmp.ne.s32.totalorder %s440, %s441
    %p455 = scmp.eq.s32.totalorder %s31, 3
    %p456 = por %p454, %p455
    %p458 = scmp.ne.s32.totalorder %s441, %s457
    %p459 = scmp.eq.s32.totalorder %s31, 0
    %p460 = por %p458, %p459
    %s461 = ssub.s32 %s33, %s40
    %p462 = scmp.eq.s32.totalorder %s461, 0
    %s464 = sadd.s32 %s463, 1
    %s465 = scalar_select %p462, %s463, %s464
    %p468 = pneg %p462
    %p469 = scmp.eq.s32.totalorder %s25, 3
    %p470 = por %p468, %p469
    %p471 = scmp.ne.s32.totalorder %s463, %s466
    %p472 = scmp.eq.s32.totalorder %s25, 0
    %p473 = por %p471, %p472
    %p474 = scmp.ne.s32.totalorder %s463, %s466
    %p475 = scmp.eq.s32.totalorder %s30, 3
    %p476 = por %p474, %p475
    %p477 = scmp.ne.s32.totalorder %s466, %s467
    %p478 = scmp.eq.s32.totalorder %s30, 0
    %p479 = por %p477, %p478
    %p480 = scmp.ne.s32.totalorder %s466, %s467
    %p481 = scmp.eq.s32.totalorder %s31, 3
    %p482 = por %p480, %p481
    %p484 = scmp.ne.s32.totalorder %s467, %s483
    %p485 = scmp.eq.s32.totalorder %s31, 0
    %p486 = por %p484, %p485
    %s488 = sadd.s32 %s487, 1
    %p491 = scmp.eq.s32.totalorder %s25, 3
    %p492 = scmp.ne.s32.totalorder %s487, %s489
    %p493 = scmp.eq.s32.totalorder %s25, 0
    %p494 = por %p492, %p493
    %p495 = scmp.ne.s32.totalorder %s487, %s489
    %p496 = scmp.eq.s32.totalorder %s30, 3
    %p497 = por %p495, %p496
    %p498 = scmp.ne.s32.totalorder %s489, %s490
    %p499 = scmp.eq.s32.totalorder %s30, 0
    %p500 = por %p498, %p499
    %p501 = scmp.ne.s32.totalorder %s489, %s490
    %p502 = scmp.eq.s32.totalorder %s31, 3
    %p503 = por %p501, %p502
    %p505 = scmp.ne.s32.totalorder %s490, %s504
    %p506 = scmp.eq.s32.totalorder %s31, 0
    %p507 = por %p505, %p506
    %s509 = sadd.s32 %s508, 1
    %p512 = scmp.eq.s32.totalorder %s25, 3
    %p513 = scmp.ne.s32.totalorder %s508, %s510
    %p514 = scmp.eq.s32.totalorder %s25, 0
    %p515 = por %p513, %p514
    %p516 = scmp.ne.s32.totalorder %s508, %s510
    %p517 = scmp.eq.s32.totalorder %s30, 3
    %p518 = por %p516, %p517
    %p519 = scmp.ne.s32.totalorder %s510, %s511
    %p520 = scmp.eq.s32.totalorder %s30, 0
    %p521 = por %p519, %p520
    %p522 = scmp.ne.s32.totalorder %s510, %s511
    %p523 = scmp.eq.s32.totalorder %s31, 3
    %p524 = por %p522, %p523
    %p526 = scmp.ne.s32.totalorder %s511, %s525
    %p527 = scmp.eq.s32.totalorder %s31, 0
    %p528 = por %p526, %p527
    %s529 = ssub.s32 %s32, %s44
    %p530 = scmp.eq.s32.totalorder %s529, 0
    %s532 = sadd.s32 %s531, 1
    %s533 = scalar_select %p530, %s531, %s532
    %p536 = pneg %p530
    %p537 = scmp.eq.s32.totalorder %s25, 3
    %p538 = por %p536, %p537
    %p539 = scmp.ne.s32.totalorder %s531, %s534
    %p540 = scmp.eq.s32.totalorder %s25, 0
    %p541 = por %p539, %p540
    %p542 = scmp.ne.s32.totalorder %s531, %s534
    %p543 = scmp.eq.s32.totalorder %s30, 3
    %p544 = por %p542, %p543
    %p545 = scmp.ne.s32.totalorder %s534, %s535
    %p546 = scmp.eq.s32.totalorder %s30, 0
    %p547 = por %p545, %p546
    %p548 = scmp.ne.s32.totalorder %s534, %s535
    %p549 = scmp.eq.s32.totalorder %s31, 3
    %p550 = por %p548, %p549
    %p552 = scmp.ne.s32.totalorder %s535, %s551
    %p553 = scmp.eq.s32.totalorder %s31, 0
    %p554 = por %p552, %p553
    %p555 = scmp.le.s32.totalorder 1, %s25
    %p556 = scmp.lt.s32.totalorder %s25, 5
    %p557 = pnand %p555, %p556
    %p558 = pneg %p557
    // Predicated region
    $region9: #{_lambda_.13} parent=5 // pred_check
      _
    $region10: #{_lambda_.13} parent=5 // pred_check_branch
      %560 = sbr.rel (%p557) target = $region12
    $region11: #{_lambda_.13} parent=5 // pred_region
      %s561 = ssub.s32 %s25, 1
      // Predicated region
      $region13: #{_lambda_.13} parent=11 // pred_check
        %p562 = pneg %p500
      $region14: #{_lambda_.13} parent=11 // pred_check_branch
        %564 = sbr.rel (%p562) target = $region16
      $region15: #{_lambda_.13} parent=11 // pred_region
        _
      $region16: #{_lambda_.13} parent=11 // pred_fallthru
        _
      // Predicated region
      $region17: #{_lambda_.13} parent=11 // pred_check
        %p565 = pneg %p521
      $region18: #{_lambda_.13} parent=11 // pred_check_branch
        %567 = sbr.rel (%p565) target = $region20
      $region19: #{_lambda_.13} parent=11 // pred_region
        _
      $region20: #{_lambda_.13} parent=11 // pred_fallthru
        _
    $region12: #{_lambda_.13} parent=5 // pred_fallthru
      _
    %p568 = scmp.lt.s32.totalorder %s25, 4
    // Predicated region
    $region21: #{_lambda_.13} parent=5 // pred_check
      %p569 = pneg %p568
    $region22: #{_lambda_.13} parent=5 // pred_check_branch
      %571 = sbr.rel (%p569) target = $region24
    $region23: #{_lambda_.13} parent=5 // pred_region
      // Predicated region
      $region25: #{_lambda_.13} parent=23 // pred_check
        %p572 = pneg %p57
      $region26: #{_lambda_.13} parent=23 // pred_check_branch
        %574 = sbr.rel (%p572) target = $region28
      $region27: #{_lambda_.13} parent=23 // pred_region
        %p575 = scmp.lt.s32.totalorder %s32, 1
        %s576 = scalar_select %p575, %s32, 1
        %s577 = smul.addr %s576, 6
        %s578 = smul.addr %s577, 8
        %s579 = scalar_lea.vmem %s0, %s578
      $region28: #{_lambda_.13} parent=23 // pred_fallthru
        _
      // Predicated region
      $region29: #{_lambda_.13} parent=23 // pred_check
        %p580 = pneg %p83
      $region30: #{_lambda_.13} parent=23 // pred_check_branch
        %582 = sbr.rel (%p580) target = $region32
      $region31: #{_lambda_.13} parent=23 // pred_region
        %p583 = scmp.lt.s32.totalorder %s33, 1
        %s584 = scalar_select %p583, %s33, 1
        %s585 = smul.addr %s584, 2
        %s586 = scalar_lea.vmem %s1, %s585
      $region32: #{_lambda_.13} parent=23 // pred_fallthru
        _
      // Predicated region
      $region33: #{_lambda_.13} parent=23 // pred_check
        %p587 = pneg %p109
      $region34: #{_lambda_.13} parent=23 // pred_check_branch
        %589 = sbr.rel (%p587) target = $region36
      $region35: #{_lambda_.13} parent=23 // pred_region
        %p590 = scmp.lt.s32.totalorder %s33, 1
        %s591 = scalar_select %p590, %s33, 1
        %s592 = smul.addr %s591, 2
        %s593 = scalar_lea.vmem %s2, %s592
      $region36: #{_lambda_.13} parent=23 // pred_fallthru
        _
      // Predicated region
      $region37: #{_lambda_.13} parent=23 // pred_check
        %p594 = pneg %p135
      $region38: #{_lambda_.13} parent=23 // pred_check_branch
        %596 = sbr.rel (%p594) target = $region40
      $region39: #{_lambda_.13} parent=23 // pred_region
        %p597 = scmp.lt.s32.totalorder %s33, 1
        %s598 = scalar_select %p597, %s33, 1
        %s599 = smul.addr %s598, 64
        %s600 = smul.addr %s599, 4
        %s601 = scalar_lea.vmem %s3, %s600
      $region40: #{_lambda_.13} parent=23 // pred_fallthru
        _
      // Predicated region
      $region41: #{_lambda_.13} parent=23 // pred_check
        %p602 = pneg %p161
      $region42: #{_lambda_.13} parent=23 // pred_check_branch
        %604 = sbr.rel (%p602) target = $region44
      $region43: #{_lambda_.13} parent=23 // pred_region
        %p605 = scmp.lt.s32.totalorder %s33, 1
        %s606 = scalar_select %p605, %s33, 1
        %s607 = smul.addr %s606, 2
        %s608 = scalar_lea.vmem %s4, %s607
      $region44: #{_lambda_.13} parent=23 // pred_fallthru
        _
      // Predicated region
      $region45: #{_lambda_.13} parent=23 // pred_check
        %p609 = pneg %p187
      $region46: #{_lambda_.13} parent=23 // pred_check_branch
        %611 = sbr.rel (%p609) target = $region48
      $region47: #{_lambda_.13} parent=23 // pred_region
        %p612 = scmp.lt.s32.totalorder %s33, 1
        %s613 = scalar_select %p612, %s33, 1
        %s614 = smul.addr %s613, 64
        %s615 = smul.addr %s614, 4
        %s616 = scalar_lea.vmem %s5, %s615
      $region48: #{_lambda_.13} parent=23 // pred_fallthru
        _
      // Predicated region
      $region49: #{_lambda_.13} parent=23 // pred_check
        %p617 = pneg %p213
      $region50: #{_lambda_.13} parent=23 // pred_check_branch
        %619 = sbr.rel (%p617) target = $region52
      $region51: #{_lambda_.13} parent=23 // pred_region
        %p620 = scmp.lt.s32.totalorder %s33, 1
        %s621 = scalar_select %p620, %s33, 1
        %s622 = smul.addr %s621, 2
        %s623 = scalar_lea.vmem %s6, %s622
      $region52: #{_lambda_.13} parent=23 // pred_fallthru
        _
      // Predicated region
      $region53: #{_lambda_.13} parent=23 // pred_check
        %p624 = pneg %p239
      $region54: #{_lambda_.13} parent=23 // pred_check_branch
        %626 = sbr.rel (%p624) target = $region56
      $region55: #{_lambda_.13} parent=23 // pred_region
        %p627 = scmp.lt.s32.totalorder %s33, 1
        %s628 = scalar_select %p627, %s33, 1
        %s629 = smul.addr %s628, 64
        %s630 = smul.addr %s629, 4
        %s631 = scalar_lea.vmem %s7, %s630
      $region56: #{_lambda_.13} parent=23 // pred_fallthru
        _
      // Predicated region
      $region57: #{_lambda_.13} parent=23 // pred_check
        %p632 = pneg %p265
      $region58: #{_lambda_.13} parent=23 // pred_check_branch
        %634 = sbr.rel (%p632) target = $region60
      $region59: #{_lambda_.13} parent=23 // pred_region
        %p635 = scmp.lt.s32.totalorder %s33, 1
        %s636 = scalar_select %p635, %s33, 1
        %s637 = smul.addr %s636, 2
        %s638 = scalar_lea.vmem %s8, %s637
      $region60: #{_lambda_.13} parent=23 // pred_fallthru
        _
      // Predicated region
      $region61: #{_lambda_.13} parent=23 // pred_check
        %p639 = pneg %p291
      $region62: #{_lambda_.13} parent=23 // pred_check_branch
        %641 = sbr.rel (%p639) target = $region64
      $region63: #{_lambda_.13} parent=23 // pred_region
        %p642 = scmp.lt.s32.totalorder %s33, 1
        %s643 = scalar_select %p642, %s33, 1
        %s644 = smul.addr %s643, 64
        %s645 = smul.addr %s644, 4
        %s646 = scalar_lea.vmem %s9, %s645
      $region64: #{_lambda_.13} parent=23 // pred_fallthru
        _
      // Predicated region
      $region65: #{_lambda_.13} parent=23 // pred_check
        %p647 = pneg %p317
      $region66: #{_lambda_.13} parent=23 // pred_check_branch
        %649 = sbr.rel (%p647) target = $region68
      $region67: #{_lambda_.13} parent=23 // pred_region
        %p650 = scmp.lt.s32.totalorder %s33, 1
        %s651 = scalar_select %p650, %s33, 1
        %s652 = smul.addr %s651, 2
        %s653 = scalar_lea.vmem %s10, %s652
      $region68: #{_lambda_.13} parent=23 // pred_fallthru
        _
      // Predicated region
      $region69: #{_lambda_.13} parent=23 // pred_check
        %p654 = pneg %p343
      $region70: #{_lambda_.13} parent=23 // pred_check_branch
        %656 = sbr.rel (%p654) target = $region72
      $region71: #{_lambda_.13} parent=23 // pred_region
        %p657 = scmp.lt.s32.totalorder %s33, 1
        %s658 = scalar_select %p657, %s33, 1
        %s659 = smul.addr %s658, 2
        %s660 = scalar_lea.vmem %s11, %s659
      $region72: #{_lambda_.13} parent=23 // pred_fallthru
        _
      // Predicated region
      $region73: #{_lambda_.13} parent=23 // pred_check
        %p661 = pneg %p369
      $region74: #{_lambda_.13} parent=23 // pred_check_branch
        %663 = sbr.rel (%p661) target = $region76
      $region75: #{_lambda_.13} parent=23 // pred_region
        %p664 = scmp.lt.s32.totalorder %s33, 1
        %s665 = scalar_select %p664, %s33, 1
        %s666 = smul.addr %s665, 2
        %s667 = scalar_lea.vmem %s12, %s666
      $region76: #{_lambda_.13} parent=23 // pred_fallthru
        _
      // Predicated region
      $region77: #{_lambda_.13} parent=23 // pred_check
        %p668 = pneg %p395
      $region78: #{_lambda_.13} parent=23 // pred_check_branch
        %670 = sbr.rel (%p668) target = $region80
      $region79: #{_lambda_.13} parent=23 // pred_region
        %p671 = scmp.lt.s32.totalorder %s33, 1
        %s672 = scalar_select %p671, %s33, 1
        %s673 = smul.addr %s672, 128
        %s674 = smul.addr %s673, 4
        %s675 = scalar_lea.vmem %s13, %s674
      $region80: #{_lambda_.13} parent=23 // pred_fallthru
        _
      // Predicated region
      $region81: #{_lambda_.13} parent=23 // pred_check
        %p676 = pneg %p421
      $region82: #{_lambda_.13} parent=23 // pred_check_branch
        %678 = sbr.rel (%p676) target = $region84
      $region83: #{_lambda_.13} parent=23 // pred_region
        %p679 = scmp.lt.s32.totalorder %s33, 1
        %s680 = scalar_select %p679, %s33, 1
        %s681 = smul.addr %s680, 4
        %s682 = scalar_lea.vmem %s14, %s681
      $region84: #{_lambda_.13} parent=23 // pred_fallthru
        _
      // Predicated region
      $region85: #{_lambda_.13} parent=23 // pred_check
        %p683 = pneg %p447
      $region86: #{_lambda_.13} parent=23 // pred_check_branch
        %685 = sbr.rel (%p683) target = $region88
      $region87: #{_lambda_.13} parent=23 // pred_region
        %p686 = scmp.lt.s32.totalorder %s33, 1
        %s687 = scalar_select %p686, %s33, 1
        %s688 = smul.addr %s687, 128
        %s689 = smul.addr %s688, 4
        %s690 = scalar_lea.vmem %s15, %s689
      $region88: #{_lambda_.13} parent=23 // pred_fallthru
        _
      // Predicated region
      $region89: #{_lambda_.13} parent=23 // pred_check
        %p691 = pneg %p473
      $region90: #{_lambda_.13} parent=23 // pred_check_branch
        %693 = sbr.rel (%p691) target = $region92
      $region91: #{_lambda_.13} parent=23 // pred_region
        %p694 = scmp.lt.s32.totalorder %s33, 1
        %s695 = scalar_select %p694, %s33, 1
        %s696 = smul.addr %s695, 2
        %s697 = scalar_lea.vmem %s16, %s696
      $region92: #{_lambda_.13} parent=23 // pred_fallthru
        _
    $region24: #{_lambda_.13} parent=5 // pred_fallthru
      _
    %p698 = scmp.le.s32.totalorder 1, %s25
    %p699 = scmp.lt.s32.totalorder %s25, 5
    %p700 = pnand %p698, %p699
    %p701 = pneg %p700
    // Predicated region
    $region93: #{_lambda_.13} parent=5 // pred_check
      _
    $region94: #{_lambda_.13} parent=5 // pred_check_branch
      %703 = sbr.rel (%p700) target = $region96
    $region95: #{_lambda_.13} parent=5 // pred_region
      %s704 = ssub.s32 %s25, 1
      %p705 = scmp.lt.s32.totalorder %s34, 1
      %s706 = scalar_select %p705, %s34, 1
      %s707 = smul.addr %s706, 6
      %s708 = smul.addr %s707, 8
      %s709 = scalar_lea.vmem %s0, %s708
      %p710 = pneg %p63
      %p711 = pneg %p60
      %p712 = scmp.lt.s32.totalorder %s35, 1
      %s713 = scalar_select %p712, %s35, 1
      %s714 = smul.addr %s713, 2
      %s715 = scalar_lea.vmem %s1, %s714
      %p716 = pneg %p89
      %p717 = pneg %p86
      %p718 = scmp.lt.s32.totalorder %s35, 1
      %s719 = scalar_select %p718, %s35, 1
      %s720 = smul.addr %s719, 2
      %s721 = scalar_lea.vmem %s2, %s720
      %p722 = pneg %p115
      %p723 = pneg %p112
      %p724 = scmp.lt.s32.totalorder %s35, 1
      %s725 = scalar_select %p724, %s35, 1
      %s726 = smul.addr %s725, 64
      %s727 = smul.addr %s726, 4
      %s728 = scalar_lea.vmem %s3, %s727
      %p729 = pneg %p141
      %p730 = pneg %p138
      %p731 = scmp.lt.s32.totalorder %s35, 1
      %s732 = scalar_select %p731, %s35, 1
      %s733 = smul.addr %s732, 2
      %s734 = scalar_lea.vmem %s4, %s733
      %p735 = pneg %p167
      %p736 = pneg %p164
      %p737 = scmp.lt.s32.totalorder %s35, 1
      %s738 = scalar_select %p737, %s35, 1
      %s739 = smul.addr %s738, 64
      %s740 = smul.addr %s739, 4
      %s741 = scalar_lea.vmem %s5, %s740
      %p742 = pneg %p193
      %p743 = pneg %p190
      %p744 = scmp.lt.s32.totalorder %s35, 1
      %s745 = scalar_select %p744, %s35, 1
      %s746 = smul.addr %s745, 2
      %s747 = scalar_lea.vmem %s6, %s746
      %p748 = pneg %p219
      %p749 = pneg %p216
      %p750 = scmp.lt.s32.totalorder %s35, 1
      %s751 = scalar_select %p750, %s35, 1
      %s752 = smul.addr %s751, 64
      %s753 = smul.addr %s752, 4
      %s754 = scalar_lea.vmem %s7, %s753
      %p755 = pneg %p245
      %p756 = pneg %p242
      %p757 = scmp.lt.s32.totalorder %s35, 1
      %s758 = scalar_select %p757, %s35, 1
      %s759 = smul.addr %s758, 2
      %s760 = scalar_lea.vmem %s8, %s759
      %p761 = pneg %p271
      %p762 = pneg %p268
      %p763 = scmp.lt.s32.totalorder %s35, 1
      %s764 = scalar_select %p763, %s35, 1
      %s765 = smul.addr %s764, 64
      %s766 = smul.addr %s765, 4
      %s767 = scalar_lea.vmem %s9, %s766
      %p768 = pneg %p297
      %p769 = pneg %p294
      %p770 = scmp.lt.s32.totalorder %s35, 1
      %s771 = scalar_select %p770, %s35, 1
      %s772 = smul.addr %s771, 2
      %s773 = scalar_lea.vmem %s10, %s772
      %p774 = pneg %p323
      %p775 = pneg %p320
      %p776 = scmp.lt.s32.totalorder %s35, 1
      %s777 = scalar_select %p776, %s35, 1
      %s778 = smul.addr %s777, 2
      %s779 = scalar_lea.vmem %s11, %s778
      %p780 = pneg %p349
      %p781 = pneg %p346
      %p782 = scmp.lt.s32.totalorder %s35, 1
      %s783 = scalar_select %p782, %s35, 1
      %s784 = smul.addr %s783, 2
      %s785 = scalar_lea.vmem %s12, %s784
      %p786 = pneg %p375
      %p787 = pneg %p372
      %p788 = scmp.lt.s32.totalorder %s35, 1
      %s789 = scalar_select %p788, %s35, 1
      %s790 = smul.addr %s789, 128
      %s791 = smul.addr %s790, 4
      %s792 = scalar_lea.vmem %s13, %s791
      %p793 = pneg %p401
      %p794 = pneg %p398
      %p795 = scmp.lt.s32.totalorder %s35, 1
      %s796 = scalar_select %p795, %s35, 1
      %s797 = smul.addr %s796, 4
      %s798 = scalar_lea.vmem %s14, %s797
      %p799 = pneg %p427
      %p800 = pneg %p424
      %p801 = scmp.lt.s32.totalorder %s35, 1
      %s802 = scalar_select %p801, %s35, 1
      %s803 = smul.addr %s802, 128
      %s804 = smul.addr %s803, 4
      %s805 = scalar_lea.vmem %s15, %s804
      %p806 = pneg %p453
      %p807 = pneg %p450
      %p808 = scmp.lt.s32.totalorder %s35, 1
      %s809 = scalar_select %p808, %s35, 1
      %s810 = smul.addr %s809, 2
      %s811 = scalar_lea.vmem %s16, %s810
      %p812 = pneg %p479
      %p813 = pneg %p476
      %p814 = pneg %p500
      %p815 = pneg %p497
      %p816 = pneg %p521
      %p817 = pneg %p518
      %p818 = pneg %p547
      %p819 = pneg %p544
      %p820 = scmp.lt.s32.totalorder %s34, 1
      %s821 = scalar_select %p820, %s34, 1
      %s822 = smul.addr %s821, 6
      %s823 = smul.addr %s822, 8
      %s824 = scalar_lea.vmem %s19, %s823
      %p825 = scmp.lt.s32.totalorder %s34, 1
      %s826 = scalar_select %p825, %s34, 1
      %s827 = smul.addr %s826, 6
      %s828 = smul.addr %s827, 8
      %s829 = scalar_lea.vmem %s0, %s828
      %p830 = scmp.lt.s32.totalorder %s35, 1
      %s831 = scalar_select %p830, %s35, 1
      %s832 = smul.addr %s831, 2
      %s833 = scalar_lea.vmem %s1, %s832
      %p834 = scmp.lt.s32.totalorder %s35, 1
      %s835 = scalar_select %p834, %s35, 1
      %s836 = smul.addr %s835, 2
      %s837 = scalar_lea.vmem %s2, %s836
      %p838 = scmp.lt.s32.totalorder %s35, 1
      %s839 = scalar_select %p838, %s35, 1
      %s840 = smul.addr %s839, 64
      %s841 = smul.addr %s840, 4
      %s842 = scalar_lea.vmem %s3, %s841
      %p843 = scmp.lt.s32.totalorder %s35, 1
      %s844 = scalar_select %p843, %s35, 1
      %s845 = smul.addr %s844, 2
      %s846 = scalar_lea.vmem %s4, %s845
      %p847 = scmp.lt.s32.totalorder %s35, 1
      %s848 = scalar_select %p847, %s35, 1
      %s849 = smul.addr %s848, 64
      %s850 = smul.addr %s849, 4
      %s851 = scalar_lea.vmem %s5, %s850
      %p852 = scmp.lt.s32.totalorder %s35, 1
      %s853 = scalar_select %p852, %s35, 1
      %s854 = smul.addr %s853, 2
      %s855 = scalar_lea.vmem %s6, %s854
      %p856 = scmp.lt.s32.totalorder %s35, 1
      %s857 = scalar_select %p856, %s35, 1
      %s858 = smul.addr %s857, 64
      %s859 = smul.addr %s858, 4
      %s860 = scalar_lea.vmem %s7, %s859
      %p861 = scmp.lt.s32.totalorder %s35, 1
      %s862 = scalar_select %p861, %s35, 1
      %s863 = smul.addr %s862, 2
      %s864 = scalar_lea.vmem %s8, %s863
      %p865 = scmp.lt.s32.totalorder %s35, 1
      %s866 = scalar_select %p865, %s35, 1
      %s867 = smul.addr %s866, 64
      %s868 = smul.addr %s867, 4
      %s869 = scalar_lea.vmem %s9, %s868
      %p870 = scmp.lt.s32.totalorder %s35, 1
      %s871 = scalar_select %p870, %s35, 1
      %s872 = smul.addr %s871, 2
      %s873 = scalar_lea.vmem %s10, %s872
      %p874 = scmp.lt.s32.totalorder %s35, 1
      %s875 = scalar_select %p874, %s35, 1
      %s876 = smul.addr %s875, 2
      %s877 = scalar_lea.vmem %s11, %s876
      %p878 = scmp.lt.s32.totalorder %s35, 1
      %s879 = scalar_select %p878, %s35, 1
      %s880 = smul.addr %s879, 2
      %s881 = scalar_lea.vmem %s12, %s880
      %p882 = scmp.lt.s32.totalorder %s35, 1
      %s883 = scalar_select %p882, %s35, 1
      %s884 = smul.addr %s883, 128
      %s885 = smul.addr %s884, 4
      %s886 = scalar_lea.vmem %s13, %s885
      %p887 = scmp.lt.s32.totalorder %s35, 1
      %s888 = scalar_select %p887, %s35, 1
      %s889 = smul.addr %s888, 4
      %s890 = scalar_lea.vmem %s14, %s889
      %p891 = scmp.lt.s32.totalorder %s35, 1
      %s892 = scalar_select %p891, %s35, 1
      %s893 = smul.addr %s892, 128
      %s894 = smul.addr %s893, 4
      %s895 = scalar_lea.vmem %s15, %s894
      %p896 = scmp.lt.s32.totalorder %s35, 1
      %s897 = scalar_select %p896, %s35, 1
      %s898 = smul.addr %s897, 2
      %s899 = scalar_lea.vmem %s16, %s898
      %p900 = scmp.lt.s32.totalorder %s34, 1
      %s901 = scalar_select %p900, %s34, 1
      %s902 = smul.addr %s901, 6
      %s903 = smul.addr %s902, 8
      %s904 = scalar_lea.vmem %s19, %s903
      %p906 = scmp.eq.s32.totalorder %s35, 0
      // Predicated region
      $region97: #{_lambda_.13} parent=95 // pred_check
        %p907 = pneg %p906
      $region98: #{_lambda_.13} parent=95 // pred_check_branch
        %909 = sbr.rel (%p907) target = $region100
      $region99: #{_lambda_.13} parent=95 // pred_region
        %v910 = vld [vmem:[%s829] sm:$0xff]
        %v911 = vld [vmem:[%s829 + $0x8] sm:$0xff]
        %v912 = vld [vmem:[%s829 + $0x10] sm:$0xff]
        %v913 = vld [vmem:[%s829 + $0x18] sm:$0xff]
        %v914 = vld [vmem:[%s829 + $0x20] sm:$0x7]
        %v915 = vld [vmem:[%s829 + $0x28] sm:$0x7]
        %916 = vst [vmem:[%s904] sm:$0xff] %v910
        %917 = vst [vmem:[%s904 + $0x8] sm:$0xff] %v911
        %918 = vst [vmem:[%s904 + $0x10] sm:$0xff] %v912
        %919 = vst [vmem:[%s904 + $0x18] sm:$0xff] %v913
        %920 = vst [vmem:[%s904 + $0x20] sm:$0x7] %v914
        %921 = vst [vmem:[%s904 + $0x28] sm:$0x7] %v915
      $region100: #{_lambda_.13} parent=95 // pred_fallthru
        _
      %v922 = vld [vmem:[%s904] sm:$0xff]
      %v923 = vld [vmem:[%s904 + $0x8] sm:$0xff]
      %v924 = vld [vmem:[%s904 + $0x10] sm:$0xff]
      %v925 = vld [vmem:[%s904 + $0x18] sm:$0xff]
      %v926 = vld [vmem:[%s904 + $0x20] sm:$0x7]
      %v927 = vld [vmem:[%s904 + $0x28] sm:$0x7]
      %v928 = vld [vmem:[%s833] sm:$0x3]
      %v929 = vld [vmem:[%s837] sm:$0x3]
      %v930 = vadd.f32 %v922, %v923
      %931 = vadd.xlane.f32.xlu0 %v930
      %v932 = vpop.xlane.xlu0 %931
      %v933 = vadd.f32 %v924, %v925
      %934 = vadd.xlane.f32.xlu0 %v933
      %v935 = vpop.xlane.xlu0 %934
      %vm936 = vcmask 1042432
      %v937 = vsel %vm936, %v926, 0.0
      %v938 = vsel %vm936, %v927, 0.0
      %v939 = vadd.f32 %v937, %v938
      %940 = vadd.xlane.f32.xlu0 %v939
      %v941 = vpop.xlane.xlu0 %940
      %v942 = vrcp.pop 256.0
      %v943 = vmul.f32 %v932, %v942
      %v944 = vmul.f32 %v935, %v942
      %v945 = vmul.f32 %v941, %v942
      %v946 = vsub.f32 %v922, %v943
      %v947 = vsub.f32 %v923, %v943
      %v948 = vsub.f32 %v924, %v944
      %v949 = vsub.f32 %v925, %v944
      %v950 = vsub.f32 %v926, %v945
      %v951 = vsub.f32 %v927, %v945
      %v952 = vmul.f32 %v946, %v946
      %v953 = vmul.f32 %v947, %v947
      %v954 = vmul.f32 %v948, %v948
      %v955 = vmul.f32 %v949, %v949
      %v956 = vmul.f32 %v950, %v950
      %v957 = vmul.f32 %v951, %v951
      %v958 = vadd.f32 %v952, %v953
      %959 = vadd.xlane.f32.xlu0 %v958
      %v960 = vpop.xlane.xlu0 %959
      %v961 = vadd.f32 %v954, %v955
      %962 = vadd.xlane.f32.xlu0 %v961
      %v963 = vpop.xlane.xlu0 %962
      %v964 = vsel %vm936, %v956, 0.0
      %v965 = vsel %vm936, %v957, 0.0
      %v966 = vadd.f32 %v964, %v965
      %967 = vadd.xlane.f32.xlu0 %v966
      %v968 = vpop.xlane.xlu0 %967
      %v969 = vmul.f32 %v960, %v942
      %v970 = vmul.f32 %v963, %v942
      %v971 = vmul.f32 %v968, %v942
      %v972 = vadd.f32 %v969, 1e-05
      %v973 = vadd.f32 %v970, 1e-05
      %v974 = vadd.f32 %v971, 1e-05
      %v975 = vrsqrt.pop %v972
      %v976 = vrsqrt.pop %v973
      %v977 = vrsqrt.pop %v974
      %v978 = vmul.f32 %v946, %v975
      %v979 = vmul.f32 %v947, %v975
      %v980 = vmul.f32 %v948, %v976
      %v981 = vmul.f32 %v949, %v976
      %v982 = vmul.f32 %v950, %v977
      %v983 = vmul.f32 %v951, %v977
      %v985 = vlaneseq
      %v986 = vshrl.u32 %v985, 7
      %v987 = vsub.s32 0, %v986
      %v988 = vrot.slane %v928, %v987
      %v989 = vlaneseq
      %v990 = vshrl.u32 %v989, 7
      %v991 = vsub.s32 1, %v990
      %v992 = vrot.slane %v928, %v991
      %v995 = vmul.f32 %v978, %v988
      %v996 = vmul.f32 %v979, %v992
      %v997 = vmul.f32 %v980, %v988
      %v998 = vmul.f32 %v981, %v992
      %v999 = vmul.f32 %v982, %v988
      %v1000 = vmul.f32 %v983, %v992
      %v1002 = vlaneseq
      %v1003 = vshrl.u32 %v1002, 7
      %v1004 = vsub.s32 0, %v1003
      %v1005 = vrot.slane %v929, %v1004
      %v1006 = vlaneseq
      %v1007 = vshrl.u32 %v1006, 7
      %v1008 = vsub.s32 1, %v1007
      %v1009 = vrot.slane %v929, %v1008
      %v1012 = vadd.f32 %v995, %v1005
      %v1013 = vadd.f32 %v996, %v1009
      %v1014 = vadd.f32 %v997, %v1005
      %v1015 = vadd.f32 %v998, %v1009
      %v1016 = vadd.f32 %v999, %v1005
      %v1017 = vadd.f32 %v1000, %v1009
      %v1018 = vpack.c.bf16 %v1014, %v1012
      %v1019 = vpack.c.bf16 %v1015, %v1013
      %v1020 = vpack.c.bf16 %v1016, %v1016
      %v1021 = vpack.c.bf16 %v1017, %v1017
      %v1022 = vld [vmem:[%s842] sm:$0xff]
      %v1023 = vld [vmem:[%s842 + $0x8] sm:$0xff]
      %v1024 = vld [vmem:[%s842 + $0x10] sm:$0xff]
      %v1025 = vld [vmem:[%s842 + $0x18] sm:$0xff]
      %v1026 = vld [vmem:[%s842 + $0x20] sm:$0xff]
      %v1027 = vld [vmem:[%s842 + $0x28] sm:$0xff]
      %v1028 = vld [vmem:[%s842 + $0x30] sm:$0xff]
      %v1029 = vld [vmem:[%s842 + $0x38] sm:$0xff]
      %v1030 = vld [vmem:[%s842 + $0x40] sm:$0xff]
      %v1031 = vld [vmem:[%s842 + $0x48] sm:$0xff]
      %v1032 = vld [vmem:[%s842 + $0x50] sm:$0xff]
      %v1033 = vld [vmem:[%s842 + $0x58] sm:$0xff]
      %v1034 = vld [vmem:[%s842 + $0x60] sm:$0xff]
      %v1035 = vld [vmem:[%s842 + $0x68] sm:$0xff]
      %v1036 = vld [vmem:[%s842 + $0x70] sm:$0xff]
      %v1037 = vld [vmem:[%s842 + $0x78] sm:$0xff]
      %v1038 = vld [vmem:[%s842 + $0x80] sm:$0xff]
      %v1039 = vld [vmem:[%s842 + $0x88] sm:$0xff]
      %v1040 = vld [vmem:[%s842 + $0x90] sm:$0xff]
      %v1041 = vld [vmem:[%s842 + $0x98] sm:$0xff]
      %v1042 = vld [vmem:[%s842 + $0xa0] sm:$0xff]
      %v1043 = vld [vmem:[%s842 + $0xa8] sm:$0xff]
      %v1044 = vld [vmem:[%s842 + $0xb0] sm:$0xff]
      %v1045 = vld [vmem:[%s842 + $0xb8] sm:$0xff]
      %v1046 = vld [vmem:[%s842 + $0xc0] sm:$0xff]
      %v1047 = vld [vmem:[%s842 + $0xc8] sm:$0xff]
      %v1048 = vld [vmem:[%s842 + $0xd0] sm:$0xff]
      %v1049 = vld [vmem:[%s842 + $0xd8] sm:$0xff]
      %v1050 = vld [vmem:[%s842 + $0xe0] sm:$0xff]
      %v1051 = vld [vmem:[%s842 + $0xe8] sm:$0xff]
      %v1052 = vld [vmem:[%s842 + $0xf0] sm:$0xff]
      %v1053 = vld [vmem:[%s842 + $0xf8] sm:$0xff]
      %v1054 = vld [vmem:[%s846] sm:$0x3]
      %v1056 = vlaneseq
      %v1057 = vshrl.u32 %v1056, 7
      %v1058 = vsub.s32 0, %v1057
      %v1059 = vrot.slane %v1054, %v1058
      %v1060 = vlaneseq
      %v1061 = vshrl.u32 %v1060, 7
      %v1062 = vsub.s32 1, %v1061
      %v1063 = vrot.slane %v1054, %v1062
      %v1098 = vunpack.c.l.b16 %v1022
      %v1099 = vunpack.c.h.b16 %v1022
      %v1100 = vunpack.c.l.b16 %v1023
      %v1101 = vunpack.c.h.b16 %v1023
      %v1102 = vunpack.c.l.b16 %v1024
      %v1103 = vunpack.c.h.b16 %v1024
      %v1104 = vunpack.c.l.b16 %v1025
      %v1105 = vunpack.c.h.b16 %v1025
      %v1106 = vunpack.c.l.b16 %v1026
      %v1107 = vunpack.c.h.b16 %v1026
      %v1108 = vunpack.c.l.b16 %v1027
      %v1109 = vunpack.c.h.b16 %v1027
      %v1110 = vunpack.c.l.b16 %v1028
      %v1111 = vunpack.c.h.b16 %v1028
      %v1112 = vunpack.c.l.b16 %v1029
      %v1113 = vunpack.c.h.b16 %v1029
      %v1114 = vunpack.c.l.b16 %v1030
      %v1115 = vunpack.c.h.b16 %v1030
      %v1116 = vunpack.c.l.b16 %v1031
      %v1117 = vunpack.c.h.b16 %v1031
      %v1118 = vunpack.c.l.b16 %v1032
      %v1119 = vunpack.c.h.b16 %v1032
      %v1120 = vunpack.c.l.b16 %v1033
      %v1121 = vunpack.c.h.b16 %v1033
      %v1122 = vunpack.c.l.b16 %v1034
      %v1123 = vunpack.c.h.b16 %v1034
      %v1124 = vunpack.c.l.b16 %v1035
      %v1125 = vunpack.c.h.b16 %v1035
      %v1126 = vunpack.c.l.b16 %v1036
      %v1127 = vunpack.c.h.b16 %v1036
      %v1128 = vunpack.c.l.b16 %v1037
      %v1129 = vunpack.c.h.b16 %v1037
      %v1130 = vunpack.c.l.b16 %v1038
      %v1131 = vunpack.c.h.b16 %v1038
      %v1132 = vunpack.c.l.b16 %v1039
      %v1133 = vunpack.c.h.b16 %v1039
      %v1134 = vunpack.c.l.b16 %v1040
      %v1135 = vunpack.c.h.b16 %v1040
      %v1136 = vunpack.c.l.b16 %v1041
      %v1137 = vunpack.c.h.b16 %v1041
      %v1138 = vunpack.c.l.b16 %v1042
      %v1139 = vunpack.c.h.b16 %v1042
      %v1140 = vunpack.c.l.b16 %v1043
      %v1141 = vunpack.c.h.b16 %v1043
      %v1142 = vunpack.c.l.b16 %v1044
      %v1143 = vunpack.c.h.b16 %v1044
      %v1144 = vunpack.c.l.b16 %v1045
      %v1145 = vunpack.c.h.b16 %v1045
      %v1146 = vunpack.c.l.b16 %v1046
      %v1147 = vunpack.c.h.b16 %v1046
      %v1148 = vunpack.c.l.b16 %v1047
      %v1149 = vunpack.c.h.b16 %v1047
      %v1150 = vunpack.c.l.b16 %v1048
      %v1151 = vunpack.c.h.b16 %v1048
      %v1152 = vunpack.c.l.b16 %v1049
      %v1153 = vunpack.c.h.b16 %v1049
      %v1154 = vunpack.c.l.b16 %v1050
      %v1155 = vunpack.c.h.b16 %v1050
      %v1156 = vunpack.c.l.b16 %v1051
      %v1157 = vunpack.c.h.b16 %v1051
      %v1158 = vunpack.c.l.b16 %v1052
      %v1159 = vunpack.c.h.b16 %v1052
      %v1160 = vunpack.c.l.b16 %v1053
      %v1161 = vunpack.c.h.b16 %v1053
      %v1162 = vpack.c.b16 %v1100, %v1098
      %v1163 = vpack.c.b16 %v1101, %v1099
      %v1164 = vpack.c.b16 %v1104, %v1102
      %v1165 = vpack.c.b16 %v1105, %v1103
      %v1166 = vpack.c.b16 %v1108, %v1106
      %v1167 = vpack.c.b16 %v1109, %v1107
      %v1168 = vpack.c.b16 %v1112, %v1110
      %v1169 = vpack.c.b16 %v1113, %v1111
      %v1170 = vpack.c.b16 %v1116, %v1114
      %v1171 = vpack.c.b16 %v1117, %v1115
      %v1172 = vpack.c.b16 %v1120, %v1118
      %v1173 = vpack.c.b16 %v1121, %v1119
      %v1174 = vpack.c.b16 %v1124, %v1122
      %v1175 = vpack.c.b16 %v1125, %v1123
      %v1176 = vpack.c.b16 %v1128, %v1126
      %v1177 = vpack.c.b16 %v1129, %v1127
      %v1178 = vpack.c.b16 %v1132, %v1130
      %v1179 = vpack.c.b16 %v1133, %v1131
      %v1180 = vpack.c.b16 %v1136, %v1134
      %v1181 = vpack.c.b16 %v1137, %v1135
      %v1182 = vpack.c.b16 %v1140, %v1138
      %v1183 = vpack.c.b16 %v1141, %v1139
      %v1184 = vpack.c.b16 %v1144, %v1142
      %v1185 = vpack.c.b16 %v1145, %v1143
      %v1186 = vpack.c.b16 %v1148, %v1146
      %v1187 = vpack.c.b16 %v1149, %v1147
      %v1188 = vpack.c.b16 %v1152, %v1150
      %v1189 = vpack.c.b16 %v1153, %v1151
      %v1190 = vpack.c.b16 %v1156, %v1154
      %v1191 = vpack.c.b16 %v1157, %v1155
      %v1192 = vpack.c.b16 %v1160, %v1158
      %v1193 = vpack.c.b16 %v1161, %v1159
      %1226 = vmatprep.subr.bf16.mxu0 %v1163
      %1227 = vmatpush1.bf16.msra.mxu0 %v1162
      %1228 = vmatprep.subr.bf16.mxu0 %v1165
      %1229 = vmatpush1.bf16.msra.mxu0 %v1164
      %1230 = vmatprep.subr.bf16.mxu0 %v1167
      %1231 = vmatpush1.bf16.msra.mxu0 %v1166
      %1232 = vmatprep.subr.bf16.mxu0 %v1169
      %1233 = vmatpush1.bf16.msra.mxu0 %v1168
      %1234 = vmatprep.subr.bf16.mxu0 %v1171
      %1235 = vmatpush1.bf16.msra.mxu0 %v1170
      %1236 = vmatprep.subr.bf16.mxu0 %v1173
      %1237 = vmatpush1.bf16.msra.mxu0 %v1172
      %1238 = vmatprep.subr.bf16.mxu0 %v1175
      %1239 = vmatpush1.bf16.msra.mxu0 %v1174
      %1240 = vmatprep.subr.bf16.mxu0 %v1177
      %1241 = vmatpush1.bf16.msra.mxu0 %v1176
      %1242 = vmatprep.subr.bf16.mxu0 %v1179
      %1243 = vmatpush1.bf16.msra.mxu0 %v1178
      %1244 = vmatprep.subr.bf16.mxu0 %v1181
      %1245 = vmatpush1.bf16.msra.mxu0 %v1180
      %1246 = vmatprep.subr.bf16.mxu0 %v1183
      %1247 = vmatpush1.bf16.msra.mxu0 %v1182
      %1248 = vmatprep.subr.bf16.mxu0 %v1185
      %1249 = vmatpush1.bf16.msra.mxu0 %v1184
      %1250 = vmatprep.subr.bf16.mxu0 %v1187
      %1251 = vmatpush1.bf16.msra.mxu0 %v1186
      %1252 = vmatprep.subr.bf16.mxu0 %v1189
      %1253 = vmatpush1.bf16.msra.mxu0 %v1188
      %1254 = vmatprep.subr.bf16.mxu0 %v1191
      %1255 = vmatpush1.bf16.msra.mxu0 %v1190
      %1256 = vmatprep.subr.bf16.mxu0 %v1193
      %1257 = vmatpush1.bf16.msra.mxu0 %v1192
      %1258 = vmatprep.mubr.bf16.mxu0 %v1019
      %1259 = vmatmul.mubr.bf16.gmra.mrb[0].mxu0 %v1018
      %v1260 = vpop.f32.mrb[0].mxu0
      %v1261 = vadd.f32 %v1059, %v1260
      %v1262 = vpop.f32.mrb[0].mxu0
      %v1263 = vadd.f32 %v1063, %v1262
      %v1264 = vpop.f32.mrb[0].mxu0
      %v1265 = vadd.f32 %v1059, %v1264
      %v1266 = vpop.f32.mrb[0].mxu0
      %v1267 = vadd.f32 %v1063, %v1266
      %1268 = vmatprep.mubr.bf16.mxu0 %v1021
      %1269 = vmatmul.mubr.bf16.gmra.mrb[0].mxu0 %v1020
      %v1270 = vpop.f32.mrb[0].mxu0
      %v1271 = vadd.f32 %v1059, %v1270
      %v1272 = vpop.f32.mrb[0].mxu0
      %v1273 = vadd.f32 %v1063, %v1272
      %v1274 = vpop.f32.mrb[0].mxu0
      %v1275 = vpop.f32.mrb[0].mxu0
      %1276 = vdwg.mxu0
      %v1277 = vld [vmem:[%s851] sm:$0xff]
      %v1278 = vld [vmem:[%s851 + $0x8] sm:$0xff]
      %v1279 = vld [vmem:[%s851 + $0x10] sm:$0xff]
      %v1280 = vld [vmem:[%s851 + $0x18] sm:$0xff]
      %v1281 = vld [vmem:[%s851 + $0x20] sm:$0xff]
      %v1282 = vld [vmem:[%s851 + $0x28] sm:$0xff]
      %v1283 = vld [vmem:[%s851 + $0x30] sm:$0xff]
      %v1284 = vld [vmem:[%s851 + $0x38] sm:$0xff]
      %v1285 = vld [vmem:[%s851 + $0x40] sm:$0xff]
      %v1286 = vld [vmem:[%s851 + $0x48] sm:$0xff]
      %v1287 = vld [vmem:[%s851 + $0x50] sm:$0xff]
      %v1288 = vld [vmem:[%s851 + $0x58] sm:$0xff]
      %v1289 = vld [vmem:[%s851 + $0x60] sm:$0xff]
      %v1290 = vld [vmem:[%s851 + $0x68] sm:$0xff]
      %v1291 = vld [vmem:[%s851 + $0x70] sm:$0xff]
      %v1292 = vld [vmem:[%s851 + $0x78] sm:$0xff]
      %v1293 = vld [vmem:[%s851 + $0x80] sm:$0xff]
      %v1294 = vld [vmem:[%s851 + $0x88] sm:$0xff]
      %v1295 = vld [vmem:[%s851 + $0x90] sm:$0xff]
      %v1296 = vld [vmem:[%s851 + $0x98] sm:$0xff]
      %v1297 = vld [vmem:[%s851 + $0xa0] sm:$0xff]
      %v1298 = vld [vmem:[%s851 + $0xa8] sm:$0xff]
      %v1299 = vld [vmem:[%s851 + $0xb0] sm:$0xff]
      %v1300 = vld [vmem:[%s851 + $0xb8] sm:$0xff]
      %v1301 = vld [vmem:[%s851 + $0xc0] sm:$0xff]
      %v1302 = vld [vmem:[%s851 + $0xc8] sm:$0xff]
      %v1303 = vld [vmem:[%s851 + $0xd0] sm:$0xff]
      %v1304 = vld [vmem:[%s851 + $0xd8] sm:$0xff]
      %v1305 = vld [vmem:[%s851 + $0xe0] sm:$0xff]
      %v1306 = vld [vmem:[%s851 + $0xe8] sm:$0xff]
      %v1307 = vld [vmem:[%s851 + $0xf0] sm:$0xff]
      %v1308 = vld [vmem:[%s851 + $0xf8] sm:$0xff]
      %v1309 = vld [vmem:[%s855] sm:$0x3]
      %v1311 = vlaneseq
      %v1312 = vshrl.u32 %v1311, 7
      %v1313 = vsub.s32 0, %v1312
      %v1314 = vrot.slane %v1309, %v1313
      %v1315 = vlaneseq
      %v1316 = vshrl.u32 %v1315, 7
      %v1317 = vsub.s32 1, %v1316
      %v1318 = vrot.slane %v1309, %v1317
      %v1353 = vunpack.c.l.b16 %v1277
      %v1354 = vunpack.c.h.b16 %v1277
      %v1355 = vunpack.c.l.b16 %v1278
      %v1356 = vunpack.c.h.b16 %v1278
      %v1357 = vunpack.c.l.b16 %v1279
      %v1358 = vunpack.c.h.b16 %v1279
      %v1359 = vunpack.c.l.b16 %v1280
      %v1360 = vunpack.c.h.b16 %v1280
      %v1361 = vunpack.c.l.b16 %v1281
      %v1362 = vunpack.c.h.b16 %v1281
      %v1363 = vunpack.c.l.b16 %v1282
      %v1364 = vunpack.c.h.b16 %v1282
      %v1365 = vunpack.c.l.b16 %v1283
      %v1366 = vunpack.c.h.b16 %v1283
      %v1367 = vunpack.c.l.b16 %v1284
      %v1368 = vunpack.c.h.b16 %v1284
      %v1369 = vunpack.c.l.b16 %v1285
      %v1370 = vunpack.c.h.b16 %v1285
      %v1371 = vunpack.c.l.b16 %v1286
      %v1372 = vunpack.c.h.b16 %v1286
      %v1373 = vunpack.c.l.b16 %v1287
      %v1374 = vunpack.c.h.b16 %v1287
      %v1375 = vunpack.c.l.b16 %v1288
      %v1376 = vunpack.c.h.b16 %v1288
      %v1377 = vunpack.c.l.b16 %v1289
      %v1378 = vunpack.c.h.b16 %v1289
      %v1379 = vunpack.c.l.b16 %v1290
      %v1380 = vunpack.c.h.b16 %v1290
      %v1381 = vunpack.c.l.b16 %v1291
      %v1382 = vunpack.c.h.b16 %v1291
      %v1383 = vunpack.c.l.b16 %v1292
      %v1384 = vunpack.c.h.b16 %v1292
      %v1385 = vunpack.c.l.b16 %v1293
      %v1386 = vunpack.c.h.b16 %v1293
      %v1387 = vunpack.c.l.b16 %v1294
      %v1388 = vunpack.c.h.b16 %v1294
      %v1389 = vunpack.c.l.b16 %v1295
      %v1390 = vunpack.c.h.b16 %v1295
      %v1391 = vunpack.c.l.b16 %v1296
      %v1392 = vunpack.c.h.b16 %v1296
      %v1393 = vunpack.c.l.b16 %v1297
      %v1394 = vunpack.c.h.b16 %v1297
      %v1395 = vunpack.c.l.b16 %v1298
      %v1396 = vunpack.c.h.b16 %v1298
      %v1397 = vunpack.c.l.b16 %v1299
      %v1398 = vunpack.c.h.b16 %v1299
      %v1399 = vunpack.c.l.b16 %v1300
      %v1400 = vunpack.c.h.b16 %v1300
      %v1401 = vunpack.c.l.b16 %v1301
      %v1402 = vunpack.c.h.b16 %v1301
      %v1403 = vunpack.c.l.b16 %v1302
      %v1404 = vunpack.c.h.b16 %v1302
      %v1405 = vunpack.c.l.b16 %v1303
      %v1406 = vunpack.c.h.b16 %v1303
      %v1407 = vunpack.c.l.b16 %v1304
      %v1408 = vunpack.c.h.b16 %v1304
      %v1409 = vunpack.c.l.b16 %v1305
      %v1410 = vunpack.c.h.b16 %v1305
      %v1411 = vunpack.c.l.b16 %v1306
      %v1412 = vunpack.c.h.b16 %v1306
      %v1413 = vunpack.c.l.b16 %v1307
      %v1414 = vunpack.c.h.b16 %v1307
      %v1415 = vunpack.c.l.b16 %v1308
      %v1416 = vunpack.c.h.b16 %v1308
      %v1417 = vpack.c.b16 %v1355, %v1353
      %v1418 = vpack.c.b16 %v1356, %v1354
      %v1419 = vpack.c.b16 %v1359, %v1357
      %v1420 = vpack.c.b16 %v1360, %v1358
      %v1421 = vpack.c.b16 %v1363, %v1361
      %v1422 = vpack.c.b16 %v1364, %v1362
      %v1423 = vpack.c.b16 %v1367, %v1365
      %v1424 = vpack.c.b16 %v1368, %v1366
      %v1425 = vpack.c.b16 %v1371, %v1369
      %v1426 = vpack.c.b16 %v1372, %v1370
      %v1427 = vpack.c.b16 %v1375, %v1373
      %v1428 = vpack.c.b16 %v1376, %v1374
      %v1429 = vpack.c.b16 %v1379, %v1377
      %v1430 = vpack.c.b16 %v1380, %v1378
      %v1431 = vpack.c.b16 %v1383, %v1381
      %v1432 = vpack.c.b16 %v1384, %v1382
      %v1433 = vpack.c.b16 %v1387, %v1385
      %v1434 = vpack.c.b16 %v1388, %v1386
      %v1435 = vpack.c.b16 %v1391, %v1389
      %v1436 = vpack.c.b16 %v1392, %v1390
      %v1437 = vpack.c.b16 %v1395, %v1393
      %v1438 = vpack.c.b16 %v1396, %v1394
      %v1439 = vpack.c.b16 %v1399, %v1397
      %v1440 = vpack.c.b16 %v1400, %v1398
      %v1441 = vpack.c.b16 %v1403, %v1401
      %v1442 = vpack.c.b16 %v1404, %v1402
      %v1443 = vpack.c.b16 %v1407, %v1405
      %v1444 = vpack.c.b16 %v1408, %v1406
      %v1445 = vpack.c.b16 %v1411, %v1409
      %v1446 = vpack.c.b16 %v1412, %v1410
      %v1447 = vpack.c.b16 %v1415, %v1413
      %v1448 = vpack.c.b16 %v1416, %v1414
      %1481 = vmatprep.subr.bf16.mxu0 %v1418
      %1482 = vmatpush1.bf16.msra.mxu0 %v1417
      %1483 = vmatprep.subr.bf16.mxu0 %v1420
      %1484 = vmatpush1.bf16.msra.mxu0 %v1419
      %1485 = vmatprep.subr.bf16.mxu0 %v1422
      %1486 = vmatpush1.bf16.msra.mxu0 %v1421
      %1487 = vmatprep.subr.bf16.mxu0 %v1424
      %1488 = vmatpush1.bf16.msra.mxu0 %v1423
      %1489 = vmatprep.subr.bf16.mxu0 %v1426
      %1490 = vmatpush1.bf16.msra.mxu0 %v1425
      %1491 = vmatprep.subr.bf16.mxu0 %v1428
      %1492 = vmatpush1.bf16.msra.mxu0 %v1427
      %1493 = vmatprep.subr.bf16.mxu0 %v1430
      %1494 = vmatpush1.bf16.msra.mxu0 %v1429
      %1495 = vmatprep.subr.bf16.mxu0 %v1432
      %1496 = vmatpush1.bf16.msra.mxu0 %v1431
      %1497 = vmatprep.subr.bf16.mxu0 %v1434
      %1498 = vmatpush1.bf16.msra.mxu0 %v1433
      %1499 = vmatprep.subr.bf16.mxu0 %v1436
      %1500 = vmatpush1.bf16.msra.mxu0 %v1435
      %1501 = vmatprep.subr.bf16.mxu0 %v1438
      %1502 = vmatpush1.bf16.msra.mxu0 %v1437
      %1503 = vmatprep.subr.bf16.mxu0 %v1440
      %1504 = vmatpush1.bf16.msra.mxu0 %v1439
      %1505 = vmatprep.subr.bf16.mxu0 %v1442
      %1506 = vmatpush1.bf16.msra.mxu0 %v1441
      %1507 = vmatprep.subr.bf16.mxu0 %v1444
      %1508 = vmatpush1.bf16.msra.mxu0 %v1443
      %1509 = vmatprep.subr.bf16.mxu0 %v1446
      %1510 = vmatpush1.bf16.msra.mxu0 %v1445
      %1511 = vmatprep.subr.bf16.mxu0 %v1448
      %1512 = vmatpush1.bf16.msra.mxu0 %v1447
      %1513 = vmatprep.mubr.bf16.mxu0 %v1019
      %1514 = vmatmul.mubr.bf16.gmra.mrb[0].mxu0 %v1018
      %v1515 = vpop.f32.mrb[0].mxu0
      %v1516 = vadd.f32 %v1314, %v1515
      %v1517 = vpop.f32.mrb[0].mxu0
      %v1518 = vadd.f32 %v1318, %v1517
      %v1519 = vpop.f32.mrb[0].mxu0
      %v1520 = vadd.f32 %v1314, %v1519
      %v1521 = vpop.f32.mrb[0].mxu0
      %v1522 = vadd.f32 %v1318, %v1521
      %1523 = vmatprep.mubr.bf16.mxu0 %v1021
      %1524 = vmatmul.mubr.bf16.gmra.mrb[0].mxu0 %v1020
      %v1525 = vpop.f32.mrb[0].mxu0
      %v1526 = vadd.f32 %v1314, %v1525
      %v1527 = vpop.f32.mrb[0].mxu0
      %v1528 = vadd.f32 %v1318, %v1527
      %v1529 = vpop.f32.mrb[0].mxu0
      %v1530 = vpop.f32.mrb[0].mxu0
      %1531 = vdwg.mxu0
      %v1532 = vld [vmem:[%s860] sm:$0xff]
      %v1533 = vld [vmem:[%s860 + $0x8] sm:$0xff]
      %v1534 = vld [vmem:[%s860 + $0x10] sm:$0xff]
      %v1535 = vld [vmem:[%s860 + $0x18] sm:$0xff]
      %v1536 = vld [vmem:[%s860 + $0x20] sm:$0xff]
      %v1537 = vld [vmem:[%s860 + $0x28] sm:$0xff]
      %v1538 = vld [vmem:[%s860 + $0x30] sm:$0xff]
      %v1539 = vld [vmem:[%s860 + $0x38] sm:$0xff]
      %v1540 = vld [vmem:[%s860 + $0x40] sm:$0xff]
      %v1541 = vld [vmem:[%s860 + $0x48] sm:$0xff]
      %v1542 = vld [vmem:[%s860 + $0x50] sm:$0xff]
      %v1543 = vld [vmem:[%s860 + $0x58] sm:$0xff]
      %v1544 = vld [vmem:[%s860 + $0x60] sm:$0xff]
      %v1545 = vld [vmem:[%s860 + $0x68] sm:$0xff]
      %v1546 = vld [vmem:[%s860 + $0x70] sm:$0xff]
      %v1547 = vld [vmem:[%s860 + $0x78] sm:$0xff]
      %v1548 = vld [vmem:[%s860 + $0x80] sm:$0xff]
      %v1549 = vld [vmem:[%s860 + $0x88] sm:$0xff]
      %v1550 = vld [vmem:[%s860 + $0x90] sm:$0xff]
      %v1551 = vld [vmem:[%s860 + $0x98] sm:$0xff]
      %v1552 = vld [vmem:[%s860 + $0xa0] sm:$0xff]
      %v1553 = vld [vmem:[%s860 + $0xa8] sm:$0xff]
      %v1554 = vld [vmem:[%s860 + $0xb0] sm:$0xff]
      %v1555 = vld [vmem:[%s860 + $0xb8] sm:$0xff]
      %v1556 = vld [vmem:[%s860 + $0xc0] sm:$0xff]
      %v1557 = vld [vmem:[%s860 + $0xc8] sm:$0xff]
      %v1558 = vld [vmem:[%s860 + $0xd0] sm:$0xff]
      %v1559 = vld [vmem:[%s860 + $0xd8] sm:$0xff]
      %v1560 = vld [vmem:[%s860 + $0xe0] sm:$0xff]
      %v1561 = vld [vmem:[%s860 + $0xe8] sm:$0xff]
      %v1562 = vld [vmem:[%s860 + $0xf0] sm:$0xff]
      %v1563 = vld [vmem:[%s860 + $0xf8] sm:$0xff]
      %v1564 = vld [vmem:[%s864] sm:$0x3]
      %v1566 = vlaneseq
      %v1567 = vshrl.u32 %v1566, 7
      %v1568 = vsub.s32 0, %v1567
      %v1569 = vrot.slane %v1564, %v1568
      %v1570 = vlaneseq
      %v1571 = vshrl.u32 %v1570, 7
      %v1572 = vsub.s32 1, %v1571
      %v1573 = vrot.slane %v1564, %v1572
      %v1608 = vunpack.c.l.b16 %v1532
      %v1609 = vunpack.c.h.b16 %v1532
      %v1610 = vunpack.c.l.b16 %v1533
      %v1611 = vunpack.c.h.b16 %v1533
      %v1612 = vunpack.c.l.b16 %v1534
      %v1613 = vunpack.c.h.b16 %v1534
      %v1614 = vunpack.c.l.b16 %v1535
      %v1615 = vunpack.c.h.b16 %v1535
      %v1616 = vunpack.c.l.b16 %v1536
      %v1617 = vunpack.c.h.b16 %v1536
      %v1618 = vunpack.c.l.b16 %v1537
      %v1619 = vunpack.c.h.b16 %v1537
      %v1620 = vunpack.c.l.b16 %v1538
      %v1621 = vunpack.c.h.b16 %v1538
      %v1622 = vunpack.c.l.b16 %v1539
      %v1623 = vunpack.c.h.b16 %v1539
      %v1624 = vunpack.c.l.b16 %v1540
      %v1625 = vunpack.c.h.b16 %v1540
      %v1626 = vunpack.c.l.b16 %v1541
      %v1627 = vunpack.c.h.b16 %v1541
      %v1628 = vunpack.c.l.b16 %v1542
      %v1629 = vunpack.c.h.b16 %v1542
      %v1630 = vunpack.c.l.b16 %v1543
      %v1631 = vunpack.c.h.b16 %v1543
      %v1632 = vunpack.c.l.b16 %v1544
      %v1633 = vunpack.c.h.b16 %v1544
      %v1634 = vunpack.c.l.b16 %v1545
      %v1635 = vunpack.c.h.b16 %v1545
      %v1636 = vunpack.c.l.b16 %v1546
      %v1637 = vunpack.c.h.b16 %v1546
      %v1638 = vunpack.c.l.b16 %v1547
      %v1639 = vunpack.c.h.b16 %v1547
      %v1640 = vunpack.c.l.b16 %v1548
      %v1641 = vunpack.c.h.b16 %v1548
      %v1642 = vunpack.c.l.b16 %v1549
      %v1643 = vunpack.c.h.b16 %v1549
      %v1644 = vunpack.c.l.b16 %v1550
      %v1645 = vunpack.c.h.b16 %v1550
      %v1646 = vunpack.c.l.b16 %v1551
      %v1647 = vunpack.c.h.b16 %v1551
      %v1648 = vunpack.c.l.b16 %v1552
      %v1649 = vunpack.c.h.b16 %v1552
      %v1650 = vunpack.c.l.b16 %v1553
      %v1651 = vunpack.c.h.b16 %v1553
      %v1652 = vunpack.c.l.b16 %v1554
      %v1653 = vunpack.c.h.b16 %v1554
      %v1654 = vunpack.c.l.b16 %v1555
      %v1655 = vunpack.c.h.b16 %v1555
      %v1656 = vunpack.c.l.b16 %v1556
      %v1657 = vunpack.c.h.b16 %v1556
      %v1658 = vunpack.c.l.b16 %v1557
      %v1659 = vunpack.c.h.b16 %v1557
      %v1660 = vunpack.c.l.b16 %v1558
      %v1661 = vunpack.c.h.b16 %v1558
      %v1662 = vunpack.c.l.b16 %v1559
      %v1663 = vunpack.c.h.b16 %v1559
      %v1664 = vunpack.c.l.b16 %v1560
      %v1665 = vunpack.c.h.b16 %v1560
      %v1666 = vunpack.c.l.b16 %v1561
      %v1667 = vunpack.c.h.b16 %v1561
      %v1668 = vunpack.c.l.b16 %v1562
      %v1669 = vunpack.c.h.b16 %v1562
      %v1670 = vunpack.c.l.b16 %v1563
      %v1671 = vunpack.c.h.b16 %v1563
      %v1672 = vpack.c.b16 %v1610, %v1608
      %v1673 = vpack.c.b16 %v1611, %v1609
      %v1674 = vpack.c.b16 %v1614, %v1612
      %v1675 = vpack.c.b16 %v1615, %v1613
      %v1676 = vpack.c.b16 %v1618, %v1616
      %v1677 = vpack.c.b16 %v1619, %v1617
      %v1678 = vpack.c.b16 %v1622, %v1620
      %v1679 = vpack.c.b16 %v1623, %v1621
      %v1680 = vpack.c.b16 %v1626, %v1624
      %v1681 = vpack.c.b16 %v1627, %v1625
      %v1682 = vpack.c.b16 %v1630, %v1628
      %v1683 = vpack.c.b16 %v1631, %v1629
      %v1684 = vpack.c.b16 %v1634, %v1632
      %v1685 = vpack.c.b16 %v1635, %v1633
      %v1686 = vpack.c.b16 %v1638, %v1636
      %v1687 = vpack.c.b16 %v1639, %v1637
      %v1688 = vpack.c.b16 %v1642, %v1640
      %v1689 = vpack.c.b16 %v1643, %v1641
      %v1690 = vpack.c.b16 %v1646, %v1644
      %v1691 = vpack.c.b16 %v1647, %v1645
      %v1692 = vpack.c.b16 %v1650, %v1648
      %v1693 = vpack.c.b16 %v1651, %v1649
      %v1694 = vpack.c.b16 %v1654, %v1652
      %v1695 = vpack.c.b16 %v1655, %v1653
      %v1696 = vpack.c.b16 %v1658, %v1656
      %v1697 = vpack.c.b16 %v1659, %v1657
      %v1698 = vpack.c.b16 %v1662, %v1660
      %v1699 = vpack.c.b16 %v1663, %v1661
      %v1700 = vpack.c.b16 %v1666, %v1664
      %v1701 = vpack.c.b16 %v1667, %v1665
      %v1702 = vpack.c.b16 %v1670, %v1668
      %v1703 = vpack.c.b16 %v1671, %v1669
      %1736 = vmatprep.subr.bf16.mxu0 %v1673
      %1737 = vmatpush1.bf16.msra.mxu0 %v1672
      %1738 = vmatprep.subr.bf16.mxu0 %v1675
      %1739 = vmatpush1.bf16.msra.mxu0 %v1674
      %1740 = vmatprep.subr.bf16.mxu0 %v1677
      %1741 = vmatpush1.bf16.msra.mxu0 %v1676
      %1742 = vmatprep.subr.bf16.mxu0 %v1679
      %1743 = vmatpush1.bf16.msra.mxu0 %v1678
      %1744 = vmatprep.subr.bf16.mxu0 %v1681
      %1745 = vmatpush1.bf16.msra.mxu0 %v1680
      %1746 = vmatprep.subr.bf16.mxu0 %v1683
      %1747 = vmatpush1.bf16.msra.mxu0 %v1682
      %1748 = vmatprep.subr.bf16.mxu0 %v1685
      %1749 = vmatpush1.bf16.msra.mxu0 %v1684
      %1750 = vmatprep.subr.bf16.mxu0 %v1687
      %1751 = vmatpush1.bf16.msra.mxu0 %v1686
      %1752 = vmatprep.subr.bf16.mxu0 %v1689
      %1753 = vmatpush1.bf16.msra.mxu0 %v1688
      %1754 = vmatprep.subr.bf16.mxu0 %v1691
      %1755 = vmatpush1.bf16.msra.mxu0 %v1690
      %1756 = vmatprep.subr.bf16.mxu0 %v1693
      %1757 = vmatpush1.bf16.msra.mxu0 %v1692
      %1758 = vmatprep.subr.bf16.mxu0 %v1695
      %1759 = vmatpush1.bf16.msra.mxu0 %v1694
      %1760 = vmatprep.subr.bf16.mxu0 %v1697
      %1761 = vmatpush1.bf16.msra.mxu0 %v1696
      %1762 = vmatprep.subr.bf16.mxu0 %v1699
      %1763 = vmatpush1.bf16.msra.mxu0 %v1698
      %1764 = vmatprep.subr.bf16.mxu0 %v1701
      %1765 = vmatpush1.bf16.msra.mxu0 %v1700
      %1766 = vmatprep.subr.bf16.mxu0 %v1703
      %1767 = vmatpush1.bf16.msra.mxu0 %v1702
      %1768 = vmatprep.mubr.bf16.mxu0 %v1019
      %1769 = vmatmul.mubr.bf16.gmra.mrb[0].mxu0 %v1018
      %v1770 = vpop.f32.mrb[0].mxu0
      %v1771 = vadd.f32 %v1569, %v1770
      %v1772 = vpop.f32.mrb[0].mxu0
      %v1773 = vadd.f32 %v1573, %v1772
      %v1774 = vpop.f32.mrb[0].mxu0
      %v1775 = vadd.f32 %v1569, %v1774
      %v1776 = vpop.f32.mrb[0].mxu0
      %v1777 = vadd.f32 %v1573, %v1776
      %1778 = vmatprep.mubr.bf16.mxu0 %v1021
      %1779 = vmatmul.mubr.bf16.gmra.mrb[0].mxu0 %v1020
      %v1780 = vpop.f32.mrb[0].mxu0
      %v1781 = vadd.f32 %v1569, %v1780
      %v1782 = vpop.f32.mrb[0].mxu0
      %v1783 = vadd.f32 %v1573, %v1782
      %v1784 = vpop.f32.mrb[0].mxu0
      %v1785 = vpop.f32.mrb[0].mxu0
      %1786 = vdwg.mxu0
      %v1787 = vld [vmem:[%s869] sm:$0xff]
      %v1788 = vld [vmem:[%s869 + $0x8] sm:$0xff]
      %v1789 = vld [vmem:[%s869 + $0x10] sm:$0xff]
      %v1790 = vld [vmem:[%s869 + $0x18] sm:$0xff]
      %v1791 = vld [vmem:[%s869 + $0x20] sm:$0xff]
      %v1792 = vld [vmem:[%s869 + $0x28] sm:$0xff]
      %v1793 = vld [vmem:[%s869 + $0x30] sm:$0xff]
      %v1794 = vld [vmem:[%s869 + $0x38] sm:$0xff]
      %v1795 = vld [vmem:[%s869 + $0x40] sm:$0xff]
      %v1796 = vld [vmem:[%s869 + $0x48] sm:$0xff]
      %v1797 = vld [vmem:[%s869 + $0x50] sm:$0xff]
      %v1798 = vld [vmem:[%s869 + $0x58] sm:$0xff]
      %v1799 = vld [vmem:[%s869 + $0x60] sm:$0xff]
      %v1800 = vld [vmem:[%s869 + $0x68] sm:$0xff]
      %v1801 = vld [vmem:[%s869 + $0x70] sm:$0xff]
      %v1802 = vld [vmem:[%s869 + $0x78] sm:$0xff]
      %v1803 = vld [vmem:[%s869 + $0x80] sm:$0xff]
      %v1804 = vld [vmem:[%s869 + $0x88] sm:$0xff]
      %v1805 = vld [vmem:[%s869 + $0x90] sm:$0xff]
      %v1806 = vld [vmem:[%s869 + $0x98] sm:$0xff]
      %v1807 = vld [vmem:[%s869 + $0xa0] sm:$0xff]
      %v1808 = vld [vmem:[%s869 + $0xa8] sm:$0xff]
      %v1809 = vld [vmem:[%s869 + $0xb0] sm:$0xff]
      %v1810 = vld [vmem:[%s869 + $0xb8] sm:$0xff]
      %v1811 = vld [vmem:[%s869 + $0xc0] sm:$0xff]
      %v1812 = vld [vmem:[%s869 + $0xc8] sm:$0xff]
      %v1813 = vld [vmem:[%s869 + $0xd0] sm:$0xff]
      %v1814 = vld [vmem:[%s869 + $0xd8] sm:$0xff]
      %v1815 = vld [vmem:[%s869 + $0xe0] sm:$0xff]
      %v1816 = vld [vmem:[%s869 + $0xe8] sm:$0xff]
      %v1817 = vld [vmem:[%s869 + $0xf0] sm:$0xff]
      %v1818 = vld [vmem:[%s869 + $0xf8] sm:$0xff]
      %v1819 = vmul.f32 %v1261, 0.088388346
      %v1820 = vmul.f32 %v1265, 0.088388346
      %v1821 = vmul.f32 %v1271, 0.088388346
      %v1822 = vpack.c.bf16 %v1820, %v1819
      %v1823 = vpack.c.bf16 %v1821, %v1821
      %v1824 = vpack.c.bf16 %v1520, %v1516
      %v1825 = vpack.c.bf16 %v1526, %v1526
      %v1826 = vpack.c.bf16 %v1775, %v1771
      %v1827 = vpack.c.bf16 %v1781, %v1781
      %1828 = vmatprep.subr.bf16.mxu0 0
      %1829 = vmatpush1.bf16.xpose.msra.mxu0 %v1824
      %1830 = vmatprep.subr.bf16.mxu0 0
      %1831 = vmatpush1.bf16.xpose.msra.mxu0 %v1825
      %1832 = vmatprep.subr.bf16.mxu0 0
      %1833 = vmatpush1.bf16.xpose.msra.mxu0 0
      %1834 = vmatprep.subr.bf16.mxu0 0
      %1835 = vmatpush1.bf16.xpose.msra.mxu0 0
      %1836 = vmatprep.subr.bf16.mxu0 0
      %1837 = vmatpush1.bf16.xpose.msra.mxu0 0
      %1838 = vmatprep.subr.bf16.mxu0 0
      %1839 = vmatpush1.bf16.xpose.msra.mxu0 0
      %1840 = vmatprep.subr.bf16.mxu0 0
      %1841 = vmatpush1.bf16.xpose.msra.mxu0 0
      %1842 = vmatprep.subr.bf16.mxu0 0
      %1843 = vmatpush1.bf16.xpose.msra.mxu0 0
      %1844 = vmatprep.subr.bf16.mxu0 0
      %1845 = vmatpush1.bf16.xpose.msra.mxu0 0
      %1846 = vmatprep.subr.bf16.mxu0 0
      %1847 = vmatpush1.bf16.xpose.msra.mxu0 0
      %1848 = vmatprep.subr.bf16.mxu0 0
      %1849 = vmatpush1.bf16.xpose.msra.mxu0 0
      %1850 = vmatprep.subr.bf16.mxu0 0
      %1851 = vmatpush1.bf16.xpose.msra.mxu0 0
      %1852 = vmatprep.subr.bf16.mxu0 0
      %1853 = vmatpush1.bf16.xpose.msra.mxu0 0
      %1854 = vmatprep.subr.bf16.mxu0 0
      %1855 = vmatpush1.bf16.xpose.msra.mxu0 0
      %1856 = vmatprep.subr.bf16.mxu0 0
      %1857 = vmatpush1.bf16.xpose.msra.mxu0 0
      %1858 = vmatprep.subr.bf16.mxu0 0
      %1859 = vmatpush1.bf16.xpose.msra.mxu0 0
      %1860 = vmatprep.mubr.bf16.mxu0 0
      %1861 = vmatmul.mubr.bf16.gmra.mrb[0].mxu0 %v1822
      %v1862 = vpop.f32.mrb[0].mxu0
      %v1863 = vadd.f32 0.0, %v1862
      %v1864 = vpop.f32.mrb[0].mxu0
      %v1865 = vpop.f32.mrb[0].mxu0
      %v1866 = vadd.f32 0.0, %v1865
      %v1867 = vpop.f32.mrb[0].mxu0
      %1868 = vmatprep.mubr.bf16.mxu0 0
      %1869 = vmatmul.mubr.bf16.gmra.mrb[0].mxu0 %v1823
      %v1870 = vpop.f32.mrb[0].mxu0
      %v1871 = vadd.f32 0.0, %v1870
      %v1872 = vpop.f32.mrb[0].mxu0
      %v1873 = vpop.f32.mrb[0].mxu0
      %v1874 = vpop.f32.mrb[0].mxu0
      %1875 = vdwg.mxu0
      %vm1876 = vcmask 154624
      %v1877 = vsel %vm1876, %v1863, -inf
      %1878 = vmax.xlane.f32.xlu0 %v1877
      %v1879 = vpop.xlane.xlu0 %1878
      %v1880 = vsel %vm1876, %v1866, -inf
      %1881 = vmax.xlane.f32.xlu0 %v1880
      %v1882 = vpop.xlane.xlu0 %1881
      %vm1883 = vcmask 149504
      %v1884 = vsel %vm1883, %v1871, -inf
      %1885 = vmax.xlane.f32.xlu0 %v1884
      %v1886 = vpop.xlane.xlu0 %1885
      %v1887 = vsub.f32 %v1863, %v1879
      %v1888 = vsub.f32 %v1866, %v1882
      %v1889 = vsub.f32 %v1871, %v1886
      %v1890 = vmul.f32 %v1887, 1.442695
      %v1891 = vpow.pop %v1890
      %v1892 = vmul.f32 %v1888, 1.442695
      %v1893 = vpow.pop %v1892
      %v1894 = vmul.f32 %v1889, 1.442695
      %v1895 = vpow.pop %v1894
      %v1896 = vsel %vm1876, %v1891, 0.0
      %1897 = vadd.xlane.f32.xlu0 %v1896
      %v1898 = vpop.xlane.xlu0 %1897
      %v1899 = vsel %vm1876, %v1893, 0.0
      %1900 = vadd.xlane.f32.xlu0 %v1899
      %v1901 = vpop.xlane.xlu0 %1900
      %v1902 = vsel %vm1883, %v1895, 0.0
      %1903 = vadd.xlane.f32.xlu0 %v1902
      %v1904 = vpop.xlane.xlu0 %1903
      %v1905 = vrcp.pop %v1898
      %v1906 = vrcp.pop %v1901
      %v1907 = vrcp.pop %v1904
      %v1908 = vmul.f32 %v1891, %v1905
      %v1909 = vmul.f32 %v1893, %v1906
      %v1910 = vmul.f32 %v1895, %v1907
      %v1911 = vpack.c.bf16 %v1909, %v1908
      %v1912 = vpack.c.bf16 %v1910, %v1910
      %v1914 = vsel %vm1876, %v1911, 0
      %v1917 = vsel %vm1876, %v1912, 0
      %vm1919 = vcmask 1040384
      %vm1920 = vcmask 1041408
      %v1921 = vsel %vm1919, 4294967295, 65535
      %v1922 = vsel %vm1920, %v1921, 0
      %v1924 = vand.u32 %v1827, %v1922
      %1926 = vmatprep.subr.bf16.mxu0 0
      %1927 = vmatpush1.bf16.msra.mxu0 %v1826
      %1928 = vmatprep.subr.bf16.mxu0 0
      %1929 = vmatpush1.bf16.msra.mxu0 %v1924
      %1930 = vmatprep.subr.bf16.mxu0 0
      %1931 = vmatpush1.bf16.msra.mxu0 0
      %1932 = vmatprep.subr.bf16.mxu0 0
      %1933 = vmatpush1.bf16.msra.mxu0 0
      %1934 = vmatprep.subr.bf16.mxu0 0
      %1935 = vmatpush1.bf16.msra.mxu0 0
      %1936 = vmatprep.subr.bf16.mxu0 0
      %1937 = vmatpush1.bf16.msra.mxu0 0
      %1938 = vmatprep.subr.bf16.mxu0 0
      %1939 = vmatpush1.bf16.msra.mxu0 0
      %1940 = vmatprep.subr.bf16.mxu0 0
      %1941 = vmatpush1.bf16.msra.mxu0 0
      %1942 = vmatprep.subr.bf16.mxu0 0
      %1943 = vmatpush1.bf16.msra.mxu0 0
      %1944 = vmatprep.subr.bf16.mxu0 0
      %1945 = vmatpush1.bf16.msra.mxu0 0
      %1946 = vmatprep.subr.bf16.mxu0 0
      %1947 = vmatpush1.bf16.msra.mxu0 0
      %1948 = vmatprep.subr.bf16.mxu0 0
      %1949 = vmatpush1.bf16.msra.mxu0 0
      %1950 = vmatprep.subr.bf16.mxu0 0
      %1951 = vmatpush1.bf16.msra.mxu0 0
      %1952 = vmatprep.subr.bf16.mxu0 0
      %1953 = vmatpush1.bf16.msra.mxu0 0
      %1954 = vmatprep.subr.bf16.mxu0 0
      %1955 = vmatpush1.bf16.msra.mxu0 0
      %1956 = vmatprep.subr.bf16.mxu0 0
      %1957 = vmatpush1.bf16.msra.mxu0 0
      %1958 = vmatprep.mubr.bf16.mxu0 0
      %1959 = vmatmul.mubr.bf16.gmra.mrb[0].mxu0 %v1914
      %v1960 = vpop.f32.mrb[0].mxu0
      %v1961 = vadd.f32 0.0, %v1960
      %v1962 = vpop.f32.mrb[0].mxu0
      %v1963 = vpop.f32.mrb[0].mxu0
      %v1964 = vadd.f32 0.0, %v1963
      %v1965 = vpop.f32.mrb[0].mxu0
      %1966 = vmatprep.mubr.bf16.mxu0 0
      %1967 = vmatmul.mubr.bf16.gmra.mrb[0].mxu0 %v1917
      %v1968 = vpop.f32.mrb[0].mxu0
      %v1969 = vadd.f32 0.0, %v1968
      %v1970 = vpop.f32.mrb[0].mxu0
      %v1971 = vpop.f32.mrb[0].mxu0
      %v1972 = vpop.f32.mrb[0].mxu0
      %1973 = vdwg.mxu0
      %v1974 = vpack.c.bf16 %v1964, %v1961
      %v1975 = vpack.c.bf16 %v1969, %v1969
      %v1976 = vmul.f32 %v1263, 0.088388346
      %v1977 = vmul.f32 %v1267, 0.088388346
      %v1978 = vmul.f32 %v1273, 0.088388346
      %v1979 = vpack.c.bf16 %v1977, %v1976
      %v1980 = vpack.c.bf16 %v1978, %v1978
      %v1981 = vpack.c.bf16 %v1522, %v1518
      %v1982 = vpack.c.bf16 %v1528, %v1528
      %v1983 = vpack.c.bf16 %v1777, %v1773
      %v1984 = vpack.c.bf16 %v1783, %v1783
      %1985 = vmatprep.subr.bf16.mxu0 0
      %1986 = vmatpush1.bf16.xpose.msra.mxu0 %v1981
      %1987 = vmatprep.subr.bf16.mxu0 0
      %1988 = vmatpush1.bf16.xpose.msra.mxu0 %v1982
      %1989 = vmatprep.subr.bf16.mxu0 0
      %1990 = vmatpush1.bf16.xpose.msra.mxu0 0
      %1991 = vmatprep.subr.bf16.mxu0 0
      %1992 = vmatpush1.bf16.xpose.msra.mxu0 0
      %1993 = vmatprep.subr.bf16.mxu0 0
      %1994 = vmatpush1.bf16.xpose.msra.mxu0 0
      %1995 = vmatprep.subr.bf16.mxu0 0
      %1996 = vmatpush1.bf16.xpose.msra.mxu0 0
      %1997 = vmatprep.subr.bf16.mxu0 0
      %1998 = vmatpush1.bf16.xpose.msra.mxu0 0
      %1999 = vmatprep.subr.bf16.mxu0 0
      %2000 = vmatpush1.bf16.xpose.msra.mxu0 0
      %2001 = vmatprep.subr.bf16.mxu0 0
      %2002 = vmatpush1.bf16.xpose.msra.mxu0 0
      %2003 = vmatprep.subr.bf16.mxu0 0
      %2004 = vmatpush1.bf16.xpose.msra.mxu0 0
      %2005 = vmatprep.subr.bf16.mxu0 0
      %2006 = vmatpush1.bf16.xpose.msra.mxu0 0
      %2007 = vmatprep.subr.bf16.mxu0 0
      %2008 = vmatpush1.bf16.xpose.msra.mxu0 0
      %2009 = vmatprep.subr.bf16.mxu0 0
      %2010 = vmatpush1.bf16.xpose.msra.mxu0 0
      %2011 = vmatprep.subr.bf16.mxu0 0
      %2012 = vmatpush1.bf16.xpose.msra.mxu0 0
      %2013 = vmatprep.subr.bf16.mxu0 0
      %2014 = vmatpush1.bf16.xpose.msra.mxu0 0
      %2015 = vmatprep.subr.bf16.mxu0 0
      %2016 = vmatpush1.bf16.xpose.msra.mxu0 0
      %2017 = vmatprep.mubr.bf16.mxu0 0
      %2018 = vmatmul.mubr.bf16.gmra.mrb[0].mxu0 %v1979
      %v2019 = vpop.f32.mrb[0].mxu0
      %v2020 = vadd.f32 0.0, %v2019
      %v2021 = vpop.f32.mrb[0].mxu0
      %v2022 = vpop.f32.mrb[0].mxu0
      %v2023 = vadd.f32 0.0, %v2022
      %v2024 = vpop.f32.mrb[0].mxu0
      %2025 = vmatprep.mubr.bf16.mxu0 0
      %2026 = vmatmul.mubr.bf16.gmra.mrb[0].mxu0 %v1980
      %v2027 = vpop.f32.mrb[0].mxu0
      %v2028 = vadd.f32 0.0, %v2027
      %v2029 = vpop.f32.mrb[0].mxu0
      %v2030 = vpop.f32.mrb[0].mxu0
      %v2031 = vpop.f32.mrb[0].mxu0
      %2032 = vdwg.mxu0
      %v2033 = vsel %vm1876, %v2020, -inf
      %2034 = vmax.xlane.f32.xlu0 %v2033
      %v2035 = vpop.xlane.xlu0 %2034
      %v2036 = vsel %vm1876, %v2023, -inf
      %2037 = vmax.xlane.f32.xlu0 %v2036
      %v2038 = vpop.xlane.xlu0 %2037
      %v2039 = vsel %vm1883, %v2028, -inf
      %2040 = vmax.xlane.f32.xlu0 %v2039
      %v2041 = vpop.xlane.xlu0 %2040
      %v2042 = vsub.f32 %v2020, %v2035
      %v2043 = vsub.f32 %v2023, %v2038
      %v2044 = vsub.f32 %v2028, %v2041
      %v2045 = vmul.f32 %v2042, 1.442695
      %v2046 = vpow.pop %v2045
      %v2047 = vmul.f32 %v2043, 1.442695
      %v2048 = vpow.pop %v2047
      %v2049 = vmul.f32 %v2044, 1.442695
      %v2050 = vpow.pop %v2049
      %v2051 = vsel %vm1876, %v2046, 0.0
      %2052 = vadd.xlane.f32.xlu0 %v2051
      %v2053 = vpop.xlane.xlu0 %2052
      %v2054 = vsel %vm1876, %v2048, 0.0
      %2055 = vadd.xlane.f32.xlu0 %v2054
      %v2056 = vpop.xlane.xlu0 %2055
      %v2057 = vsel %vm1883, %v2050, 0.0
      %2058 = vadd.xlane.f32.xlu0 %v2057
      %v2059 = vpop.xlane.xlu0 %2058
      %v2060 = vrcp.pop %v2053
      %v2061 = vrcp.pop %v2056
      %v2062 = vrcp.pop %v2059
      %v2063 = vmul.f32 %v2046, %v2060
      %v2064 = vmul.f32 %v2048, %v2061
      %v2065 = vmul.f32 %v2050, %v2062
      %v2066 = vpack.c.bf16 %v2064, %v2063
      %v2067 = vpack.c.bf16 %v2065, %v2065
      %v2069 = vsel %vm1876, %v2066, 0
      %v2072 = vsel %vm1876, %v2067, 0
      %v2075 = vand.u32 %v1984, %v1922
      %2077 = vmatprep.subr.bf16.mxu0 0
      %2078 = vmatpush1.bf16.msra.mxu0 %v1983
      %2079 = vmatprep.subr.bf16.mxu0 0
      %2080 = vmatpush1.bf16.msra.mxu0 %v2075
      %2081 = vmatprep.subr.bf16.mxu0 0
      %2082 = vmatpush1.bf16.msra.mxu0 0
      %2083 = vmatprep.subr.bf16.mxu0 0
      %2084 = vmatpush1.bf16.msra.mxu0 0
      %2085 = vmatprep.subr.bf16.mxu0 0
      %2086 = vmatpush1.bf16.msra.mxu0 0
      %2087 = vmatprep.subr.bf16.mxu0 0
      %2088 = vmatpush1.bf16.msra.mxu0 0
      %2089 = vmatprep.subr.bf16.mxu0 0
      %2090 = vmatpush1.bf16.msra.mxu0 0
      %2091 = vmatprep.subr.bf16.mxu0 0
      %2092 = vmatpush1.bf16.msra.mxu0 0
      %2093 = vmatprep.subr.bf16.mxu0 0
      %2094 = vmatpush1.bf16.msra.mxu0 0
      %2095 = vmatprep.subr.bf16.mxu0 0
      %2096 = vmatpush1.bf16.msra.mxu0 0
      %2097 = vmatprep.subr.bf16.mxu0 0
      %2098 = vmatpush1.bf16.msra.mxu0 0
      %2099 = vmatprep.subr.bf16.mxu0 0
      %2100 = vmatpush1.bf16.msra.mxu0 0
      %2101 = vmatprep.subr.bf16.mxu0 0
      %2102 = vmatpush1.bf16.msra.mxu0 0
      %2103 = vmatprep.subr.bf16.mxu0 0
      %2104 = vmatpush1.bf16.msra.mxu0 0
      %2105 = vmatprep.subr.bf16.mxu0 0
      %2106 = vmatpush1.bf16.msra.mxu0 0
      %2107 = vmatprep.subr.bf16.mxu0 0
      %2108 = vmatpush1.bf16.msra.mxu0 0
      %2109 = vmatprep.mubr.bf16.mxu0 0
      %2110 = vmatmul.mubr.bf16.gmra.mrb[0].mxu0 %v2069
      %v2111 = vpop.f32.mrb[0].mxu0
      %v2112 = vadd.f32 0.0, %v2111
      %v2113 = vpop.f32.mrb[0].mxu0
      %v2114 = vpop.f32.mrb[0].mxu0
      %v2115 = vadd.f32 0.0, %v2114
      %v2116 = vpop.f32.mrb[0].mxu0
      %2117 = vmatprep.mubr.bf16.mxu0 0
      %2118 = vmatmul.mubr.bf16.gmra.mrb[0].mxu0 %v2072
      %v2119 = vpop.f32.mrb[0].mxu0
      %v2120 = vadd.f32 0.0, %v2119
      %v2121 = vpop.f32.mrb[0].mxu0
      %v2122 = vpop.f32.mrb[0].mxu0
      %v2123 = vpop.f32.mrb[0].mxu0
      %2124 = vdwg.mxu0
      %v2125 = vpack.c.bf16 %v2115, %v2112
      %v2126 = vpack.c.bf16 %v2120, %v2120
      %v2143 = vunpack.c.l.b16 %v1803
      %v2144 = vunpack.c.h.b16 %v1803
      %v2145 = vunpack.c.l.b16 %v1804
      %v2146 = vunpack.c.h.b16 %v1804
      %v2147 = vunpack.c.l.b16 %v1805
      %v2148 = vunpack.c.h.b16 %v1805
      %v2149 = vunpack.c.l.b16 %v1806
      %v2150 = vunpack.c.h.b16 %v1806
      %v2151 = vunpack.c.l.b16 %v1807
      %v2152 = vunpack.c.h.b16 %v1807
      %v2153 = vunpack.c.l.b16 %v1808
      %v2154 = vunpack.c.h.b16 %v1808
      %v2155 = vunpack.c.l.b16 %v1809
      %v2156 = vunpack.c.h.b16 %v1809
      %v2157 = vunpack.c.l.b16 %v1810
      %v2158 = vunpack.c.h.b16 %v1810
      %v2159 = vunpack.c.l.b16 %v1811
      %v2160 = vunpack.c.h.b16 %v1811
      %v2161 = vunpack.c.l.b16 %v1812
      %v2162 = vunpack.c.h.b16 %v1812
      %v2163 = vunpack.c.l.b16 %v1813
      %v2164 = vunpack.c.h.b16 %v1813
      %v2165 = vunpack.c.l.b16 %v1814
      %v2166 = vunpack.c.h.b16 %v1814
      %v2167 = vunpack.c.l.b16 %v1815
      %v2168 = vunpack.c.h.b16 %v1815
      %v2169 = vunpack.c.l.b16 %v1816
      %v2170 = vunpack.c.h.b16 %v1816
      %v2171 = vunpack.c.l.b16 %v1817
      %v2172 = vunpack.c.h.b16 %v1817
      %v2173 = vunpack.c.l.b16 %v1818
      %v2174 = vunpack.c.h.b16 %v1818
      %v2175 = vpack.c.b16 %v2145, %v2143
      %v2176 = vpack.c.b16 %v2146, %v2144
      %v2177 = vpack.c.b16 %v2149, %v2147
      %v2178 = vpack.c.b16 %v2150, %v2148
      %v2179 = vpack.c.b16 %v2153, %v2151
      %v2180 = vpack.c.b16 %v2154, %v2152
      %v2181 = vpack.c.b16 %v2157, %v2155
      %v2182 = vpack.c.b16 %v2158, %v2156
      %v2183 = vpack.c.b16 %v2161, %v2159
      %v2184 = vpack.c.b16 %v2162, %v2160
      %v2185 = vpack.c.b16 %v2165, %v2163
      %v2186 = vpack.c.b16 %v2166, %v2164
      %v2187 = vpack.c.b16 %v2169, %v2167
      %v2188 = vpack.c.b16 %v2170, %v2168
      %v2189 = vpack.c.b16 %v2173, %v2171
      %v2190 = vpack.c.b16 %v2174, %v2172
      %2207 = vmatprep.subr.bf16.mxu0 %v2176
      %2208 = vmatpush1.bf16.msra.mxu0 %v2175
      %2209 = vmatprep.subr.bf16.mxu0 %v2178
      %2210 = vmatpush1.bf16.msra.mxu0 %v2177
      %2211 = vmatprep.subr.bf16.mxu0 %v2180
      %2212 = vmatpush1.bf16.msra.mxu0 %v2179
      %2213 = vmatprep.subr.bf16.mxu0 %v2182
      %2214 = vmatpush1.bf16.msra.mxu0 %v2181
      %2215 = vmatprep.subr.bf16.mxu0 %v2184
      %2216 = vmatpush1.bf16.msra.mxu0 %v2183
      %2217 = vmatprep.subr.bf16.mxu0 %v2186
      %2218 = vmatpush1.bf16.msra.mxu0 %v2185
      %2219 = vmatprep.subr.bf16.mxu0 %v2188
      %2220 = vmatpush1.bf16.msra.mxu0 %v2187
      %2221 = vmatprep.subr.bf16.mxu0 %v2190
      %2222 = vmatpush1.bf16.msra.mxu0 %v2189
      %2223 = vmatprep.subr.bf16.mxu0 0
      %2224 = vmatpush1.bf16.msra.mxu0 0
      %2225 = vmatprep.subr.bf16.mxu0 0
      %2226 = vmatpush1.bf16.msra.mxu0 0
      %2227 = vmatprep.subr.bf16.mxu0 0
      %2228 = vmatpush1.bf16.msra.mxu0 0
      %2229 = vmatprep.subr.bf16.mxu0 0
      %2230 = vmatpush1.bf16.msra.mxu0 0
      %2231 = vmatprep.subr.bf16.mxu0 0
      %2232 = vmatpush1.bf16.msra.mxu0 0
      %2233 = vmatprep.subr.bf16.mxu0 0
      %2234 = vmatpush1.bf16.msra.mxu0 0
      %2235 = vmatprep.subr.bf16.mxu0 0
      %2236 = vmatpush1.bf16.msra.mxu0 0
      %2237 = vmatprep.subr.bf16.mxu0 0
      %2238 = vmatpush1.bf16.msra.mxu0 0
      %2239 = vmatprep.mubr.bf16.mxu0 0
      %2240 = vmatmul.mubr.bf16.gmra.mrb[0].mxu0 %v2125
      %v2241 = vpop.f32.mrb[0].mxu0
      %v2242 = vadd.f32 0.0, %v2241
      %v2243 = vpop.f32.mrb[0].mxu0
      %v2244 = vadd.f32 0.0, %v2243
      %v2245 = vpop.f32.mrb[0].mxu0
      %v2246 = vadd.f32 0.0, %v2245
      %v2247 = vpop.f32.mrb[0].mxu0
      %v2248 = vadd.f32 0.0, %v2247
      %2249 = vmatprep.mubr.bf16.mxu0 0
      %2250 = vmatmul.mubr.bf16.gmra.mrb[0].mxu0 %v2126
      %v2251 = vpop.f32.mrb[0].mxu0
      %v2252 = vadd.f32 0.0, %v2251
      %v2253 = vpop.f32.mrb[0].mxu0
      %v2254 = vadd.f32 0.0, %v2253
      %v2255 = vpop.f32.mrb[0].mxu0
      %v2256 = vpop.f32.mrb[0].mxu0
      %2257 = vdwg.mxu0
      %v2274 = vunpack.c.l.b16 %v1787
      %v2275 = vunpack.c.h.b16 %v1787
      %v2276 = vunpack.c.l.b16 %v1788
      %v2277 = vunpack.c.h.b16 %v1788
      %v2278 = vunpack.c.l.b16 %v1789
      %v2279 = vunpack.c.h.b16 %v1789
      %v2280 = vunpack.c.l.b16 %v1790
      %v2281 = vunpack.c.h.b16 %v1790
      %v2282 = vunpack.c.l.b16 %v1791
      %v2283 = vunpack.c.h.b16 %v1791
      %v2284 = vunpack.c.l.b16 %v1792
      %v2285 = vunpack.c.h.b16 %v1792
      %v2286 = vunpack.c.l.b16 %v1793
      %v2287 = vunpack.c.h.b16 %v1793
      %v2288 = vunpack.c.l.b16 %v1794
      %v2289 = vunpack.c.h.b16 %v1794
      %v2290 = vunpack.c.l.b16 %v1795
      %v2291 = vunpack.c.h.b16 %v1795
      %v2292 = vunpack.c.l.b16 %v1796
      %v2293 = vunpack.c.h.b16 %v1796
      %v2294 = vunpack.c.l.b16 %v1797
      %v2295 = vunpack.c.h.b16 %v1797
      %v2296 = vunpack.c.l.b16 %v1798
      %v2297 = vunpack.c.h.b16 %v1798
      %v2298 = vunpack.c.l.b16 %v1799
      %v2299 = vunpack.c.h.b16 %v1799
      %v2300 = vunpack.c.l.b16 %v1800
      %v2301 = vunpack.c.h.b16 %v1800
      %v2302 = vunpack.c.l.b16 %v1801
      %v2303 = vunpack.c.h.b16 %v1801
      %v2304 = vunpack.c.l.b16 %v1802
      %v2305 = vunpack.c.h.b16 %v1802
      %v2306 = vpack.c.b16 %v2276, %v2274
      %v2307 = vpack.c.b16 %v2277, %v2275
      %v2308 = vpack.c.b16 %v2280, %v2278
      %v2309 = vpack.c.b16 %v2281, %v2279
      %v2310 = vpack.c.b16 %v2284, %v2282
      %v2311 = vpack.c.b16 %v2285, %v2283
      %v2312 = vpack.c.b16 %v2288, %v2286
      %v2313 = vpack.c.b16 %v2289, %v2287
      %v2314 = vpack.c.b16 %v2292, %v2290
      %v2315 = vpack.c.b16 %v2293, %v2291
      %v2316 = vpack.c.b16 %v2296, %v2294
      %v2317 = vpack.c.b16 %v2297, %v2295
      %v2318 = vpack.c.b16 %v2300, %v2298
      %v2319 = vpack.c.b16 %v2301, %v2299
      %v2320 = vpack.c.b16 %v2304, %v2302
      %v2321 = vpack.c.b16 %v2305, %v2303
      %2338 = vmatprep.subr.bf16.mxu0 %v2307
      %2339 = vmatpush1.bf16.msra.mxu0 %v2306
      %2340 = vmatprep.subr.bf16.mxu0 %v2309
      %2341 = vmatpush1.bf16.msra.mxu0 %v2308
      %2342 = vmatprep.subr.bf16.mxu0 %v2311
      %2343 = vmatpush1.bf16.msra.mxu0 %v2310
      %2344 = vmatprep.subr.bf16.mxu0 %v2313
      %2345 = vmatpush1.bf16.msra.mxu0 %v2312
      %2346 = vmatprep.subr.bf16.mxu0 %v2315
      %2347 = vmatpush1.bf16.msra.mxu0 %v2314
      %2348 = vmatprep.subr.bf16.mxu0 %v2317
      %2349 = vmatpush1.bf16.msra.mxu0 %v2316
      %2350 = vmatprep.subr.bf16.mxu0 %v2319
      %2351 = vmatpush1.bf16.msra.mxu0 %v2318
      %2352 = vmatprep.subr.bf16.mxu0 %v2321
      %2353 = vmatpush1.bf16.msra.mxu0 %v2320
      %2354 = vmatprep.subr.bf16.mxu0 0
      %2355 = vmatpush1.bf16.msra.mxu0 0
      %2356 = vmatprep.subr.bf16.mxu0 0
      %2357 = vmatpush1.bf16.msra.mxu0 0
      %2358 = vmatprep.subr.bf16.mxu0 0
      %2359 = vmatpush1.bf16.msra.mxu0 0
      %2360 = vmatprep.subr.bf16.mxu0 0
      %2361 = vmatpush1.bf16.msra.mxu0 0
      %2362 = vmatprep.subr.bf16.mxu0 0
      %2363 = vmatpush1.bf16.msra.mxu0 0
      %2364 = vmatprep.subr.bf16.mxu0 0
      %2365 = vmatpush1.bf16.msra.mxu0 0
      %2366 = vmatprep.subr.bf16.mxu0 0
      %2367 = vmatpush1.bf16.msra.mxu0 0
      %2368 = vmatprep.subr.bf16.mxu0 0
      %2369 = vmatpush1.bf16.msra.mxu0 0
      %2370 = vmatprep.mubr.bf16.mxu0 0
      %2371 = vmatmul.mubr.bf16.gmra.mrb[0].mxu0 %v1974
      %v2372 = vpop.f32.mrb[0].mxu0
      %v2373 = vadd.f32 %v2242, %v2372
      %v2374 = vpop.f32.mrb[0].mxu0
      %v2375 = vadd.f32 %v2244, %v2374
      %v2376 = vpop.f32.mrb[0].mxu0
      %v2377 = vadd.f32 %v2246, %v2376
      %v2378 = vpop.f32.mrb[0].mxu0
      %v2379 = vadd.f32 %v2248, %v2378
      %2380 = vmatprep.mubr.bf16.mxu0 0
      %2381 = vmatmul.mubr.bf16.gmra.mrb[0].mxu0 %v1975
      %v2382 = vpop.f32.mrb[0].mxu0
      %v2383 = vadd.f32 %v2252, %v2382
      %v2384 = vpop.f32.mrb[0].mxu0
      %v2385 = vadd.f32 %v2254, %v2384
      %v2386 = vpop.f32.mrb[0].mxu0
      %v2387 = vpop.f32.mrb[0].mxu0
      %2388 = vdwg.mxu0
      %v2389 = vadd.f32 %v922, %v2373
      %v2390 = vadd.f32 %v923, %v2375
      %v2391 = vadd.f32 %v924, %v2377
      %v2392 = vadd.f32 %v925, %v2379
      %v2393 = vadd.f32 %v926, %v2383
      %v2394 = vadd.f32 %v927, %v2385
      %v2395 = vld [vmem:[%s873] sm:$0x3]
      %v2397 = vlaneseq
      %v2398 = vshrl.u32 %v2397, 7
      %v2399 = vsub.s32 0, %v2398
      %v2400 = vrot.slane %v2395, %v2399
      %v2401 = vlaneseq
      %v2402 = vshrl.u32 %v2401, 7
      %v2403 = vsub.s32 1, %v2402
      %v2404 = vrot.slane %v2395, %v2403
      %v2407 = vadd.f32 %v2389, %v2400
      %v2408 = vadd.f32 %v2390, %v2404
      %v2409 = vadd.f32 %v2391, %v2400
      %v2410 = vadd.f32 %v2392, %v2404
      %v2411 = vadd.f32 %v2393, %v2400
      %v2412 = vadd.f32 %v2394, %v2404
      %v2413 = vld [vmem:[%s877] sm:$0x3]
      %v2414 = vld [vmem:[%s881] sm:$0x3]
      %v2415 = vadd.f32 %v2407, %v2408
      %2416 = vadd.xlane.f32.xlu0 %v2415
      %v2417 = vpop.xlane.xlu0 %2416
      %v2418 = vadd.f32 %v2409, %v2410
      %2419 = vadd.xlane.f32.xlu0 %v2418
      %v2420 = vpop.xlane.xlu0 %2419
      %v2421 = vsel %vm936, %v2411, 0.0
      %v2422 = vsel %vm936, %v2412, 0.0
      %v2423 = vadd.f32 %v2421, %v2422
      %2424 = vadd.xlane.f32.xlu0 %v2423
      %v2425 = vpop.xlane.xlu0 %2424
      %v2426 = vmul.f32 %v2417, %v942
      %v2427 = vmul.f32 %v2420, %v942
      %v2428 = vmul.f32 %v2425, %v942
      %v2429 = vsub.f32 %v2407, %v2426
      %v2430 = vsub.f32 %v2408, %v2426
      %v2431 = vsub.f32 %v2409, %v2427
      %v2432 = vsub.f32 %v2410, %v2427
      %v2433 = vsub.f32 %v2411, %v2428
      %v2434 = vsub.f32 %v2412, %v2428
      %v2435 = vmul.f32 %v2429, %v2429
      %v2436 = vmul.f32 %v2430, %v2430
      %v2437 = vmul.f32 %v2431, %v2431
      %v2438 = vmul.f32 %v2432, %v2432
      %v2439 = vmul.f32 %v2433, %v2433
      %v2440 = vmul.f32 %v2434, %v2434
      %v2441 = vadd.f32 %v2435, %v2436
      %2442 = vadd.xlane.f32.xlu0 %v2441
      %v2443 = vpop.xlane.xlu0 %2442
      %v2444 = vadd.f32 %v2437, %v2438
      %2445 = vadd.xlane.f32.xlu0 %v2444
      %v2446 = vpop.xlane.xlu0 %2445
      %v2447 = vsel %vm936, %v2439, 0.0
      %v2448 = vsel %vm936, %v2440, 0.0
      %v2449 = vadd.f32 %v2447, %v2448
      %2450 = vadd.xlane.f32.xlu0 %v2449
      %v2451 = vpop.xlane.xlu0 %2450
      %v2452 = vmul.f32 %v2443, %v942
      %v2453 = vmul.f32 %v2446, %v942
      %v2454 = vmul.f32 %v2451, %v942
      %v2455 = vadd.f32 %v2452, 1e-05
      %v2456 = vadd.f32 %v2453, 1e-05
      %v2457 = vadd.f32 %v2454, 1e-05
      %v2458 = vrsqrt.pop %v2455
      %v2459 = vrsqrt.pop %v2456
      %v2460 = vrsqrt.pop %v2457
      %v2461 = vmul.f32 %v2429, %v2458
      %v2462 = vmul.f32 %v2430, %v2458
      %v2463 = vmul.f32 %v2431, %v2459
      %v2464 = vmul.f32 %v2432, %v2459
      %v2465 = vmul.f32 %v2433, %v2460
      %v2466 = vmul.f32 %v2434, %v2460
      %v2468 = vlaneseq
      %v2469 = vshrl.u32 %v2468, 7
      %v2470 = vsub.s32 0, %v2469
      %v2471 = vrot.slane %v2413, %v2470
      %v2472 = vlaneseq
      %v2473 = vshrl.u32 %v2472, 7
      %v2474 = vsub.s32 1, %v2473
      %v2475 = vrot.slane %v2413, %v2474
      %v2478 = vmul.f32 %v2461, %v2471
      %v2479 = vmul.f32 %v2462, %v2475
      %v2480 = vmul.f32 %v2463, %v2471
      %v2481 = vmul.f32 %v2464, %v2475
      %v2482 = vmul.f32 %v2465, %v2471
      %v2483 = vmul.f32 %v2466, %v2475
      %v2485 = vlaneseq
      %v2486 = vshrl.u32 %v2485, 7
      %v2487 = vsub.s32 0, %v2486
      %v2488 = vrot.slane %v2414, %v2487
      %v2489 = vlaneseq
      %v2490 = vshrl.u32 %v2489, 7
      %v2491 = vsub.s32 1, %v2490
      %v2492 = vrot.slane %v2414, %v2491
      %v2495 = vadd.f32 %v2478, %v2488
      %v2496 = vadd.f32 %v2479, %v2492
      %v2497 = vadd.f32 %v2480, %v2488
      %v2498 = vadd.f32 %v2481, %v2492
      %v2499 = vadd.f32 %v2482, %v2488
      %v2500 = vadd.f32 %v2483, %v2492
      %v2501 = vpack.c.bf16 %v2497, %v2495
      %v2502 = vpack.c.bf16 %v2498, %v2496
      %v2503 = vpack.c.bf16 %v2499, %v2499
      %v2504 = vpack.c.bf16 %v2500, %v2500
      %v2505 = vld [vmem:[%s886] sm:$0xff]
      %v2506 = vld [vmem:[%s886 + $0x8] sm:$0xff]
      %v2507 = vld [vmem:[%s886 + $0x10] sm:$0xff]
      %v2508 = vld [vmem:[%s886 + $0x18] sm:$0xff]
      %v2509 = vld [vmem:[%s886 + $0x20] sm:$0xff]
      %v2510 = vld [vmem:[%s886 + $0x28] sm:$0xff]
      %v2511 = vld [vmem:[%s886 + $0x30] sm:$0xff]
      %v2512 = vld [vmem:[%s886 + $0x38] sm:$0xff]
      %v2513 = vld [vmem:[%s886 + $0x40] sm:$0xff]
      %v2514 = vld [vmem:[%s886 + $0x48] sm:$0xff]
      %v2515 = vld [vmem:[%s886 + $0x50] sm:$0xff]
      %v2516 = vld [vmem:[%s886 + $0x58] sm:$0xff]
      %v2517 = vld [vmem:[%s886 + $0x60] sm:$0xff]
      %v2518 = vld [vmem:[%s886 + $0x68] sm:$0xff]
      %v2519 = vld [vmem:[%s886 + $0x70] sm:$0xff]
      %v2520 = vld [vmem:[%s886 + $0x78] sm:$0xff]
      %v2521 = vld [vmem:[%s886 + $0x80] sm:$0xff]
      %v2522 = vld [vmem:[%s886 + $0x88] sm:$0xff]
      %v2523 = vld [vmem:[%s886 + $0x90] sm:$0xff]
      %v2524 = vld [vmem:[%s886 + $0x98] sm:$0xff]
      %v2525 = vld [vmem:[%s886 + $0xa0] sm:$0xff]
      %v2526 = vld [vmem:[%s886 + $0xa8] sm:$0xff]
      %v2527 = vld [vmem:[%s886 + $0xb0] sm:$0xff]
      %v2528 = vld [vmem:[%s886 + $0xb8] sm:$0xff]
      %v2529 = vld [vmem:[%s886 + $0xc0] sm:$0xff]
      %v2530 = vld [vmem:[%s886 + $0xc8] sm:$0xff]
      %v2531 = vld [vmem:[%s886 + $0xd0] sm:$0xff]
      %v2532 = vld [vmem:[%s886 + $0xd8] sm:$0xff]
      %v2533 = vld [vmem:[%s886 + $0xe0] sm:$0xff]
      %v2534 = vld [vmem:[%s886 + $0xe8] sm:$0xff]
      %v2535 = vld [vmem:[%s886 + $0xf0] sm:$0xff]
      %v2536 = vld [vmem:[%s886 + $0xf8] sm:$0xff]
      %v2537 = vld [vmem:[%s886 + $0x100] sm:$0xff]
      %v2538 = vld [vmem:[%s886 + $0x108] sm:$0xff]
      %v2539 = vld [vmem:[%s886 + $0x110] sm:$0xff]
      %v2540 = vld [vmem:[%s886 + $0x118] sm:$0xff]
      %v2541 = vld [vmem:[%s886 + $0x120] sm:$0xff]
      %v2542 = vld [vmem:[%s886 + $0x128] sm:$0xff]
      %v2543 = vld [vmem:[%s886 + $0x130] sm:$0xff]
      %v2544 = vld [vmem:[%s886 + $0x138] sm:$0xff]
      %v2545 = vld [vmem:[%s886 + $0x140] sm:$0xff]
      %v2546 = vld [vmem:[%s886 + $0x148] sm:$0xff]
      %v2547 = vld [vmem:[%s886 + $0x150] sm:$0xff]
      %v2548 = vld [vmem:[%s886 + $0x158] sm:$0xff]
      %v2549 = vld [vmem:[%s886 + $0x160] sm:$0xff]
      %v2550 = vld [vmem:[%s886 + $0x168] sm:$0xff]
      %v2551 = vld [vmem:[%s886 + $0x170] sm:$0xff]
      %v2552 = vld [vmem:[%s886 + $0x178] sm:$0xff]
      %v2553 = vld [vmem:[%s886 + $0x180] sm:$0xff]
      %v2554 = vld [vmem:[%s886 + $0x188] sm:$0xff]
      %v2555 = vld [vmem:[%s886 + $0x190] sm:$0xff]
      %v2556 = vld [vmem:[%s886 + $0x198] sm:$0xff]
      %v2557 = vld [vmem:[%s886 + $0x1a0] sm:$0xff]
      %v2558 = vld [vmem:[%s886 + $0x1a8] sm:$0xff]
      %v2559 = vld [vmem:[%s886 + $0x1b0] sm:$0xff]
      %v2560 = vld [vmem:[%s886 + $0x1b8] sm:$0xff]
      %v2561 = vld [vmem:[%s886 + $0x1c0] sm:$0xff]
      %v2562 = vld [vmem:[%s886 + $0x1c8] sm:$0xff]
      %v2563 = vld [vmem:[%s886 + $0x1d0] sm:$0xff]
      %v2564 = vld [vmem:[%s886 + $0x1d8] sm:$0xff]
      %v2565 = vld [vmem:[%s886 + $0x1e0] sm:$0xff]
      %v2566 = vld [vmem:[%s886 + $0x1e8] sm:$0xff]
      %v2567 = vld [vmem:[%s886 + $0x1f0] sm:$0xff]
      %v2568 = vld [vmem:[%s886 + $0x1f8] sm:$0xff]
      %v2569 = vld [vmem:[%s890] sm:$0xf]
      %v2571 = vlaneseq
      %v2572 = vshrl.u32 %v2571, 7
      %v2573 = vsub.s32 0, %v2572
      %v2574 = vrot.slane %v2569, %v2573
      %v2575 = vlaneseq
      %v2576 = vshrl.u32 %v2575, 7
      %v2577 = vsub.s32 1, %v2576
      %v2578 = vrot.slane %v2569, %v2577
      %v2579 = vlaneseq
      %v2580 = vshrl.u32 %v2579, 7
      %v2581 = vsub.s32 2, %v2580
      %v2582 = vrot.slane %v2569, %v2581
      %v2583 = vlaneseq
      %v2584 = vshrl.u32 %v2583, 7
      %v2585 = vsub.s32 3, %v2584
      %v2586 = vrot.slane %v2569, %v2585
      %v2655 = vunpack.c.l.b16 %v2505
      %v2656 = vunpack.c.h.b16 %v2505
      %v2657 = vunpack.c.l.b16 %v2506
      %v2658 = vunpack.c.h.b16 %v2506
      %v2659 = vunpack.c.l.b16 %v2507
      %v2660 = vunpack.c.h.b16 %v2507
      %v2661 = vunpack.c.l.b16 %v2508
      %v2662 = vunpack.c.h.b16 %v2508
      %v2663 = vunpack.c.l.b16 %v2509
      %v2664 = vunpack.c.h.b16 %v2509
      %v2665 = vunpack.c.l.b16 %v2510
      %v2666 = vunpack.c.h.b16 %v2510
      %v2667 = vunpack.c.l.b16 %v2511
      %v2668 = vunpack.c.h.b16 %v2511
      %v2669 = vunpack.c.l.b16 %v2512
      %v2670 = vunpack.c.h.b16 %v2512
      %v2671 = vunpack.c.l.b16 %v2513
      %v2672 = vunpack.c.h.b16 %v2513
      %v2673 = vunpack.c.l.b16 %v2514
      %v2674 = vunpack.c.h.b16 %v2514
      %v2675 = vunpack.c.l.b16 %v2515
      %v2676 = vunpack.c.h.b16 %v2515
      %v2677 = vunpack.c.l.b16 %v2516
      %v2678 = vunpack.c.h.b16 %v2516
      %v2679 = vunpack.c.l.b16 %v2517
      %v2680 = vunpack.c.h.b16 %v2517
      %v2681 = vunpack.c.l.b16 %v2518
      %v2682 = vunpack.c.h.b16 %v2518
      %v2683 = vunpack.c.l.b16 %v2519
      %v2684 = vunpack.c.h.b16 %v2519
      %v2685 = vunpack.c.l.b16 %v2520
      %v2686 = vunpack.c.h.b16 %v2520
      %v2687 = vunpack.c.l.b16 %v2521
      %v2688 = vunpack.c.h.b16 %v2521
      %v2689 = vunpack.c.l.b16 %v2522
      %v2690 = vunpack.c.h.b16 %v2522
      %v2691 = vunpack.c.l.b16 %v2523
      %v2692 = vunpack.c.h.b16 %v2523
      %v2693 = vunpack.c.l.b16 %v2524
      %v2694 = vunpack.c.h.b16 %v2524
      %v2695 = vunpack.c.l.b16 %v2525
      %v2696 = vunpack.c.h.b16 %v2525
      %v2697 = vunpack.c.l.b16 %v2526
      %v2698 = vunpack.c.h.b16 %v2526
      %v2699 = vunpack.c.l.b16 %v2527
      %v2700 = vunpack.c.h.b16 %v2527
      %v2701 = vunpack.c.l.b16 %v2528
      %v2702 = vunpack.c.h.b16 %v2528
      %v2703 = vunpack.c.l.b16 %v2529
      %v2704 = vunpack.c.h.b16 %v2529
      %v2705 = vunpack.c.l.b16 %v2530
      %v2706 = vunpack.c.h.b16 %v2530
      %v2707 = vunpack.c.l.b16 %v2531
      %v2708 = vunpack.c.h.b16 %v2531
      %v2709 = vunpack.c.l.b16 %v2532
      %v2710 = vunpack.c.h.b16 %v2532
      %v2711 = vunpack.c.l.b16 %v2533
      %v2712 = vunpack.c.h.b16 %v2533
      %v2713 = vunpack.c.l.b16 %v2534
      %v2714 = vunpack.c.h.b16 %v2534
      %v2715 = vunpack.c.l.b16 %v2535
      %v2716 = vunpack.c.h.b16 %v2535
      %v2717 = vunpack.c.l.b16 %v2536
      %v2718 = vunpack.c.h.b16 %v2536
      %v2719 = vunpack.c.l.b16 %v2537
      %v2720 = vunpack.c.h.b16 %v2537
      %v2721 = vunpack.c.l.b16 %v2538
      %v2722 = vunpack.c.h.b16 %v2538
      %v2723 = vunpack.c.l.b16 %v2539
      %v2724 = vunpack.c.h.b16 %v2539
      %v2725 = vunpack.c.l.b16 %v2540
      %v2726 = vunpack.c.h.b16 %v2540
      %v2727 = vunpack.c.l.b16 %v2541
      %v2728 = vunpack.c.h.b16 %v2541
      %v2729 = vunpack.c.l.b16 %v2542
      %v2730 = vunpack.c.h.b16 %v2542
      %v2731 = vunpack.c.l.b16 %v2543
      %v2732 = vunpack.c.h.b16 %v2543
      %v2733 = vunpack.c.l.b16 %v2544
      %v2734 = vunpack.c.h.b16 %v2544
      %v2735 = vunpack.c.l.b16 %v2545
      %v2736 = vunpack.c.h.b16 %v2545
      %v2737 = vunpack.c.l.b16 %v2546
      %v2738 = vunpack.c.h.b16 %v2546
      %v2739 = vunpack.c.l.b16 %v2547
      %v2740 = vunpack.c.h.b16 %v2547
      %v2741 = vunpack.c.l.b16 %v2548
      %v2742 = vunpack.c.h.b16 %v2548
      %v2743 = vunpack.c.l.b16 %v2549
      %v2744 = vunpack.c.h.b16 %v2549
      %v2745 = vunpack.c.l.b16 %v2550
      %v2746 = vunpack.c.h.b16 %v2550
      %v2747 = vunpack.c.l.b16 %v2551
      %v2748 = vunpack.c.h.b16 %v2551
      %v2749 = vunpack.c.l.b16 %v2552
      %v2750 = vunpack.c.h.b16 %v2552
      %v2751 = vunpack.c.l.b16 %v2553
      %v2752 = vunpack.c.h.b16 %v2553
      %v2753 = vunpack.c.l.b16 %v2554
      %v2754 = vunpack.c.h.b16 %v2554
      %v2755 = vunpack.c.l.b16 %v2555
      %v2756 = vunpack.c.h.b16 %v2555
      %v2757 = vunpack.c.l.b16 %v2556
      %v2758 = vunpack.c.h.b16 %v2556
      %v2759 = vunpack.c.l.b16 %v2557
      %v2760 = vunpack.c.h.b16 %v2557
      %v2761 = vunpack.c.l.b16 %v2558
      %v2762 = vunpack.c.h.b16 %v2558
      %v2763 = vunpack.c.l.b16 %v2559
      %v2764 = vunpack.c.h.b16 %v2559
      %v2765 = vunpack.c.l.b16 %v2560
      %v2766 = vunpack.c.h.b16 %v2560
      %v2767 = vunpack.c.l.b16 %v2561
      %v2768 = vunpack.c.h.b16 %v2561
      %v2769 = vunpack.c.l.b16 %v2562
      %v2770 = vunpack.c.h.b16 %v2562
      %v2771 = vunpack.c.l.b16 %v2563
      %v2772 = vunpack.c.h.b16 %v2563
      %v2773 = vunpack.c.l.b16 %v2564
      %v2774 = vunpack.c.h.b16 %v2564
      %v2775 = vunpack.c.l.b16 %v2565
      %v2776 = vunpack.c.h.b16 %v2565
      %v2777 = vunpack.c.l.b16 %v2566
      %v2778 = vunpack.c.h.b16 %v2566
      %v2779 = vunpack.c.l.b16 %v2567
      %v2780 = vunpack.c.h.b16 %v2567
      %v2781 = vunpack.c.l.b16 %v2568
      %v2782 = vunpack.c.h.b16 %v2568
      %v2783 = vpack.c.b16 %v2659, %v2655
      %v2784 = vpack.c.b16 %v2660, %v2656
      %v2785 = vpack.c.b16 %v2661, %v2657
      %v2786 = vpack.c.b16 %v2662, %v2658
      %v2787 = vpack.c.b16 %v2667, %v2663
      %v2788 = vpack.c.b16 %v2668, %v2664
      %v2789 = vpack.c.b16 %v2669, %v2665
      %v2790 = vpack.c.b16 %v2670, %v2666
      %v2791 = vpack.c.b16 %v2675, %v2671
      %v2792 = vpack.c.b16 %v2676, %v2672
      %v2793 = vpack.c.b16 %v2677, %v2673
      %v2794 = vpack.c.b16 %v2678, %v2674
      %v2795 = vpack.c.b16 %v2683, %v2679
      %v2796 = vpack.c.b16 %v2684, %v2680
      %v2797 = vpack.c.b16 %v2685, %v2681
      %v2798 = vpack.c.b16 %v2686, %v2682
      %v2799 = vpack.c.b16 %v2691, %v2687
      %v2800 = vpack.c.b16 %v2692, %v2688
      %v2801 = vpack.c.b16 %v2693, %v2689
      %v2802 = vpack.c.b16 %v2694, %v2690
      %v2803 = vpack.c.b16 %v2699, %v2695
      %v2804 = vpack.c.b16 %v2700, %v2696
      %v2805 = vpack.c.b16 %v2701, %v2697
      %v2806 = vpack.c.b16 %v2702, %v2698
      %v2807 = vpack.c.b16 %v2707, %v2703
      %v2808 = vpack.c.b16 %v2708, %v2704
      %v2809 = vpack.c.b16 %v2709, %v2705
      %v2810 = vpack.c.b16 %v2710, %v2706
      %v2811 = vpack.c.b16 %v2715, %v2711
      %v2812 = vpack.c.b16 %v2716, %v2712
      %v2813 = vpack.c.b16 %v2717, %v2713
      %v2814 = vpack.c.b16 %v2718, %v2714
      %v2815 = vpack.c.b16 %v2723, %v2719
      %v2816 = vpack.c.b16 %v2724, %v2720
      %v2817 = vpack.c.b16 %v2725, %v2721
      %v2818 = vpack.c.b16 %v2726, %v2722
      %v2819 = vpack.c.b16 %v2731, %v2727
      %v2820 = vpack.c.b16 %v2732, %v2728
      %v2821 = vpack.c.b16 %v2733, %v2729
      %v2822 = vpack.c.b16 %v2734, %v2730
      %v2823 = vpack.c.b16 %v2739, %v2735
      %v2824 = vpack.c.b16 %v2740, %v2736
      %v2825 = vpack.c.b16 %v2741, %v2737
      %v2826 = vpack.c.b16 %v2742, %v2738
      %v2827 = vpack.c.b16 %v2747, %v2743
      %v2828 = vpack.c.b16 %v2748, %v2744
      %v2829 = vpack.c.b16 %v2749, %v2745
      %v2830 = vpack.c.b16 %v2750, %v2746
      %v2831 = vpack.c.b16 %v2755, %v2751
      %v2832 = vpack.c.b16 %v2756, %v2752
      %v2833 = vpack.c.b16 %v2757, %v2753
      %v2834 = vpack.c.b16 %v2758, %v2754
      %v2835 = vpack.c.b16 %v2763, %v2759
      %v2836 = vpack.c.b16 %v2764, %v2760
      %v2837 = vpack.c.b16 %v2765, %v2761
      %v2838 = vpack.c.b16 %v2766, %v2762
      %v2839 = vpack.c.b16 %v2771, %v2767
      %v2840 = vpack.c.b16 %v2772, %v2768
      %v2841 = vpack.c.b16 %v2773, %v2769
      %v2842 = vpack.c.b16 %v2774, %v2770
      %v2843 = vpack.c.b16 %v2779, %v2775
      %v2844 = vpack.c.b16 %v2780, %v2776
      %v2845 = vpack.c.b16 %v2781, %v2777
      %v2846 = vpack.c.b16 %v2782, %v2778
      %2911 = vmatprep.subr.bf16.mxu0 %v2784
      %2912 = vmatpush1.bf16.msra.mxu0 %v2783
      %2913 = vmatprep.subr.bf16.mxu0 %v2788
      %2914 = vmatpush1.bf16.msra.mxu0 %v2787
      %2915 = vmatprep.subr.bf16.mxu0 %v2792
      %2916 = vmatpush1.bf16.msra.mxu0 %v2791
      %2917 = vmatprep.subr.bf16.mxu0 %v2796
      %2918 = vmatpush1.bf16.msra.mxu0 %v2795
      %2919 = vmatprep.subr.bf16.mxu0 %v2800
      %2920 = vmatpush1.bf16.msra.mxu0 %v2799
      %2921 = vmatprep.subr.bf16.mxu0 %v2804
      %2922 = vmatpush1.bf16.msra.mxu0 %v2803
      %2923 = vmatprep.subr.bf16.mxu0 %v2808
      %2924 = vmatpush1.bf16.msra.mxu0 %v2807
      %2925 = vmatprep.subr.bf16.mxu0 %v2812
      %2926 = vmatpush1.bf16.msra.mxu0 %v2811
      %2927 = vmatprep.subr.bf16.mxu0 %v2816
      %2928 = vmatpush1.bf16.msra.mxu0 %v2815
      %2929 = vmatprep.subr.bf16.mxu0 %v2820
      %2930 = vmatpush1.bf16.msra.mxu0 %v2819
      %2931 = vmatprep.subr.bf16.mxu0 %v2824
      %2932 = vmatpush1.bf16.msra.mxu0 %v2823
      %2933 = vmatprep.subr.bf16.mxu0 %v2828
      %2934 = vmatpush1.bf16.msra.mxu0 %v2827
      %2935 = vmatprep.subr.bf16.mxu0 %v2832
      %2936 = vmatpush1.bf16.msra.mxu0 %v2831
      %2937 = vmatprep.subr.bf16.mxu0 %v2836
      %2938 = vmatpush1.bf16.msra.mxu0 %v2835
      %2939 = vmatprep.subr.bf16.mxu0 %v2840
      %2940 = vmatpush1.bf16.msra.mxu0 %v2839
      %2941 = vmatprep.subr.bf16.mxu0 %v2844
      %2942 = vmatpush1.bf16.msra.mxu0 %v2843
      %2943 = vmatprep.mubr.bf16.mxu0 %v2502
      %2944 = vmatmul.mubr.bf16.gmra.mrb[0].mxu0 %v2501
      %v2945 = vpop.f32.mrb[0].mxu0
      %v2946 = vadd.f32 %v2574, %v2945
      %v2947 = vpop.f32.mrb[0].mxu0
      %v2948 = vadd.f32 %v2578, %v2947
      %v2949 = vpop.f32.mrb[0].mxu0
      %v2950 = vadd.f32 %v2574, %v2949
      %v2951 = vpop.f32.mrb[0].mxu0
      %v2952 = vadd.f32 %v2578, %v2951
      %2953 = vmatprep.mubr.bf16.mxu0 %v2504
      %2954 = vmatmul.mubr.bf16.gmra.mrb[0].mxu0 %v2503
      %v2955 = vpop.f32.mrb[0].mxu0
      %v2956 = vadd.f32 %v2574, %v2955
      %v2957 = vpop.f32.mrb[0].mxu0
      %v2958 = vadd.f32 %v2578, %v2957
      %v2959 = vpop.f32.mrb[0].mxu0
      %v2960 = vpop.f32.mrb[0].mxu0
      %2961 = vdwg.mxu0
      %2962 = vmatprep.subr.bf16.mxu0 %v2786
      %2963 = vmatpush1.bf16.msra.mxu0 %v2785
      %2964 = vmatprep.subr.bf16.mxu0 %v2790
      %2965 = vmatpush1.bf16.msra.mxu0 %v2789
      %2966 = vmatprep.subr.bf16.mxu0 %v2794
      %2967 = vmatpush1.bf16.msra.mxu0 %v2793
      %2968 = vmatprep.subr.bf16.mxu0 %v2798
      %2969 = vmatpush1.bf16.msra.mxu0 %v2797
      %2970 = vmatprep.subr.bf16.mxu0 %v2802
      %2971 = vmatpush1.bf16.msra.mxu0 %v2801
      %2972 = vmatprep.subr.bf16.mxu0 %v2806
      %2973 = vmatpush1.bf16.msra.mxu0 %v2805
      %2974 = vmatprep.subr.bf16.mxu0 %v2810
      %2975 = vmatpush1.bf16.msra.mxu0 %v2809
      %2976 = vmatprep.subr.bf16.mxu0 %v2814
      %2977 = vmatpush1.bf16.msra.mxu0 %v2813
      %2978 = vmatprep.subr.bf16.mxu0 %v2818
      %2979 = vmatpush1.bf16.msra.mxu0 %v2817
      %2980 = vmatprep.subr.bf16.mxu0 %v2822
      %2981 = vmatpush1.bf16.msra.mxu0 %v2821
      %2982 = vmatprep.subr.bf16.mxu0 %v2826
      %2983 = vmatpush1.bf16.msra.mxu0 %v2825
      %2984 = vmatprep.subr.bf16.mxu0 %v2830
      %2985 = vmatpush1.bf16.msra.mxu0 %v2829
      %2986 = vmatprep.subr.bf16.mxu0 %v2834
      %2987 = vmatpush1.bf16.msra.mxu0 %v2833
      %2988 = vmatprep.subr.bf16.mxu0 %v2838
      %2989 = vmatpush1.bf16.msra.mxu0 %v2837
      %2990 = vmatprep.subr.bf16.mxu0 %v2842
      %2991 = vmatpush1.bf16.msra.mxu0 %v2841
      %2992 = vmatprep.subr.bf16.mxu0 %v2846
      %2993 = vmatpush1.bf16.msra.mxu0 %v2845
      %2994 = vmatprep.mubr.bf16.mxu0 %v2502
      %2995 = vmatmul.mubr.bf16.gmra.mrb[0].mxu0 %v2501
      %v2996 = vpop.f32.mrb[0].mxu0
      %v2997 = vadd.f32 %v2582, %v2996
      %v2998 = vpop.f32.mrb[0].mxu0
      %v2999 = vadd.f32 %v2586, %v2998
      %v3000 = vpop.f32.mrb[0].mxu0
      %v3001 = vadd.f32 %v2582, %v3000
      %v3002 = vpop.f32.mrb[0].mxu0
      %v3003 = vadd.f32 %v2586, %v3002
      %3004 = vmatprep.mubr.bf16.mxu0 %v2504
      %3005 = vmatmul.mubr.bf16.gmra.mrb[0].mxu0 %v2503
      %v3006 = vpop.f32.mrb[0].mxu0
      %v3007 = vadd.f32 %v2582, %v3006
      %v3008 = vpop.f32.mrb[0].mxu0
      %v3009 = vadd.f32 %v2586, %v3008
      %v3010 = vpop.f32.mrb[0].mxu0
      %v3011 = vpop.f32.mrb[0].mxu0
      %3012 = vdwg.mxu0
      %v3013 = vmul.f32 %v2946, %v2946
      %v3014 = vmul.f32 %v2948, %v2948
      %v3015 = vmul.f32 %v2997, %v2997
      %v3016 = vmul.f32 %v2999, %v2999
      %v3017 = vmul.f32 %v2950, %v2950
      %v3018 = vmul.f32 %v2952, %v2952
      %v3019 = vmul.f32 %v3001, %v3001
      %v3020 = vmul.f32 %v3003, %v3003
      %v3021 = vmul.f32 %v2956, %v2956
      %v3022 = vmul.f32 %v2958, %v2958
      %v3023 = vmul.f32 %v3007, %v3007
      %v3024 = vmul.f32 %v3009, %v3009
      %v3025 = vmul.f32 %v2946, %v3013
      %v3026 = vmul.f32 %v2948, %v3014
      %v3027 = vmul.f32 %v2997, %v3015
      %v3028 = vmul.f32 %v2999, %v3016
      %v3029 = vmul.f32 %v2950, %v3017
      %v3030 = vmul.f32 %v2952, %v3018
      %v3031 = vmul.f32 %v3001, %v3019
      %v3032 = vmul.f32 %v3003, %v3020
      %v3033 = vmul.f32 %v2956, %v3021
      %v3034 = vmul.f32 %v2958, %v3022
      %v3035 = vmul.f32 %v3007, %v3023
      %v3036 = vmul.f32 %v3009, %v3024
      %v3037 = vmul.f32 %v3025, 0.044715
      %v3038 = vmul.f32 %v3026, 0.044715
      %v3039 = vmul.f32 %v3027, 0.044715
      %v3040 = vmul.f32 %v3028, 0.044715
      %v3041 = vmul.f32 %v3029, 0.044715
      %v3042 = vmul.f32 %v3030, 0.044715
      %v3043 = vmul.f32 %v3031, 0.044715
      %v3044 = vmul.f32 %v3032, 0.044715
      %v3045 = vmul.f32 %v3033, 0.044715
      %v3046 = vmul.f32 %v3034, 0.044715
      %v3047 = vmul.f32 %v3035, 0.044715
      %v3048 = vmul.f32 %v3036, 0.044715
      %v3049 = vadd.f32 %v2946, %v3037
      %v3050 = vadd.f32 %v2948, %v3038
      %v3051 = vadd.f32 %v2997, %v3039
      %v3052 = vadd.f32 %v2999, %v3040
      %v3053 = vadd.f32 %v2950, %v3041
      %v3054 = vadd.f32 %v2952, %v3042
      %v3055 = vadd.f32 %v3001, %v3043
      %v3056 = vadd.f32 %v3003, %v3044
      %v3057 = vadd.f32 %v2956, %v3045
      %v3058 = vadd.f32 %v2958, %v3046
      %v3059 = vadd.f32 %v3007, %v3047
      %v3060 = vadd.f32 %v3009, %v3048
      %v3061 = vmul.f32 %v3049, 0.7978846
      %v3062 = vmul.f32 %v3050, 0.7978846
      %v3063 = vmul.f32 %v3051, 0.7978846
      %v3064 = vmul.f32 %v3052, 0.7978846
      %v3065 = vmul.f32 %v3053, 0.7978846
      %v3066 = vmul.f32 %v3054, 0.7978846
      %v3067 = vmul.f32 %v3055, 0.7978846
      %v3068 = vmul.f32 %v3056, 0.7978846
      %v3069 = vmul.f32 %v3057, 0.7978846
      %v3070 = vmul.f32 %v3058, 0.7978846
      %v3071 = vmul.f32 %v3059, 0.7978846
      %v3072 = vmul.f32 %v3060, 0.7978846
      %v3073 = vtanh.pop %v3061
      %v3074 = vtanh.pop %v3062
      %v3075 = vtanh.pop %v3063
      %v3076 = vtanh.pop %v3064
      %v3077 = vtanh.pop %v3065
      %v3078 = vtanh.pop %v3066
      %v3079 = vtanh.pop %v3067
      %v3080 = vtanh.pop %v3068
      %v3081 = vtanh.pop %v3069
      %v3082 = vtanh.pop %v3070
      %v3083 = vtanh.pop %v3071
      %v3084 = vtanh.pop %v3072
      %v3085 = vadd.f32 %v3073, 1.0
      %v3086 = vadd.f32 %v3074, 1.0
      %v3087 = vadd.f32 %v3075, 1.0
      %v3088 = vadd.f32 %v3076, 1.0
      %v3089 = vadd.f32 %v3077, 1.0
      %v3090 = vadd.f32 %v3078, 1.0
      %v3091 = vadd.f32 %v3079, 1.0
      %v3092 = vadd.f32 %v3080, 1.0
      %v3093 = vadd.f32 %v3081, 1.0
      %v3094 = vadd.f32 %v3082, 1.0
      %v3095 = vadd.f32 %v3083, 1.0
      %v3096 = vadd.f32 %v3084, 1.0
      %v3097 = vmul.f32 %v3085, 0.5
      %v3098 = vmul.f32 %v3086, 0.5
      %v3099 = vmul.f32 %v3087, 0.5
      %v3100 = vmul.f32 %v3088, 0.5
      %v3101 = vmul.f32 %v3089, 0.5
      %v3102 = vmul.f32 %v3090, 0.5
      %v3103 = vmul.f32 %v3091, 0.5
      %v3104 = vmul.f32 %v3092, 0.5
      %v3105 = vmul.f32 %v3093, 0.5
      %v3106 = vmul.f32 %v3094, 0.5
      %v3107 = vmul.f32 %v3095, 0.5
      %v3108 = vmul.f32 %v3096, 0.5
      %v3109 = vmul.f32 %v2946, %v3097
      %v3110 = vmul.f32 %v2948, %v3098
      %v3111 = vmul.f32 %v2997, %v3099
      %v3112 = vmul.f32 %v2999, %v3100
      %v3113 = vmul.f32 %v2950, %v3101
      %v3114 = vmul.f32 %v2952, %v3102
      %v3115 = vmul.f32 %v3001, %v3103
      %v3116 = vmul.f32 %v3003, %v3104
      %v3117 = vmul.f32 %v2956, %v3105
      %v3118 = vmul.f32 %v2958, %v3106
      %v3119 = vmul.f32 %v3007, %v3107
      %v3120 = vmul.f32 %v3009, %v3108
      %v3121 = vpack.c.bf16 %v3113, %v3109
      %v3122 = vpack.c.bf16 %v3114, %v3110
      %v3123 = vpack.c.bf16 %v3115, %v3111
      %v3124 = vpack.c.bf16 %v3116, %v3112
      %v3125 = vpack.c.bf16 %v3117, %v3117
      %v3126 = vpack.c.bf16 %v3118, %v3118
      %v3127 = vpack.c.bf16 %v3119, %v3119
      %v3128 = vpack.c.bf16 %v3120, %v3120
      %v3129 = vld [vmem:[%s895] sm:$0xff]
      %v3130 = vld [vmem:[%s895 + $0x8] sm:$0xff]
      %v3131 = vld [vmem:[%s895 + $0x10] sm:$0xff]
      %v3132 = vld [vmem:[%s895 + $0x18] sm:$0xff]
      %v3133 = vld [vmem:[%s895 + $0x20] sm:$0xff]
      %v3134 = vld [vmem:[%s895 + $0x28] sm:$0xff]
      %v3135 = vld [vmem:[%s895 + $0x30] sm:$0xff]
      %v3136 = vld [vmem:[%s895 + $0x38] sm:$0xff]
      %v3137 = vld [vmem:[%s895 + $0x40] sm:$0xff]
      %v3138 = vld [vmem:[%s895 + $0x48] sm:$0xff]
      %v3139 = vld [vmem:[%s895 + $0x50] sm:$0xff]
      %v3140 = vld [vmem:[%s895 + $0x58] sm:$0xff]
      %v3141 = vld [vmem:[%s895 + $0x60] sm:$0xff]
      %v3142 = vld [vmem:[%s895 + $0x68] sm:$0xff]
      %v3143 = vld [vmem:[%s895 + $0x70] sm:$0xff]
      %v3144 = vld [vmem:[%s895 + $0x78] sm:$0xff]
      %v3145 = vld [vmem:[%s895 + $0x80] sm:$0xff]
      %v3146 = vld [vmem:[%s895 + $0x88] sm:$0xff]
      %v3147 = vld [vmem:[%s895 + $0x90] sm:$0xff]
      %v3148 = vld [vmem:[%s895 + $0x98] sm:$0xff]
      %v3149 = vld [vmem:[%s895 + $0xa0] sm:$0xff]
      %v3150 = vld [vmem:[%s895 + $0xa8] sm:$0xff]
      %v3151 = vld [vmem:[%s895 + $0xb0] sm:$0xff]
      %v3152 = vld [vmem:[%s895 + $0xb8] sm:$0xff]
      %v3153 = vld [vmem:[%s895 + $0xc0] sm:$0xff]
      %v3154 = vld [vmem:[%s895 + $0xc8] sm:$0xff]
      %v3155 = vld [vmem:[%s895 + $0xd0] sm:$0xff]
      %v3156 = vld [vmem:[%s895 + $0xd8] sm:$0xff]
      %v3157 = vld [vmem:[%s895 + $0xe0] sm:$0xff]
      %v3158 = vld [vmem:[%s895 + $0xe8] sm:$0xff]
      %v3159 = vld [vmem:[%s895 + $0xf0] sm:$0xff]
      %v3160 = vld [vmem:[%s895 + $0xf8] sm:$0xff]
      %v3161 = vld [vmem:[%s895 + $0x100] sm:$0xff]
      %v3162 = vld [vmem:[%s895 + $0x108] sm:$0xff]
      %v3163 = vld [vmem:[%s895 + $0x110] sm:$0xff]
      %v3164 = vld [vmem:[%s895 + $0x118] sm:$0xff]
      %v3165 = vld [vmem:[%s895 + $0x120] sm:$0xff]
      %v3166 = vld [vmem:[%s895 + $0x128] sm:$0xff]
      %v3167 = vld [vmem:[%s895 + $0x130] sm:$0xff]
      %v3168 = vld [vmem:[%s895 + $0x138] sm:$0xff]
      %v3169 = vld [vmem:[%s895 + $0x140] sm:$0xff]
      %v3170 = vld [vmem:[%s895 + $0x148] sm:$0xff]
      %v3171 = vld [vmem:[%s895 + $0x150] sm:$0xff]
      %v3172 = vld [vmem:[%s895 + $0x158] sm:$0xff]
      %v3173 = vld [vmem:[%s895 + $0x160] sm:$0xff]
      %v3174 = vld [vmem:[%s895 + $0x168] sm:$0xff]
      %v3175 = vld [vmem:[%s895 + $0x170] sm:$0xff]
      %v3176 = vld [vmem:[%s895 + $0x178] sm:$0xff]
      %v3177 = vld [vmem:[%s895 + $0x180] sm:$0xff]
      %v3178 = vld [vmem:[%s895 + $0x188] sm:$0xff]
      %v3179 = vld [vmem:[%s895 + $0x190] sm:$0xff]
      %v3180 = vld [vmem:[%s895 + $0x198] sm:$0xff]
      %v3181 = vld [vmem:[%s895 + $0x1a0] sm:$0xff]
      %v3182 = vld [vmem:[%s895 + $0x1a8] sm:$0xff]
      %v3183 = vld [vmem:[%s895 + $0x1b0] sm:$0xff]
      %v3184 = vld [vmem:[%s895 + $0x1b8] sm:$0xff]
      %v3185 = vld [vmem:[%s895 + $0x1c0] sm:$0xff]
      %v3186 = vld [vmem:[%s895 + $0x1c8] sm:$0xff]
      %v3187 = vld [vmem:[%s895 + $0x1d0] sm:$0xff]
      %v3188 = vld [vmem:[%s895 + $0x1d8] sm:$0xff]
      %v3189 = vld [vmem:[%s895 + $0x1e0] sm:$0xff]
      %v3190 = vld [vmem:[%s895 + $0x1e8] sm:$0xff]
      %v3191 = vld [vmem:[%s895 + $0x1f0] sm:$0xff]
      %v3192 = vld [vmem:[%s895 + $0x1f8] sm:$0xff]
      %v3193 = vld [vmem:[%s899] sm:$0x3]
      %v3195 = vlaneseq
      %v3196 = vshrl.u32 %v3195, 7
      %v3197 = vsub.s32 0, %v3196
      %v3198 = vrot.slane %v3193, %v3197
      %v3199 = vlaneseq
      %v3200 = vshrl.u32 %v3199, 7
      %v3201 = vsub.s32 1, %v3200
      %v3202 = vrot.slane %v3193, %v3201
      %v3269 = vunpack.c.l.b16 %v3129
      %v3270 = vunpack.c.h.b16 %v3129
      %v3271 = vunpack.c.l.b16 %v3130
      %v3272 = vunpack.c.h.b16 %v3130
      %v3273 = vunpack.c.l.b16 %v3131
      %v3274 = vunpack.c.h.b16 %v3131
      %v3275 = vunpack.c.l.b16 %v3132
      %v3276 = vunpack.c.h.b16 %v3132
      %v3277 = vunpack.c.l.b16 %v3133
      %v3278 = vunpack.c.h.b16 %v3133
      %v3279 = vunpack.c.l.b16 %v3134
      %v3280 = vunpack.c.h.b16 %v3134
      %v3281 = vunpack.c.l.b16 %v3135
      %v3282 = vunpack.c.h.b16 %v3135
      %v3283 = vunpack.c.l.b16 %v3136
      %v3284 = vunpack.c.h.b16 %v3136
      %v3285 = vunpack.c.l.b16 %v3137
      %v3286 = vunpack.c.h.b16 %v3137
      %v3287 = vunpack.c.l.b16 %v3138
      %v3288 = vunpack.c.h.b16 %v3138
      %v3289 = vunpack.c.l.b16 %v3139
      %v3290 = vunpack.c.h.b16 %v3139
      %v3291 = vunpack.c.l.b16 %v3140
      %v3292 = vunpack.c.h.b16 %v3140
      %v3293 = vunpack.c.l.b16 %v3141
      %v3294 = vunpack.c.h.b16 %v3141
      %v3295 = vunpack.c.l.b16 %v3142
      %v3296 = vunpack.c.h.b16 %v3142
      %v3297 = vunpack.c.l.b16 %v3143
      %v3298 = vunpack.c.h.b16 %v3143
      %v3299 = vunpack.c.l.b16 %v3144
      %v3300 = vunpack.c.h.b16 %v3144
      %v3301 = vunpack.c.l.b16 %v3145
      %v3302 = vunpack.c.h.b16 %v3145
      %v3303 = vunpack.c.l.b16 %v3146
      %v3304 = vunpack.c.h.b16 %v3146
      %v3305 = vunpack.c.l.b16 %v3147
      %v3306 = vunpack.c.h.b16 %v3147
      %v3307 = vunpack.c.l.b16 %v3148
      %v3308 = vunpack.c.h.b16 %v3148
      %v3309 = vunpack.c.l.b16 %v3149
      %v3310 = vunpack.c.h.b16 %v3149
      %v3311 = vunpack.c.l.b16 %v3150
      %v3312 = vunpack.c.h.b16 %v3150
      %v3313 = vunpack.c.l.b16 %v3151
      %v3314 = vunpack.c.h.b16 %v3151
      %v3315 = vunpack.c.l.b16 %v3152
      %v3316 = vunpack.c.h.b16 %v3152
      %v3317 = vunpack.c.l.b16 %v3153
      %v3318 = vunpack.c.h.b16 %v3153
      %v3319 = vunpack.c.l.b16 %v3154
      %v3320 = vunpack.c.h.b16 %v3154
      %v3321 = vunpack.c.l.b16 %v3155
      %v3322 = vunpack.c.h.b16 %v3155
      %v3323 = vunpack.c.l.b16 %v3156
      %v3324 = vunpack.c.h.b16 %v3156
      %v3325 = vunpack.c.l.b16 %v3157
      %v3326 = vunpack.c.h.b16 %v3157
      %v3327 = vunpack.c.l.b16 %v3158
      %v3328 = vunpack.c.h.b16 %v3158
      %v3329 = vunpack.c.l.b16 %v3159
      %v3330 = vunpack.c.h.b16 %v3159
      %v3331 = vunpack.c.l.b16 %v3160
      %v3332 = vunpack.c.h.b16 %v3160
      %v3333 = vunpack.c.l.b16 %v3161
      %v3334 = vunpack.c.h.b16 %v3161
      %v3335 = vunpack.c.l.b16 %v3162
      %v3336 = vunpack.c.h.b16 %v3162
      %v3337 = vunpack.c.l.b16 %v3163
      %v3338 = vunpack.c.h.b16 %v3163
      %v3339 = vunpack.c.l.b16 %v3164
      %v3340 = vunpack.c.h.b16 %v3164
      %v3341 = vunpack.c.l.b16 %v3165
      %v3342 = vunpack.c.h.b16 %v3165
      %v3343 = vunpack.c.l.b16 %v3166
      %v3344 = vunpack.c.h.b16 %v3166
      %v3345 = vunpack.c.l.b16 %v3167
      %v3346 = vunpack.c.h.b16 %v3167
      %v3347 = vunpack.c.l.b16 %v3168
      %v3348 = vunpack.c.h.b16 %v3168
      %v3349 = vunpack.c.l.b16 %v3169
      %v3350 = vunpack.c.h.b16 %v3169
      %v3351 = vunpack.c.l.b16 %v3170
      %v3352 = vunpack.c.h.b16 %v3170
      %v3353 = vunpack.c.l.b16 %v3171
      %v3354 = vunpack.c.h.b16 %v3171
      %v3355 = vunpack.c.l.b16 %v3172
      %v3356 = vunpack.c.h.b16 %v3172
      %v3357 = vunpack.c.l.b16 %v3173
      %v3358 = vunpack.c.h.b16 %v3173
      %v3359 = vunpack.c.l.b16 %v3174
      %v3360 = vunpack.c.h.b16 %v3174
      %v3361 = vunpack.c.l.b16 %v3175
      %v3362 = vunpack.c.h.b16 %v3175
      %v3363 = vunpack.c.l.b16 %v3176
      %v3364 = vunpack.c.h.b16 %v3176
      %v3365 = vunpack.c.l.b16 %v3177
      %v3366 = vunpack.c.h.b16 %v3177
      %v3367 = vunpack.c.l.b16 %v3178
      %v3368 = vunpack.c.h.b16 %v3178
      %v3369 = vunpack.c.l.b16 %v3179
      %v3370 = vunpack.c.h.b16 %v3179
      %v3371 = vunpack.c.l.b16 %v3180
      %v3372 = vunpack.c.h.b16 %v3180
      %v3373 = vunpack.c.l.b16 %v3181
      %v3374 = vunpack.c.h.b16 %v3181
      %v3375 = vunpack.c.l.b16 %v3182
      %v3376 = vunpack.c.h.b16 %v3182
      %v3377 = vunpack.c.l.b16 %v3183
      %v3378 = vunpack.c.h.b16 %v3183
      %v3379 = vunpack.c.l.b16 %v3184
      %v3380 = vunpack.c.h.b16 %v3184
      %v3381 = vunpack.c.l.b16 %v3185
      %v3382 = vunpack.c.h.b16 %v3185
      %v3383 = vunpack.c.l.b16 %v3186
      %v3384 = vunpack.c.h.b16 %v3186
      %v3385 = vunpack.c.l.b16 %v3187
      %v3386 = vunpack.c.h.b16 %v3187
      %v3387 = vunpack.c.l.b16 %v3188
      %v3388 = vunpack.c.h.b16 %v3188
      %v3389 = vunpack.c.l.b16 %v3189
      %v3390 = vunpack.c.h.b16 %v3189
      %v3391 = vunpack.c.l.b16 %v3190
      %v3392 = vunpack.c.h.b16 %v3190
      %v3393 = vunpack.c.l.b16 %v3191
      %v3394 = vunpack.c.h.b16 %v3191
      %v3395 = vunpack.c.l.b16 %v3192
      %v3396 = vunpack.c.h.b16 %v3192
      %v3397 = vpack.c.b16 %v3271, %v3269
      %v3398 = vpack.c.b16 %v3272, %v3270
      %v3399 = vpack.c.b16 %v3275, %v3273
      %v3400 = vpack.c.b16 %v3276, %v3274
      %v3401 = vpack.c.b16 %v3279, %v3277
      %v3402 = vpack.c.b16 %v3280, %v3278
      %v3403 = vpack.c.b16 %v3283, %v3281
      %v3404 = vpack.c.b16 %v3284, %v3282
      %v3405 = vpack.c.b16 %v3287, %v3285
      %v3406 = vpack.c.b16 %v3288, %v3286
      %v3407 = vpack.c.b16 %v3291, %v3289
      %v3408 = vpack.c.b16 %v3292, %v3290
      %v3409 = vpack.c.b16 %v3295, %v3293
      %v3410 = vpack.c.b16 %v3296, %v3294
      %v3411 = vpack.c.b16 %v3299, %v3297
      %v3412 = vpack.c.b16 %v3300, %v3298
      %v3413 = vpack.c.b16 %v3303, %v3301
      %v3414 = vpack.c.b16 %v3304, %v3302
      %v3415 = vpack.c.b16 %v3307, %v3305
      %v3416 = vpack.c.b16 %v3308, %v3306
      %v3417 = vpack.c.b16 %v3311, %v3309
      %v3418 = vpack.c.b16 %v3312, %v3310
      %v3419 = vpack.c.b16 %v3315, %v3313
      %v3420 = vpack.c.b16 %v3316, %v3314
      %v3421 = vpack.c.b16 %v3319, %v3317
      %v3422 = vpack.c.b16 %v3320, %v3318
      %v3423 = vpack.c.b16 %v3323, %v3321
      %v3424 = vpack.c.b16 %v3324, %v3322
      %v3425 = vpack.c.b16 %v3327, %v3325
      %v3426 = vpack.c.b16 %v3328, %v3326
      %v3427 = vpack.c.b16 %v3331, %v3329
      %v3428 = vpack.c.b16 %v3332, %v3330
      %v3429 = vpack.c.b16 %v3335, %v3333
      %v3430 = vpack.c.b16 %v3336, %v3334
      %v3431 = vpack.c.b16 %v3339, %v3337
      %v3432 = vpack.c.b16 %v3340, %v3338
      %v3433 = vpack.c.b16 %v3343, %v3341
      %v3434 = vpack.c.b16 %v3344, %v3342
      %v3435 = vpack.c.b16 %v3347, %v3345
      %v3436 = vpack.c.b16 %v3348, %v3346
      %v3437 = vpack.c.b16 %v3351, %v3349
      %v3438 = vpack.c.b16 %v3352, %v3350
      %v3439 = vpack.c.b16 %v3355, %v3353
      %v3440 = vpack.c.b16 %v3356, %v3354
      %v3441 = vpack.c.b16 %v3359, %v3357
      %v3442 = vpack.c.b16 %v3360, %v3358
      %v3443 = vpack.c.b16 %v3363, %v3361
      %v3444 = vpack.c.b16 %v3364, %v3362
      %v3445 = vpack.c.b16 %v3367, %v3365
      %v3446 = vpack.c.b16 %v3368, %v3366
      %v3447 = vpack.c.b16 %v3371, %v3369
      %v3448 = vpack.c.b16 %v3372, %v3370
      %v3449 = vpack.c.b16 %v3375, %v3373
      %v3450 = vpack.c.b16 %v3376, %v3374
      %v3451 = vpack.c.b16 %v3379, %v3377
      %v3452 = vpack.c.b16 %v3380, %v3378
      %v3453 = vpack.c.b16 %v3383, %v3381
      %v3454 = vpack.c.b16 %v3384, %v3382
      %v3455 = vpack.c.b16 %v3387, %v3385
      %v3456 = vpack.c.b16 %v3388, %v3386
      %v3457 = vpack.c.b16 %v3391, %v3389
      %v3458 = vpack.c.b16 %v3392, %v3390
      %v3459 = vpack.c.b16 %v3395, %v3393
      %v3460 = vpack.c.b16 %v3396, %v3394
      %3525 = vmatprep.subr.bf16.mxu0 %v3398
      %3526 = vmatpush1.bf16.msra.mxu0 %v3397
      %3527 = vmatprep.subr.bf16.mxu0 %v3400
      %3528 = vmatpush1.bf16.msra.mxu0 %v3399
      %3529 = vmatprep.subr.bf16.mxu0 %v3402
      %3530 = vmatpush1.bf16.msra.mxu0 %v3401
      %3531 = vmatprep.subr.bf16.mxu0 %v3404
      %3532 = vmatpush1.bf16.msra.mxu0 %v3403
      %3533 = vmatprep.subr.bf16.mxu0 %v3406
      %3534 = vmatpush1.bf16.msra.mxu0 %v3405
      %3535 = vmatprep.subr.bf16.mxu0 %v3408
      %3536 = vmatpush1.bf16.msra.mxu0 %v3407
      %3537 = vmatprep.subr.bf16.mxu0 %v3410
      %3538 = vmatpush1.bf16.msra.mxu0 %v3409
      %3539 = vmatprep.subr.bf16.mxu0 %v3412
      %3540 = vmatpush1.bf16.msra.mxu0 %v3411
      %3541 = vmatprep.subr.bf16.mxu0 %v3414
      %3542 = vmatpush1.bf16.msra.mxu0 %v3413
      %3543 = vmatprep.subr.bf16.mxu0 %v3416
      %3544 = vmatpush1.bf16.msra.mxu0 %v3415
      %3545 = vmatprep.subr.bf16.mxu0 %v3418
      %3546 = vmatpush1.bf16.msra.mxu0 %v3417
      %3547 = vmatprep.subr.bf16.mxu0 %v3420
      %3548 = vmatpush1.bf16.msra.mxu0 %v3419
      %3549 = vmatprep.subr.bf16.mxu0 %v3422
      %3550 = vmatpush1.bf16.msra.mxu0 %v3421
      %3551 = vmatprep.subr.bf16.mxu0 %v3424
      %3552 = vmatpush1.bf16.msra.mxu0 %v3423
      %3553 = vmatprep.subr.bf16.mxu0 %v3426
      %3554 = vmatpush1.bf16.msra.mxu0 %v3425
      %3555 = vmatprep.subr.bf16.mxu0 %v3428
      %3556 = vmatpush1.bf16.msra.mxu0 %v3427
      %3557 = vmatprep.mubr.bf16.mxu0 %v3122
      %3558 = vmatmul.mubr.bf16.gmra.mrb[0].mxu0 %v3121
      %v3559 = vpop.f32.mrb[0].mxu0
      %v3560 = vadd.f32 %v3198, %v3559
      %v3561 = vpop.f32.mrb[0].mxu0
      %v3562 = vadd.f32 %v3202, %v3561
      %v3563 = vpop.f32.mrb[0].mxu0
      %v3564 = vadd.f32 %v3198, %v3563
      %v3565 = vpop.f32.mrb[0].mxu0
      %v3566 = vadd.f32 %v3202, %v3565
      %3567 = vmatprep.mubr.bf16.mxu0 %v3126
      %3568 = vmatmul.mubr.bf16.gmra.mrb[0].mxu0 %v3125
      %v3569 = vpop.f32.mrb[0].mxu0
      %v3570 = vadd.f32 %v3198, %v3569
      %v3571 = vpop.f32.mrb[0].mxu0
      %v3572 = vadd.f32 %v3202, %v3571
      %v3573 = vpop.f32.mrb[0].mxu0
      %v3574 = vpop.f32.mrb[0].mxu0
      %3575 = vdwg.mxu0
      %3576 = vmatprep.subr.bf16.mxu0 %v3430
      %3577 = vmatpush1.bf16.msra.mxu0 %v3429
      %3578 = vmatprep.subr.bf16.mxu0 %v3432
      %3579 = vmatpush1.bf16.msra.mxu0 %v3431
      %3580 = vmatprep.subr.bf16.mxu0 %v3434
      %3581 = vmatpush1.bf16.msra.mxu0 %v3433
      %3582 = vmatprep.subr.bf16.mxu0 %v3436
      %3583 = vmatpush1.bf16.msra.mxu0 %v3435
      %3584 = vmatprep.subr.bf16.mxu0 %v3438
      %3585 = vmatpush1.bf16.msra.mxu0 %v3437
      %3586 = vmatprep.subr.bf16.mxu0 %v3440
      %3587 = vmatpush1.bf16.msra.mxu0 %v3439
      %3588 = vmatprep.subr.bf16.mxu0 %v3442
      %3589 = vmatpush1.bf16.msra.mxu0 %v3441
      %3590 = vmatprep.subr.bf16.mxu0 %v3444
      %3591 = vmatpush1.bf16.msra.mxu0 %v3443
      %3592 = vmatprep.subr.bf16.mxu0 %v3446
      %3593 = vmatpush1.bf16.msra.mxu0 %v3445
      %3594 = vmatprep.subr.bf16.mxu0 %v3448
      %3595 = vmatpush1.bf16.msra.mxu0 %v3447
      %3596 = vmatprep.subr.bf16.mxu0 %v3450
      %3597 = vmatpush1.bf16.msra.mxu0 %v3449
      %3598 = vmatprep.subr.bf16.mxu0 %v3452
      %3599 = vmatpush1.bf16.msra.mxu0 %v3451
      %3600 = vmatprep.subr.bf16.mxu0 %v3454
      %3601 = vmatpush1.bf16.msra.mxu0 %v3453
      %3602 = vmatprep.subr.bf16.mxu0 %v3456
      %3603 = vmatpush1.bf16.msra.mxu0 %v3455
      %3604 = vmatprep.subr.bf16.mxu0 %v3458
      %3605 = vmatpush1.bf16.msra.mxu0 %v3457
      %3606 = vmatprep.subr.bf16.mxu0 %v3460
      %3607 = vmatpush1.bf16.msra.mxu0 %v3459
      %3608 = vmatprep.mubr.bf16.mxu0 %v3124
      %3609 = vmatmul.mubr.bf16.gmra.mrb[0].mxu0 %v3123
      %v3610 = vpop.f32.mrb[0].mxu0
      %v3611 = vadd.f32 %v3560, %v3610
      %v3612 = vpop.f32.mrb[0].mxu0
      %v3613 = vadd.f32 %v3562, %v3612
      %v3614 = vpop.f32.mrb[0].mxu0
      %v3615 = vadd.f32 %v3564, %v3614
      %v3616 = vpop.f32.mrb[0].mxu0
      %v3617 = vadd.f32 %v3566, %v3616
      %3618 = vmatprep.mubr.bf16.mxu0 %v3128
      %3619 = vmatmul.mubr.bf16.gmra.mrb[0].mxu0 %v3127
      %v3620 = vpop.f32.mrb[0].mxu0
      %v3621 = vadd.f32 %v3570, %v3620
      %v3622 = vpop.f32.mrb[0].mxu0
      %v3623 = vadd.f32 %v3572, %v3622
      %v3624 = vpop.f32.mrb[0].mxu0
      %v3625 = vpop.f32.mrb[0].mxu0
      %3626 = vdwg.mxu0
      %v3627 = vadd.f32 %v2407, %v3611
      %v3628 = vadd.f32 %v2408, %v3613
      %v3629 = vadd.f32 %v2409, %v3615
      %v3630 = vadd.f32 %v2410, %v3617
      %v3631 = vadd.f32 %v2411, %v3621
      %v3632 = vadd.f32 %v2412, %v3623
      %p3633 = scmp.eq.s32.totalorder %s35, 1
      %v3634 = vld [vmem:[%s17] sm:$0x3]
      %v3635 = vld [vmem:[%s18] sm:$0x3]
      %v3636 = vadd.f32 %v3627, %v3628
      %3637 = vadd.xlane.f32.xlu0 %v3636
      %v3638 = vpop.xlane.xlu0 %3637
      %v3639 = vadd.f32 %v3629, %v3630
      %3640 = vadd.xlane.f32.xlu0 %v3639
      %v3641 = vpop.xlane.xlu0 %3640
      %v3642 = vsel %vm936, %v3631, 0.0
      %v3643 = vsel %vm936, %v3632, 0.0
      %v3644 = vadd.f32 %v3642, %v3643
      %3645 = vadd.xlane.f32.xlu0 %v3644
      %v3646 = vpop.xlane.xlu0 %3645
      %v3647 = vmul.f32 %v3638, %v942
      %v3648 = vmul.f32 %v3641, %v942
      %v3649 = vmul.f32 %v3646, %v942
      %v3650 = vsub.f32 %v3627, %v3647
      %v3651 = vsub.f32 %v3628, %v3647
      %v3652 = vsub.f32 %v3629, %v3648
      %v3653 = vsub.f32 %v3630, %v3648
      %v3654 = vsub.f32 %v3631, %v3649
      %v3655 = vsub.f32 %v3632, %v3649
      %v3656 = vmul.f32 %v3650, %v3650
      %v3657 = vmul.f32 %v3651, %v3651
      %v3658 = vmul.f32 %v3652, %v3652
      %v3659 = vmul.f32 %v3653, %v3653
      %v3660 = vmul.f32 %v3654, %v3654
      %v3661 = vmul.f32 %v3655, %v3655
      %v3662 = vadd.f32 %v3656, %v3657
      %3663 = vadd.xlane.f32.xlu0 %v3662
      %v3664 = vpop.xlane.xlu0 %3663
      %v3665 = vadd.f32 %v3658, %v3659
      %3666 = vadd.xlane.f32.xlu0 %v3665
      %v3667 = vpop.xlane.xlu0 %3666
      %v3668 = vsel %vm936, %v3660, 0.0
      %v3669 = vsel %vm936, %v3661, 0.0
      %v3670 = vadd.f32 %v3668, %v3669
      %3671 = vadd.xlane.f32.xlu0 %v3670
      %v3672 = vpop.xlane.xlu0 %3671
      %v3673 = vmul.f32 %v3664, %v942
      %v3674 = vmul.f32 %v3667, %v942
      %v3675 = vmul.f32 %v3672, %v942
      %v3676 = vadd.f32 %v3673, 1e-05
      %v3677 = vadd.f32 %v3674, 1e-05
      %v3678 = vadd.f32 %v3675, 1e-05
      %v3679 = vrsqrt.pop %v3676
      %v3680 = vrsqrt.pop %v3677
      %v3681 = vrsqrt.pop %v3678
      %v3682 = vmul.f32 %v3650, %v3679
      %v3683 = vmul.f32 %v3651, %v3679
      %v3684 = vmul.f32 %v3652, %v3680
      %v3685 = vmul.f32 %v3653, %v3680
      %v3686 = vmul.f32 %v3654, %v3681
      %v3687 = vmul.f32 %v3655, %v3681
      %v3689 = vlaneseq
      %v3690 = vshrl.u32 %v3689, 7
      %v3691 = vsub.s32 0, %v3690
      %v3692 = vrot.slane %v3634, %v3691
      %v3693 = vlaneseq
      %v3694 = vshrl.u32 %v3693, 7
      %v3695 = vsub.s32 1, %v3694
      %v3696 = vrot.slane %v3634, %v3695
      %v3699 = vmul.f32 %v3682, %v3692
      %v3700 = vmul.f32 %v3683, %v3696
      %v3701 = vmul.f32 %v3684, %v3692
      %v3702 = vmul.f32 %v3685, %v3696
      %v3703 = vmul.f32 %v3686, %v3692
      %v3704 = vmul.f32 %v3687, %v3696
      %v3706 = vlaneseq
      %v3707 = vshrl.u32 %v3706, 7
      %v3708 = vsub.s32 0, %v3707
      %v3709 = vrot.slane %v3635, %v3708
      %v3710 = vlaneseq
      %v3711 = vshrl.u32 %v3710, 7
      %v3712 = vsub.s32 1, %v3711
      %v3713 = vrot.slane %v3635, %v3712
      %v3716 = vadd.f32 %v3699, %v3709
      %v3717 = vadd.f32 %v3700, %v3713
      %v3718 = vadd.f32 %v3701, %v3709
      %v3719 = vadd.f32 %v3702, %v3713
      %v3720 = vadd.f32 %v3703, %v3709
      %v3721 = vadd.f32 %v3704, %v3713
      %s3722 = scalar_select %p3633, 1, 0
      %v3723 = vstv %s3722
      %vm3724 = vcmp.eq.s32.totalorder %v3723, 1
      %v3725 = vsel %vm3724, %v3716, %v3627
      %v3726 = vsel %vm3724, %v3717, %v3628
      %v3727 = vsel %vm3724, %v3718, %v3629
      %v3728 = vsel %vm3724, %v3719, %v3630
      %v3729 = vsel %vm3724, %v3720, %v3631
      %v3730 = vsel %vm3724, %v3721, %v3632
      %3731 = vst [vmem:[%s904] sm:$0xff] %v3725
      %3732 = vst [vmem:[%s904 + $0x8] sm:$0xff] %v3726
      %3733 = vst [vmem:[%s904 + $0x10] sm:$0xff] %v3727
      %3734 = vst [vmem:[%s904 + $0x18] sm:$0xff] %v3728
      %3735 = vst [vmem:[%s904 + $0x20] sm:$0x7] %v3729
      %3736 = vst [vmem:[%s904 + $0x28] sm:$0x7] %v3730
      %p3737 = scmp.lt.s32.totalorder %s34, 1
      %s3738 = scalar_select %p3737, %s34, 1
      %s3739 = smul.addr %s3738, 6
      %s3740 = smul.addr %s3739, 8
      %s3741 = scalar_lea.vmem %s19, %s3740
      // Predicated region
      $region101: #{_lambda_.13} parent=95 // pred_check
        %p3742 = pneg %p544
      $region102: #{_lambda_.13} parent=95 // pred_check_branch
        %3744 = sbr.rel (%p3742) target = $region104
      $region103: #{_lambda_.13} parent=95 // pred_region
        _
      $region104: #{_lambda_.13} parent=95 // pred_fallthru
        _
    $region96: #{_lambda_.13} parent=5 // pred_fallthru
      _
    %p3745 = scmp.le.s32.totalorder 2, %s25
    // Predicated region
    $region105: #{_lambda_.13} parent=5 // pred_check
      %p3746 = pneg %p3745
    $region106: #{_lambda_.13} parent=5 // pred_check_branch
      %3748 = sbr.rel (%p3746) target = $region108
    $region107: #{_lambda_.13} parent=5 // pred_region
      %s3749 = ssub.s32 %s25, 2
      // Predicated region
      $region109: #{_lambda_.13} parent=107 // pred_check
        %p3750 = pneg %p550
      $region110: #{_lambda_.13} parent=107 // pred_check_branch
        %3752 = sbr.rel (%p3750) target = $region112
      $region111: #{_lambda_.13} parent=107 // pred_region
        %p3753 = scmp.lt.s32.totalorder %s36, 1
        %s3754 = scalar_select %p3753, %s36, 1
        %s3755 = smul.addr %s3754, 6
        %s3756 = smul.addr %s3755, 8
        %s3757 = scalar_lea.vmem %s19, %s3756
      $region112: #{_lambda_.13} parent=107 // pred_fallthru
        _
    $region108: #{_lambda_.13} parent=5 // pred_fallthru
      _
  $region6: #{_lambda_.13} parent=0 // loop_footer
    %s29 = sadd.s32 1, %s25
  $region7: #{_lambda_.13} parent=0 // loop_footer_branch
    %24 = sbr.rel target = $region3
  $region8: #{_lambda_.13} parent=0 // loop_exit
    _

</llo_original>
